<compile_context>
chip_gen: v7x
topology: tpu7x:2x2x1
jax: 0.10.0
libtpu: 0.0.40
codegen_flags: <defaults>
</compile_context>

<pallas_src>
import functools

import numpy as np
import jax
import jax.numpy as jnp
from jax import lax
from jax.experimental import pallas as pl
from jax.experimental.pallas import tpu as pltpu

CHANNELS = 64
NUM_CONVS_PER_BLOCK = 10
LEAKY_SLOPE = 0.2


# ----------------------------- in-kernel helpers -----------------------------
def _leaky(x):
    # LeakyReLU(0.2): max(x, 0.2*x) is exact for slopes in (0, 1).
    return jnp.maximum(x, LEAKY_SLOPE * x)


def _shift_m1(x):
    # x[:, t-1] with a zero at the left border.
    c, l = x.shape
    return jnp.concatenate([jnp.zeros((c, 1), x.dtype), x[:, :l - 1]], axis=1)


def _shift_p1(x):
    # x[:, t+1] with a zero at the right border.
    c, l = x.shape
    return jnp.concatenate([x[:, 1:], jnp.zeros((c, 1), x.dtype)], axis=1)


def _mxu_stack(a, b, c):
    # Stack three (C, L) operands along the contraction dim and cast to bf16
    # for the MXU (accumulation stays in f32 inside the dot).
    return jnp.concatenate([a, b, c], axis=0).astype(jnp.bfloat16)


def _dot(w, s):
    return jnp.dot(w, s, preferred_element_type=jnp.float32)


# --------------------------------- kernel ------------------------------------
def _level_kernel(first, *refs):
    # One full pyramid level:
    #   [level 0 only] conv_input (1 -> C) + LeakyReLU,
    #   ConvBlock: 10 x (Conv1d k=3 'same' + LeakyReLU) then
    #              ConvTranspose1d(k=4, s=2, p=1) + LeakyReLU,
    #   convt_R (C -> 1 conv3), convt_I (1 -> 1 deconv), hr = convt_I + convt_R.
    # All stride-2 transposed convs are evaluated in polyphase form, so every
    # array in the kernel keeps lane length L; interleaving to 2L is done as a
    # free reshape in the wrapper.
    if first:
        x_ref, w_in_ref, wc_ref, wdec_ref, wr_ref, wi_ref, feat_ref, hr_ref = refs
        lr_ref = x_ref
    else:
        x_ref, lr_ref, wc_ref, wdec_ref, wr_ref, wi_ref, feat_ref, hr_ref = refs

    c = CHANNELS
    lr = lr_ref[0]                                   # (1, L) float32

    if first:
        # conv_input (1 -> C, k=3, pad=1) + LeakyReLU on the VPU: three
        # broadcasted multiply-adds instead of a K=3 MXU matmul.
        w_in = w_in_ref[...]                         # (C, 3) float32
        out = _leaky(w_in[:, 0:1] * _shift_m1(lr)
                     + w_in[:, 1:2] * lr
                     + w_in[:, 2:3] * _shift_p1(lr))
    else:
        out = x_ref[0]                               # (C, L) float32

    # --- ConvBlock: 10 x (Conv1d k=3 'same' + LeakyReLU) ---------------------
    # One fused (C, 3C) @ (3C, L) bf16 matmul per conv (taps along K).
    for i in range(NUM_CONVS_PER_BLOCK):
        s = _mxu_stack(_shift_m1(out), out, _shift_p1(out))
        out = _leaky(_dot(wc_ref[i], s))

    # --- ConvTranspose1d(k=4, s=2, p=1) + LeakyReLU, polyphase ---------------
    # Single (2C, 3C) @ (3C, L) matmul producing [even; odd] stacked on
    # sublanes:  even[m] = W1^T x[m] + W3^T x[m-1],
    #            odd[m]  = W0^T x[m+1] + W2^T x[m].
    s = _mxu_stack(_shift_m1(out), out, _shift_p1(out))
    de = _leaky(_dot(wdec_ref[...], s))              # (2C, L) float32
    feat_ref[0] = de                                 # planar [even; odd]
    even, odd = de[:c], de[c:]

    # --- convt_R: Conv1d(C -> 1, k=3, 'same') on the interleaved deconv ------
    # Per phase: r_e[m] = R0 odd[m-1] + R1 even[m] + R2 odd[m]
    #            r_o[m] = R0 even[m]  + R1 odd[m]  + R2 even[m+1]
    wr = wr_ref[...]                                 # (8, 3C) bf16, row 0 real
    r_e = _dot(wr, _mxu_stack(_shift_m1(odd), even, odd))[0:1]
    r_o = _dot(wr, _mxu_stack(even, odd, _shift_p1(even)))[0:1]

    # --- convt_I: ConvTranspose1d(1 -> 1, k=4, s=2, p=1) on lr, pure VPU -----
    wi = wi_ref[...]                                 # (1, 4) float32
    i_e = wi[:, 1:2] * lr + wi[:, 3:4] * _shift_m1(lr)
    i_o = wi[:, 0:1] * _shift_p1(lr) + wi[:, 2:3] * lr

    # hr in planar phase layout: row 0 = even positions, row 1 = odd positions.
    hr_ref[0, 0:1, :] = i_e + r_e
    hr_ref[0, 1:2, :] = i_o + r_o


# -------------------------------- wrappers -----------------------------------
def _pyramid_level_pallas(first, x, lr, w_in, wc, wdec, wr, wi):
    b = x.shape[0]
    l = x.shape[-1]
    c = CHANNELS
    if first:
        arrays = (x, w_in)
        in_specs = [pl.BlockSpec((1, 1, l), lambda i: (i, 0, 0)),
                    pl.BlockSpec(w_in.shape, lambda i: (0, 0))]
    else:
        arrays = (x, lr)
        in_specs = [pl.BlockSpec((1, c, l), lambda i: (i, 0, 0)),
                    pl.BlockSpec((1, 1, l), lambda i: (i, 0, 0))]
    arrays += (wc, wdec, wr, wi)
    in_specs += [pl.BlockSpec(wc.shape, lambda i: (0, 0, 0)),   # constant blocks:
                 pl.BlockSpec(wdec.shape, lambda i: (0, 0)),    # fetched once
                 pl.BlockSpec(wr.shape, lambda i: (0, 0)),
                 pl.BlockSpec(wi.shape, lambda i: (0, 0))]
    feat_pl, hr_pl = pl.pallas_call(
        functools.partial(_level_kernel, first),
        out_shape=(jax.ShapeDtypeStruct((b, 2 * c, l), jnp.float32),
                   jax.ShapeDtypeStruct((b, 2, l), jnp.float32)),
        grid=(b,),
        in_specs=in_specs,
        out_specs=(pl.BlockSpec((1, 2 * c, l), lambda i: (i, 0, 0)),
                   pl.BlockSpec((1, 2, l), lambda i: (i, 0, 0))),
        compiler_params=pltpu.CompilerParams(
            dimension_semantics=("parallel",)),
    )(*arrays)
    return feat_pl, hr_pl


def _prep_level_weights(lvl):
    c = CHANNELS
    # Conv taps concatenated along the contraction dim: (10, C, 3C), ordered
    # [k=0 | k=1 | k=2] to match the [x_{t-1}; x_t; x_{t+1}] operand stack.
    wc = jnp.concatenate([lvl['convs'][:, :, :, k] for k in range(3)],
                         axis=2).astype(jnp.bfloat16)
    # ConvTranspose1d(k=4, s=2, p=1) polyphase matrix (2C, 3C):
    #   even row-block: [W3^T | W1^T | 0], odd row-block: [0 | W2^T | W0^T].
    wt = lvl['deconv']                               # torch layout (I, O, 4)
    wk = [wt[:, :, k].T for k in range(4)]           # (O, I) per tap
    z = jnp.zeros((c, c), jnp.float32)
    wdec = jnp.concatenate(
        [jnp.concatenate([wk[3], wk[1], z], axis=1),
         jnp.concatenate([z, wk[2], wk[0]], axis=1)],
        axis=0).astype(jnp.bfloat16)
    # convt_R taps (1, 3C), padded to 8 sublanes for a clean MXU layout.
    wr_row = jnp.concatenate([lvl['wR'][:, :, k] for k in range(3)], axis=1)
    wr = jnp.concatenate([wr_row, jnp.zeros((7, 3 * c), jnp.float32)],
                         axis=0).astype(jnp.bfloat16)
    # convt_I scalars stay f32 (VPU path).
    wi = lvl['wI'][:, 0, :]                          # (1, 4)
    return wc, wdec, wr, wi


def lapsrn_forward_pallas(signal, params):
    # TODO(synk): fuse all pyramid levels into a single pallas_call by carrying
    # polyphase planes in VMEM across levels (needs phase-indexed conv
    # bookkeeping); with 2 levels the remaining overhead is one extra launch
    # plus a tiny HBM round-trip of feat.
    b = signal.shape[0]
    c = CHANNELS
    w_in = params['conv_input'][:, 0, :]             # (C, 3) float32
    lr = signal
    feat = signal                                    # level-0 kernel takes the raw signal
    hr_signals = []
    for li, lvl in enumerate(params['levels']):
        wc, wdec, wr, wi = _prep_level_weights(lvl)
        l = feat.shape[-1]
        feat_pl, hr_pl = _pyramid_level_pallas(li == 0, feat, lr, w_in,
                                               wc, wdec, wr, wi)
        # planar [even; odd] phase planes -> interleaved (free XLA reshapes).
        feat = (feat_pl.reshape(b, 2, c, l).transpose(0, 2, 3, 1)
                .reshape(b, c, 2 * l))
        hr = hr_pl.transpose(0, 2, 1).reshape(b, 1, 2 * l)
        hr_signals.append(hr)
        lr = hr
    return hr_signals


# ------------------------- parameters (deterministic) -------------------------
def init_params(key, channels, num_levels):
    # Note: the custom init in LapSrn.__init__ only touches Conv2d /
    # ConvTranspose2d modules, which do not exist here (all layers are 1D), so
    # it is a no-op; plain deterministic random init is used instead.
    keys = iter(jax.random.split(key, 4 + num_levels * (NUM_CONVS_PER_BLOCK + 3)))

    def nrm(shape, fan_in):
        return jax.random.normal(next(keys), shape, jnp.float32) / np.sqrt(fan_in)

    params = {
        'conv_input': nrm((channels, 1, 3), 1 * 3),                 # Conv1d (O,I,K)
        'levels': [],
    }
    for _ in range(num_levels):
        params['levels'].append({
            'convs': jnp.stack([nrm((channels, channels, 3), channels * 3)
                                for _ in range(NUM_CONVS_PER_BLOCK)]),  # (10,O,I,3)
            'deconv': nrm((channels, channels, 4), channels * 4),       # (I,O,4)
            'wR': nrm((1, channels, 3), channels * 3),                  # (O=1,I,3)
            'wI': nrm((1, 1, 4), 1 * 4),                                # (I=1,O=1,4)
        })
    return params


# ------------------------------ pure-JAX reference ----------------------------
def _ref_conv1d(x, w, pad):
    return lax.conv_general_dilated(
        x, w, (1,), [(pad, pad)],
        dimension_numbers=('NCH', 'OIH', 'NCH'),
        precision=lax.Precision.HIGHEST)


def _ref_deconv1d_k4_s2_p1(x, w):
    # ConvTranspose1d(k=4, s=2, p=1) == dilated conv with flipped/transposed W.
    w_eq = jnp.transpose(jnp.flip(w, axis=2), (1, 0, 2))   # (O, I, 4)
    return lax.conv_general_dilated(
        x, w_eq, (1,), [(2, 2)], lhs_dilation=(2,),
        dimension_numbers=('NCH', 'OIH', 'NCH'),
        precision=lax.Precision.HIGHEST)


def lapsrn_forward_ref(signal, params):
    leaky = lambda x: jnp.where(x >= 0, x, LEAKY_SLOPE * x)
    out = leaky(_ref_conv1d(signal, params['conv_input'], 1))
    lr = signal
    hrs = []
    for lvl in params['levels']:
        for i in range(NUM_CONVS_PER_BLOCK):
            out = leaky(_ref_conv1d(out, lvl['convs'][i], 1))
        out = leaky(_ref_deconv1d_k4_s2_p1(out, lvl['deconv']))
        convt_i = _ref_deconv1d_k4_s2_p1(lr, lvl['wI'])
        convt_r = _ref_conv1d(out, lvl['wR'], 1)
        hr = convt_i + convt_r
        hrs.append(hr)
        lr = hr
    return hrs


# ----------------------------------- main -------------------------------------
if __name__ == "__main__":
    channels = CHANNELS            # conv_input is hard-wired to 64 output channels
    lr_sr, hr_sr = 8, 24           # scale_factor = 3  ->  2 pyramid levels
    num_levels = int(hr_sr / lr_sr) - 1
    batch, length = 2, 16

    key = jax.random.PRNGKey(0)
    k_sig, k_par = jax.random.split(key)
    signal = jax.random.normal(k_sig, (batch, 1, length), jnp.float32)
    params = init_params(k_par, channels, num_levels)

    fwd = jax.jit(lapsrn_forward_pallas)
    hr_pallas = jax.block_until_ready(fwd(signal, params))

    hr_ref = lapsrn_forward_ref(signal, params)
    for got, want in zip(hr_pallas, hr_ref):
        assert got.shape == want.shape, (got.shape, want.shape)
        np.testing.assert_allclose(np.asarray(got), np.asarray(want),
                                   rtol=2e-2, atol=2e-2)

    print("KERNEL_OK")
</pallas_src>

<mosaic_0001>
module attributes {stable_mosaic.version = 11 : i64} {
  func.func @_level_kernel(%arg0: i32, %arg1: memref<1x1x16xf32, #tpu.memory_space<vmem>>, %arg2: memref<64x3xf32, #tpu.memory_space<vmem>>, %arg3: memref<10x64x192xbf16, #tpu.memory_space<vmem>>, %arg4: memref<128x192xbf16, #tpu.memory_space<vmem>>, %arg5: memref<8x192xbf16, #tpu.memory_space<vmem>>, %arg6: memref<1x4xf32, #tpu.memory_space<vmem>>, %arg7: memref<1x128x16xf32, #tpu.memory_space<vmem>>, %arg8: memref<1x2x16xf32, #tpu.memory_space<vmem>>) attributes {dimension_semantics = [#tpu.dimension_semantics<parallel>], iteration_bounds = array<i64: 2>, scalar_prefetch = 0 : i64, scratch_operands = 0 : i64, tpu.core_type = #tpu.core_type<tc>, window_params = [{transform_indices = @transform_0, window_bounds = array<i64: 1, 1, 16>}, {pipeline_mode = #tpu.pipeline_mode<synchronous>, transform_indices = @transform_1, window_bounds = array<i64: 64, 3>}, {pipeline_mode = #tpu.pipeline_mode<synchronous>, transform_indices = @transform_2, window_bounds = array<i64: 10, 64, 192>}, {pipeline_mode = #tpu.pipeline_mode<synchronous>, transform_indices = @transform_3, window_bounds = array<i64: 128, 192>}, {pipeline_mode = #tpu.pipeline_mode<synchronous>, transform_indices = @transform_4, window_bounds = array<i64: 8, 192>}, {pipeline_mode = #tpu.pipeline_mode<synchronous>, transform_indices = @transform_5, window_bounds = array<i64: 1, 4>}, {transform_indices = @transform_6, window_bounds = array<i64: 1, 128, 16>}, {transform_indices = @transform_7, window_bounds = array<i64: 1, 2, 16>}]} {
    %c0 = arith.constant 0 : index
    %c0_0 = arith.constant 0 : index
    %c0_1 = arith.constant 0 : index
    %0 = vector.load %arg1[%c0, %c0_0, %c0_1] : memref<1x1x16xf32, #tpu.memory_space<vmem>>, vector<1x1x16xf32>
    %1 = vector.shape_cast %0 : vector<1x1x16xf32> to vector<1x16xf32>
    %c0_2 = arith.constant 0 : index
    %c0_3 = arith.constant 0 : index
    %2 = vector.load %arg2[%c0_2, %c0_3] : memref<64x3xf32, #tpu.memory_space<vmem>>, vector<64x3xf32>
    %3 = vector.extract_strided_slice %2 {offsets = [0, 0], sizes = [64, 1], strides = [1, 1]} : vector<64x3xf32> to vector<64x1xf32>
    %cst = arith.constant 0.000000e+00 : f32
    %4 = vector.broadcast %cst : f32 to vector<1x1xf32>
    %5 = vector.extract_strided_slice %1 {offsets = [0, 0], sizes = [1, 15], strides = [1, 1]} : vector<1x16xf32> to vector<1x15xf32>
    %6 = tpu.concatenate %4, %5 in 1 : vector<1x1xf32>, vector<1x15xf32> -> vector<1x16xf32>
    %7 = vector.broadcast %3 : vector<64x1xf32> to vector<64x16xf32>
    %8 = vector.broadcast %6 : vector<1x16xf32> to vector<64x16xf32>
    %9 = arith.mulf %7, %8 : vector<64x16xf32>
    %10 = vector.extract_strided_slice %2 {offsets = [0, 1], sizes = [64, 1], strides = [1, 1]} : vector<64x3xf32> to vector<64x1xf32>
    %11 = vector.broadcast %10 : vector<64x1xf32> to vector<64x16xf32>
    %12 = vector.broadcast %1 : vector<1x16xf32> to vector<64x16xf32>
    %13 = arith.mulf %11, %12 : vector<64x16xf32>
    %14 = arith.addf %9, %13 : vector<64x16xf32>
    %15 = vector.extract_strided_slice %2 {offsets = [0, 2], sizes = [64, 1], strides = [1, 1]} : vector<64x3xf32> to vector<64x1xf32>
    %16 = vector.extract_strided_slice %1 {offsets = [0, 1], sizes = [1, 15], strides = [1, 1]} : vector<1x16xf32> to vector<1x15xf32>
    %cst_4 = arith.constant 0.000000e+00 : f32
    %17 = vector.broadcast %cst_4 : f32 to vector<1x1xf32>
    %18 = tpu.concatenate %16, %17 in 1 : vector<1x15xf32>, vector<1x1xf32> -> vector<1x16xf32>
    %19 = vector.broadcast %15 : vector<64x1xf32> to vector<64x16xf32>
    %20 = vector.broadcast %18 : vector<1x16xf32> to vector<64x16xf32>
    %21 = arith.mulf %19, %20 : vector<64x16xf32>
    %22 = arith.addf %14, %21 : vector<64x16xf32>
    %cst_5 = arith.constant 2.000000e-01 : f32
    %23 = vector.broadcast %cst_5 : f32 to vector<64x16xf32>
    %24 = arith.mulf %23, %22 : vector<64x16xf32>
    %25 = arith.maximumf %22, %24 : vector<64x16xf32>
    %cst_6 = arith.constant 0.000000e+00 : f32
    %26 = vector.broadcast %cst_6 : f32 to vector<64x1xf32>
    %27 = vector.extract_strided_slice %25 {offsets = [0, 0], sizes = [64, 15], strides = [1, 1]} : vector<64x16xf32> to vector<64x15xf32>
    %28 = tpu.concatenate %26, %27 in 1 : vector<64x1xf32>, vector<64x15xf32> -> vector<64x16xf32>
    %29 = vector.extract_strided_slice %25 {offsets = [0, 1], sizes = [64, 15], strides = [1, 1]} : vector<64x16xf32> to vector<64x15xf32>
    %cst_7 = arith.constant 0.000000e+00 : f32
    %30 = vector.broadcast %cst_7 : f32 to vector<64x1xf32>
    %31 = tpu.concatenate %29, %30 in 1 : vector<64x15xf32>, vector<64x1xf32> -> vector<64x16xf32>
    %32 = tpu.concatenate %28, %25, %31 in 0 : vector<64x16xf32>, vector<64x16xf32>, vector<64x16xf32> -> vector<192x16xf32>
    %33 = arith.truncf %32 : vector<192x16xf32> to vector<192x16xbf16>
    %c0_8 = arith.constant 0 : index
    %c0_9 = arith.constant 0 : index
    %c0_10 = arith.constant 0 : index
    %34 = vector.load %arg3[%c0_8, %c0_9, %c0_10] : memref<10x64x192xbf16, #tpu.memory_space<vmem>>, vector<1x64x192xbf16>
    %35 = vector.shape_cast %34 : vector<1x64x192xbf16> to vector<64x192xbf16>
    %cst_11 = arith.constant dense<0.000000e+00> : vector<64x16xf32>
    %36 = tpu.matmul %35, %33, %cst_11 {dimension_numbers = #tpu.dot_dimension_numbers<[1], [0], [0], [1], [0, 0, 1, 1], [], []>} : vector<64x192xbf16>, vector<192x16xbf16>, vector<64x16xf32> -> vector<64x16xf32>
    %cst_12 = arith.constant 2.000000e-01 : f32
    %37 = vector.broadcast %cst_12 : f32 to vector<64x16xf32>
    %38 = arith.mulf %37, %36 : vector<64x16xf32>
    %39 = arith.maximumf %36, %38 : vector<64x16xf32>
    %cst_13 = arith.constant 0.000000e+00 : f32
    %40 = vector.broadcast %cst_13 : f32 to vector<64x1xf32>
    %41 = vector.extract_strided_slice %39 {offsets = [0, 0], sizes = [64, 15], strides = [1, 1]} : vector<64x16xf32> to vector<64x15xf32>
    %42 = tpu.concatenate %40, %41 in 1 : vector<64x1xf32>, vector<64x15xf32> -> vector<64x16xf32>
    %43 = vector.extract_strided_slice %39 {offsets = [0, 1], sizes = [64, 15], strides = [1, 1]} : vector<64x16xf32> to vector<64x15xf32>
    %cst_14 = arith.constant 0.000000e+00 : f32
    %44 = vector.broadcast %cst_14 : f32 to vector<64x1xf32>
    %45 = tpu.concatenate %43, %44 in 1 : vector<64x15xf32>, vector<64x1xf32> -> vector<64x16xf32>
    %46 = tpu.concatenate %42, %39, %45 in 0 : vector<64x16xf32>, vector<64x16xf32>, vector<64x16xf32> -> vector<192x16xf32>
    %47 = arith.truncf %46 : vector<192x16xf32> to vector<192x16xbf16>
    %c1 = arith.constant 1 : index
    %c0_15 = arith.constant 0 : index
    %c0_16 = arith.constant 0 : index
    %48 = vector.load %arg3[%c1, %c0_15, %c0_16] : memref<10x64x192xbf16, #tpu.memory_space<vmem>>, vector<1x64x192xbf16>
    %49 = vector.shape_cast %48 : vector<1x64x192xbf16> to vector<64x192xbf16>
    %cst_17 = arith.constant dense<0.000000e+00> : vector<64x16xf32>
    %50 = tpu.matmul %49, %47, %cst_17 {dimension_numbers = #tpu.dot_dimension_numbers<[1], [0], [0], [1], [0, 0, 1, 1], [], []>} : vector<64x192xbf16>, vector<192x16xbf16>, vector<64x16xf32> -> vector<64x16xf32>
    %cst_18 = arith.constant 2.000000e-01 : f32
    %51 = vector.broadcast %cst_18 : f32 to vector<64x16xf32>
    %52 = arith.mulf %51, %50 : vector<64x16xf32>
    %53 = arith.maximumf %50, %52 : vector<64x16xf32>
    %cst_19 = arith.constant 0.000000e+00 : f32
    %54 = vector.broadcast %cst_19 : f32 to vector<64x1xf32>
    %55 = vector.extract_strided_slice %53 {offsets = [0, 0], sizes = [64, 15], strides = [1, 1]} : vector<64x16xf32> to vector<64x15xf32>
    %56 = tpu.concatenate %54, %55 in 1 : vector<64x1xf32>, vector<64x15xf32> -> vector<64x16xf32>
    %57 = vector.extract_strided_slice %53 {offsets = [0, 1], sizes = [64, 15], strides = [1, 1]} : vector<64x16xf32> to vector<64x15xf32>
    %cst_20 = arith.constant 0.000000e+00 : f32
    %58 = vector.broadcast %cst_20 : f32 to vector<64x1xf32>
    %59 = tpu.concatenate %57, %58 in 1 : vector<64x15xf32>, vector<64x1xf32> -> vector<64x16xf32>
    %60 = tpu.concatenate %56, %53, %59 in 0 : vector<64x16xf32>, vector<64x16xf32>, vector<64x16xf32> -> vector<192x16xf32>
    %61 = arith.truncf %60 : vector<192x16xf32> to vector<192x16xbf16>
    %c2 = arith.constant 2 : index
    %c0_21 = arith.constant 0 : index
    %c0_22 = arith.constant 0 : index
    %62 = vector.load %arg3[%c2, %c0_21, %c0_22] : memref<10x64x192xbf16, #tpu.memory_space<vmem>>, vector<1x64x192xbf16>
    %63 = vector.shape_cast %62 : vector<1x64x192xbf16> to vector<64x192xbf16>
    %cst_23 = arith.constant dense<0.000000e+00> : vector<64x16xf32>
    %64 = tpu.matmul %63, %61, %cst_23 {dimension_numbers = #tpu.dot_dimension_numbers<[1], [0], [0], [1], [0, 0, 1, 1], [], []>} : vector<64x192xbf16>, vector<192x16xbf16>, vector<64x16xf32> -> vector<64x16xf32>
    %cst_24 = arith.constant 2.000000e-01 : f32
    %65 = vector.broadcast %cst_24 : f32 to vector<64x16xf32>
    %66 = arith.mulf %65, %64 : vector<64x16xf32>
    %67 = arith.maximumf %64, %66 : vector<64x16xf32>
    %cst_25 = arith.constant 0.000000e+00 : f32
    %68 = vector.broadcast %cst_25 : f32 to vector<64x1xf32>
    %69 = vector.extract_strided_slice %67 {offsets = [0, 0], sizes = [64, 15], strides = [1, 1]} : vector<64x16xf32> to vector<64x15xf32>
    %70 = tpu.concatenate %68, %69 in 1 : vector<64x1xf32>, vector<64x15xf32> -> vector<64x16xf32>
    %71 = vector.extract_strided_slice %67 {offsets = [0, 1], sizes = [64, 15], strides = [1, 1]} : vector<64x16xf32> to vector<64x15xf32>
    %cst_26 = arith.constant 0.000000e+00 : f32
    %72 = vector.broadcast %cst_26 : f32 to vector<64x1xf32>
    %73 = tpu.concatenate %71, %72 in 1 : vector<64x15xf32>, vector<64x1xf32> -> vector<64x16xf32>
    %74 = tpu.concatenate %70, %67, %73 in 0 : vector<64x16xf32>, vector<64x16xf32>, vector<64x16xf32> -> vector<192x16xf32>
    %75 = arith.truncf %74 : vector<192x16xf32> to vector<192x16xbf16>
    %c3 = arith.constant 3 : index
    %c0_27 = arith.constant 0 : index
    %c0_28 = arith.constant 0 : index
    %76 = vector.load %arg3[%c3, %c0_27, %c0_28] : memref<10x64x192xbf16, #tpu.memory_space<vmem>>, vector<1x64x192xbf16>
    %77 = vector.shape_cast %76 : vector<1x64x192xbf16> to vector<64x192xbf16>
    %cst_29 = arith.constant dense<0.000000e+00> : vector<64x16xf32>
    %78 = tpu.matmul %77, %75, %cst_29 {dimension_numbers = #tpu.dot_dimension_numbers<[1], [0], [0], [1], [0, 0, 1, 1], [], []>} : vector<64x192xbf16>, vector<192x16xbf16>, vector<64x16xf32> -> vector<64x16xf32>
    %cst_30 = arith.constant 2.000000e-01 : f32
    %79 = vector.broadcast %cst_30 : f32 to vector<64x16xf32>
    %80 = arith.mulf %79, %78 : vector<64x16xf32>
    %81 = arith.maximumf %78, %80 : vector<64x16xf32>
    %cst_31 = arith.constant 0.000000e+00 : f32
    %82 = vector.broadcast %cst_31 : f32 to vector<64x1xf32>
    %83 = vector.extract_strided_slice %81 {offsets = [0, 0], sizes = [64, 15], strides = [1, 1]} : vector<64x16xf32> to vector<64x15xf32>
    %84 = tpu.concatenate %82, %83 in 1 : vector<64x1xf32>, vector<64x15xf32> -> vector<64x16xf32>
    %85 = vector.extract_strided_slice %81 {offsets = [0, 1], sizes = [64, 15], strides = [1, 1]} : vector<64x16xf32> to vector<64x15xf32>
    %cst_32 = arith.constant 0.000000e+00 : f32
    %86 = vector.broadcast %cst_32 : f32 to vector<64x1xf32>
    %87 = tpu.concatenate %85, %86 in 1 : vector<64x15xf32>, vector<64x1xf32> -> vector<64x16xf32>
    %88 = tpu.concatenate %84, %81, %87 in 0 : vector<64x16xf32>, vector<64x16xf32>, vector<64x16xf32> -> vector<192x16xf32>
    %89 = arith.truncf %88 : vector<192x16xf32> to vector<192x16xbf16>
    %c4 = arith.constant 4 : index
    %c0_33 = arith.constant 0 : index
    %c0_34 = arith.constant 0 : index
    %90 = vector.load %arg3[%c4, %c0_33, %c0_34] : memref<10x64x192xbf16, #tpu.memory_space<vmem>>, vector<1x64x192xbf16>
    %91 = vector.shape_cast %90 : vector<1x64x192xbf16> to vector<64x192xbf16>
    %cst_35 = arith.constant dense<0.000000e+00> : vector<64x16xf32>
    %92 = tpu.matmul %91, %89, %cst_35 {dimension_numbers = #tpu.dot_dimension_numbers<[1], [0], [0], [1], [0, 0, 1, 1], [], []>} : vector<64x192xbf16>, vector<192x16xbf16>, vector<64x16xf32> -> vector<64x16xf32>
    %cst_36 = arith.constant 2.000000e-01 : f32
    %93 = vector.broadcast %cst_36 : f32 to vector<64x16xf32>
    %94 = arith.mulf %93, %92 : vector<64x16xf32>
    %95 = arith.maximumf %92, %94 : vector<64x16xf32>
    %cst_37 = arith.constant 0.000000e+00 : f32
    %96 = vector.broadcast %cst_37 : f32 to vector<64x1xf32>
    %97 = vector.extract_strided_slice %95 {offsets = [0, 0], sizes = [64, 15], strides = [1, 1]} : vector<64x16xf32> to vector<64x15xf32>
    %98 = tpu.concatenate %96, %97 in 1 : vector<64x1xf32>, vector<64x15xf32> -> vector<64x16xf32>
    %99 = vector.extract_strided_slice %95 {offsets = [0, 1], sizes = [64, 15], strides = [1, 1]} : vector<64x16xf32> to vector<64x15xf32>
    %cst_38 = arith.constant 0.000000e+00 : f32
    %100 = vector.broadcast %cst_38 : f32 to vector<64x1xf32>
    %101 = tpu.concatenate %99, %100 in 1 : vector<64x15xf32>, vector<64x1xf32> -> vector<64x16xf32>
    %102 = tpu.concatenate %98, %95, %101 in 0 : vector<64x16xf32>, vector<64x16xf32>, vector<64x16xf32> -> vector<192x16xf32>
    %103 = arith.truncf %102 : vector<192x16xf32> to vector<192x16xbf16>
    %c5 = arith.constant 5 : index
    %c0_39 = arith.constant 0 : index
    %c0_40 = arith.constant 0 : index
    %104 = vector.load %arg3[%c5, %c0_39, %c0_40] : memref<10x64x192xbf16, #tpu.memory_space<vmem>>, vector<1x64x192xbf16>
    %105 = vector.shape_cast %104 : vector<1x64x192xbf16> to vector<64x192xbf16>
    %cst_41 = arith.constant dense<0.000000e+00> : vector<64x16xf32>
    %106 = tpu.matmul %105, %103, %cst_41 {dimension_numbers = #tpu.dot_dimension_numbers<[1], [0], [0], [1], [0, 0, 1, 1], [], []>} : vector<64x192xbf16>, vector<192x16xbf16>, vector<64x16xf32> -> vector<64x16xf32>
    %cst_42 = arith.constant 2.000000e-01 : f32
    %107 = vector.broadcast %cst_42 : f32 to vector<64x16xf32>
    %108 = arith.mulf %107, %106 : vector<64x16xf32>
    %109 = arith.maximumf %106, %108 : vector<64x16xf32>
    %cst_43 = arith.constant 0.000000e+00 : f32
    %110 = vector.broadcast %cst_43 : f32 to vector<64x1xf32>
    %111 = vector.extract_strided_slice %109 {offsets = [0, 0], sizes = [64, 15], strides = [1, 1]} : vector<64x16xf32> to vector<64x15xf32>
    %112 = tpu.concatenate %110, %111 in 1 : vector<64x1xf32>, vector<64x15xf32> -> vector<64x16xf32>
    %113 = vector.extract_strided_slice %109 {offsets = [0, 1], sizes = [64, 15], strides = [1, 1]} : vector<64x16xf32> to vector<64x15xf32>
    %cst_44 = arith.constant 0.000000e+00 : f32
    %114 = vector.broadcast %cst_44 : f32 to vector<64x1xf32>
    %115 = tpu.concatenate %113, %114 in 1 : vector<64x15xf32>, vector<64x1xf32> -> vector<64x16xf32>
    %116 = tpu.concatenate %112, %109, %115 in 0 : vector<64x16xf32>, vector<64x16xf32>, vector<64x16xf32> -> vector<192x16xf32>
    %117 = arith.truncf %116 : vector<192x16xf32> to vector<192x16xbf16>
    %c6 = arith.constant 6 : index
    %c0_45 = arith.constant 0 : index
    %c0_46 = arith.constant 0 : index
    %118 = vector.load %arg3[%c6, %c0_45, %c0_46] : memref<10x64x192xbf16, #tpu.memory_space<vmem>>, vector<1x64x192xbf16>
    %119 = vector.shape_cast %118 : vector<1x64x192xbf16> to vector<64x192xbf16>
    %cst_47 = arith.constant dense<0.000000e+00> : vector<64x16xf32>
    %120 = tpu.matmul %119, %117, %cst_47 {dimension_numbers = #tpu.dot_dimension_numbers<[1], [0], [0], [1], [0, 0, 1, 1], [], []>} : vector<64x192xbf16>, vector<192x16xbf16>, vector<64x16xf32> -> vector<64x16xf32>
    %cst_48 = arith.constant 2.000000e-01 : f32
    %121 = vector.broadcast %cst_48 : f32 to vector<64x16xf32>
    %122 = arith.mulf %121, %120 : vector<64x16xf32>
    %123 = arith.maximumf %120, %122 : vector<64x16xf32>
    %cst_49 = arith.constant 0.000000e+00 : f32
    %124 = vector.broadcast %cst_49 : f32 to vector<64x1xf32>
    %125 = vector.extract_strided_slice %123 {offsets = [0, 0], sizes = [64, 15], strides = [1, 1]} : vector<64x16xf32> to vector<64x15xf32>
    %126 = tpu.concatenate %124, %125 in 1 : vector<64x1xf32>, vector<64x15xf32> -> vector<64x16xf32>
    %127 = vector.extract_strided_slice %123 {offsets = [0, 1], sizes = [64, 15], strides = [1, 1]} : vector<64x16xf32> to vector<64x15xf32>
    %cst_50 = arith.constant 0.000000e+00 : f32
    %128 = vector.broadcast %cst_50 : f32 to vector<64x1xf32>
    %129 = tpu.concatenate %127, %128 in 1 : vector<64x15xf32>, vector<64x1xf32> -> vector<64x16xf32>
    %130 = tpu.concatenate %126, %123, %129 in 0 : vector<64x16xf32>, vector<64x16xf32>, vector<64x16xf32> -> vector<192x16xf32>
    %131 = arith.truncf %130 : vector<192x16xf32> to vector<192x16xbf16>
    %c7 = arith.constant 7 : index
    %c0_51 = arith.constant 0 : index
    %c0_52 = arith.constant 0 : index
    %132 = vector.load %arg3[%c7, %c0_51, %c0_52] : memref<10x64x192xbf16, #tpu.memory_space<vmem>>, vector<1x64x192xbf16>
    %133 = vector.shape_cast %132 : vector<1x64x192xbf16> to vector<64x192xbf16>
    %cst_53 = arith.constant dense<0.000000e+00> : vector<64x16xf32>
    %134 = tpu.matmul %133, %131, %cst_53 {dimension_numbers = #tpu.dot_dimension_numbers<[1], [0], [0], [1], [0, 0, 1, 1], [], []>} : vector<64x192xbf16>, vector<192x16xbf16>, vector<64x16xf32> -> vector<64x16xf32>
    %cst_54 = arith.constant 2.000000e-01 : f32
    %135 = vector.broadcast %cst_54 : f32 to vector<64x16xf32>
    %136 = arith.mulf %135, %134 : vector<64x16xf32>
    %137 = arith.maximumf %134, %136 : vector<64x16xf32>
    %cst_55 = arith.constant 0.000000e+00 : f32
    %138 = vector.broadcast %cst_55 : f32 to vector<64x1xf32>
    %139 = vector.extract_strided_slice %137 {offsets = [0, 0], sizes = [64, 15], strides = [1, 1]} : vector<64x16xf32> to vector<64x15xf32>
    %140 = tpu.concatenate %138, %139 in 1 : vector<64x1xf32>, vector<64x15xf32> -> vector<64x16xf32>
    %141 = vector.extract_strided_slice %137 {offsets = [0, 1], sizes = [64, 15], strides = [1, 1]} : vector<64x16xf32> to vector<64x15xf32>
    %cst_56 = arith.constant 0.000000e+00 : f32
    %142 = vector.broadcast %cst_56 : f32 to vector<64x1xf32>
    %143 = tpu.concatenate %141, %142 in 1 : vector<64x15xf32>, vector<64x1xf32> -> vector<64x16xf32>
    %144 = tpu.concatenate %140, %137, %143 in 0 : vector<64x16xf32>, vector<64x16xf32>, vector<64x16xf32> -> vector<192x16xf32>
    %145 = arith.truncf %144 : vector<192x16xf32> to vector<192x16xbf16>
    %c8 = arith.constant 8 : index
    %c0_57 = arith.constant 0 : index
    %c0_58 = arith.constant 0 : index
    %146 = vector.load %arg3[%c8, %c0_57, %c0_58] : memref<10x64x192xbf16, #tpu.memory_space<vmem>>, vector<1x64x192xbf16>
    %147 = vector.shape_cast %146 : vector<1x64x192xbf16> to vector<64x192xbf16>
    %cst_59 = arith.constant dense<0.000000e+00> : vector<64x16xf32>
    %148 = tpu.matmul %147, %145, %cst_59 {dimension_numbers = #tpu.dot_dimension_numbers<[1], [0], [0], [1], [0, 0, 1, 1], [], []>} : vector<64x192xbf16>, vector<192x16xbf16>, vector<64x16xf32> -> vector<64x16xf32>
    %cst_60 = arith.constant 2.000000e-01 : f32
    %149 = vector.broadcast %cst_60 : f32 to vector<64x16xf32>
    %150 = arith.mulf %149, %148 : vector<64x16xf32>
    %151 = arith.maximumf %148, %150 : vector<64x16xf32>
    %cst_61 = arith.constant 0.000000e+00 : f32
    %152 = vector.broadcast %cst_61 : f32 to vector<64x1xf32>
    %153 = vector.extract_strided_slice %151 {offsets = [0, 0], sizes = [64, 15], strides = [1, 1]} : vector<64x16xf32> to vector<64x15xf32>
    %154 = tpu.concatenate %152, %153 in 1 : vector<64x1xf32>, vector<64x15xf32> -> vector<64x16xf32>
    %155 = vector.extract_strided_slice %151 {offsets = [0, 1], sizes = [64, 15], strides = [1, 1]} : vector<64x16xf32> to vector<64x15xf32>
    %cst_62 = arith.constant 0.000000e+00 : f32
    %156 = vector.broadcast %cst_62 : f32 to vector<64x1xf32>
    %157 = tpu.concatenate %155, %156 in 1 : vector<64x15xf32>, vector<64x1xf32> -> vector<64x16xf32>
    %158 = tpu.concatenate %154, %151, %157 in 0 : vector<64x16xf32>, vector<64x16xf32>, vector<64x16xf32> -> vector<192x16xf32>
    %159 = arith.truncf %158 : vector<192x16xf32> to vector<192x16xbf16>
    %c9 = arith.constant 9 : index
    %c0_63 = arith.constant 0 : index
    %c0_64 = arith.constant 0 : index
    %160 = vector.load %arg3[%c9, %c0_63, %c0_64] : memref<10x64x192xbf16, #tpu.memory_space<vmem>>, vector<1x64x192xbf16>
    %161 = vector.shape_cast %160 : vector<1x64x192xbf16> to vector<64x192xbf16>
    %cst_65 = arith.constant dense<0.000000e+00> : vector<64x16xf32>
    %162 = tpu.matmul %161, %159, %cst_65 {dimension_numbers = #tpu.dot_dimension_numbers<[1], [0], [0], [1], [0, 0, 1, 1], [], []>} : vector<64x192xbf16>, vector<192x16xbf16>, vector<64x16xf32> -> vector<64x16xf32>
    %cst_66 = arith.constant 2.000000e-01 : f32
    %163 = vector.broadcast %cst_66 : f32 to vector<64x16xf32>
    %164 = arith.mulf %163, %162 : vector<64x16xf32>
    %165 = arith.maximumf %162, %164 : vector<64x16xf32>
    %cst_67 = arith.constant 0.000000e+00 : f32
    %166 = vector.broadcast %cst_67 : f32 to vector<64x1xf32>
    %167 = vector.extract_strided_slice %165 {offsets = [0, 0], sizes = [64, 15], strides = [1, 1]} : vector<64x16xf32> to vector<64x15xf32>
    %168 = tpu.concatenate %166, %167 in 1 : vector<64x1xf32>, vector<64x15xf32> -> vector<64x16xf32>
    %169 = vector.extract_strided_slice %165 {offsets = [0, 1], sizes = [64, 15], strides = [1, 1]} : vector<64x16xf32> to vector<64x15xf32>
    %cst_68 = arith.constant 0.000000e+00 : f32
    %170 = vector.broadcast %cst_68 : f32 to vector<64x1xf32>
    %171 = tpu.concatenate %169, %170 in 1 : vector<64x15xf32>, vector<64x1xf32> -> vector<64x16xf32>
    %172 = tpu.concatenate %168, %165, %171 in 0 : vector<64x16xf32>, vector<64x16xf32>, vector<64x16xf32> -> vector<192x16xf32>
    %173 = arith.truncf %172 : vector<192x16xf32> to vector<192x16xbf16>
    %c0_69 = arith.constant 0 : index
    %c0_70 = arith.constant 0 : index
    %174 = vector.load %arg4[%c0_69, %c0_70] : memref<128x192xbf16, #tpu.memory_space<vmem>>, vector<128x192xbf16>
    %cst_71 = arith.constant dense<0.000000e+00> : vector<128x16xf32>
    %175 = tpu.matmul %174, %173, %cst_71 {dimension_numbers = #tpu.dot_dimension_numbers<[1], [0], [0], [1], [0, 0, 1, 1], [], []>} : vector<128x192xbf16>, vector<192x16xbf16>, vector<128x16xf32> -> vector<128x16xf32>
    %cst_72 = arith.constant 2.000000e-01 : f32
    %176 = vector.broadcast %cst_72 : f32 to vector<128x16xf32>
    %177 = arith.mulf %176, %175 : vector<128x16xf32>
    %178 = arith.maximumf %175, %177 : vector<128x16xf32>
    %c0_73 = arith.constant 0 : index
    %c0_74 = arith.constant 0 : index
    %c0_75 = arith.constant 0 : index
    %179 = vector.load %arg7[%c0_73, %c0_74, %c0_75] : memref<1x128x16xf32, #tpu.memory_space<vmem>>, vector<1x128x16xf32>
    %180 = vector.shape_cast %179 : vector<1x128x16xf32> to vector<128x16xf32>
    %181 = vector.shape_cast %178 : vector<128x16xf32> to vector<1x128x16xf32>
    tpu.vector_store %arg7[%c0_73, %c0_74, %c0_75], %181 {strides = array<i32>} : memref<1x128x16xf32, #tpu.memory_space<vmem>>, vector<1x128x16xf32>,
    %182 = vector.extract_strided_slice %178 {offsets = [0, 0], sizes = [64, 16], strides = [1, 1]} : vector<128x16xf32> to vector<64x16xf32>
    %183 = vector.extract_strided_slice %178 {offsets = [64, 0], sizes = [64, 16], strides = [1, 1]} : vector<128x16xf32> to vector<64x16xf32>
    %c0_76 = arith.constant 0 : index
    %c0_77 = arith.constant 0 : index
    %184 = vector.load %arg5[%c0_76, %c0_77] : memref<8x192xbf16, #tpu.memory_space<vmem>>, vector<8x192xbf16>
    %cst_78 = arith.constant 0.000000e+00 : f32
    %185 = vector.broadcast %cst_78 : f32 to vector<64x1xf32>
    %186 = vector.extract_strided_slice %183 {offsets = [0, 0], sizes = [64, 15], strides = [1, 1]} : vector<64x16xf32> to vector<64x15xf32>
    %187 = tpu.concatenate %185, %186 in 1 : vector<64x1xf32>, vector<64x15xf32> -> vector<64x16xf32>
    %188 = tpu.concatenate %187, %182, %183 in 0 : vector<64x16xf32>, vector<64x16xf32>, vector<64x16xf32> -> vector<192x16xf32>
    %189 = arith.truncf %188 : vector<192x16xf32> to vector<192x16xbf16>
    %cst_79 = arith.constant dense<0.000000e+00> : vector<8x16xf32>
    %190 = tpu.matmul %184, %189, %cst_79 {dimension_numbers = #tpu.dot_dimension_numbers<[1], [0], [0], [1], [0, 0, 1, 1], [], []>} : vector<8x192xbf16>, vector<192x16xbf16>, vector<8x16xf32> -> vector<8x16xf32>
    %191 = vector.extract_strided_slice %190 {offsets = [0, 0], sizes = [1, 16], strides = [1, 1]} : vector<8x16xf32> to vector<1x16xf32>
    %192 = vector.extract_strided_slice %182 {offsets = [0, 1], sizes = [64, 15], strides = [1, 1]} : vector<64x16xf32> to vector<64x15xf32>
    %cst_80 = arith.constant 0.000000e+00 : f32
    %193 = vector.broadcast %cst_80 : f32 to vector<64x1xf32>
    %194 = tpu.concatenate %192, %193 in 1 : vector<64x15xf32>, vector<64x1xf32> -> vector<64x16xf32>
    %195 = tpu.concatenate %182, %183, %194 in 0 : vector<64x16xf32>, vector<64x16xf32>, vector<64x16xf32> -> vector<192x16xf32>
    %196 = arith.truncf %195 : vector<192x16xf32> to vector<192x16xbf16>
    %cst_81 = arith.constant dense<0.000000e+00> : vector<8x16xf32>
    %197 = tpu.matmul %184, %196, %cst_81 {dimension_numbers = #tpu.dot_dimension_numbers<[1], [0], [0], [1], [0, 0, 1, 1], [], []>} : vector<8x192xbf16>, vector<192x16xbf16>, vector<8x16xf32> -> vector<8x16xf32>
    %198 = vector.extract_strided_slice %197 {offsets = [0, 0], sizes = [1, 16], strides = [1, 1]} : vector<8x16xf32> to vector<1x16xf32>
    %c0_82 = arith.constant 0 : index
    %c0_83 = arith.constant 0 : index
    %199 = vector.load %arg6[%c0_82, %c0_83] : memref<1x4xf32, #tpu.memory_space<vmem>>, vector<1x4xf32>
    %200 = vector.extract_strided_slice %199 {offsets = [0, 1], sizes = [1, 1], strides = [1, 1]} : vector<1x4xf32> to vector<1x1xf32>
    %201 = vector.broadcast %200 : vector<1x1xf32> to vector<1x16xf32>
    %202 = arith.mulf %201, %1 : vector<1x16xf32>
    %203 = vector.extract_strided_slice %199 {offsets = [0, 3], sizes = [1, 1], strides = [1, 1]} : vector<1x4xf32> to vector<1x1xf32>
    %cst_84 = arith.constant 0.000000e+00 : f32
    %204 = vector.broadcast %cst_84 : f32 to vector<1x1xf32>
    %205 = vector.extract_strided_slice %1 {offsets = [0, 0], sizes = [1, 15], strides = [1, 1]} : vector<1x16xf32> to vector<1x15xf32>
    %206 = tpu.concatenate %204, %205 in 1 : vector<1x1xf32>, vector<1x15xf32> -> vector<1x16xf32>
    %207 = vector.broadcast %203 : vector<1x1xf32> to vector<1x16xf32>
    %208 = arith.mulf %207, %206 : vector<1x16xf32>
    %209 = arith.addf %202, %208 : vector<1x16xf32>
    %210 = vector.extract_strided_slice %199 {offsets = [0, 0], sizes = [1, 1], strides = [1, 1]} : vector<1x4xf32> to vector<1x1xf32>
    %211 = vector.extract_strided_slice %1 {offsets = [0, 1], sizes = [1, 15], strides = [1, 1]} : vector<1x16xf32> to vector<1x15xf32>
    %cst_85 = arith.constant 0.000000e+00 : f32
    %212 = vector.broadcast %cst_85 : f32 to vector<1x1xf32>
    %213 = tpu.concatenate %211, %212 in 1 : vector<1x15xf32>, vector<1x1xf32> -> vector<1x16xf32>
    %214 = vector.broadcast %210 : vector<1x1xf32> to vector<1x16xf32>
    %215 = arith.mulf %214, %213 : vector<1x16xf32>
    %216 = vector.extract_strided_slice %199 {offsets = [0, 2], sizes = [1, 1], strides = [1, 1]} : vector<1x4xf32> to vector<1x1xf32>
    %217 = vector.broadcast %216 : vector<1x1xf32> to vector<1x16xf32>
    %218 = arith.mulf %217, %1 : vector<1x16xf32>
    %219 = arith.addf %215, %218 : vector<1x16xf32>
    %220 = arith.addf %209, %191 : vector<1x16xf32>
    %c0_86 = arith.constant 0 : index
    %c0_87 = arith.constant 0 : index
    %c0_88 = arith.constant 0 : index
    %221 = vector.load %arg8[%c0_86, %c0_87, %c0_88] : memref<1x2x16xf32, #tpu.memory_space<vmem>>, vector<1x1x16xf32>
    %222 = vector.shape_cast %221 : vector<1x1x16xf32> to vector<1x16xf32>
    %223 = vector.shape_cast %220 : vector<1x16xf32> to vector<1x1x16xf32>
    tpu.vector_store %arg8[%c0_86, %c0_87, %c0_88], %223 {strides = array<i32>} : memref<1x2x16xf32, #tpu.memory_space<vmem>>, vector<1x1x16xf32>,
    %224 = arith.addf %219, %198 : vector<1x16xf32>
    %c0_89 = arith.constant 0 : index
    %c1_90 = arith.constant 1 : index
    %c0_91 = arith.constant 0 : index
    %225 = vector.load %arg8[%c0_89, %c1_90, %c0_91] : memref<1x2x16xf32, #tpu.memory_space<vmem>>, vector<1x1x16xf32>
    %226 = vector.shape_cast %225 : vector<1x1x16xf32> to vector<1x16xf32>
    %227 = vector.shape_cast %224 : vector<1x16xf32> to vector<1x1x16xf32>
    tpu.vector_store %arg8[%c0_89, %c1_90, %c0_91], %227 {strides = array<i32>} : memref<1x2x16xf32, #tpu.memory_space<vmem>>, vector<1x1x16xf32>,
    return
  }
  func.func @transform_0(%arg0: i32) -> (i32, i32, i32) {
    %c0_i32 = arith.constant 0 : i32
    %c0_i32_0 = arith.constant 0 : i32
    %c0_i32_1 = arith.constant 0 : i32
    return %arg0, %c0_i32, %c0_i32_0 : i32, i32, i32
  }
  func.func @transform_1(%arg0: i32) -> (i32, i32) {
    %c0_i32 = arith.constant 0 : i32
    %c0_i32_0 = arith.constant 0 : i32
    %c0_i32_1 = arith.constant 0 : i32
    return %c0_i32, %c0_i32_0 : i32, i32
  }
  func.func @transform_2(%arg0: i32) -> (i32, i32, i32) {
    %c0_i32 = arith.constant 0 : i32
    %c0_i32_0 = arith.constant 0 : i32
    %c0_i32_1 = arith.constant 0 : i32
    %c0_i32_2 = arith.constant 0 : i32
    return %c0_i32, %c0_i32_0, %c0_i32_1 : i32, i32, i32
  }
  func.func @transform_3(%arg0: i32) -> (i32, i32) {
    %c0_i32 = arith.constant 0 : i32
    %c0_i32_0 = arith.constant 0 : i32
    %c0_i32_1 = arith.constant 0 : i32
    return %c0_i32, %c0_i32_0 : i32, i32
  }
  func.func @transform_4(%arg0: i32) -> (i32, i32) {
    %c0_i32 = arith.constant 0 : i32
    %c0_i32_0 = arith.constant 0 : i32
    %c0_i32_1 = arith.constant 0 : i32
    return %c0_i32, %c0_i32_0 : i32, i32
  }
  func.func @transform_5(%arg0: i32) -> (i32, i32) {
    %c0_i32 = arith.constant 0 : i32
    %c0_i32_0 = arith.constant 0 : i32
    %c0_i32_1 = arith.constant 0 : i32
    return %c0_i32, %c0_i32_0 : i32, i32
  }
  func.func @transform_6(%arg0: i32) -> (i32, i32, i32) {
    %c0_i32 = arith.constant 0 : i32
    %c0_i32_0 = arith.constant 0 : i32
    %c0_i32_1 = arith.constant 0 : i32
    return %arg0, %c0_i32, %c0_i32_0 : i32, i32, i32
  }
  func.func @transform_7(%arg0: i32) -> (i32, i32, i32) {
    %c0_i32 = arith.constant 0 : i32
    %c0_i32_0 = arith.constant 0 : i32
    %c0_i32_1 = arith.constant 0 : i32
    return %arg0, %c0_i32, %c0_i32_0 : i32, i32, i32
  }
}

module attributes {stable_mosaic.version = 11 : i64} {
  func.func @_level_kernel(%arg0: i32, %arg1: memref<1x64x32xf32, #tpu.memory_space<vmem>>, %arg2: memref<1x1x32xf32, #tpu.memory_space<vmem>>, %arg3: memref<10x64x192xbf16, #tpu.memory_space<vmem>>, %arg4: memref<128x192xbf16, #tpu.memory_space<vmem>>, %arg5: memref<8x192xbf16, #tpu.memory_space<vmem>>, %arg6: memref<1x4xf32, #tpu.memory_space<vmem>>, %arg7: memref<1x128x32xf32, #tpu.memory_space<vmem>>, %arg8: memref<1x2x32xf32, #tpu.memory_space<vmem>>) attributes {dimension_semantics = [#tpu.dimension_semantics<parallel>], iteration_bounds = array<i64: 2>, scalar_prefetch = 0 : i64, scratch_operands = 0 : i64, tpu.core_type = #tpu.core_type<tc>, window_params = [{transform_indices = @transform_0, window_bounds = array<i64: 1, 64, 32>}, {transform_indices = @transform_1, window_bounds = array<i64: 1, 1, 32>}, {pipeline_mode = #tpu.pipeline_mode<synchronous>, transform_indices = @transform_2, window_bounds = array<i64: 10, 64, 192>}, {pipeline_mode = #tpu.pipeline_mode<synchronous>, transform_indices = @transform_3, window_bounds = array<i64: 128, 192>}, {pipeline_mode = #tpu.pipeline_mode<synchronous>, transform_indices = @transform_4, window_bounds = array<i64: 8, 192>}, {pipeline_mode = #tpu.pipeline_mode<synchronous>, transform_indices = @transform_5, window_bounds = array<i64: 1, 4>}, {transform_indices = @transform_6, window_bounds = array<i64: 1, 128, 32>}, {transform_indices = @transform_7, window_bounds = array<i64: 1, 2, 32>}]} {
    %c0 = arith.constant 0 : index
    %c0_0 = arith.constant 0 : index
    %c0_1 = arith.constant 0 : index
    %0 = vector.load %arg2[%c0, %c0_0, %c0_1] : memref<1x1x32xf32, #tpu.memory_space<vmem>>, vector<1x1x32xf32>
    %1 = vector.shape_cast %0 : vector<1x1x32xf32> to vector<1x32xf32>
    %c0_2 = arith.constant 0 : index
    %c0_3 = arith.constant 0 : index
    %c0_4 = arith.constant 0 : index
    %2 = vector.load %arg1[%c0_2, %c0_3, %c0_4] : memref<1x64x32xf32, #tpu.memory_space<vmem>>, vector<1x64x32xf32>
    %3 = vector.shape_cast %2 : vector<1x64x32xf32> to vector<64x32xf32>
    %cst = arith.constant 0.000000e+00 : f32
    %4 = vector.broadcast %cst : f32 to vector<64x1xf32>
    %5 = vector.extract_strided_slice %3 {offsets = [0, 0], sizes = [64, 31], strides = [1, 1]} : vector<64x32xf32> to vector<64x31xf32>
    %6 = tpu.concatenate %4, %5 in 1 : vector<64x1xf32>, vector<64x31xf32> -> vector<64x32xf32>
    %7 = vector.extract_strided_slice %3 {offsets = [0, 1], sizes = [64, 31], strides = [1, 1]} : vector<64x32xf32> to vector<64x31xf32>
    %cst_5 = arith.constant 0.000000e+00 : f32
    %8 = vector.broadcast %cst_5 : f32 to vector<64x1xf32>
    %9 = tpu.concatenate %7, %8 in 1 : vector<64x31xf32>, vector<64x1xf32> -> vector<64x32xf32>
    %10 = tpu.concatenate %6, %3, %9 in 0 : vector<64x32xf32>, vector<64x32xf32>, vector<64x32xf32> -> vector<192x32xf32>
    %11 = arith.truncf %10 : vector<192x32xf32> to vector<192x32xbf16>
    %c0_6 = arith.constant 0 : index
    %c0_7 = arith.constant 0 : index
    %c0_8 = arith.constant 0 : index
    %12 = vector.load %arg3[%c0_6, %c0_7, %c0_8] : memref<10x64x192xbf16, #tpu.memory_space<vmem>>, vector<1x64x192xbf16>
    %13 = vector.shape_cast %12 : vector<1x64x192xbf16> to vector<64x192xbf16>
    %cst_9 = arith.constant dense<0.000000e+00> : vector<64x32xf32>
    %14 = tpu.matmul %13, %11, %cst_9 {dimension_numbers = #tpu.dot_dimension_numbers<[1], [0], [0], [1], [0, 0, 1, 1], [], []>} : vector<64x192xbf16>, vector<192x32xbf16>, vector<64x32xf32> -> vector<64x32xf32>
    %cst_10 = arith.constant 2.000000e-01 : f32
    %15 = vector.broadcast %cst_10 : f32 to vector<64x32xf32>
    %16 = arith.mulf %15, %14 : vector<64x32xf32>
    %17 = arith.maximumf %14, %16 : vector<64x32xf32>
    %cst_11 = arith.constant 0.000000e+00 : f32
    %18 = vector.broadcast %cst_11 : f32 to vector<64x1xf32>
    %19 = vector.extract_strided_slice %17 {offsets = [0, 0], sizes = [64, 31], strides = [1, 1]} : vector<64x32xf32> to vector<64x31xf32>
    %20 = tpu.concatenate %18, %19 in 1 : vector<64x1xf32>, vector<64x31xf32> -> vector<64x32xf32>
    %21 = vector.extract_strided_slice %17 {offsets = [0, 1], sizes = [64, 31], strides = [1, 1]} : vector<64x32xf32> to vector<64x31xf32>
    %cst_12 = arith.constant 0.000000e+00 : f32
    %22 = vector.broadcast %cst_12 : f32 to vector<64x1xf32>
    %23 = tpu.concatenate %21, %22 in 1 : vector<64x31xf32>, vector<64x1xf32> -> vector<64x32xf32>
    %24 = tpu.concatenate %20, %17, %23 in 0 : vector<64x32xf32>, vector<64x32xf32>, vector<64x32xf32> -> vector<192x32xf32>
    %25 = arith.truncf %24 : vector<192x32xf32> to vector<192x32xbf16>
    %c1 = arith.constant 1 : index
    %c0_13 = arith.constant 0 : index
    %c0_14 = arith.constant 0 : index
    %26 = vector.load %arg3[%c1, %c0_13, %c0_14] : memref<10x64x192xbf16, #tpu.memory_space<vmem>>, vector<1x64x192xbf16>
    %27 = vector.shape_cast %26 : vector<1x64x192xbf16> to vector<64x192xbf16>
    %cst_15 = arith.constant dense<0.000000e+00> : vector<64x32xf32>
    %28 = tpu.matmul %27, %25, %cst_15 {dimension_numbers = #tpu.dot_dimension_numbers<[1], [0], [0], [1], [0, 0, 1, 1], [], []>} : vector<64x192xbf16>, vector<192x32xbf16>, vector<64x32xf32> -> vector<64x32xf32>
    %cst_16 = arith.constant 2.000000e-01 : f32
    %29 = vector.broadcast %cst_16 : f32 to vector<64x32xf32>
    %30 = arith.mulf %29, %28 : vector<64x32xf32>
    %31 = arith.maximumf %28, %30 : vector<64x32xf32>
    %cst_17 = arith.constant 0.000000e+00 : f32
    %32 = vector.broadcast %cst_17 : f32 to vector<64x1xf32>
    %33 = vector.extract_strided_slice %31 {offsets = [0, 0], sizes = [64, 31], strides = [1, 1]} : vector<64x32xf32> to vector<64x31xf32>
    %34 = tpu.concatenate %32, %33 in 1 : vector<64x1xf32>, vector<64x31xf32> -> vector<64x32xf32>
    %35 = vector.extract_strided_slice %31 {offsets = [0, 1], sizes = [64, 31], strides = [1, 1]} : vector<64x32xf32> to vector<64x31xf32>
    %cst_18 = arith.constant 0.000000e+00 : f32
    %36 = vector.broadcast %cst_18 : f32 to vector<64x1xf32>
    %37 = tpu.concatenate %35, %36 in 1 : vector<64x31xf32>, vector<64x1xf32> -> vector<64x32xf32>
    %38 = tpu.concatenate %34, %31, %37 in 0 : vector<64x32xf32>, vector<64x32xf32>, vector<64x32xf32> -> vector<192x32xf32>
    %39 = arith.truncf %38 : vector<192x32xf32> to vector<192x32xbf16>
    %c2 = arith.constant 2 : index
    %c0_19 = arith.constant 0 : index
    %c0_20 = arith.constant 0 : index
    %40 = vector.load %arg3[%c2, %c0_19, %c0_20] : memref<10x64x192xbf16, #tpu.memory_space<vmem>>, vector<1x64x192xbf16>
    %41 = vector.shape_cast %40 : vector<1x64x192xbf16> to vector<64x192xbf16>
    %cst_21 = arith.constant dense<0.000000e+00> : vector<64x32xf32>
    %42 = tpu.matmul %41, %39, %cst_21 {dimension_numbers = #tpu.dot_dimension_numbers<[1], [0], [0], [1], [0, 0, 1, 1], [], []>} : vector<64x192xbf16>, vector<192x32xbf16>, vector<64x32xf32> -> vector<64x32xf32>
    %cst_22 = arith.constant 2.000000e-01 : f32
    %43 = vector.broadcast %cst_22 : f32 to vector<64x32xf32>
    %44 = arith.mulf %43, %42 : vector<64x32xf32>
    %45 = arith.maximumf %42, %44 : vector<64x32xf32>
    %cst_23 = arith.constant 0.000000e+00 : f32
    %46 = vector.broadcast %cst_23 : f32 to vector<64x1xf32>
    %47 = vector.extract_strided_slice %45 {offsets = [0, 0], sizes = [64, 31], strides = [1, 1]} : vector<64x32xf32> to vector<64x31xf32>
    %48 = tpu.concatenate %46, %47 in 1 : vector<64x1xf32>, vector<64x31xf32> -> vector<64x32xf32>
    %49 = vector.extract_strided_slice %45 {offsets = [0, 1], sizes = [64, 31], strides = [1, 1]} : vector<64x32xf32> to vector<64x31xf32>
    %cst_24 = arith.constant 0.000000e+00 : f32
    %50 = vector.broadcast %cst_24 : f32 to vector<64x1xf32>
    %51 = tpu.concatenate %49, %50 in 1 : vector<64x31xf32>, vector<64x1xf32> -> vector<64x32xf32>
    %52 = tpu.concatenate %48, %45, %51 in 0 : vector<64x32xf32>, vector<64x32xf32>, vector<64x32xf32> -> vector<192x32xf32>
    %53 = arith.truncf %52 : vector<192x32xf32> to vector<192x32xbf16>
    %c3 = arith.constant 3 : index
    %c0_25 = arith.constant 0 : index
    %c0_26 = arith.constant 0 : index
    %54 = vector.load %arg3[%c3, %c0_25, %c0_26] : memref<10x64x192xbf16, #tpu.memory_space<vmem>>, vector<1x64x192xbf16>
    %55 = vector.shape_cast %54 : vector<1x64x192xbf16> to vector<64x192xbf16>
    %cst_27 = arith.constant dense<0.000000e+00> : vector<64x32xf32>
    %56 = tpu.matmul %55, %53, %cst_27 {dimension_numbers = #tpu.dot_dimension_numbers<[1], [0], [0], [1], [0, 0, 1, 1], [], []>} : vector<64x192xbf16>, vector<192x32xbf16>, vector<64x32xf32> -> vector<64x32xf32>
    %cst_28 = arith.constant 2.000000e-01 : f32
    %57 = vector.broadcast %cst_28 : f32 to vector<64x32xf32>
    %58 = arith.mulf %57, %56 : vector<64x32xf32>
    %59 = arith.maximumf %56, %58 : vector<64x32xf32>
    %cst_29 = arith.constant 0.000000e+00 : f32
    %60 = vector.broadcast %cst_29 : f32 to vector<64x1xf32>
    %61 = vector.extract_strided_slice %59 {offsets = [0, 0], sizes = [64, 31], strides = [1, 1]} : vector<64x32xf32> to vector<64x31xf32>
    %62 = tpu.concatenate %60, %61 in 1 : vector<64x1xf32>, vector<64x31xf32> -> vector<64x32xf32>
    %63 = vector.extract_strided_slice %59 {offsets = [0, 1], sizes = [64, 31], strides = [1, 1]} : vector<64x32xf32> to vector<64x31xf32>
    %cst_30 = arith.constant 0.000000e+00 : f32
    %64 = vector.broadcast %cst_30 : f32 to vector<64x1xf32>
    %65 = tpu.concatenate %63, %64 in 1 : vector<64x31xf32>, vector<64x1xf32> -> vector<64x32xf32>
    %66 = tpu.concatenate %62, %59, %65 in 0 : vector<64x32xf32>, vector<64x32xf32>, vector<64x32xf32> -> vector<192x32xf32>
    %67 = arith.truncf %66 : vector<192x32xf32> to vector<192x32xbf16>
    %c4 = arith.constant 4 : index
    %c0_31 = arith.constant 0 : index
    %c0_32 = arith.constant 0 : index
    %68 = vector.load %arg3[%c4, %c0_31, %c0_32] : memref<10x64x192xbf16, #tpu.memory_space<vmem>>, vector<1x64x192xbf16>
    %69 = vector.shape_cast %68 : vector<1x64x192xbf16> to vector<64x192xbf16>
    %cst_33 = arith.constant dense<0.000000e+00> : vector<64x32xf32>
    %70 = tpu.matmul %69, %67, %cst_33 {dimension_numbers = #tpu.dot_dimension_numbers<[1], [0], [0], [1], [0, 0, 1, 1], [], []>} : vector<64x192xbf16>, vector<192x32xbf16>, vector<64x32xf32> -> vector<64x32xf32>
    %cst_34 = arith.constant 2.000000e-01 : f32
    %71 = vector.broadcast %cst_34 : f32 to vector<64x32xf32>
    %72 = arith.mulf %71, %70 : vector<64x32xf32>
    %73 = arith.maximumf %70, %72 : vector<64x32xf32>
    %cst_35 = arith.constant 0.000000e+00 : f32
    %74 = vector.broadcast %cst_35 : f32 to vector<64x1xf32>
    %75 = vector.extract_strided_slice %73 {offsets = [0, 0], sizes = [64, 31], strides = [1, 1]} : vector<64x32xf32> to vector<64x31xf32>
    %76 = tpu.concatenate %74, %75 in 1 : vector<64x1xf32>, vector<64x31xf32> -> vector<64x32xf32>
    %77 = vector.extract_strided_slice %73 {offsets = [0, 1], sizes = [64, 31], strides = [1, 1]} : vector<64x32xf32> to vector<64x31xf32>
    %cst_36 = arith.constant 0.000000e+00 : f32
    %78 = vector.broadcast %cst_36 : f32 to vector<64x1xf32>
    %79 = tpu.concatenate %77, %78 in 1 : vector<64x31xf32>, vector<64x1xf32> -> vector<64x32xf32>
    %80 = tpu.concatenate %76, %73, %79 in 0 : vector<64x32xf32>, vector<64x32xf32>, vector<64x32xf32> -> vector<192x32xf32>
    %81 = arith.truncf %80 : vector<192x32xf32> to vector<192x32xbf16>
    %c5 = arith.constant 5 : index
    %c0_37 = arith.constant 0 : index
    %c0_38 = arith.constant 0 : index
    %82 = vector.load %arg3[%c5, %c0_37, %c0_38] : memref<10x64x192xbf16, #tpu.memory_space<vmem>>, vector<1x64x192xbf16>
    %83 = vector.shape_cast %82 : vector<1x64x192xbf16> to vector<64x192xbf16>
    %cst_39 = arith.constant dense<0.000000e+00> : vector<64x32xf32>
    %84 = tpu.matmul %83, %81, %cst_39 {dimension_numbers = #tpu.dot_dimension_numbers<[1], [0], [0], [1], [0, 0, 1, 1], [], []>} : vector<64x192xbf16>, vector<192x32xbf16>, vector<64x32xf32> -> vector<64x32xf32>
    %cst_40 = arith.constant 2.000000e-01 : f32
    %85 = vector.broadcast %cst_40 : f32 to vector<64x32xf32>
    %86 = arith.mulf %85, %84 : vector<64x32xf32>
    %87 = arith.maximumf %84, %86 : vector<64x32xf32>
    %cst_41 = arith.constant 0.000000e+00 : f32
    %88 = vector.broadcast %cst_41 : f32 to vector<64x1xf32>
    %89 = vector.extract_strided_slice %87 {offsets = [0, 0], sizes = [64, 31], strides = [1, 1]} : vector<64x32xf32> to vector<64x31xf32>
    %90 = tpu.concatenate %88, %89 in 1 : vector<64x1xf32>, vector<64x31xf32> -> vector<64x32xf32>
    %91 = vector.extract_strided_slice %87 {offsets = [0, 1], sizes = [64, 31], strides = [1, 1]} : vector<64x32xf32> to vector<64x31xf32>
    %cst_42 = arith.constant 0.000000e+00 : f32
    %92 = vector.broadcast %cst_42 : f32 to vector<64x1xf32>
    %93 = tpu.concatenate %91, %92 in 1 : vector<64x31xf32>, vector<64x1xf32> -> vector<64x32xf32>
    %94 = tpu.concatenate %90, %87, %93 in 0 : vector<64x32xf32>, vector<64x32xf32>, vector<64x32xf32> -> vector<192x32xf32>
    %95 = arith.truncf %94 : vector<192x32xf32> to vector<192x32xbf16>
    %c6 = arith.constant 6 : index
    %c0_43 = arith.constant 0 : index
    %c0_44 = arith.constant 0 : index
    %96 = vector.load %arg3[%c6, %c0_43, %c0_44] : memref<10x64x192xbf16, #tpu.memory_space<vmem>>, vector<1x64x192xbf16>
    %97 = vector.shape_cast %96 : vector<1x64x192xbf16> to vector<64x192xbf16>
    %cst_45 = arith.constant dense<0.000000e+00> : vector<64x32xf32>
    %98 = tpu.matmul %97, %95, %cst_45 {dimension_numbers = #tpu.dot_dimension_numbers<[1], [0], [0], [1], [0, 0, 1, 1], [], []>} : vector<64x192xbf16>, vector<192x32xbf16>, vector<64x32xf32> -> vector<64x32xf32>
    %cst_46 = arith.constant 2.000000e-01 : f32
    %99 = vector.broadcast %cst_46 : f32 to vector<64x32xf32>
    %100 = arith.mulf %99, %98 : vector<64x32xf32>
    %101 = arith.maximumf %98, %100 : vector<64x32xf32>
    %cst_47 = arith.constant 0.000000e+00 : f32
    %102 = vector.broadcast %cst_47 : f32 to vector<64x1xf32>
    %103 = vector.extract_strided_slice %101 {offsets = [0, 0], sizes = [64, 31], strides = [1, 1]} : vector<64x32xf32> to vector<64x31xf32>
    %104 = tpu.concatenate %102, %103 in 1 : vector<64x1xf32>, vector<64x31xf32> -> vector<64x32xf32>
    %105 = vector.extract_strided_slice %101 {offsets = [0, 1], sizes = [64, 31], strides = [1, 1]} : vector<64x32xf32> to vector<64x31xf32>
    %cst_48 = arith.constant 0.000000e+00 : f32
    %106 = vector.broadcast %cst_48 : f32 to vector<64x1xf32>
    %107 = tpu.concatenate %105, %106 in 1 : vector<64x31xf32>, vector<64x1xf32> -> vector<64x32xf32>
    %108 = tpu.concatenate %104, %101, %107 in 0 : vector<64x32xf32>, vector<64x32xf32>, vector<64x32xf32> -> vector<192x32xf32>
    %109 = arith.truncf %108 : vector<192x32xf32> to vector<192x32xbf16>
    %c7 = arith.constant 7 : index
    %c0_49 = arith.constant 0 : index
    %c0_50 = arith.constant 0 : index
    %110 = vector.load %arg3[%c7, %c0_49, %c0_50] : memref<10x64x192xbf16, #tpu.memory_space<vmem>>, vector<1x64x192xbf16>
    %111 = vector.shape_cast %110 : vector<1x64x192xbf16> to vector<64x192xbf16>
    %cst_51 = arith.constant dense<0.000000e+00> : vector<64x32xf32>
    %112 = tpu.matmul %111, %109, %cst_51 {dimension_numbers = #tpu.dot_dimension_numbers<[1], [0], [0], [1], [0, 0, 1, 1], [], []>} : vector<64x192xbf16>, vector<192x32xbf16>, vector<64x32xf32> -> vector<64x32xf32>
    %cst_52 = arith.constant 2.000000e-01 : f32
    %113 = vector.broadcast %cst_52 : f32 to vector<64x32xf32>
    %114 = arith.mulf %113, %112 : vector<64x32xf32>
    %115 = arith.maximumf %112, %114 : vector<64x32xf32>
    %cst_53 = arith.constant 0.000000e+00 : f32
    %116 = vector.broadcast %cst_53 : f32 to vector<64x1xf32>
    %117 = vector.extract_strided_slice %115 {offsets = [0, 0], sizes = [64, 31], strides = [1, 1]} : vector<64x32xf32> to vector<64x31xf32>
    %118 = tpu.concatenate %116, %117 in 1 : vector<64x1xf32>, vector<64x31xf32> -> vector<64x32xf32>
    %119 = vector.extract_strided_slice %115 {offsets = [0, 1], sizes = [64, 31], strides = [1, 1]} : vector<64x32xf32> to vector<64x31xf32>
    %cst_54 = arith.constant 0.000000e+00 : f32
    %120 = vector.broadcast %cst_54 : f32 to vector<64x1xf32>
    %121 = tpu.concatenate %119, %120 in 1 : vector<64x31xf32>, vector<64x1xf32> -> vector<64x32xf32>
    %122 = tpu.concatenate %118, %115, %121 in 0 : vector<64x32xf32>, vector<64x32xf32>, vector<64x32xf32> -> vector<192x32xf32>
    %123 = arith.truncf %122 : vector<192x32xf32> to vector<192x32xbf16>
    %c8 = arith.constant 8 : index
    %c0_55 = arith.constant 0 : index
    %c0_56 = arith.constant 0 : index
    %124 = vector.load %arg3[%c8, %c0_55, %c0_56] : memref<10x64x192xbf16, #tpu.memory_space<vmem>>, vector<1x64x192xbf16>
    %125 = vector.shape_cast %124 : vector<1x64x192xbf16> to vector<64x192xbf16>
    %cst_57 = arith.constant dense<0.000000e+00> : vector<64x32xf32>
    %126 = tpu.matmul %125, %123, %cst_57 {dimension_numbers = #tpu.dot_dimension_numbers<[1], [0], [0], [1], [0, 0, 1, 1], [], []>} : vector<64x192xbf16>, vector<192x32xbf16>, vector<64x32xf32> -> vector<64x32xf32>
    %cst_58 = arith.constant 2.000000e-01 : f32
    %127 = vector.broadcast %cst_58 : f32 to vector<64x32xf32>
    %128 = arith.mulf %127, %126 : vector<64x32xf32>
    %129 = arith.maximumf %126, %128 : vector<64x32xf32>
    %cst_59 = arith.constant 0.000000e+00 : f32
    %130 = vector.broadcast %cst_59 : f32 to vector<64x1xf32>
    %131 = vector.extract_strided_slice %129 {offsets = [0, 0], sizes = [64, 31], strides = [1, 1]} : vector<64x32xf32> to vector<64x31xf32>
    %132 = tpu.concatenate %130, %131 in 1 : vector<64x1xf32>, vector<64x31xf32> -> vector<64x32xf32>
    %133 = vector.extract_strided_slice %129 {offsets = [0, 1], sizes = [64, 31], strides = [1, 1]} : vector<64x32xf32> to vector<64x31xf32>
    %cst_60 = arith.constant 0.000000e+00 : f32
    %134 = vector.broadcast %cst_60 : f32 to vector<64x1xf32>
    %135 = tpu.concatenate %133, %134 in 1 : vector<64x31xf32>, vector<64x1xf32> -> vector<64x32xf32>
    %136 = tpu.concatenate %132, %129, %135 in 0 : vector<64x32xf32>, vector<64x32xf32>, vector<64x32xf32> -> vector<192x32xf32>
    %137 = arith.truncf %136 : vector<192x32xf32> to vector<192x32xbf16>
    %c9 = arith.constant 9 : index
    %c0_61 = arith.constant 0 : index
    %c0_62 = arith.constant 0 : index
    %138 = vector.load %arg3[%c9, %c0_61, %c0_62] : memref<10x64x192xbf16, #tpu.memory_space<vmem>>, vector<1x64x192xbf16>
    %139 = vector.shape_cast %138 : vector<1x64x192xbf16> to vector<64x192xbf16>
    %cst_63 = arith.constant dense<0.000000e+00> : vector<64x32xf32>
    %140 = tpu.matmul %139, %137, %cst_63 {dimension_numbers = #tpu.dot_dimension_numbers<[1], [0], [0], [1], [0, 0, 1, 1], [], []>} : vector<64x192xbf16>, vector<192x32xbf16>, vector<64x32xf32> -> vector<64x32xf32>
    %cst_64 = arith.constant 2.000000e-01 : f32
    %141 = vector.broadcast %cst_64 : f32 to vector<64x32xf32>
    %142 = arith.mulf %141, %140 : vector<64x32xf32>
    %143 = arith.maximumf %140, %142 : vector<64x32xf32>
    %cst_65 = arith.constant 0.000000e+00 : f32
    %144 = vector.broadcast %cst_65 : f32 to vector<64x1xf32>
    %145 = vector.extract_strided_slice %143 {offsets = [0, 0], sizes = [64, 31], strides = [1, 1]} : vector<64x32xf32> to vector<64x31xf32>
    %146 = tpu.concatenate %144, %145 in 1 : vector<64x1xf32>, vector<64x31xf32> -> vector<64x32xf32>
    %147 = vector.extract_strided_slice %143 {offsets = [0, 1], sizes = [64, 31], strides = [1, 1]} : vector<64x32xf32> to vector<64x31xf32>
    %cst_66 = arith.constant 0.000000e+00 : f32
    %148 = vector.broadcast %cst_66 : f32 to vector<64x1xf32>
    %149 = tpu.concatenate %147, %148 in 1 : vector<64x31xf32>, vector<64x1xf32> -> vector<64x32xf32>
    %150 = tpu.concatenate %146, %143, %149 in 0 : vector<64x32xf32>, vector<64x32xf32>, vector<64x32xf32> -> vector<192x32xf32>
    %151 = arith.truncf %150 : vector<192x32xf32> to vector<192x32xbf16>
    %c0_67 = arith.constant 0 : index
    %c0_68 = arith.constant 0 : index
    %152 = vector.load %arg4[%c0_67, %c0_68] : memref<128x192xbf16, #tpu.memory_space<vmem>>, vector<128x192xbf16>
    %cst_69 = arith.constant dense<0.000000e+00> : vector<128x32xf32>
    %153 = tpu.matmul %152, %151, %cst_69 {dimension_numbers = #tpu.dot_dimension_numbers<[1], [0], [0], [1], [0, 0, 1, 1], [], []>} : vector<128x192xbf16>, vector<192x32xbf16>, vector<128x32xf32> -> vector<128x32xf32>
    %cst_70 = arith.constant 2.000000e-01 : f32
    %154 = vector.broadcast %cst_70 : f32 to vector<128x32xf32>
    %155 = arith.mulf %154, %153 : vector<128x32xf32>
    %156 = arith.maximumf %153, %155 : vector<128x32xf32>
    %c0_71 = arith.constant 0 : index
    %c0_72 = arith.constant 0 : index
    %c0_73 = arith.constant 0 : index
    %157 = vector.load %arg7[%c0_71, %c0_72, %c0_73] : memref<1x128x32xf32, #tpu.memory_space<vmem>>, vector<1x128x32xf32>
    %158 = vector.shape_cast %157 : vector<1x128x32xf32> to vector<128x32xf32>
    %159 = vector.shape_cast %156 : vector<128x32xf32> to vector<1x128x32xf32>
    tpu.vector_store %arg7[%c0_71, %c0_72, %c0_73], %159 {strides = array<i32>} : memref<1x128x32xf32, #tpu.memory_space<vmem>>, vector<1x128x32xf32>,
    %160 = vector.extract_strided_slice %156 {offsets = [0, 0], sizes = [64, 32], strides = [1, 1]} : vector<128x32xf32> to vector<64x32xf32>
    %161 = vector.extract_strided_slice %156 {offsets = [64, 0], sizes = [64, 32], strides = [1, 1]} : vector<128x32xf32> to vector<64x32xf32>
    %c0_74 = arith.constant 0 : index
    %c0_75 = arith.constant 0 : index
    %162 = vector.load %arg5[%c0_74, %c0_75] : memref<8x192xbf16, #tpu.memory_space<vmem>>, vector<8x192xbf16>
    %cst_76 = arith.constant 0.000000e+00 : f32
    %163 = vector.broadcast %cst_76 : f32 to vector<64x1xf32>
    %164 = vector.extract_strided_slice %161 {offsets = [0, 0], sizes = [64, 31], strides = [1, 1]} : vector<64x32xf32> to vector<64x31xf32>
    %165 = tpu.concatenate %163, %164 in 1 : vector<64x1xf32>, vector<64x31xf32> -> vector<64x32xf32>
    %166 = tpu.concatenate %165, %160, %161 in 0 : vector<64x32xf32>, vector<64x32xf32>, vector<64x32xf32> -> vector<192x32xf32>
    %167 = arith.truncf %166 : vector<192x32xf32> to vector<192x32xbf16>
    %cst_77 = arith.constant dense<0.000000e+00> : vector<8x32xf32>
    %168 = tpu.matmul %162, %167, %cst_77 {dimension_numbers = #tpu.dot_dimension_numbers<[1], [0], [0], [1], [0, 0, 1, 1], [], []>} : vector<8x192xbf16>, vector<192x32xbf16>, vector<8x32xf32> -> vector<8x32xf32>
    %169 = vector.extract_strided_slice %168 {offsets = [0, 0], sizes = [1, 32], strides = [1, 1]} : vector<8x32xf32> to vector<1x32xf32>
    %170 = vector.extract_strided_slice %160 {offsets = [0, 1], sizes = [64, 31], strides = [1, 1]} : vector<64x32xf32> to vector<64x31xf32>
    %cst_78 = arith.constant 0.000000e+00 : f32
    %171 = vector.broadcast %cst_78 : f32 to vector<64x1xf32>
    %172 = tpu.concatenate %170, %171 in 1 : vector<64x31xf32>, vector<64x1xf32> -> vector<64x32xf32>
    %173 = tpu.concatenate %160, %161, %172 in 0 : vector<64x32xf32>, vector<64x32xf32>, vector<64x32xf32> -> vector<192x32xf32>
    %174 = arith.truncf %173 : vector<192x32xf32> to vector<192x32xbf16>
    %cst_79 = arith.constant dense<0.000000e+00> : vector<8x32xf32>
    %175 = tpu.matmul %162, %174, %cst_79 {dimension_numbers = #tpu.dot_dimension_numbers<[1], [0], [0], [1], [0, 0, 1, 1], [], []>} : vector<8x192xbf16>, vector<192x32xbf16>, vector<8x32xf32> -> vector<8x32xf32>
    %176 = vector.extract_strided_slice %175 {offsets = [0, 0], sizes = [1, 32], strides = [1, 1]} : vector<8x32xf32> to vector<1x32xf32>
    %c0_80 = arith.constant 0 : index
    %c0_81 = arith.constant 0 : index
    %177 = vector.load %arg6[%c0_80, %c0_81] : memref<1x4xf32, #tpu.memory_space<vmem>>, vector<1x4xf32>
    %178 = vector.extract_strided_slice %177 {offsets = [0, 1], sizes = [1, 1], strides = [1, 1]} : vector<1x4xf32> to vector<1x1xf32>
    %179 = vector.broadcast %178 : vector<1x1xf32> to vector<1x32xf32>
    %180 = arith.mulf %179, %1 : vector<1x32xf32>
    %181 = vector.extract_strided_slice %177 {offsets = [0, 3], sizes = [1, 1], strides = [1, 1]} : vector<1x4xf32> to vector<1x1xf32>
    %cst_82 = arith.constant 0.000000e+00 : f32
    %182 = vector.broadcast %cst_82 : f32 to vector<1x1xf32>
    %183 = vector.extract_strided_slice %1 {offsets = [0, 0], sizes = [1, 31], strides = [1, 1]} : vector<1x32xf32> to vector<1x31xf32>
    %184 = tpu.concatenate %182, %183 in 1 : vector<1x1xf32>, vector<1x31xf32> -> vector<1x32xf32>
    %185 = vector.broadcast %181 : vector<1x1xf32> to vector<1x32xf32>
    %186 = arith.mulf %185, %184 : vector<1x32xf32>
    %187 = arith.addf %180, %186 : vector<1x32xf32>
    %188 = vector.extract_strided_slice %177 {offsets = [0, 0], sizes = [1, 1], strides = [1, 1]} : vector<1x4xf32> to vector<1x1xf32>
    %189 = vector.extract_strided_slice %1 {offsets = [0, 1], sizes = [1, 31], strides = [1, 1]} : vector<1x32xf32> to vector<1x31xf32>
    %cst_83 = arith.constant 0.000000e+00 : f32
    %190 = vector.broadcast %cst_83 : f32 to vector<1x1xf32>
    %191 = tpu.concatenate %189, %190 in 1 : vector<1x31xf32>, vector<1x1xf32> -> vector<1x32xf32>
    %192 = vector.broadcast %188 : vector<1x1xf32> to vector<1x32xf32>
    %193 = arith.mulf %192, %191 : vector<1x32xf32>
    %194 = vector.extract_strided_slice %177 {offsets = [0, 2], sizes = [1, 1], strides = [1, 1]} : vector<1x4xf32> to vector<1x1xf32>
    %195 = vector.broadcast %194 : vector<1x1xf32> to vector<1x32xf32>
    %196 = arith.mulf %195, %1 : vector<1x32xf32>
    %197 = arith.addf %193, %196 : vector<1x32xf32>
    %198 = arith.addf %187, %169 : vector<1x32xf32>
    %c0_84 = arith.constant 0 : index
    %c0_85 = arith.constant 0 : index
    %c0_86 = arith.constant 0 : index
    %199 = vector.load %arg8[%c0_84, %c0_85, %c0_86] : memref<1x2x32xf32, #tpu.memory_space<vmem>>, vector<1x1x32xf32>
    %200 = vector.shape_cast %199 : vector<1x1x32xf32> to vector<1x32xf32>
    %201 = vector.shape_cast %198 : vector<1x32xf32> to vector<1x1x32xf32>
    tpu.vector_store %arg8[%c0_84, %c0_85, %c0_86], %201 {strides = array<i32>} : memref<1x2x32xf32, #tpu.memory_space<vmem>>, vector<1x1x32xf32>,
    %202 = arith.addf %197, %176 : vector<1x32xf32>
    %c0_87 = arith.constant 0 : index
    %c1_88 = arith.constant 1 : index
    %c0_89 = arith.constant 0 : index
    %203 = vector.load %arg8[%c0_87, %c1_88, %c0_89] : memref<1x2x32xf32, #tpu.memory_space<vmem>>, vector<1x1x32xf32>
    %204 = vector.shape_cast %203 : vector<1x1x32xf32> to vector<1x32xf32>
    %205 = vector.shape_cast %202 : vector<1x32xf32> to vector<1x1x32xf32>
    tpu.vector_store %arg8[%c0_87, %c1_88, %c0_89], %205 {strides = array<i32>} : memref<1x2x32xf32, #tpu.memory_space<vmem>>, vector<1x1x32xf32>,
    return
  }
  func.func @transform_0(%arg0: i32) -> (i32, i32, i32) {
    %c0_i32 = arith.constant 0 : i32
    %c0_i32_0 = arith.constant 0 : i32
    %c0_i32_1 = arith.constant 0 : i32
    return %arg0, %c0_i32, %c0_i32_0 : i32, i32, i32
  }
  func.func @transform_1(%arg0: i32) -> (i32, i32, i32) {
    %c0_i32 = arith.constant 0 : i32
    %c0_i32_0 = arith.constant 0 : i32
    %c0_i32_1 = arith.constant 0 : i32
    return %arg0, %c0_i32, %c0_i32_0 : i32, i32, i32
  }
  func.func @transform_2(%arg0: i32) -> (i32, i32, i32) {
    %c0_i32 = arith.constant 0 : i32
    %c0_i32_0 = arith.constant 0 : i32
    %c0_i32_1 = arith.constant 0 : i32
    %c0_i32_2 = arith.constant 0 : i32
    return %c0_i32, %c0_i32_0, %c0_i32_1 : i32, i32, i32
  }
  func.func @transform_3(%arg0: i32) -> (i32, i32) {
    %c0_i32 = arith.constant 0 : i32
    %c0_i32_0 = arith.constant 0 : i32
    %c0_i32_1 = arith.constant 0 : i32
    return %c0_i32, %c0_i32_0 : i32, i32
  }
  func.func @transform_4(%arg0: i32) -> (i32, i32) {
    %c0_i32 = arith.constant 0 : i32
    %c0_i32_0 = arith.constant 0 : i32
    %c0_i32_1 = arith.constant 0 : i32
    return %c0_i32, %c0_i32_0 : i32, i32
  }
  func.func @transform_5(%arg0: i32) -> (i32, i32) {
    %c0_i32 = arith.constant 0 : i32
    %c0_i32_0 = arith.constant 0 : i32
    %c0_i32_1 = arith.constant 0 : i32
    return %c0_i32, %c0_i32_0 : i32, i32
  }
  func.func @transform_6(%arg0: i32) -> (i32, i32, i32) {
    %c0_i32 = arith.constant 0 : i32
    %c0_i32_0 = arith.constant 0 : i32
    %c0_i32_1 = arith.constant 0 : i32
    return %arg0, %c0_i32, %c0_i32_0 : i32, i32, i32
  }
  func.func @transform_7(%arg0: i32) -> (i32, i32, i32) {
    %c0_i32 = arith.constant 0 : i32
    %c0_i32_0 = arith.constant 0 : i32
    %c0_i32_1 = arith.constant 0 : i32
    return %arg0, %c0_i32, %c0_i32_0 : i32, i32, i32
  }
}

</mosaic_0001>

<llo_original>
// kernel: lapsrn_forward_pallas.3
$region0: #{lapsrn_forward_pallas.3}
  #allocation0 [shape = 'u32[]', space=smem, size = 0x4, offset = 0x4, fixed_abs, tag = 'smem constant byte address 0x4 - core index']
  #allocation1 [shape = 'u32[144,128]{1,0:T(1,128)}', space=vmem, size = 0x12000, scoped, tag = 'internal scratch']
  %s0 = inlined_call_operand.vmem [shape: f32[2,64,32], index: 0, kind: input, shape index: {}]
  %s1 = inlined_call_operand.vmem [shape: f32[2,1,32], index: 1, kind: input, shape index: {}]
  %s2 = inlined_call_operand.vmem [shape: bf16[10,64,192], index: 2, kind: input, shape index: {}]
  %s3 = inlined_call_operand.vmem [shape: bf16[128,192], index: 3, kind: input, shape index: {}]
  %s4 = inlined_call_operand.vmem [shape: bf16[8,192], index: 4, kind: input, shape index: {}]
  %s5 = inlined_call_operand.vmem [shape: f32[1,4], index: 5, kind: input, shape index: {}]
  %s6 = inlined_call_operand.hbm [shape: f32[2,128,32], index: 6, kind: output, shape index: {0}]
  %s7 = inlined_call_operand.vmem [shape: f32[2,2,32], index: 7, kind: output, shape index: {1}]
  %8 = xla_tuple %s6, %s7
  %s9 = sld [smem:[#allocation0]]
  $region65: #{lapsrn_forward_pallas.3} parent=0
    _
  %s11 = ssub.s32 1, %s9
  %s12 = scalar_select 0, %s11, %s9
  $region1: #{lapsrn_forward_pallas.3} parent=0
    #allocation2 [shape = 'u8[131072]{0}', space=vmem, size = 0x20000, scoped, tag = 'output window, operand 0']
    #allocation3 [shape = 's32[2]{0}', space=sflag, size = 0x8, scoped, tag = 'scoped memory for lapsrn_forward_pallas.3']
    %13 = vsyncpa [#allocation3], 0
    %s14 = scalar_lea.sflag [#allocation3], 1
    %15 = vsyncpa %s14, 0
    loop: start=0, step=1, limit=4
    $region2: #{lapsrn_forward_pallas.3} parent=1 // loop_pre_header
      _
    $region3: #{lapsrn_forward_pallas.3} parent=1 // loop_header
      %s17 = sphi 0, %s21
      %p18 = scmp.ge.s32.totalorder %s17, 4
      %s27 = sphi 0, %s29
      %s30 = sphi 0, %s27
      %s31 = sphi 0, %s30
      %s47 = sphi 0, %s31
      %s53 = sphi 0, %s55
      %s56 = sphi 0, %s53
      %s57 = sphi 0, %s56
      %s73 = sphi 0, %s57
      %s77 = sphi 0, %s77
      %s79 = sphi 0, %s77
      %s80 = sphi 0, %s79
      %s94 = sphi 0, %s80
      %s98 = sphi 0, %s98
      %s100 = sphi 0, %s98
      %s101 = sphi 0, %s100
      %s115 = sphi 0, %s101
      %s119 = sphi 0, %s119
      %s121 = sphi 0, %s119
      %s122 = sphi 0, %s121
      %s136 = sphi 0, %s122
      %s140 = sphi 0, %s140
      %s142 = sphi 0, %s140
      %s143 = sphi 0, %s142
      %s157 = sphi 0, %s143
      %s163 = sphi 0, %s165
      %s166 = sphi 0, %s163
      %s167 = sphi 0, %s166
      %s183 = sphi 0, %s167
      %s189 = sphi 0, %s191
      %s192 = sphi 0, %s189
      %s193 = sphi 0, %s192
      %s209 = sphi 0, %s193
    $region4: #{lapsrn_forward_pallas.3} parent=1 // loop_header_branch
      %20 = sbr.rel (%p18) target = $region8
    $region5: #{lapsrn_forward_pallas.3} parent=1 // loop_body
      %s22 = ssub.s32 %s17, 1
      %s23 = ssub.s32 %s17, 2
      %s24 = sadd.s32 %s17, 1
      %s25 = ssub.s32 %s17, %s24
      %p26 = scmp.eq.s32.totalorder %s25, 0
      %s28 = sadd.s32 %s27, 1
      %s29 = scalar_select %p26, %s27, %s28
      %p32 = pneg %p26
      %p33 = scmp.eq.s32.totalorder %s17, 1
      %p34 = por %p32, %p33
      %p35 = scmp.ne.s32.totalorder %s27, %s30
      %p36 = scmp.eq.s32.totalorder %s17, 0
      %p37 = por %p35, %p36
      %p38 = scmp.ne.s32.totalorder %s27, %s30
      %p39 = scmp.eq.s32.totalorder %s22, 1
      %p40 = por %p38, %p39
      %p41 = scmp.ne.s32.totalorder %s30, %s31
      %p42 = scmp.eq.s32.totalorder %s22, 0
      %p43 = por %p41, %p42
      %p44 = scmp.ne.s32.totalorder %s30, %s31
      %p45 = scmp.eq.s32.totalorder %s23, 1
      %p46 = por %p44, %p45
      %p48 = scmp.ne.s32.totalorder %s31, %s47
      %p49 = scmp.eq.s32.totalorder %s23, 0
      %p50 = por %p48, %p49
      %s51 = ssub.s32 %s17, %s24
      %p52 = scmp.eq.s32.totalorder %s51, 0
      %s54 = sadd.s32 %s53, 1
      %s55 = scalar_select %p52, %s53, %s54
      %p58 = pneg %p52
      %p59 = scmp.eq.s32.totalorder %s17, 1
      %p60 = por %p58, %p59
      %p61 = scmp.ne.s32.totalorder %s53, %s56
      %p62 = scmp.eq.s32.totalorder %s17, 0
      %p63 = por %p61, %p62
      %p64 = scmp.ne.s32.totalorder %s53, %s56
      %p65 = scmp.eq.s32.totalorder %s22, 1
      %p66 = por %p64, %p65
      %p67 = scmp.ne.s32.totalorder %s56, %s57
      %p68 = scmp.eq.s32.totalorder %s22, 0
      %p69 = por %p67, %p68
      %p70 = scmp.ne.s32.totalorder %s56, %s57
      %p71 = scmp.eq.s32.totalorder %s23, 1
      %p72 = por %p70, %p71
      %p74 = scmp.ne.s32.totalorder %s57, %s73
      %p75 = scmp.eq.s32.totalorder %s23, 0
      %p76 = por %p74, %p75
      %s78 = sadd.s32 %s77, 1
      %p81 = scmp.eq.s32.totalorder %s17, 1
      %p82 = scmp.ne.s32.totalorder %s77, %s79
      %p83 = scmp.eq.s32.totalorder %s17, 0
      %p84 = por %p82, %p83
      %p85 = scmp.ne.s32.totalorder %s77, %s79
      %p86 = scmp.eq.s32.totalorder %s22, 1
      %p87 = por %p85, %p86
      %p88 = scmp.ne.s32.totalorder %s79, %s80
      %p89 = scmp.eq.s32.totalorder %s22, 0
      %p90 = por %p88, %p89
      %p91 = scmp.ne.s32.totalorder %s79, %s80
      %p92 = scmp.eq.s32.totalorder %s23, 1
      %p93 = por %p91, %p92
      %p95 = scmp.ne.s32.totalorder %s80, %s94
      %p96 = scmp.eq.s32.totalorder %s23, 0
      %p97 = por %p95, %p96
      %s99 = sadd.s32 %s98, 1
      %p102 = scmp.eq.s32.totalorder %s17, 1
      %p103 = scmp.ne.s32.totalorder %s98, %s100
      %p104 = scmp.eq.s32.totalorder %s17, 0
      %p105 = por %p103, %p104
      %p106 = scmp.ne.s32.totalorder %s98, %s100
      %p107 = scmp.eq.s32.totalorder %s22, 1
      %p108 = por %p106, %p107
      %p109 = scmp.ne.s32.totalorder %s100, %s101
      %p110 = scmp.eq.s32.totalorder %s22, 0
      %p111 = por %p109, %p110
      %p112 = scmp.ne.s32.totalorder %s100, %s101
      %p113 = scmp.eq.s32.totalorder %s23, 1
      %p114 = por %p112, %p113
      %p116 = scmp.ne.s32.totalorder %s101, %s115
      %p117 = scmp.eq.s32.totalorder %s23, 0
      %p118 = por %p116, %p117
      %s120 = sadd.s32 %s119, 1
      %p123 = scmp.eq.s32.totalorder %s17, 1
      %p124 = scmp.ne.s32.totalorder %s119, %s121
      %p125 = scmp.eq.s32.totalorder %s17, 0
      %p126 = por %p124, %p125
      %p127 = scmp.ne.s32.totalorder %s119, %s121
      %p128 = scmp.eq.s32.totalorder %s22, 1
      %p129 = por %p127, %p128
      %p130 = scmp.ne.s32.totalorder %s121, %s122
      %p131 = scmp.eq.s32.totalorder %s22, 0
      %p132 = por %p130, %p131
      %p133 = scmp.ne.s32.totalorder %s121, %s122
      %p134 = scmp.eq.s32.totalorder %s23, 1
      %p135 = por %p133, %p134
      %p137 = scmp.ne.s32.totalorder %s122, %s136
      %p138 = scmp.eq.s32.totalorder %s23, 0
      %p139 = por %p137, %p138
      %s141 = sadd.s32 %s140, 1
      %p144 = scmp.eq.s32.totalorder %s17, 1
      %p145 = scmp.ne.s32.totalorder %s140, %s142
      %p146 = scmp.eq.s32.totalorder %s17, 0
      %p147 = por %p145, %p146
      %p148 = scmp.ne.s32.totalorder %s140, %s142
      %p149 = scmp.eq.s32.totalorder %s22, 1
      %p150 = por %p148, %p149
      %p151 = scmp.ne.s32.totalorder %s142, %s143
      %p152 = scmp.eq.s32.totalorder %s22, 0
      %p153 = por %p151, %p152
      %p154 = scmp.ne.s32.totalorder %s142, %s143
      %p155 = scmp.eq.s32.totalorder %s23, 1
      %p156 = por %p154, %p155
      %p158 = scmp.ne.s32.totalorder %s143, %s157
      %p159 = scmp.eq.s32.totalorder %s23, 0
      %p160 = por %p158, %p159
      %s161 = ssub.s32 %s17, %s24
      %p162 = scmp.eq.s32.totalorder %s161, 0
      %s164 = sadd.s32 %s163, 1
      %s165 = scalar_select %p162, %s163, %s164
      %p168 = pneg %p162
      %p169 = scmp.eq.s32.totalorder %s17, 1
      %p170 = por %p168, %p169
      %p171 = scmp.ne.s32.totalorder %s163, %s166
      %p172 = scmp.eq.s32.totalorder %s17, 0
      %p173 = por %p171, %p172
      %p174 = scmp.ne.s32.totalorder %s163, %s166
      %p175 = scmp.eq.s32.totalorder %s22, 1
      %p176 = por %p174, %p175
      %p177 = scmp.ne.s32.totalorder %s166, %s167
      %p178 = scmp.eq.s32.totalorder %s22, 0
      %p179 = por %p177, %p178
      %p180 = scmp.ne.s32.totalorder %s166, %s167
      %p181 = scmp.eq.s32.totalorder %s23, 1
      %p182 = por %p180, %p181
      %p184 = scmp.ne.s32.totalorder %s167, %s183
      %p185 = scmp.eq.s32.totalorder %s23, 0
      %p186 = por %p184, %p185
      %s187 = ssub.s32 %s17, %s24
      %p188 = scmp.eq.s32.totalorder %s187, 0
      %s190 = sadd.s32 %s189, 1
      %s191 = scalar_select %p188, %s189, %s190
      %p194 = pneg %p188
      %p195 = scmp.eq.s32.totalorder %s17, 1
      %p196 = por %p194, %p195
      %p197 = scmp.ne.s32.totalorder %s189, %s192
      %p198 = scmp.eq.s32.totalorder %s17, 0
      %p199 = por %p197, %p198
      %p200 = scmp.ne.s32.totalorder %s189, %s192
      %p201 = scmp.eq.s32.totalorder %s22, 1
      %p202 = por %p200, %p201
      %p203 = scmp.ne.s32.totalorder %s192, %s193
      %p204 = scmp.eq.s32.totalorder %s22, 0
      %p205 = por %p203, %p204
      %p206 = scmp.ne.s32.totalorder %s192, %s193
      %p207 = scmp.eq.s32.totalorder %s23, 1
      %p208 = por %p206, %p207
      %p210 = scmp.ne.s32.totalorder %s193, %s209
      %p211 = scmp.eq.s32.totalorder %s23, 0
      %p212 = por %p210, %p211
      %p213 = scmp.le.s32.totalorder 1, %s17
      %p214 = scmp.lt.s32.totalorder %s17, 3
      %p215 = pnand %p213, %p214
      %p216 = pneg %p215
      // Predicated region
      $region9: #{lapsrn_forward_pallas.3} parent=5 // pred_check
        _
      $region10: #{lapsrn_forward_pallas.3} parent=5 // pred_check_branch
        %218 = sbr.rel (%p215) target = $region12
      $region11: #{lapsrn_forward_pallas.3} parent=5 // pred_region
        %s219 = ssub.s32 %s17, 1
        // Predicated region
        $region13: #{lapsrn_forward_pallas.3} parent=11 // pred_check
          %p220 = pneg %p90
        $region14: #{lapsrn_forward_pallas.3} parent=11 // pred_check_branch
          %222 = sbr.rel (%p220) target = $region16
        $region15: #{lapsrn_forward_pallas.3} parent=11 // pred_region
          _
        $region16: #{lapsrn_forward_pallas.3} parent=11 // pred_fallthru
          _
        // Predicated region
        $region17: #{lapsrn_forward_pallas.3} parent=11 // pred_check
          %p223 = pneg %p111
        $region18: #{lapsrn_forward_pallas.3} parent=11 // pred_check_branch
          %225 = sbr.rel (%p223) target = $region20
        $region19: #{lapsrn_forward_pallas.3} parent=11 // pred_region
          _
        $region20: #{lapsrn_forward_pallas.3} parent=11 // pred_fallthru
          _
        // Predicated region
        $region21: #{lapsrn_forward_pallas.3} parent=11 // pred_check
          %p226 = pneg %p132
        $region22: #{lapsrn_forward_pallas.3} parent=11 // pred_check_branch
          %228 = sbr.rel (%p226) target = $region24
        $region23: #{lapsrn_forward_pallas.3} parent=11 // pred_region
          _
        $region24: #{lapsrn_forward_pallas.3} parent=11 // pred_fallthru
          _
        // Predicated region
        $region25: #{lapsrn_forward_pallas.3} parent=11 // pred_check
          %p229 = pneg %p153
        $region26: #{lapsrn_forward_pallas.3} parent=11 // pred_check_branch
          %231 = sbr.rel (%p229) target = $region28
        $region27: #{lapsrn_forward_pallas.3} parent=11 // pred_region
          _
        $region28: #{lapsrn_forward_pallas.3} parent=11 // pred_fallthru
          _
      $region12: #{lapsrn_forward_pallas.3} parent=5 // pred_fallthru
        _
      %p232 = scmp.lt.s32.totalorder %s17, 2
      // Predicated region
      $region29: #{lapsrn_forward_pallas.3} parent=5 // pred_check
        %p233 = pneg %p232
      $region30: #{lapsrn_forward_pallas.3} parent=5 // pred_check_branch
        %235 = sbr.rel (%p233) target = $region32
      $region31: #{lapsrn_forward_pallas.3} parent=5 // pred_region
        // Predicated region
        $region33: #{lapsrn_forward_pallas.3} parent=31 // pred_check
          %p236 = pneg %p37
        $region34: #{lapsrn_forward_pallas.3} parent=31 // pred_check_branch
          %238 = sbr.rel (%p236) target = $region36
        $region35: #{lapsrn_forward_pallas.3} parent=31 // pred_region
          %p239 = scmp.lt.s32.totalorder %s17, 1
          %s240 = scalar_select %p239, %s17, 1
          %s241 = smul.addr %s240, 8
          %s242 = smul.addr %s241, 8
          %s243 = scalar_lea.vmem %s0, %s242
        $region36: #{lapsrn_forward_pallas.3} parent=31 // pred_fallthru
          _
        // Predicated region
        $region37: #{lapsrn_forward_pallas.3} parent=31 // pred_check
          %p244 = pneg %p63
        $region38: #{lapsrn_forward_pallas.3} parent=31 // pred_check_branch
          %246 = sbr.rel (%p244) target = $region40
        $region39: #{lapsrn_forward_pallas.3} parent=31 // pred_region
          %p247 = scmp.lt.s32.totalorder %s17, 1
          %s248 = scalar_select %p247, %s17, 1
          %s249 = scalar_lea.vmem %s1, %s248
        $region40: #{lapsrn_forward_pallas.3} parent=31 // pred_fallthru
          _
      $region32: #{lapsrn_forward_pallas.3} parent=5 // pred_fallthru
        _
      %p250 = scmp.le.s32.totalorder 1, %s17
      %p251 = scmp.lt.s32.totalorder %s17, 3
      %p252 = pnand %p250, %p251
      %p253 = pneg %p252
      // Predicated region
      $region41: #{lapsrn_forward_pallas.3} parent=5 // pred_check
        _
      $region42: #{lapsrn_forward_pallas.3} parent=5 // pred_check_branch
        %255 = sbr.rel (%p252) target = $region44
      $region43: #{lapsrn_forward_pallas.3} parent=5 // pred_region
        %s256 = ssub.s32 %s17, 1
        %p257 = scmp.lt.s32.totalorder %s22, 1
        %s258 = scalar_select %p257, %s22, 1
        %s259 = smul.addr %s258, 8
        %s260 = smul.addr %s259, 8
        %s261 = scalar_lea.vmem %s0, %s260
        %p262 = pneg %p43
        %p263 = pneg %p40
        %p264 = scmp.lt.s32.totalorder %s22, 1
        %s265 = scalar_select %p264, %s22, 1
        %s266 = scalar_lea.vmem %s1, %s265
        %p267 = pneg %p69
        %p268 = pneg %p66
        %p269 = pneg %p90
        %p270 = pneg %p87
        %p271 = pneg %p111
        %p272 = pneg %p108
        %p273 = pneg %p132
        %p274 = pneg %p129
        %p275 = pneg %p153
        %p276 = pneg %p150
        %p277 = pneg %p179
        %p278 = pneg %p176
        %s279 = sand.u32 %s166, 1
        %s280 = scalar_lea.sflag [#allocation3], %s279
        %s281 = sand.u32 %s166, 1
        %s282 = smul.addr %s281, 128
        %s283 = scalar_lea.vmem [#allocation2], %s282
        %p284 = pneg %p205
        %p285 = pneg %p202
        %p286 = scmp.lt.s32.totalorder %s22, 1
        %s287 = scalar_select %p286, %s22, 1
        %s288 = smul.addr %s287, 2
        %s289 = scalar_lea.vmem %s7, %s288
        %p290 = scmp.lt.s32.totalorder %s22, 1
        %s291 = scalar_select %p290, %s22, 1
        %s292 = smul.addr %s291, 8
        %s293 = smul.addr %s292, 8
        %s294 = scalar_lea.vmem %s0, %s293
        %p295 = scmp.lt.s32.totalorder %s22, 1
        %s296 = scalar_select %p295, %s22, 1
        %s297 = scalar_lea.vmem %s1, %s296
        %p298 = scmp.lt.s32.totalorder %s22, 1
        %s299 = scalar_select %p298, %s22, 1
        %s300 = smul.addr %s299, 2
        %s301 = scalar_lea.vmem %s7, %s300
        %v303 = vld [vmem:[%s297] sm:$0x1]
        %v304 = vld [vmem:[%s294] sm:$0xff]
        %v305 = vld [vmem:[%s294 + $0x8] sm:$0xff]
        %v306 = vld [vmem:[%s294 + $0x10] sm:$0xff]
        %v307 = vld [vmem:[%s294 + $0x18] sm:$0xff]
        %v308 = vld [vmem:[%s294 + $0x20] sm:$0xff]
        %v309 = vld [vmem:[%s294 + $0x28] sm:$0xff]
        %v310 = vld [vmem:[%s294 + $0x30] sm:$0xff]
        %v311 = vld [vmem:[%s294 + $0x38] sm:$0xff]
        %320 = vrot.lane.b32.xlu0 %v304, 1
        %v321 = vpop.permute.xlu0 %320
        %322 = vrot.lane.b32.xlu0 %v305, 1
        %v323 = vpop.permute.xlu0 %322
        %324 = vrot.lane.b32.xlu0 %v306, 1
        %v325 = vpop.permute.xlu0 %324
        %326 = vrot.lane.b32.xlu0 %v307, 1
        %v327 = vpop.permute.xlu0 %326
        %328 = vrot.lane.b32.xlu0 %v308, 1
        %v329 = vpop.permute.xlu0 %328
        %330 = vrot.lane.b32.xlu0 %v309, 1
        %v331 = vpop.permute.xlu0 %330
        %332 = vrot.lane.b32.xlu0 %v310, 1
        %v333 = vpop.permute.xlu0 %332
        %334 = vrot.lane.b32.xlu0 %v311, 1
        %v335 = vpop.permute.xlu0 %334
        %vm344 = vcmask 7168
        %v345 = vsel %vm344, 0.0, %v321
        %v346 = vsel %vm344, 0.0, %v323
        %v347 = vsel %vm344, 0.0, %v325
        %v348 = vsel %vm344, 0.0, %v327
        %v349 = vsel %vm344, 0.0, %v329
        %v350 = vsel %vm344, 0.0, %v331
        %v351 = vsel %vm344, 0.0, %v333
        %v352 = vsel %vm344, 0.0, %v335
        %353 = vrot.lane.b32.xlu0 %v304, 127
        %v354 = vpop.permute.xlu0 %353
        %355 = vrot.lane.b32.xlu0 %v305, 127
        %v356 = vpop.permute.xlu0 %355
        %357 = vrot.lane.b32.xlu0 %v306, 127
        %v358 = vpop.permute.xlu0 %357
        %359 = vrot.lane.b32.xlu0 %v307, 127
        %v360 = vpop.permute.xlu0 %359
        %361 = vrot.lane.b32.xlu0 %v308, 127
        %v362 = vpop.permute.xlu0 %361
        %363 = vrot.lane.b32.xlu0 %v309, 127
        %v364 = vpop.permute.xlu0 %363
        %365 = vrot.lane.b32.xlu0 %v310, 127
        %v366 = vpop.permute.xlu0 %365
        %367 = vrot.lane.b32.xlu0 %v311, 127
        %v368 = vpop.permute.xlu0 %367
        %vm377 = vcmask 252928
        %v378 = vsel %vm377, %v354, 0.0
        %v379 = vsel %vm377, %v356, 0.0
        %v380 = vsel %vm377, %v358, 0.0
        %v381 = vsel %vm377, %v360, 0.0
        %v382 = vsel %vm377, %v362, 0.0
        %v383 = vsel %vm377, %v364, 0.0
        %v384 = vsel %vm377, %v366, 0.0
        %v385 = vsel %vm377, %v368, 0.0
        %v386 = vpack.c.bf16 %v346, %v345
        %v387 = vpack.c.bf16 %v348, %v347
        %v388 = vpack.c.bf16 %v350, %v349
        %v389 = vpack.c.bf16 %v352, %v351
        %v390 = vpack.c.bf16 %v305, %v304
        %v391 = vpack.c.bf16 %v307, %v306
        %v392 = vpack.c.bf16 %v309, %v308
        %v393 = vpack.c.bf16 %v311, %v310
        %v394 = vpack.c.bf16 %v379, %v378
        %v395 = vpack.c.bf16 %v381, %v380
        %v396 = vpack.c.bf16 %v383, %v382
        %v397 = vpack.c.bf16 %v385, %v384
        %v398 = vld [vmem:[%s2] sm:$0xff]
        %v399 = vld [vmem:[%s2 + $0x8] sm:$0xff]
        %v400 = vld [vmem:[%s2 + $0x10] sm:$0xff]
        %v401 = vld [vmem:[%s2 + $0x18] sm:$0xff]
        %v402 = vld [vmem:[%s2 + $0x20] sm:$0xff]
        %v403 = vld [vmem:[%s2 + $0x28] sm:$0xff]
        %v404 = vld [vmem:[%s2 + $0x30] sm:$0xff]
        %v405 = vld [vmem:[%s2 + $0x38] sm:$0xff]
        %v414 = vunpack.c.l.b16 %v398
        %v415 = vunpack.c.h.b16 %v398
        %v416 = vunpack.c.l.b16 %v399
        %v417 = vunpack.c.h.b16 %v399
        %v418 = vunpack.c.l.b16 %v400
        %v419 = vunpack.c.h.b16 %v400
        %v420 = vunpack.c.l.b16 %v401
        %v421 = vunpack.c.h.b16 %v401
        %v422 = vunpack.c.l.b16 %v402
        %v423 = vunpack.c.h.b16 %v402
        %v424 = vunpack.c.l.b16 %v403
        %v425 = vunpack.c.h.b16 %v403
        %v426 = vunpack.c.l.b16 %v404
        %v427 = vunpack.c.h.b16 %v404
        %v428 = vunpack.c.l.b16 %v405
        %v429 = vunpack.c.h.b16 %v405
        %v430 = vpack.c.b16 %v416, %v414
        %v431 = vpack.c.b16 %v417, %v415
        %v432 = vpack.c.b16 %v420, %v418
        %v433 = vpack.c.b16 %v421, %v419
        %v434 = vpack.c.b16 %v424, %v422
        %v435 = vpack.c.b16 %v425, %v423
        %v436 = vpack.c.b16 %v428, %v426
        %v437 = vpack.c.b16 %v429, %v427
        %vm442 = vcmask 523264
        %v444 = vsel %vm442, %v431, 0
        %v447 = vsel %vm442, %v433, 0
        %v450 = vsel %vm442, %v435, 0
        %v453 = vsel %vm442, %v437, 0
        %455 = vmatprep.subr.bf16.mxu0 0
        %456 = vmatpush1.bf16.msra.mxu0 %v386
        %457 = vmatprep.subr.bf16.mxu0 0
        %458 = vmatpush1.bf16.msra.mxu0 %v387
        %459 = vmatprep.subr.bf16.mxu0 0
        %460 = vmatpush1.bf16.msra.mxu0 %v388
        %461 = vmatprep.subr.bf16.mxu0 0
        %462 = vmatpush1.bf16.msra.mxu0 %v389
        %463 = vmatprep.subr.bf16.mxu0 0
        %464 = vmatpush1.bf16.msra.mxu0 %v390
        %465 = vmatprep.subr.bf16.mxu0 0
        %466 = vmatpush1.bf16.msra.mxu0 %v391
        %467 = vmatprep.subr.bf16.mxu0 0
        %468 = vmatpush1.bf16.msra.mxu0 %v392
        %469 = vmatprep.subr.bf16.mxu0 0
        %470 = vmatpush1.bf16.msra.mxu0 %v393
        %471 = vmatprep.subr.bf16.mxu0 0
        %472 = vmatpush1.bf16.msra.mxu0 %v394
        %473 = vmatprep.subr.bf16.mxu0 0
        %474 = vmatpush1.bf16.msra.mxu0 %v395
        %475 = vmatprep.subr.bf16.mxu0 0
        %476 = vmatpush1.bf16.msra.mxu0 %v396
        %477 = vmatprep.subr.bf16.mxu0 0
        %478 = vmatpush1.bf16.msra.mxu0 %v397
        %479 = vmatprep.subr.bf16.mxu0 0
        %480 = vmatpush1.bf16.msra.mxu0 0
        %481 = vmatprep.subr.bf16.mxu0 0
        %482 = vmatpush1.bf16.msra.mxu0 0
        %483 = vmatprep.subr.bf16.mxu0 0
        %484 = vmatpush1.bf16.msra.mxu0 0
        %485 = vmatprep.subr.bf16.mxu0 0
        %486 = vmatpush1.bf16.msra.mxu0 0
        %487 = vmatprep.mubr.bf16.mxu0 %v444
        %488 = vmatmul.mubr.bf16.gmra.mrb[0].mxu0 %v430
        %v489 = vpop.f32.mrb[0].mxu0
        %v490 = vadd.f32 0.0, %v489
        %v491 = vpop.f32.mrb[0].mxu0
        %v492 = vpop.f32.mrb[0].mxu0
        %v493 = vadd.f32 0.0, %v492
        %v494 = vpop.f32.mrb[0].mxu0
        %495 = vmatprep.mubr.bf16.mxu0 %v447
        %496 = vmatmul.mubr.bf16.gmra.mrb[0].mxu0 %v432
        %v497 = vpop.f32.mrb[0].mxu0
        %v498 = vadd.f32 0.0, %v497
        %v499 = vpop.f32.mrb[0].mxu0
        %v500 = vpop.f32.mrb[0].mxu0
        %v501 = vadd.f32 0.0, %v500
        %v502 = vpop.f32.mrb[0].mxu0
        %503 = vmatprep.mubr.bf16.mxu0 %v450
        %504 = vmatmul.mubr.bf16.gmra.mrb[0].mxu0 %v434
        %v505 = vpop.f32.mrb[0].mxu0
        %v506 = vadd.f32 0.0, %v505
        %v507 = vpop.f32.mrb[0].mxu0
        %v508 = vpop.f32.mrb[0].mxu0
        %v509 = vadd.f32 0.0, %v508
        %v510 = vpop.f32.mrb[0].mxu0
        %511 = vmatprep.mubr.bf16.mxu0 %v453
        %512 = vmatmul.mubr.bf16.gmra.mrb[0].mxu0 %v436
        %v513 = vpop.f32.mrb[0].mxu0
        %v514 = vadd.f32 0.0, %v513
        %v515 = vpop.f32.mrb[0].mxu0
        %v516 = vpop.f32.mrb[0].mxu0
        %v517 = vadd.f32 0.0, %v516
        %v518 = vpop.f32.mrb[0].mxu0
        %519 = vdwg.mxu0
        %v520 = vmul.f32 %v490, 0.2
        %v521 = vmul.f32 %v493, 0.2
        %v522 = vmul.f32 %v498, 0.2
        %v523 = vmul.f32 %v501, 0.2
        %v524 = vmul.f32 %v506, 0.2
        %v525 = vmul.f32 %v509, 0.2
        %v526 = vmul.f32 %v514, 0.2
        %v527 = vmul.f32 %v517, 0.2
        %v528 = vmax.f32 %v490, %v520
        %v529 = vmax.f32 %v493, %v521
        %v530 = vmax.f32 %v498, %v522
        %v531 = vmax.f32 %v501, %v523
        %v532 = vmax.f32 %v506, %v524
        %v533 = vmax.f32 %v509, %v525
        %v534 = vmax.f32 %v514, %v526
        %v535 = vmax.f32 %v517, %v527
        %544 = vrot.lane.b32.xlu0 %v528, 1
        %v545 = vpop.permute.xlu0 %544
        %546 = vrot.lane.b32.xlu0 %v529, 1
        %v547 = vpop.permute.xlu0 %546
        %548 = vrot.lane.b32.xlu0 %v530, 1
        %v549 = vpop.permute.xlu0 %548
        %550 = vrot.lane.b32.xlu0 %v531, 1
        %v551 = vpop.permute.xlu0 %550
        %552 = vrot.lane.b32.xlu0 %v532, 1
        %v553 = vpop.permute.xlu0 %552
        %554 = vrot.lane.b32.xlu0 %v533, 1
        %v555 = vpop.permute.xlu0 %554
        %556 = vrot.lane.b32.xlu0 %v534, 1
        %v557 = vpop.permute.xlu0 %556
        %558 = vrot.lane.b32.xlu0 %v535, 1
        %v559 = vpop.permute.xlu0 %558
        %v568 = vsel %vm344, 0.0, %v545
        %v569 = vsel %vm344, 0.0, %v547
        %v570 = vsel %vm344, 0.0, %v549
        %v571 = vsel %vm344, 0.0, %v551
        %v572 = vsel %vm344, 0.0, %v553
        %v573 = vsel %vm344, 0.0, %v555
        %v574 = vsel %vm344, 0.0, %v557
        %v575 = vsel %vm344, 0.0, %v559
        %576 = vrot.lane.b32.xlu0 %v528, 127
        %v577 = vpop.permute.xlu0 %576
        %578 = vrot.lane.b32.xlu0 %v529, 127
        %v579 = vpop.permute.xlu0 %578
        %580 = vrot.lane.b32.xlu0 %v530, 127
        %v581 = vpop.permute.xlu0 %580
        %582 = vrot.lane.b32.xlu0 %v531, 127
        %v583 = vpop.permute.xlu0 %582
        %584 = vrot.lane.b32.xlu0 %v532, 127
        %v585 = vpop.permute.xlu0 %584
        %586 = vrot.lane.b32.xlu0 %v533, 127
        %v587 = vpop.permute.xlu0 %586
        %588 = vrot.lane.b32.xlu0 %v534, 127
        %v589 = vpop.permute.xlu0 %588
        %590 = vrot.lane.b32.xlu0 %v535, 127
        %v591 = vpop.permute.xlu0 %590
        %v600 = vsel %vm377, %v577, 0.0
        %v601 = vsel %vm377, %v579, 0.0
        %v602 = vsel %vm377, %v581, 0.0
        %v603 = vsel %vm377, %v583, 0.0
        %v604 = vsel %vm377, %v585, 0.0
        %v605 = vsel %vm377, %v587, 0.0
        %v606 = vsel %vm377, %v589, 0.0
        %v607 = vsel %vm377, %v591, 0.0
        %v608 = vpack.c.bf16 %v569, %v568
        %v609 = vpack.c.bf16 %v571, %v570
        %v610 = vpack.c.bf16 %v573, %v572
        %v611 = vpack.c.bf16 %v575, %v574
        %v612 = vpack.c.bf16 %v529, %v528
        %v613 = vpack.c.bf16 %v531, %v530
        %v614 = vpack.c.bf16 %v533, %v532
        %v615 = vpack.c.bf16 %v535, %v534
        %v616 = vpack.c.bf16 %v601, %v600
        %v617 = vpack.c.bf16 %v603, %v602
        %v618 = vpack.c.bf16 %v605, %v604
        %v619 = vpack.c.bf16 %v607, %v606
        %s620 = scalar_lea.vmem %s2, 64
        %v621 = vld [vmem:[%s620] sm:$0xff]
        %v622 = vld [vmem:[%s620 + $0x8] sm:$0xff]
        %v623 = vld [vmem:[%s620 + $0x10] sm:$0xff]
        %v624 = vld [vmem:[%s620 + $0x18] sm:$0xff]
        %v625 = vld [vmem:[%s620 + $0x20] sm:$0xff]
        %v626 = vld [vmem:[%s620 + $0x28] sm:$0xff]
        %v627 = vld [vmem:[%s620 + $0x30] sm:$0xff]
        %v628 = vld [vmem:[%s620 + $0x38] sm:$0xff]
        %v637 = vunpack.c.l.b16 %v621
        %v638 = vunpack.c.h.b16 %v621
        %v639 = vunpack.c.l.b16 %v622
        %v640 = vunpack.c.h.b16 %v622
        %v641 = vunpack.c.l.b16 %v623
        %v642 = vunpack.c.h.b16 %v623
        %v643 = vunpack.c.l.b16 %v624
        %v644 = vunpack.c.h.b16 %v624
        %v645 = vunpack.c.l.b16 %v625
        %v646 = vunpack.c.h.b16 %v625
        %v647 = vunpack.c.l.b16 %v626
        %v648 = vunpack.c.h.b16 %v626
        %v649 = vunpack.c.l.b16 %v627
        %v650 = vunpack.c.h.b16 %v627
        %v651 = vunpack.c.l.b16 %v628
        %v652 = vunpack.c.h.b16 %v628
        %v653 = vpack.c.b16 %v639, %v637
        %v654 = vpack.c.b16 %v640, %v638
        %v655 = vpack.c.b16 %v643, %v641
        %v656 = vpack.c.b16 %v644, %v642
        %v657 = vpack.c.b16 %v647, %v645
        %v658 = vpack.c.b16 %v648, %v646
        %v659 = vpack.c.b16 %v651, %v649
        %v660 = vpack.c.b16 %v652, %v650
        %v666 = vsel %vm442, %v654, 0
        %v669 = vsel %vm442, %v656, 0
        %v672 = vsel %vm442, %v658, 0
        %v675 = vsel %vm442, %v660, 0
        %677 = vmatprep.subr.bf16.mxu0 0
        %678 = vmatpush1.bf16.msra.mxu0 %v608
        %679 = vmatprep.subr.bf16.mxu0 0
        %680 = vmatpush1.bf16.msra.mxu0 %v609
        %681 = vmatprep.subr.bf16.mxu0 0
        %682 = vmatpush1.bf16.msra.mxu0 %v610
        %683 = vmatprep.subr.bf16.mxu0 0
        %684 = vmatpush1.bf16.msra.mxu0 %v611
        %685 = vmatprep.subr.bf16.mxu0 0
        %686 = vmatpush1.bf16.msra.mxu0 %v612
        %687 = vmatprep.subr.bf16.mxu0 0
        %688 = vmatpush1.bf16.msra.mxu0 %v613
        %689 = vmatprep.subr.bf16.mxu0 0
        %690 = vmatpush1.bf16.msra.mxu0 %v614
        %691 = vmatprep.subr.bf16.mxu0 0
        %692 = vmatpush1.bf16.msra.mxu0 %v615
        %693 = vmatprep.subr.bf16.mxu0 0
        %694 = vmatpush1.bf16.msra.mxu0 %v616
        %695 = vmatprep.subr.bf16.mxu0 0
        %696 = vmatpush1.bf16.msra.mxu0 %v617
        %697 = vmatprep.subr.bf16.mxu0 0
        %698 = vmatpush1.bf16.msra.mxu0 %v618
        %699 = vmatprep.subr.bf16.mxu0 0
        %700 = vmatpush1.bf16.msra.mxu0 %v619
        %701 = vmatprep.subr.bf16.mxu0 0
        %702 = vmatpush1.bf16.msra.mxu0 0
        %703 = vmatprep.subr.bf16.mxu0 0
        %704 = vmatpush1.bf16.msra.mxu0 0
        %705 = vmatprep.subr.bf16.mxu0 0
        %706 = vmatpush1.bf16.msra.mxu0 0
        %707 = vmatprep.subr.bf16.mxu0 0
        %708 = vmatpush1.bf16.msra.mxu0 0
        %709 = vmatprep.mubr.bf16.mxu0 %v666
        %710 = vmatmul.mubr.bf16.gmra.mrb[0].mxu0 %v653
        %v711 = vpop.f32.mrb[0].mxu0
        %v712 = vadd.f32 0.0, %v711
        %v713 = vpop.f32.mrb[0].mxu0
        %v714 = vpop.f32.mrb[0].mxu0
        %v715 = vadd.f32 0.0, %v714
        %v716 = vpop.f32.mrb[0].mxu0
        %717 = vmatprep.mubr.bf16.mxu0 %v669
        %718 = vmatmul.mubr.bf16.gmra.mrb[0].mxu0 %v655
        %v719 = vpop.f32.mrb[0].mxu0
        %v720 = vadd.f32 0.0, %v719
        %v721 = vpop.f32.mrb[0].mxu0
        %v722 = vpop.f32.mrb[0].mxu0
        %v723 = vadd.f32 0.0, %v722
        %v724 = vpop.f32.mrb[0].mxu0
        %725 = vmatprep.mubr.bf16.mxu0 %v672
        %726 = vmatmul.mubr.bf16.gmra.mrb[0].mxu0 %v657
        %v727 = vpop.f32.mrb[0].mxu0
        %v728 = vadd.f32 0.0, %v727
        %v729 = vpop.f32.mrb[0].mxu0
        %v730 = vpop.f32.mrb[0].mxu0
        %v731 = vadd.f32 0.0, %v730
        %v732 = vpop.f32.mrb[0].mxu0
        %733 = vmatprep.mubr.bf16.mxu0 %v675
        %734 = vmatmul.mubr.bf16.gmra.mrb[0].mxu0 %v659
        %v735 = vpop.f32.mrb[0].mxu0
        %v736 = vadd.f32 0.0, %v735
        %v737 = vpop.f32.mrb[0].mxu0
        %v738 = vpop.f32.mrb[0].mxu0
        %v739 = vadd.f32 0.0, %v738
        %v740 = vpop.f32.mrb[0].mxu0
        %741 = vdwg.mxu0
        %v742 = vmul.f32 %v712, 0.2
        %v743 = vmul.f32 %v715, 0.2
        %v744 = vmul.f32 %v720, 0.2
        %v745 = vmul.f32 %v723, 0.2
        %v746 = vmul.f32 %v728, 0.2
        %v747 = vmul.f32 %v731, 0.2
        %v748 = vmul.f32 %v736, 0.2
        %v749 = vmul.f32 %v739, 0.2
        %v750 = vmax.f32 %v712, %v742
        %v751 = vmax.f32 %v715, %v743
        %v752 = vmax.f32 %v720, %v744
        %v753 = vmax.f32 %v723, %v745
        %v754 = vmax.f32 %v728, %v746
        %v755 = vmax.f32 %v731, %v747
        %v756 = vmax.f32 %v736, %v748
        %v757 = vmax.f32 %v739, %v749
        %766 = vrot.lane.b32.xlu0 %v750, 1
        %v767 = vpop.permute.xlu0 %766
        %768 = vrot.lane.b32.xlu0 %v751, 1
        %v769 = vpop.permute.xlu0 %768
        %770 = vrot.lane.b32.xlu0 %v752, 1
        %v771 = vpop.permute.xlu0 %770
        %772 = vrot.lane.b32.xlu0 %v753, 1
        %v773 = vpop.permute.xlu0 %772
        %774 = vrot.lane.b32.xlu0 %v754, 1
        %v775 = vpop.permute.xlu0 %774
        %776 = vrot.lane.b32.xlu0 %v755, 1
        %v777 = vpop.permute.xlu0 %776
        %778 = vrot.lane.b32.xlu0 %v756, 1
        %v779 = vpop.permute.xlu0 %778
        %780 = vrot.lane.b32.xlu0 %v757, 1
        %v781 = vpop.permute.xlu0 %780
        %v790 = vsel %vm344, 0.0, %v767
        %v791 = vsel %vm344, 0.0, %v769
        %v792 = vsel %vm344, 0.0, %v771
        %v793 = vsel %vm344, 0.0, %v773
        %v794 = vsel %vm344, 0.0, %v775
        %v795 = vsel %vm344, 0.0, %v777
        %v796 = vsel %vm344, 0.0, %v779
        %v797 = vsel %vm344, 0.0, %v781
        %798 = vrot.lane.b32.xlu0 %v750, 127
        %v799 = vpop.permute.xlu0 %798
        %800 = vrot.lane.b32.xlu0 %v751, 127
        %v801 = vpop.permute.xlu0 %800
        %802 = vrot.lane.b32.xlu0 %v752, 127
        %v803 = vpop.permute.xlu0 %802
        %804 = vrot.lane.b32.xlu0 %v753, 127
        %v805 = vpop.permute.xlu0 %804
        %806 = vrot.lane.b32.xlu0 %v754, 127
        %v807 = vpop.permute.xlu0 %806
        %808 = vrot.lane.b32.xlu0 %v755, 127
        %v809 = vpop.permute.xlu0 %808
        %810 = vrot.lane.b32.xlu0 %v756, 127
        %v811 = vpop.permute.xlu0 %810
        %812 = vrot.lane.b32.xlu0 %v757, 127
        %v813 = vpop.permute.xlu0 %812
        %v822 = vsel %vm377, %v799, 0.0
        %v823 = vsel %vm377, %v801, 0.0
        %v824 = vsel %vm377, %v803, 0.0
        %v825 = vsel %vm377, %v805, 0.0
        %v826 = vsel %vm377, %v807, 0.0
        %v827 = vsel %vm377, %v809, 0.0
        %v828 = vsel %vm377, %v811, 0.0
        %v829 = vsel %vm377, %v813, 0.0
        %v830 = vpack.c.bf16 %v791, %v790
        %v831 = vpack.c.bf16 %v793, %v792
        %v832 = vpack.c.bf16 %v795, %v794
        %v833 = vpack.c.bf16 %v797, %v796
        %v834 = vpack.c.bf16 %v751, %v750
        %v835 = vpack.c.bf16 %v753, %v752
        %v836 = vpack.c.bf16 %v755, %v754
        %v837 = vpack.c.bf16 %v757, %v756
        %v838 = vpack.c.bf16 %v823, %v822
        %v839 = vpack.c.bf16 %v825, %v824
        %v840 = vpack.c.bf16 %v827, %v826
        %v841 = vpack.c.bf16 %v829, %v828
        %s842 = scalar_lea.vmem %s2, 128
        %v843 = vld [vmem:[%s842] sm:$0xff]
        %v844 = vld [vmem:[%s842 + $0x8] sm:$0xff]
        %v845 = vld [vmem:[%s842 + $0x10] sm:$0xff]
        %v846 = vld [vmem:[%s842 + $0x18] sm:$0xff]
        %v847 = vld [vmem:[%s842 + $0x20] sm:$0xff]
        %v848 = vld [vmem:[%s842 + $0x28] sm:$0xff]
        %v849 = vld [vmem:[%s842 + $0x30] sm:$0xff]
        %v850 = vld [vmem:[%s842 + $0x38] sm:$0xff]
        %v859 = vunpack.c.l.b16 %v843
        %v860 = vunpack.c.h.b16 %v843
        %v861 = vunpack.c.l.b16 %v844
        %v862 = vunpack.c.h.b16 %v844
        %v863 = vunpack.c.l.b16 %v845
        %v864 = vunpack.c.h.b16 %v845
        %v865 = vunpack.c.l.b16 %v846
        %v866 = vunpack.c.h.b16 %v846
        %v867 = vunpack.c.l.b16 %v847
        %v868 = vunpack.c.h.b16 %v847
        %v869 = vunpack.c.l.b16 %v848
        %v870 = vunpack.c.h.b16 %v848
        %v871 = vunpack.c.l.b16 %v849
        %v872 = vunpack.c.h.b16 %v849
        %v873 = vunpack.c.l.b16 %v850
        %v874 = vunpack.c.h.b16 %v850
        %v875 = vpack.c.b16 %v861, %v859
        %v876 = vpack.c.b16 %v862, %v860
        %v877 = vpack.c.b16 %v865, %v863
        %v878 = vpack.c.b16 %v866, %v864
        %v879 = vpack.c.b16 %v869, %v867
        %v880 = vpack.c.b16 %v870, %v868
        %v881 = vpack.c.b16 %v873, %v871
        %v882 = vpack.c.b16 %v874, %v872
        %v888 = vsel %vm442, %v876, 0
        %v891 = vsel %vm442, %v878, 0
        %v894 = vsel %vm442, %v880, 0
        %v897 = vsel %vm442, %v882, 0
        %899 = vmatprep.subr.bf16.mxu0 0
        %900 = vmatpush1.bf16.msra.mxu0 %v830
        %901 = vmatprep.subr.bf16.mxu0 0
        %902 = vmatpush1.bf16.msra.mxu0 %v831
        %903 = vmatprep.subr.bf16.mxu0 0
        %904 = vmatpush1.bf16.msra.mxu0 %v832
        %905 = vmatprep.subr.bf16.mxu0 0
        %906 = vmatpush1.bf16.msra.mxu0 %v833
        %907 = vmatprep.subr.bf16.mxu0 0
        %908 = vmatpush1.bf16.msra.mxu0 %v834
        %909 = vmatprep.subr.bf16.mxu0 0
        %910 = vmatpush1.bf16.msra.mxu0 %v835
        %911 = vmatprep.subr.bf16.mxu0 0
        %912 = vmatpush1.bf16.msra.mxu0 %v836
        %913 = vmatprep.subr.bf16.mxu0 0
        %914 = vmatpush1.bf16.msra.mxu0 %v837
        %915 = vmatprep.subr.bf16.mxu0 0
        %916 = vmatpush1.bf16.msra.mxu0 %v838
        %917 = vmatprep.subr.bf16.mxu0 0
        %918 = vmatpush1.bf16.msra.mxu0 %v839
        %919 = vmatprep.subr.bf16.mxu0 0
        %920 = vmatpush1.bf16.msra.mxu0 %v840
        %921 = vmatprep.subr.bf16.mxu0 0
        %922 = vmatpush1.bf16.msra.mxu0 %v841
        %923 = vmatprep.subr.bf16.mxu0 0
        %924 = vmatpush1.bf16.msra.mxu0 0
        %925 = vmatprep.subr.bf16.mxu0 0
        %926 = vmatpush1.bf16.msra.mxu0 0
        %927 = vmatprep.subr.bf16.mxu0 0
        %928 = vmatpush1.bf16.msra.mxu0 0
        %929 = vmatprep.subr.bf16.mxu0 0
        %930 = vmatpush1.bf16.msra.mxu0 0
        %931 = vmatprep.mubr.bf16.mxu0 %v888
        %932 = vmatmul.mubr.bf16.gmra.mrb[0].mxu0 %v875
        %v933 = vpop.f32.mrb[0].mxu0
        %v934 = vadd.f32 0.0, %v933
        %v935 = vpop.f32.mrb[0].mxu0
        %v936 = vpop.f32.mrb[0].mxu0
        %v937 = vadd.f32 0.0, %v936
        %v938 = vpop.f32.mrb[0].mxu0
        %939 = vmatprep.mubr.bf16.mxu0 %v891
        %940 = vmatmul.mubr.bf16.gmra.mrb[0].mxu0 %v877
        %v941 = vpop.f32.mrb[0].mxu0
        %v942 = vadd.f32 0.0, %v941
        %v943 = vpop.f32.mrb[0].mxu0
        %v944 = vpop.f32.mrb[0].mxu0
        %v945 = vadd.f32 0.0, %v944
        %v946 = vpop.f32.mrb[0].mxu0
        %947 = vmatprep.mubr.bf16.mxu0 %v894
        %948 = vmatmul.mubr.bf16.gmra.mrb[0].mxu0 %v879
        %v949 = vpop.f32.mrb[0].mxu0
        %v950 = vadd.f32 0.0, %v949
        %v951 = vpop.f32.mrb[0].mxu0
        %v952 = vpop.f32.mrb[0].mxu0
        %v953 = vadd.f32 0.0, %v952
        %v954 = vpop.f32.mrb[0].mxu0
        %955 = vmatprep.mubr.bf16.mxu0 %v897
        %956 = vmatmul.mubr.bf16.gmra.mrb[0].mxu0 %v881
        %v957 = vpop.f32.mrb[0].mxu0
        %v958 = vadd.f32 0.0, %v957
        %v959 = vpop.f32.mrb[0].mxu0
        %v960 = vpop.f32.mrb[0].mxu0
        %v961 = vadd.f32 0.0, %v960
        %v962 = vpop.f32.mrb[0].mxu0
        %963 = vdwg.mxu0
        %v964 = vmul.f32 %v934, 0.2
        %v965 = vmul.f32 %v937, 0.2
        %v966 = vmul.f32 %v942, 0.2
        %v967 = vmul.f32 %v945, 0.2
        %v968 = vmul.f32 %v950, 0.2
        %v969 = vmul.f32 %v953, 0.2
        %v970 = vmul.f32 %v958, 0.2
        %v971 = vmul.f32 %v961, 0.2
        %v972 = vmax.f32 %v934, %v964
        %v973 = vmax.f32 %v937, %v965
        %v974 = vmax.f32 %v942, %v966
        %v975 = vmax.f32 %v945, %v967
        %v976 = vmax.f32 %v950, %v968
        %v977 = vmax.f32 %v953, %v969
        %v978 = vmax.f32 %v958, %v970
        %v979 = vmax.f32 %v961, %v971
        %988 = vrot.lane.b32.xlu0 %v972, 1
        %v989 = vpop.permute.xlu0 %988
        %990 = vrot.lane.b32.xlu0 %v973, 1
        %v991 = vpop.permute.xlu0 %990
        %992 = vrot.lane.b32.xlu0 %v974, 1
        %v993 = vpop.permute.xlu0 %992
        %994 = vrot.lane.b32.xlu0 %v975, 1
        %v995 = vpop.permute.xlu0 %994
        %996 = vrot.lane.b32.xlu0 %v976, 1
        %v997 = vpop.permute.xlu0 %996
        %998 = vrot.lane.b32.xlu0 %v977, 1
        %v999 = vpop.permute.xlu0 %998
        %1000 = vrot.lane.b32.xlu0 %v978, 1
        %v1001 = vpop.permute.xlu0 %1000
        %1002 = vrot.lane.b32.xlu0 %v979, 1
        %v1003 = vpop.permute.xlu0 %1002
        %v1012 = vsel %vm344, 0.0, %v989
        %v1013 = vsel %vm344, 0.0, %v991
        %v1014 = vsel %vm344, 0.0, %v993
        %v1015 = vsel %vm344, 0.0, %v995
        %v1016 = vsel %vm344, 0.0, %v997
        %v1017 = vsel %vm344, 0.0, %v999
        %v1018 = vsel %vm344, 0.0, %v1001
        %v1019 = vsel %vm344, 0.0, %v1003
        %1020 = vrot.lane.b32.xlu0 %v972, 127
        %v1021 = vpop.permute.xlu0 %1020
        %1022 = vrot.lane.b32.xlu0 %v973, 127
        %v1023 = vpop.permute.xlu0 %1022
        %1024 = vrot.lane.b32.xlu0 %v974, 127
        %v1025 = vpop.permute.xlu0 %1024
        %1026 = vrot.lane.b32.xlu0 %v975, 127
        %v1027 = vpop.permute.xlu0 %1026
        %1028 = vrot.lane.b32.xlu0 %v976, 127
        %v1029 = vpop.permute.xlu0 %1028
        %1030 = vrot.lane.b32.xlu0 %v977, 127
        %v1031 = vpop.permute.xlu0 %1030
        %1032 = vrot.lane.b32.xlu0 %v978, 127
        %v1033 = vpop.permute.xlu0 %1032
        %1034 = vrot.lane.b32.xlu0 %v979, 127
        %v1035 = vpop.permute.xlu0 %1034
        %v1044 = vsel %vm377, %v1021, 0.0
        %v1045 = vsel %vm377, %v1023, 0.0
        %v1046 = vsel %vm377, %v1025, 0.0
        %v1047 = vsel %vm377, %v1027, 0.0
        %v1048 = vsel %vm377, %v1029, 0.0
        %v1049 = vsel %vm377, %v1031, 0.0
        %v1050 = vsel %vm377, %v1033, 0.0
        %v1051 = vsel %vm377, %v1035, 0.0
        %v1052 = vpack.c.bf16 %v1013, %v1012
        %v1053 = vpack.c.bf16 %v1015, %v1014
        %v1054 = vpack.c.bf16 %v1017, %v1016
        %v1055 = vpack.c.bf16 %v1019, %v1018
        %v1056 = vpack.c.bf16 %v973, %v972
        %v1057 = vpack.c.bf16 %v975, %v974
        %v1058 = vpack.c.bf16 %v977, %v976
        %v1059 = vpack.c.bf16 %v979, %v978
        %v1060 = vpack.c.bf16 %v1045, %v1044
        %v1061 = vpack.c.bf16 %v1047, %v1046
        %v1062 = vpack.c.bf16 %v1049, %v1048
        %v1063 = vpack.c.bf16 %v1051, %v1050
        %s1064 = scalar_lea.vmem %s2, 192
        %v1065 = vld [vmem:[%s1064] sm:$0xff]
        %v1066 = vld [vmem:[%s1064 + $0x8] sm:$0xff]
        %v1067 = vld [vmem:[%s1064 + $0x10] sm:$0xff]
        %v1068 = vld [vmem:[%s1064 + $0x18] sm:$0xff]
        %v1069 = vld [vmem:[%s1064 + $0x20] sm:$0xff]
        %v1070 = vld [vmem:[%s1064 + $0x28] sm:$0xff]
        %v1071 = vld [vmem:[%s1064 + $0x30] sm:$0xff]
        %v1072 = vld [vmem:[%s1064 + $0x38] sm:$0xff]
        %v1081 = vunpack.c.l.b16 %v1065
        %v1082 = vunpack.c.h.b16 %v1065
        %v1083 = vunpack.c.l.b16 %v1066
        %v1084 = vunpack.c.h.b16 %v1066
        %v1085 = vunpack.c.l.b16 %v1067
        %v1086 = vunpack.c.h.b16 %v1067
        %v1087 = vunpack.c.l.b16 %v1068
        %v1088 = vunpack.c.h.b16 %v1068
        %v1089 = vunpack.c.l.b16 %v1069
        %v1090 = vunpack.c.h.b16 %v1069
        %v1091 = vunpack.c.l.b16 %v1070
        %v1092 = vunpack.c.h.b16 %v1070
        %v1093 = vunpack.c.l.b16 %v1071
        %v1094 = vunpack.c.h.b16 %v1071
        %v1095 = vunpack.c.l.b16 %v1072
        %v1096 = vunpack.c.h.b16 %v1072
        %v1097 = vpack.c.b16 %v1083, %v1081
        %v1098 = vpack.c.b16 %v1084, %v1082
        %v1099 = vpack.c.b16 %v1087, %v1085
        %v1100 = vpack.c.b16 %v1088, %v1086
        %v1101 = vpack.c.b16 %v1091, %v1089
        %v1102 = vpack.c.b16 %v1092, %v1090
        %v1103 = vpack.c.b16 %v1095, %v1093
        %v1104 = vpack.c.b16 %v1096, %v1094
        %v1110 = vsel %vm442, %v1098, 0
        %v1113 = vsel %vm442, %v1100, 0
        %v1116 = vsel %vm442, %v1102, 0
        %v1119 = vsel %vm442, %v1104, 0
        %1121 = vmatprep.subr.bf16.mxu0 0
        %1122 = vmatpush1.bf16.msra.mxu0 %v1052
        %1123 = vmatprep.subr.bf16.mxu0 0
        %1124 = vmatpush1.bf16.msra.mxu0 %v1053
        %1125 = vmatprep.subr.bf16.mxu0 0
        %1126 = vmatpush1.bf16.msra.mxu0 %v1054
        %1127 = vmatprep.subr.bf16.mxu0 0
        %1128 = vmatpush1.bf16.msra.mxu0 %v1055
        %1129 = vmatprep.subr.bf16.mxu0 0
        %1130 = vmatpush1.bf16.msra.mxu0 %v1056
        %1131 = vmatprep.subr.bf16.mxu0 0
        %1132 = vmatpush1.bf16.msra.mxu0 %v1057
        %1133 = vmatprep.subr.bf16.mxu0 0
        %1134 = vmatpush1.bf16.msra.mxu0 %v1058
        %1135 = vmatprep.subr.bf16.mxu0 0
        %1136 = vmatpush1.bf16.msra.mxu0 %v1059
        %1137 = vmatprep.subr.bf16.mxu0 0
        %1138 = vmatpush1.bf16.msra.mxu0 %v1060
        %1139 = vmatprep.subr.bf16.mxu0 0
        %1140 = vmatpush1.bf16.msra.mxu0 %v1061
        %1141 = vmatprep.subr.bf16.mxu0 0
        %1142 = vmatpush1.bf16.msra.mxu0 %v1062
        %1143 = vmatprep.subr.bf16.mxu0 0
        %1144 = vmatpush1.bf16.msra.mxu0 %v1063
        %1145 = vmatprep.subr.bf16.mxu0 0
        %1146 = vmatpush1.bf16.msra.mxu0 0
        %1147 = vmatprep.subr.bf16.mxu0 0
        %1148 = vmatpush1.bf16.msra.mxu0 0
        %1149 = vmatprep.subr.bf16.mxu0 0
        %1150 = vmatpush1.bf16.msra.mxu0 0
        %1151 = vmatprep.subr.bf16.mxu0 0
        %1152 = vmatpush1.bf16.msra.mxu0 0
        %1153 = vmatprep.mubr.bf16.mxu0 %v1110
        %1154 = vmatmul.mubr.bf16.gmra.mrb[0].mxu0 %v1097
        %v1155 = vpop.f32.mrb[0].mxu0
        %v1156 = vadd.f32 0.0, %v1155
        %v1157 = vpop.f32.mrb[0].mxu0
        %v1158 = vpop.f32.mrb[0].mxu0
        %v1159 = vadd.f32 0.0, %v1158
        %v1160 = vpop.f32.mrb[0].mxu0
        %1161 = vmatprep.mubr.bf16.mxu0 %v1113
        %1162 = vmatmul.mubr.bf16.gmra.mrb[0].mxu0 %v1099
        %v1163 = vpop.f32.mrb[0].mxu0
        %v1164 = vadd.f32 0.0, %v1163
        %v1165 = vpop.f32.mrb[0].mxu0
        %v1166 = vpop.f32.mrb[0].mxu0
        %v1167 = vadd.f32 0.0, %v1166
        %v1168 = vpop.f32.mrb[0].mxu0
        %1169 = vmatprep.mubr.bf16.mxu0 %v1116
        %1170 = vmatmul.mubr.bf16.gmra.mrb[0].mxu0 %v1101
        %v1171 = vpop.f32.mrb[0].mxu0
        %v1172 = vadd.f32 0.0, %v1171
        %v1173 = vpop.f32.mrb[0].mxu0
        %v1174 = vpop.f32.mrb[0].mxu0
        %v1175 = vadd.f32 0.0, %v1174
        %v1176 = vpop.f32.mrb[0].mxu0
        %1177 = vmatprep.mubr.bf16.mxu0 %v1119
        %1178 = vmatmul.mubr.bf16.gmra.mrb[0].mxu0 %v1103
        %v1179 = vpop.f32.mrb[0].mxu0
        %v1180 = vadd.f32 0.0, %v1179
        %v1181 = vpop.f32.mrb[0].mxu0
        %v1182 = vpop.f32.mrb[0].mxu0
        %v1183 = vadd.f32 0.0, %v1182
        %v1184 = vpop.f32.mrb[0].mxu0
        %1185 = vdwg.mxu0
        %v1186 = vmul.f32 %v1156, 0.2
        %v1187 = vmul.f32 %v1159, 0.2
        %v1188 = vmul.f32 %v1164, 0.2
        %v1189 = vmul.f32 %v1167, 0.2
        %v1190 = vmul.f32 %v1172, 0.2
        %v1191 = vmul.f32 %v1175, 0.2
        %v1192 = vmul.f32 %v1180, 0.2
        %v1193 = vmul.f32 %v1183, 0.2
        %v1194 = vmax.f32 %v1156, %v1186
        %v1195 = vmax.f32 %v1159, %v1187
        %v1196 = vmax.f32 %v1164, %v1188
        %v1197 = vmax.f32 %v1167, %v1189
        %v1198 = vmax.f32 %v1172, %v1190
        %v1199 = vmax.f32 %v1175, %v1191
        %v1200 = vmax.f32 %v1180, %v1192
        %v1201 = vmax.f32 %v1183, %v1193
        %1210 = vrot.lane.b32.xlu0 %v1194, 1
        %v1211 = vpop.permute.xlu0 %1210
        %1212 = vrot.lane.b32.xlu0 %v1195, 1
        %v1213 = vpop.permute.xlu0 %1212
        %1214 = vrot.lane.b32.xlu0 %v1196, 1
        %v1215 = vpop.permute.xlu0 %1214
        %1216 = vrot.lane.b32.xlu0 %v1197, 1
        %v1217 = vpop.permute.xlu0 %1216
        %1218 = vrot.lane.b32.xlu0 %v1198, 1
        %v1219 = vpop.permute.xlu0 %1218
        %1220 = vrot.lane.b32.xlu0 %v1199, 1
        %v1221 = vpop.permute.xlu0 %1220
        %1222 = vrot.lane.b32.xlu0 %v1200, 1
        %v1223 = vpop.permute.xlu0 %1222
        %1224 = vrot.lane.b32.xlu0 %v1201, 1
        %v1225 = vpop.permute.xlu0 %1224
        %v1234 = vsel %vm344, 0.0, %v1211
        %v1235 = vsel %vm344, 0.0, %v1213
        %v1236 = vsel %vm344, 0.0, %v1215
        %v1237 = vsel %vm344, 0.0, %v1217
        %v1238 = vsel %vm344, 0.0, %v1219
        %v1239 = vsel %vm344, 0.0, %v1221
        %v1240 = vsel %vm344, 0.0, %v1223
        %v1241 = vsel %vm344, 0.0, %v1225
        %1242 = vrot.lane.b32.xlu0 %v1194, 127
        %v1243 = vpop.permute.xlu0 %1242
        %1244 = vrot.lane.b32.xlu0 %v1195, 127
        %v1245 = vpop.permute.xlu0 %1244
        %1246 = vrot.lane.b32.xlu0 %v1196, 127
        %v1247 = vpop.permute.xlu0 %1246
        %1248 = vrot.lane.b32.xlu0 %v1197, 127
        %v1249 = vpop.permute.xlu0 %1248
        %1250 = vrot.lane.b32.xlu0 %v1198, 127
        %v1251 = vpop.permute.xlu0 %1250
        %1252 = vrot.lane.b32.xlu0 %v1199, 127
        %v1253 = vpop.permute.xlu0 %1252
        %1254 = vrot.lane.b32.xlu0 %v1200, 127
        %v1255 = vpop.permute.xlu0 %1254
        %1256 = vrot.lane.b32.xlu0 %v1201, 127
        %v1257 = vpop.permute.xlu0 %1256
        %v1266 = vsel %vm377, %v1243, 0.0
        %v1267 = vsel %vm377, %v1245, 0.0
        %v1268 = vsel %vm377, %v1247, 0.0
        %v1269 = vsel %vm377, %v1249, 0.0
        %v1270 = vsel %vm377, %v1251, 0.0
        %v1271 = vsel %vm377, %v1253, 0.0
        %v1272 = vsel %vm377, %v1255, 0.0
        %v1273 = vsel %vm377, %v1257, 0.0
        %v1274 = vpack.c.bf16 %v1235, %v1234
        %v1275 = vpack.c.bf16 %v1237, %v1236
        %v1276 = vpack.c.bf16 %v1239, %v1238
        %v1277 = vpack.c.bf16 %v1241, %v1240
        %v1278 = vpack.c.bf16 %v1195, %v1194
        %v1279 = vpack.c.bf16 %v1197, %v1196
        %v1280 = vpack.c.bf16 %v1199, %v1198
        %v1281 = vpack.c.bf16 %v1201, %v1200
        %v1282 = vpack.c.bf16 %v1267, %v1266
        %v1283 = vpack.c.bf16 %v1269, %v1268
        %v1284 = vpack.c.bf16 %v1271, %v1270
        %v1285 = vpack.c.bf16 %v1273, %v1272
        %s1286 = scalar_lea.vmem %s2, 256
        %v1287 = vld [vmem:[%s1286] sm:$0xff]
        %v1288 = vld [vmem:[%s1286 + $0x8] sm:$0xff]
        %v1289 = vld [vmem:[%s1286 + $0x10] sm:$0xff]
        %v1290 = vld [vmem:[%s1286 + $0x18] sm:$0xff]
        %v1291 = vld [vmem:[%s1286 + $0x20] sm:$0xff]
        %v1292 = vld [vmem:[%s1286 + $0x28] sm:$0xff]
        %v1293 = vld [vmem:[%s1286 + $0x30] sm:$0xff]
        %v1294 = vld [vmem:[%s1286 + $0x38] sm:$0xff]
        %v1303 = vunpack.c.l.b16 %v1287
        %v1304 = vunpack.c.h.b16 %v1287
        %v1305 = vunpack.c.l.b16 %v1288
        %v1306 = vunpack.c.h.b16 %v1288
        %v1307 = vunpack.c.l.b16 %v1289
        %v1308 = vunpack.c.h.b16 %v1289
        %v1309 = vunpack.c.l.b16 %v1290
        %v1310 = vunpack.c.h.b16 %v1290
        %v1311 = vunpack.c.l.b16 %v1291
        %v1312 = vunpack.c.h.b16 %v1291
        %v1313 = vunpack.c.l.b16 %v1292
        %v1314 = vunpack.c.h.b16 %v1292
        %v1315 = vunpack.c.l.b16 %v1293
        %v1316 = vunpack.c.h.b16 %v1293
        %v1317 = vunpack.c.l.b16 %v1294
        %v1318 = vunpack.c.h.b16 %v1294
        %v1319 = vpack.c.b16 %v1305, %v1303
        %v1320 = vpack.c.b16 %v1306, %v1304
        %v1321 = vpack.c.b16 %v1309, %v1307
        %v1322 = vpack.c.b16 %v1310, %v1308
        %v1323 = vpack.c.b16 %v1313, %v1311
        %v1324 = vpack.c.b16 %v1314, %v1312
        %v1325 = vpack.c.b16 %v1317, %v1315
        %v1326 = vpack.c.b16 %v1318, %v1316
        %v1332 = vsel %vm442, %v1320, 0
        %v1335 = vsel %vm442, %v1322, 0
        %v1338 = vsel %vm442, %v1324, 0
        %v1341 = vsel %vm442, %v1326, 0
        %1343 = vmatprep.subr.bf16.mxu0 0
        %1344 = vmatpush1.bf16.msra.mxu0 %v1274
        %1345 = vmatprep.subr.bf16.mxu0 0
        %1346 = vmatpush1.bf16.msra.mxu0 %v1275
        %1347 = vmatprep.subr.bf16.mxu0 0
        %1348 = vmatpush1.bf16.msra.mxu0 %v1276
        %1349 = vmatprep.subr.bf16.mxu0 0
        %1350 = vmatpush1.bf16.msra.mxu0 %v1277
        %1351 = vmatprep.subr.bf16.mxu0 0
        %1352 = vmatpush1.bf16.msra.mxu0 %v1278
        %1353 = vmatprep.subr.bf16.mxu0 0
        %1354 = vmatpush1.bf16.msra.mxu0 %v1279
        %1355 = vmatprep.subr.bf16.mxu0 0
        %1356 = vmatpush1.bf16.msra.mxu0 %v1280
        %1357 = vmatprep.subr.bf16.mxu0 0
        %1358 = vmatpush1.bf16.msra.mxu0 %v1281
        %1359 = vmatprep.subr.bf16.mxu0 0
        %1360 = vmatpush1.bf16.msra.mxu0 %v1282
        %1361 = vmatprep.subr.bf16.mxu0 0
        %1362 = vmatpush1.bf16.msra.mxu0 %v1283
        %1363 = vmatprep.subr.bf16.mxu0 0
        %1364 = vmatpush1.bf16.msra.mxu0 %v1284
        %1365 = vmatprep.subr.bf16.mxu0 0
        %1366 = vmatpush1.bf16.msra.mxu0 %v1285
        %1367 = vmatprep.subr.bf16.mxu0 0
        %1368 = vmatpush1.bf16.msra.mxu0 0
        %1369 = vmatprep.subr.bf16.mxu0 0
        %1370 = vmatpush1.bf16.msra.mxu0 0
        %1371 = vmatprep.subr.bf16.mxu0 0
        %1372 = vmatpush1.bf16.msra.mxu0 0
        %1373 = vmatprep.subr.bf16.mxu0 0
        %1374 = vmatpush1.bf16.msra.mxu0 0
        %1375 = vmatprep.mubr.bf16.mxu0 %v1332
        %1376 = vmatmul.mubr.bf16.gmra.mrb[0].mxu0 %v1319
        %v1377 = vpop.f32.mrb[0].mxu0
        %v1378 = vadd.f32 0.0, %v1377
        %v1379 = vpop.f32.mrb[0].mxu0
        %v1380 = vpop.f32.mrb[0].mxu0
        %v1381 = vadd.f32 0.0, %v1380
        %v1382 = vpop.f32.mrb[0].mxu0
        %1383 = vmatprep.mubr.bf16.mxu0 %v1335
        %1384 = vmatmul.mubr.bf16.gmra.mrb[0].mxu0 %v1321
        %v1385 = vpop.f32.mrb[0].mxu0
        %v1386 = vadd.f32 0.0, %v1385
        %v1387 = vpop.f32.mrb[0].mxu0
        %v1388 = vpop.f32.mrb[0].mxu0
        %v1389 = vadd.f32 0.0, %v1388
        %v1390 = vpop.f32.mrb[0].mxu0
        %1391 = vmatprep.mubr.bf16.mxu0 %v1338
        %1392 = vmatmul.mubr.bf16.gmra.mrb[0].mxu0 %v1323
        %v1393 = vpop.f32.mrb[0].mxu0
        %v1394 = vadd.f32 0.0, %v1393
        %v1395 = vpop.f32.mrb[0].mxu0
        %v1396 = vpop.f32.mrb[0].mxu0
        %v1397 = vadd.f32 0.0, %v1396
        %v1398 = vpop.f32.mrb[0].mxu0
        %1399 = vmatprep.mubr.bf16.mxu0 %v1341
        %1400 = vmatmul.mubr.bf16.gmra.mrb[0].mxu0 %v1325
        %v1401 = vpop.f32.mrb[0].mxu0
        %v1402 = vadd.f32 0.0, %v1401
        %v1403 = vpop.f32.mrb[0].mxu0
        %v1404 = vpop.f32.mrb[0].mxu0
        %v1405 = vadd.f32 0.0, %v1404
        %v1406 = vpop.f32.mrb[0].mxu0
        %1407 = vdwg.mxu0
        %v1408 = vmul.f32 %v1378, 0.2
        %v1409 = vmul.f32 %v1381, 0.2
        %v1410 = vmul.f32 %v1386, 0.2
        %v1411 = vmul.f32 %v1389, 0.2
        %v1412 = vmul.f32 %v1394, 0.2
        %v1413 = vmul.f32 %v1397, 0.2
        %v1414 = vmul.f32 %v1402, 0.2
        %v1415 = vmul.f32 %v1405, 0.2
        %v1416 = vmax.f32 %v1378, %v1408
        %v1417 = vmax.f32 %v1381, %v1409
        %v1418 = vmax.f32 %v1386, %v1410
        %v1419 = vmax.f32 %v1389, %v1411
        %v1420 = vmax.f32 %v1394, %v1412
        %v1421 = vmax.f32 %v1397, %v1413
        %v1422 = vmax.f32 %v1402, %v1414
        %v1423 = vmax.f32 %v1405, %v1415
        %1432 = vrot.lane.b32.xlu0 %v1416, 1
        %v1433 = vpop.permute.xlu0 %1432
        %1434 = vrot.lane.b32.xlu0 %v1417, 1
        %v1435 = vpop.permute.xlu0 %1434
        %1436 = vrot.lane.b32.xlu0 %v1418, 1
        %v1437 = vpop.permute.xlu0 %1436
        %1438 = vrot.lane.b32.xlu0 %v1419, 1
        %v1439 = vpop.permute.xlu0 %1438
        %1440 = vrot.lane.b32.xlu0 %v1420, 1
        %v1441 = vpop.permute.xlu0 %1440
        %1442 = vrot.lane.b32.xlu0 %v1421, 1
        %v1443 = vpop.permute.xlu0 %1442
        %1444 = vrot.lane.b32.xlu0 %v1422, 1
        %v1445 = vpop.permute.xlu0 %1444
        %1446 = vrot.lane.b32.xlu0 %v1423, 1
        %v1447 = vpop.permute.xlu0 %1446
        %v1456 = vsel %vm344, 0.0, %v1433
        %v1457 = vsel %vm344, 0.0, %v1435
        %v1458 = vsel %vm344, 0.0, %v1437
        %v1459 = vsel %vm344, 0.0, %v1439
        %v1460 = vsel %vm344, 0.0, %v1441
        %v1461 = vsel %vm344, 0.0, %v1443
        %v1462 = vsel %vm344, 0.0, %v1445
        %v1463 = vsel %vm344, 0.0, %v1447
        %1464 = vrot.lane.b32.xlu0 %v1416, 127
        %v1465 = vpop.permute.xlu0 %1464
        %1466 = vrot.lane.b32.xlu0 %v1417, 127
        %v1467 = vpop.permute.xlu0 %1466
        %1468 = vrot.lane.b32.xlu0 %v1418, 127
        %v1469 = vpop.permute.xlu0 %1468
        %1470 = vrot.lane.b32.xlu0 %v1419, 127
        %v1471 = vpop.permute.xlu0 %1470
        %1472 = vrot.lane.b32.xlu0 %v1420, 127
        %v1473 = vpop.permute.xlu0 %1472
        %1474 = vrot.lane.b32.xlu0 %v1421, 127
        %v1475 = vpop.permute.xlu0 %1474
        %1476 = vrot.lane.b32.xlu0 %v1422, 127
        %v1477 = vpop.permute.xlu0 %1476
        %1478 = vrot.lane.b32.xlu0 %v1423, 127
        %v1479 = vpop.permute.xlu0 %1478
        %v1488 = vsel %vm377, %v1465, 0.0
        %v1489 = vsel %vm377, %v1467, 0.0
        %v1490 = vsel %vm377, %v1469, 0.0
        %v1491 = vsel %vm377, %v1471, 0.0
        %v1492 = vsel %vm377, %v1473, 0.0
        %v1493 = vsel %vm377, %v1475, 0.0
        %v1494 = vsel %vm377, %v1477, 0.0
        %v1495 = vsel %vm377, %v1479, 0.0
        %v1496 = vpack.c.bf16 %v1457, %v1456
        %v1497 = vpack.c.bf16 %v1459, %v1458
        %v1498 = vpack.c.bf16 %v1461, %v1460
        %v1499 = vpack.c.bf16 %v1463, %v1462
        %v1500 = vpack.c.bf16 %v1417, %v1416
        %v1501 = vpack.c.bf16 %v1419, %v1418
        %v1502 = vpack.c.bf16 %v1421, %v1420
        %v1503 = vpack.c.bf16 %v1423, %v1422
        %v1504 = vpack.c.bf16 %v1489, %v1488
        %v1505 = vpack.c.bf16 %v1491, %v1490
        %v1506 = vpack.c.bf16 %v1493, %v1492
        %v1507 = vpack.c.bf16 %v1495, %v1494
        %s1508 = scalar_lea.vmem %s2, 320
        %v1509 = vld [vmem:[%s1508] sm:$0xff]
        %v1510 = vld [vmem:[%s1508 + $0x8] sm:$0xff]
        %v1511 = vld [vmem:[%s1508 + $0x10] sm:$0xff]
        %v1512 = vld [vmem:[%s1508 + $0x18] sm:$0xff]
        %v1513 = vld [vmem:[%s1508 + $0x20] sm:$0xff]
        %v1514 = vld [vmem:[%s1508 + $0x28] sm:$0xff]
        %v1515 = vld [vmem:[%s1508 + $0x30] sm:$0xff]
        %v1516 = vld [vmem:[%s1508 + $0x38] sm:$0xff]
        %v1525 = vunpack.c.l.b16 %v1509
        %v1526 = vunpack.c.h.b16 %v1509
        %v1527 = vunpack.c.l.b16 %v1510
        %v1528 = vunpack.c.h.b16 %v1510
        %v1529 = vunpack.c.l.b16 %v1511
        %v1530 = vunpack.c.h.b16 %v1511
        %v1531 = vunpack.c.l.b16 %v1512
        %v1532 = vunpack.c.h.b16 %v1512
        %v1533 = vunpack.c.l.b16 %v1513
        %v1534 = vunpack.c.h.b16 %v1513
        %v1535 = vunpack.c.l.b16 %v1514
        %v1536 = vunpack.c.h.b16 %v1514
        %v1537 = vunpack.c.l.b16 %v1515
        %v1538 = vunpack.c.h.b16 %v1515
        %v1539 = vunpack.c.l.b16 %v1516
        %v1540 = vunpack.c.h.b16 %v1516
        %v1541 = vpack.c.b16 %v1527, %v1525
        %v1542 = vpack.c.b16 %v1528, %v1526
        %v1543 = vpack.c.b16 %v1531, %v1529
        %v1544 = vpack.c.b16 %v1532, %v1530
        %v1545 = vpack.c.b16 %v1535, %v1533
        %v1546 = vpack.c.b16 %v1536, %v1534
        %v1547 = vpack.c.b16 %v1539, %v1537
        %v1548 = vpack.c.b16 %v1540, %v1538
        %v1554 = vsel %vm442, %v1542, 0
        %v1557 = vsel %vm442, %v1544, 0
        %v1560 = vsel %vm442, %v1546, 0
        %v1563 = vsel %vm442, %v1548, 0
        %1565 = vmatprep.subr.bf16.mxu0 0
        %1566 = vmatpush1.bf16.msra.mxu0 %v1496
        %1567 = vmatprep.subr.bf16.mxu0 0
        %1568 = vmatpush1.bf16.msra.mxu0 %v1497
        %1569 = vmatprep.subr.bf16.mxu0 0
        %1570 = vmatpush1.bf16.msra.mxu0 %v1498
        %1571 = vmatprep.subr.bf16.mxu0 0
        %1572 = vmatpush1.bf16.msra.mxu0 %v1499
        %1573 = vmatprep.subr.bf16.mxu0 0
        %1574 = vmatpush1.bf16.msra.mxu0 %v1500
        %1575 = vmatprep.subr.bf16.mxu0 0
        %1576 = vmatpush1.bf16.msra.mxu0 %v1501
        %1577 = vmatprep.subr.bf16.mxu0 0
        %1578 = vmatpush1.bf16.msra.mxu0 %v1502
        %1579 = vmatprep.subr.bf16.mxu0 0
        %1580 = vmatpush1.bf16.msra.mxu0 %v1503
        %1581 = vmatprep.subr.bf16.mxu0 0
        %1582 = vmatpush1.bf16.msra.mxu0 %v1504
        %1583 = vmatprep.subr.bf16.mxu0 0
        %1584 = vmatpush1.bf16.msra.mxu0 %v1505
        %1585 = vmatprep.subr.bf16.mxu0 0
        %1586 = vmatpush1.bf16.msra.mxu0 %v1506
        %1587 = vmatprep.subr.bf16.mxu0 0
        %1588 = vmatpush1.bf16.msra.mxu0 %v1507
        %1589 = vmatprep.subr.bf16.mxu0 0
        %1590 = vmatpush1.bf16.msra.mxu0 0
        %1591 = vmatprep.subr.bf16.mxu0 0
        %1592 = vmatpush1.bf16.msra.mxu0 0
        %1593 = vmatprep.subr.bf16.mxu0 0
        %1594 = vmatpush1.bf16.msra.mxu0 0
        %1595 = vmatprep.subr.bf16.mxu0 0
        %1596 = vmatpush1.bf16.msra.mxu0 0
        %1597 = vmatprep.mubr.bf16.mxu0 %v1554
        %1598 = vmatmul.mubr.bf16.gmra.mrb[0].mxu0 %v1541
        %v1599 = vpop.f32.mrb[0].mxu0
        %v1600 = vadd.f32 0.0, %v1599
        %v1601 = vpop.f32.mrb[0].mxu0
        %v1602 = vpop.f32.mrb[0].mxu0
        %v1603 = vadd.f32 0.0, %v1602
        %v1604 = vpop.f32.mrb[0].mxu0
        %1605 = vmatprep.mubr.bf16.mxu0 %v1557
        %1606 = vmatmul.mubr.bf16.gmra.mrb[0].mxu0 %v1543
        %v1607 = vpop.f32.mrb[0].mxu0
        %v1608 = vadd.f32 0.0, %v1607
        %v1609 = vpop.f32.mrb[0].mxu0
        %v1610 = vpop.f32.mrb[0].mxu0
        %v1611 = vadd.f32 0.0, %v1610
        %v1612 = vpop.f32.mrb[0].mxu0
        %1613 = vmatprep.mubr.bf16.mxu0 %v1560
        %1614 = vmatmul.mubr.bf16.gmra.mrb[0].mxu0 %v1545
        %v1615 = vpop.f32.mrb[0].mxu0
        %v1616 = vadd.f32 0.0, %v1615
        %v1617 = vpop.f32.mrb[0].mxu0
        %v1618 = vpop.f32.mrb[0].mxu0
        %v1619 = vadd.f32 0.0, %v1618
        %v1620 = vpop.f32.mrb[0].mxu0
        %1621 = vmatprep.mubr.bf16.mxu0 %v1563
        %1622 = vmatmul.mubr.bf16.gmra.mrb[0].mxu0 %v1547
        %v1623 = vpop.f32.mrb[0].mxu0
        %v1624 = vadd.f32 0.0, %v1623
        %v1625 = vpop.f32.mrb[0].mxu0
        %v1626 = vpop.f32.mrb[0].mxu0
        %v1627 = vadd.f32 0.0, %v1626
        %v1628 = vpop.f32.mrb[0].mxu0
        %1629 = vdwg.mxu0
        %v1630 = vmul.f32 %v1600, 0.2
        %v1631 = vmul.f32 %v1603, 0.2
        %v1632 = vmul.f32 %v1608, 0.2
        %v1633 = vmul.f32 %v1611, 0.2
        %v1634 = vmul.f32 %v1616, 0.2
        %v1635 = vmul.f32 %v1619, 0.2
        %v1636 = vmul.f32 %v1624, 0.2
        %v1637 = vmul.f32 %v1627, 0.2
        %v1638 = vmax.f32 %v1600, %v1630
        %v1639 = vmax.f32 %v1603, %v1631
        %v1640 = vmax.f32 %v1608, %v1632
        %v1641 = vmax.f32 %v1611, %v1633
        %v1642 = vmax.f32 %v1616, %v1634
        %v1643 = vmax.f32 %v1619, %v1635
        %v1644 = vmax.f32 %v1624, %v1636
        %v1645 = vmax.f32 %v1627, %v1637
        %1654 = vrot.lane.b32.xlu0 %v1638, 1
        %v1655 = vpop.permute.xlu0 %1654
        %1656 = vrot.lane.b32.xlu0 %v1639, 1
        %v1657 = vpop.permute.xlu0 %1656
        %1658 = vrot.lane.b32.xlu0 %v1640, 1
        %v1659 = vpop.permute.xlu0 %1658
        %1660 = vrot.lane.b32.xlu0 %v1641, 1
        %v1661 = vpop.permute.xlu0 %1660
        %1662 = vrot.lane.b32.xlu0 %v1642, 1
        %v1663 = vpop.permute.xlu0 %1662
        %1664 = vrot.lane.b32.xlu0 %v1643, 1
        %v1665 = vpop.permute.xlu0 %1664
        %1666 = vrot.lane.b32.xlu0 %v1644, 1
        %v1667 = vpop.permute.xlu0 %1666
        %1668 = vrot.lane.b32.xlu0 %v1645, 1
        %v1669 = vpop.permute.xlu0 %1668
        %v1678 = vsel %vm344, 0.0, %v1655
        %v1679 = vsel %vm344, 0.0, %v1657
        %v1680 = vsel %vm344, 0.0, %v1659
        %v1681 = vsel %vm344, 0.0, %v1661
        %v1682 = vsel %vm344, 0.0, %v1663
        %v1683 = vsel %vm344, 0.0, %v1665
        %v1684 = vsel %vm344, 0.0, %v1667
        %v1685 = vsel %vm344, 0.0, %v1669
        %1686 = vrot.lane.b32.xlu0 %v1638, 127
        %v1687 = vpop.permute.xlu0 %1686
        %1688 = vrot.lane.b32.xlu0 %v1639, 127
        %v1689 = vpop.permute.xlu0 %1688
        %1690 = vrot.lane.b32.xlu0 %v1640, 127
        %v1691 = vpop.permute.xlu0 %1690
        %1692 = vrot.lane.b32.xlu0 %v1641, 127
        %v1693 = vpop.permute.xlu0 %1692
        %1694 = vrot.lane.b32.xlu0 %v1642, 127
        %v1695 = vpop.permute.xlu0 %1694
        %1696 = vrot.lane.b32.xlu0 %v1643, 127
        %v1697 = vpop.permute.xlu0 %1696
        %1698 = vrot.lane.b32.xlu0 %v1644, 127
        %v1699 = vpop.permute.xlu0 %1698
        %1700 = vrot.lane.b32.xlu0 %v1645, 127
        %v1701 = vpop.permute.xlu0 %1700
        %v1710 = vsel %vm377, %v1687, 0.0
        %v1711 = vsel %vm377, %v1689, 0.0
        %v1712 = vsel %vm377, %v1691, 0.0
        %v1713 = vsel %vm377, %v1693, 0.0
        %v1714 = vsel %vm377, %v1695, 0.0
        %v1715 = vsel %vm377, %v1697, 0.0
        %v1716 = vsel %vm377, %v1699, 0.0
        %v1717 = vsel %vm377, %v1701, 0.0
        %v1718 = vpack.c.bf16 %v1679, %v1678
        %v1719 = vpack.c.bf16 %v1681, %v1680
        %v1720 = vpack.c.bf16 %v1683, %v1682
        %v1721 = vpack.c.bf16 %v1685, %v1684
        %v1722 = vpack.c.bf16 %v1639, %v1638
        %v1723 = vpack.c.bf16 %v1641, %v1640
        %v1724 = vpack.c.bf16 %v1643, %v1642
        %v1725 = vpack.c.bf16 %v1645, %v1644
        %v1726 = vpack.c.bf16 %v1711, %v1710
        %v1727 = vpack.c.bf16 %v1713, %v1712
        %v1728 = vpack.c.bf16 %v1715, %v1714
        %v1729 = vpack.c.bf16 %v1717, %v1716
        %s1730 = scalar_lea.vmem %s2, 384
        %v1731 = vld [vmem:[%s1730] sm:$0xff]
        %v1732 = vld [vmem:[%s1730 + $0x8] sm:$0xff]
        %v1733 = vld [vmem:[%s1730 + $0x10] sm:$0xff]
        %v1734 = vld [vmem:[%s1730 + $0x18] sm:$0xff]
        %v1735 = vld [vmem:[%s1730 + $0x20] sm:$0xff]
        %v1736 = vld [vmem:[%s1730 + $0x28] sm:$0xff]
        %v1737 = vld [vmem:[%s1730 + $0x30] sm:$0xff]
        %v1738 = vld [vmem:[%s1730 + $0x38] sm:$0xff]
        %v1747 = vunpack.c.l.b16 %v1731
        %v1748 = vunpack.c.h.b16 %v1731
        %v1749 = vunpack.c.l.b16 %v1732
        %v1750 = vunpack.c.h.b16 %v1732
        %v1751 = vunpack.c.l.b16 %v1733
        %v1752 = vunpack.c.h.b16 %v1733
        %v1753 = vunpack.c.l.b16 %v1734
        %v1754 = vunpack.c.h.b16 %v1734
        %v1755 = vunpack.c.l.b16 %v1735
        %v1756 = vunpack.c.h.b16 %v1735
        %v1757 = vunpack.c.l.b16 %v1736
        %v1758 = vunpack.c.h.b16 %v1736
        %v1759 = vunpack.c.l.b16 %v1737
        %v1760 = vunpack.c.h.b16 %v1737
        %v1761 = vunpack.c.l.b16 %v1738
        %v1762 = vunpack.c.h.b16 %v1738
        %v1763 = vpack.c.b16 %v1749, %v1747
        %v1764 = vpack.c.b16 %v1750, %v1748
        %v1765 = vpack.c.b16 %v1753, %v1751
        %v1766 = vpack.c.b16 %v1754, %v1752
        %v1767 = vpack.c.b16 %v1757, %v1755
        %v1768 = vpack.c.b16 %v1758, %v1756
        %v1769 = vpack.c.b16 %v1761, %v1759
        %v1770 = vpack.c.b16 %v1762, %v1760
        %v1776 = vsel %vm442, %v1764, 0
        %v1779 = vsel %vm442, %v1766, 0
        %v1782 = vsel %vm442, %v1768, 0
        %v1785 = vsel %vm442, %v1770, 0
        %1787 = vmatprep.subr.bf16.mxu0 0
        %1788 = vmatpush1.bf16.msra.mxu0 %v1718
        %1789 = vmatprep.subr.bf16.mxu0 0
        %1790 = vmatpush1.bf16.msra.mxu0 %v1719
        %1791 = vmatprep.subr.bf16.mxu0 0
        %1792 = vmatpush1.bf16.msra.mxu0 %v1720
        %1793 = vmatprep.subr.bf16.mxu0 0
        %1794 = vmatpush1.bf16.msra.mxu0 %v1721
        %1795 = vmatprep.subr.bf16.mxu0 0
        %1796 = vmatpush1.bf16.msra.mxu0 %v1722
        %1797 = vmatprep.subr.bf16.mxu0 0
        %1798 = vmatpush1.bf16.msra.mxu0 %v1723
        %1799 = vmatprep.subr.bf16.mxu0 0
        %1800 = vmatpush1.bf16.msra.mxu0 %v1724
        %1801 = vmatprep.subr.bf16.mxu0 0
        %1802 = vmatpush1.bf16.msra.mxu0 %v1725
        %1803 = vmatprep.subr.bf16.mxu0 0
        %1804 = vmatpush1.bf16.msra.mxu0 %v1726
        %1805 = vmatprep.subr.bf16.mxu0 0
        %1806 = vmatpush1.bf16.msra.mxu0 %v1727
        %1807 = vmatprep.subr.bf16.mxu0 0
        %1808 = vmatpush1.bf16.msra.mxu0 %v1728
        %1809 = vmatprep.subr.bf16.mxu0 0
        %1810 = vmatpush1.bf16.msra.mxu0 %v1729
        %1811 = vmatprep.subr.bf16.mxu0 0
        %1812 = vmatpush1.bf16.msra.mxu0 0
        %1813 = vmatprep.subr.bf16.mxu0 0
        %1814 = vmatpush1.bf16.msra.mxu0 0
        %1815 = vmatprep.subr.bf16.mxu0 0
        %1816 = vmatpush1.bf16.msra.mxu0 0
        %1817 = vmatprep.subr.bf16.mxu0 0
        %1818 = vmatpush1.bf16.msra.mxu0 0
        %1819 = vmatprep.mubr.bf16.mxu0 %v1776
        %1820 = vmatmul.mubr.bf16.gmra.mrb[0].mxu0 %v1763
        %v1821 = vpop.f32.mrb[0].mxu0
        %v1822 = vadd.f32 0.0, %v1821
        %v1823 = vpop.f32.mrb[0].mxu0
        %v1824 = vpop.f32.mrb[0].mxu0
        %v1825 = vadd.f32 0.0, %v1824
        %v1826 = vpop.f32.mrb[0].mxu0
        %1827 = vmatprep.mubr.bf16.mxu0 %v1779
        %1828 = vmatmul.mubr.bf16.gmra.mrb[0].mxu0 %v1765
        %v1829 = vpop.f32.mrb[0].mxu0
        %v1830 = vadd.f32 0.0, %v1829
        %v1831 = vpop.f32.mrb[0].mxu0
        %v1832 = vpop.f32.mrb[0].mxu0
        %v1833 = vadd.f32 0.0, %v1832
        %v1834 = vpop.f32.mrb[0].mxu0
        %1835 = vmatprep.mubr.bf16.mxu0 %v1782
        %1836 = vmatmul.mubr.bf16.gmra.mrb[0].mxu0 %v1767
        %v1837 = vpop.f32.mrb[0].mxu0
        %v1838 = vadd.f32 0.0, %v1837
        %v1839 = vpop.f32.mrb[0].mxu0
        %v1840 = vpop.f32.mrb[0].mxu0
        %v1841 = vadd.f32 0.0, %v1840
        %v1842 = vpop.f32.mrb[0].mxu0
        %1843 = vmatprep.mubr.bf16.mxu0 %v1785
        %1844 = vmatmul.mubr.bf16.gmra.mrb[0].mxu0 %v1769
        %v1845 = vpop.f32.mrb[0].mxu0
        %v1846 = vadd.f32 0.0, %v1845
        %v1847 = vpop.f32.mrb[0].mxu0
        %v1848 = vpop.f32.mrb[0].mxu0
        %v1849 = vadd.f32 0.0, %v1848
        %v1850 = vpop.f32.mrb[0].mxu0
        %1851 = vdwg.mxu0
        %v1852 = vmul.f32 %v1822, 0.2
        %v1853 = vmul.f32 %v1825, 0.2
        %v1854 = vmul.f32 %v1830, 0.2
        %v1855 = vmul.f32 %v1833, 0.2
        %v1856 = vmul.f32 %v1838, 0.2
        %v1857 = vmul.f32 %v1841, 0.2
        %v1858 = vmul.f32 %v1846, 0.2
        %v1859 = vmul.f32 %v1849, 0.2
        %v1860 = vmax.f32 %v1822, %v1852
        %v1861 = vmax.f32 %v1825, %v1853
        %v1862 = vmax.f32 %v1830, %v1854
        %v1863 = vmax.f32 %v1833, %v1855
        %v1864 = vmax.f32 %v1838, %v1856
        %v1865 = vmax.f32 %v1841, %v1857
        %v1866 = vmax.f32 %v1846, %v1858
        %v1867 = vmax.f32 %v1849, %v1859
        %1876 = vrot.lane.b32.xlu0 %v1860, 1
        %v1877 = vpop.permute.xlu0 %1876
        %1878 = vrot.lane.b32.xlu0 %v1861, 1
        %v1879 = vpop.permute.xlu0 %1878
        %1880 = vrot.lane.b32.xlu0 %v1862, 1
        %v1881 = vpop.permute.xlu0 %1880
        %1882 = vrot.lane.b32.xlu0 %v1863, 1
        %v1883 = vpop.permute.xlu0 %1882
        %1884 = vrot.lane.b32.xlu0 %v1864, 1
        %v1885 = vpop.permute.xlu0 %1884
        %1886 = vrot.lane.b32.xlu0 %v1865, 1
        %v1887 = vpop.permute.xlu0 %1886
        %1888 = vrot.lane.b32.xlu0 %v1866, 1
        %v1889 = vpop.permute.xlu0 %1888
        %1890 = vrot.lane.b32.xlu0 %v1867, 1
        %v1891 = vpop.permute.xlu0 %1890
        %v1900 = vsel %vm344, 0.0, %v1877
        %v1901 = vsel %vm344, 0.0, %v1879
        %v1902 = vsel %vm344, 0.0, %v1881
        %v1903 = vsel %vm344, 0.0, %v1883
        %v1904 = vsel %vm344, 0.0, %v1885
        %v1905 = vsel %vm344, 0.0, %v1887
        %v1906 = vsel %vm344, 0.0, %v1889
        %v1907 = vsel %vm344, 0.0, %v1891
        %1908 = vrot.lane.b32.xlu0 %v1860, 127
        %v1909 = vpop.permute.xlu0 %1908
        %1910 = vrot.lane.b32.xlu0 %v1861, 127
        %v1911 = vpop.permute.xlu0 %1910
        %1912 = vrot.lane.b32.xlu0 %v1862, 127
        %v1913 = vpop.permute.xlu0 %1912
        %1914 = vrot.lane.b32.xlu0 %v1863, 127
        %v1915 = vpop.permute.xlu0 %1914
        %1916 = vrot.lane.b32.xlu0 %v1864, 127
        %v1917 = vpop.permute.xlu0 %1916
        %1918 = vrot.lane.b32.xlu0 %v1865, 127
        %v1919 = vpop.permute.xlu0 %1918
        %1920 = vrot.lane.b32.xlu0 %v1866, 127
        %v1921 = vpop.permute.xlu0 %1920
        %1922 = vrot.lane.b32.xlu0 %v1867, 127
        %v1923 = vpop.permute.xlu0 %1922
        %v1932 = vsel %vm377, %v1909, 0.0
        %v1933 = vsel %vm377, %v1911, 0.0
        %v1934 = vsel %vm377, %v1913, 0.0
        %v1935 = vsel %vm377, %v1915, 0.0
        %v1936 = vsel %vm377, %v1917, 0.0
        %v1937 = vsel %vm377, %v1919, 0.0
        %v1938 = vsel %vm377, %v1921, 0.0
        %v1939 = vsel %vm377, %v1923, 0.0
        %v1940 = vpack.c.bf16 %v1901, %v1900
        %v1941 = vpack.c.bf16 %v1903, %v1902
        %v1942 = vpack.c.bf16 %v1905, %v1904
        %v1943 = vpack.c.bf16 %v1907, %v1906
        %v1944 = vpack.c.bf16 %v1861, %v1860
        %v1945 = vpack.c.bf16 %v1863, %v1862
        %v1946 = vpack.c.bf16 %v1865, %v1864
        %v1947 = vpack.c.bf16 %v1867, %v1866
        %v1948 = vpack.c.bf16 %v1933, %v1932
        %v1949 = vpack.c.bf16 %v1935, %v1934
        %v1950 = vpack.c.bf16 %v1937, %v1936
        %v1951 = vpack.c.bf16 %v1939, %v1938
        %s1952 = scalar_lea.vmem %s2, 448
        %v1953 = vld [vmem:[%s1952] sm:$0xff]
        %v1954 = vld [vmem:[%s1952 + $0x8] sm:$0xff]
        %v1955 = vld [vmem:[%s1952 + $0x10] sm:$0xff]
        %v1956 = vld [vmem:[%s1952 + $0x18] sm:$0xff]
        %v1957 = vld [vmem:[%s1952 + $0x20] sm:$0xff]
        %v1958 = vld [vmem:[%s1952 + $0x28] sm:$0xff]
        %v1959 = vld [vmem:[%s1952 + $0x30] sm:$0xff]
        %v1960 = vld [vmem:[%s1952 + $0x38] sm:$0xff]
        %v1969 = vunpack.c.l.b16 %v1953
        %v1970 = vunpack.c.h.b16 %v1953
        %v1971 = vunpack.c.l.b16 %v1954
        %v1972 = vunpack.c.h.b16 %v1954
        %v1973 = vunpack.c.l.b16 %v1955
        %v1974 = vunpack.c.h.b16 %v1955
        %v1975 = vunpack.c.l.b16 %v1956
        %v1976 = vunpack.c.h.b16 %v1956
        %v1977 = vunpack.c.l.b16 %v1957
        %v1978 = vunpack.c.h.b16 %v1957
        %v1979 = vunpack.c.l.b16 %v1958
        %v1980 = vunpack.c.h.b16 %v1958
        %v1981 = vunpack.c.l.b16 %v1959
        %v1982 = vunpack.c.h.b16 %v1959
        %v1983 = vunpack.c.l.b16 %v1960
        %v1984 = vunpack.c.h.b16 %v1960
        %v1985 = vpack.c.b16 %v1971, %v1969
        %v1986 = vpack.c.b16 %v1972, %v1970
        %v1987 = vpack.c.b16 %v1975, %v1973
        %v1988 = vpack.c.b16 %v1976, %v1974
        %v1989 = vpack.c.b16 %v1979, %v1977
        %v1990 = vpack.c.b16 %v1980, %v1978
        %v1991 = vpack.c.b16 %v1983, %v1981
        %v1992 = vpack.c.b16 %v1984, %v1982
        %v1998 = vsel %vm442, %v1986, 0
        %v2001 = vsel %vm442, %v1988, 0
        %v2004 = vsel %vm442, %v1990, 0
        %v2007 = vsel %vm442, %v1992, 0
        %2009 = vmatprep.subr.bf16.mxu0 0
        %2010 = vmatpush1.bf16.msra.mxu0 %v1940
        %2011 = vmatprep.subr.bf16.mxu0 0
        %2012 = vmatpush1.bf16.msra.mxu0 %v1941
        %2013 = vmatprep.subr.bf16.mxu0 0
        %2014 = vmatpush1.bf16.msra.mxu0 %v1942
        %2015 = vmatprep.subr.bf16.mxu0 0
        %2016 = vmatpush1.bf16.msra.mxu0 %v1943
        %2017 = vmatprep.subr.bf16.mxu0 0
        %2018 = vmatpush1.bf16.msra.mxu0 %v1944
        %2019 = vmatprep.subr.bf16.mxu0 0
        %2020 = vmatpush1.bf16.msra.mxu0 %v1945
        %2021 = vmatprep.subr.bf16.mxu0 0
        %2022 = vmatpush1.bf16.msra.mxu0 %v1946
        %2023 = vmatprep.subr.bf16.mxu0 0
        %2024 = vmatpush1.bf16.msra.mxu0 %v1947
        %2025 = vmatprep.subr.bf16.mxu0 0
        %2026 = vmatpush1.bf16.msra.mxu0 %v1948
        %2027 = vmatprep.subr.bf16.mxu0 0
        %2028 = vmatpush1.bf16.msra.mxu0 %v1949
        %2029 = vmatprep.subr.bf16.mxu0 0
        %2030 = vmatpush1.bf16.msra.mxu0 %v1950
        %2031 = vmatprep.subr.bf16.mxu0 0
        %2032 = vmatpush1.bf16.msra.mxu0 %v1951
        %2033 = vmatprep.subr.bf16.mxu0 0
        %2034 = vmatpush1.bf16.msra.mxu0 0
        %2035 = vmatprep.subr.bf16.mxu0 0
        %2036 = vmatpush1.bf16.msra.mxu0 0
        %2037 = vmatprep.subr.bf16.mxu0 0
        %2038 = vmatpush1.bf16.msra.mxu0 0
        %2039 = vmatprep.subr.bf16.mxu0 0
        %2040 = vmatpush1.bf16.msra.mxu0 0
        %2041 = vmatprep.mubr.bf16.mxu0 %v1998
        %2042 = vmatmul.mubr.bf16.gmra.mrb[0].mxu0 %v1985
        %v2043 = vpop.f32.mrb[0].mxu0
        %v2044 = vadd.f32 0.0, %v2043
        %v2045 = vpop.f32.mrb[0].mxu0
        %v2046 = vpop.f32.mrb[0].mxu0
        %v2047 = vadd.f32 0.0, %v2046
        %v2048 = vpop.f32.mrb[0].mxu0
        %2049 = vmatprep.mubr.bf16.mxu0 %v2001
        %2050 = vmatmul.mubr.bf16.gmra.mrb[0].mxu0 %v1987
        %v2051 = vpop.f32.mrb[0].mxu0
        %v2052 = vadd.f32 0.0, %v2051
        %v2053 = vpop.f32.mrb[0].mxu0
        %v2054 = vpop.f32.mrb[0].mxu0
        %v2055 = vadd.f32 0.0, %v2054
        %v2056 = vpop.f32.mrb[0].mxu0
        %2057 = vmatprep.mubr.bf16.mxu0 %v2004
        %2058 = vmatmul.mubr.bf16.gmra.mrb[0].mxu0 %v1989
        %v2059 = vpop.f32.mrb[0].mxu0
        %v2060 = vadd.f32 0.0, %v2059
        %v2061 = vpop.f32.mrb[0].mxu0
        %v2062 = vpop.f32.mrb[0].mxu0
        %v2063 = vadd.f32 0.0, %v2062
        %v2064 = vpop.f32.mrb[0].mxu0
        %2065 = vmatprep.mubr.bf16.mxu0 %v2007
        %2066 = vmatmul.mubr.bf16.gmra.mrb[0].mxu0 %v1991
        %v2067 = vpop.f32.mrb[0].mxu0
        %v2068 = vadd.f32 0.0, %v2067
        %v2069 = vpop.f32.mrb[0].mxu0
        %v2070 = vpop.f32.mrb[0].mxu0
        %v2071 = vadd.f32 0.0, %v2070
        %v2072 = vpop.f32.mrb[0].mxu0
        %2073 = vdwg.mxu0
        %v2074 = vmul.f32 %v2044, 0.2
        %v2075 = vmul.f32 %v2047, 0.2
        %v2076 = vmul.f32 %v2052, 0.2
        %v2077 = vmul.f32 %v2055, 0.2
        %v2078 = vmul.f32 %v2060, 0.2
        %v2079 = vmul.f32 %v2063, 0.2
        %v2080 = vmul.f32 %v2068, 0.2
        %v2081 = vmul.f32 %v2071, 0.2
        %v2082 = vmax.f32 %v2044, %v2074
        %v2083 = vmax.f32 %v2047, %v2075
        %v2084 = vmax.f32 %v2052, %v2076
        %v2085 = vmax.f32 %v2055, %v2077
        %v2086 = vmax.f32 %v2060, %v2078
        %v2087 = vmax.f32 %v2063, %v2079
        %v2088 = vmax.f32 %v2068, %v2080
        %v2089 = vmax.f32 %v2071, %v2081
        %2098 = vrot.lane.b32.xlu0 %v2082, 1
        %v2099 = vpop.permute.xlu0 %2098
        %2100 = vrot.lane.b32.xlu0 %v2083, 1
        %v2101 = vpop.permute.xlu0 %2100
        %2102 = vrot.lane.b32.xlu0 %v2084, 1
        %v2103 = vpop.permute.xlu0 %2102
        %2104 = vrot.lane.b32.xlu0 %v2085, 1
        %v2105 = vpop.permute.xlu0 %2104
        %2106 = vrot.lane.b32.xlu0 %v2086, 1
        %v2107 = vpop.permute.xlu0 %2106
        %2108 = vrot.lane.b32.xlu0 %v2087, 1
        %v2109 = vpop.permute.xlu0 %2108
        %2110 = vrot.lane.b32.xlu0 %v2088, 1
        %v2111 = vpop.permute.xlu0 %2110
        %2112 = vrot.lane.b32.xlu0 %v2089, 1
        %v2113 = vpop.permute.xlu0 %2112
        %v2122 = vsel %vm344, 0.0, %v2099
        %v2123 = vsel %vm344, 0.0, %v2101
        %v2124 = vsel %vm344, 0.0, %v2103
        %v2125 = vsel %vm344, 0.0, %v2105
        %v2126 = vsel %vm344, 0.0, %v2107
        %v2127 = vsel %vm344, 0.0, %v2109
        %v2128 = vsel %vm344, 0.0, %v2111
        %v2129 = vsel %vm344, 0.0, %v2113
        %2130 = vrot.lane.b32.xlu0 %v2082, 127
        %v2131 = vpop.permute.xlu0 %2130
        %2132 = vrot.lane.b32.xlu0 %v2083, 127
        %v2133 = vpop.permute.xlu0 %2132
        %2134 = vrot.lane.b32.xlu0 %v2084, 127
        %v2135 = vpop.permute.xlu0 %2134
        %2136 = vrot.lane.b32.xlu0 %v2085, 127
        %v2137 = vpop.permute.xlu0 %2136
        %2138 = vrot.lane.b32.xlu0 %v2086, 127
        %v2139 = vpop.permute.xlu0 %2138
        %2140 = vrot.lane.b32.xlu0 %v2087, 127
        %v2141 = vpop.permute.xlu0 %2140
        %2142 = vrot.lane.b32.xlu0 %v2088, 127
        %v2143 = vpop.permute.xlu0 %2142
        %2144 = vrot.lane.b32.xlu0 %v2089, 127
        %v2145 = vpop.permute.xlu0 %2144
        %v2154 = vsel %vm377, %v2131, 0.0
        %v2155 = vsel %vm377, %v2133, 0.0
        %v2156 = vsel %vm377, %v2135, 0.0
        %v2157 = vsel %vm377, %v2137, 0.0
        %v2158 = vsel %vm377, %v2139, 0.0
        %v2159 = vsel %vm377, %v2141, 0.0
        %v2160 = vsel %vm377, %v2143, 0.0
        %v2161 = vsel %vm377, %v2145, 0.0
        %v2162 = vpack.c.bf16 %v2123, %v2122
        %v2163 = vpack.c.bf16 %v2125, %v2124
        %v2164 = vpack.c.bf16 %v2127, %v2126
        %v2165 = vpack.c.bf16 %v2129, %v2128
        %v2166 = vpack.c.bf16 %v2083, %v2082
        %v2167 = vpack.c.bf16 %v2085, %v2084
        %v2168 = vpack.c.bf16 %v2087, %v2086
        %v2169 = vpack.c.bf16 %v2089, %v2088
        %v2170 = vpack.c.bf16 %v2155, %v2154
        %v2171 = vpack.c.bf16 %v2157, %v2156
        %v2172 = vpack.c.bf16 %v2159, %v2158
        %v2173 = vpack.c.bf16 %v2161, %v2160
        %s2174 = scalar_lea.vmem %s2, 512
        %v2175 = vld [vmem:[%s2174] sm:$0xff]
        %v2176 = vld [vmem:[%s2174 + $0x8] sm:$0xff]
        %v2177 = vld [vmem:[%s2174 + $0x10] sm:$0xff]
        %v2178 = vld [vmem:[%s2174 + $0x18] sm:$0xff]
        %v2179 = vld [vmem:[%s2174 + $0x20] sm:$0xff]
        %v2180 = vld [vmem:[%s2174 + $0x28] sm:$0xff]
        %v2181 = vld [vmem:[%s2174 + $0x30] sm:$0xff]
        %v2182 = vld [vmem:[%s2174 + $0x38] sm:$0xff]
        %v2191 = vunpack.c.l.b16 %v2175
        %v2192 = vunpack.c.h.b16 %v2175
        %v2193 = vunpack.c.l.b16 %v2176
        %v2194 = vunpack.c.h.b16 %v2176
        %v2195 = vunpack.c.l.b16 %v2177
        %v2196 = vunpack.c.h.b16 %v2177
        %v2197 = vunpack.c.l.b16 %v2178
        %v2198 = vunpack.c.h.b16 %v2178
        %v2199 = vunpack.c.l.b16 %v2179
        %v2200 = vunpack.c.h.b16 %v2179
        %v2201 = vunpack.c.l.b16 %v2180
        %v2202 = vunpack.c.h.b16 %v2180
        %v2203 = vunpack.c.l.b16 %v2181
        %v2204 = vunpack.c.h.b16 %v2181
        %v2205 = vunpack.c.l.b16 %v2182
        %v2206 = vunpack.c.h.b16 %v2182
        %v2207 = vpack.c.b16 %v2193, %v2191
        %v2208 = vpack.c.b16 %v2194, %v2192
        %v2209 = vpack.c.b16 %v2197, %v2195
        %v2210 = vpack.c.b16 %v2198, %v2196
        %v2211 = vpack.c.b16 %v2201, %v2199
        %v2212 = vpack.c.b16 %v2202, %v2200
        %v2213 = vpack.c.b16 %v2205, %v2203
        %v2214 = vpack.c.b16 %v2206, %v2204
        %v2220 = vsel %vm442, %v2208, 0
        %v2223 = vsel %vm442, %v2210, 0
        %v2226 = vsel %vm442, %v2212, 0
        %v2229 = vsel %vm442, %v2214, 0
        %2231 = vmatprep.subr.bf16.mxu0 0
        %2232 = vmatpush1.bf16.msra.mxu0 %v2162
        %2233 = vmatprep.subr.bf16.mxu0 0
        %2234 = vmatpush1.bf16.msra.mxu0 %v2163
        %2235 = vmatprep.subr.bf16.mxu0 0
        %2236 = vmatpush1.bf16.msra.mxu0 %v2164
        %2237 = vmatprep.subr.bf16.mxu0 0
        %2238 = vmatpush1.bf16.msra.mxu0 %v2165
        %2239 = vmatprep.subr.bf16.mxu0 0
        %2240 = vmatpush1.bf16.msra.mxu0 %v2166
        %2241 = vmatprep.subr.bf16.mxu0 0
        %2242 = vmatpush1.bf16.msra.mxu0 %v2167
        %2243 = vmatprep.subr.bf16.mxu0 0
        %2244 = vmatpush1.bf16.msra.mxu0 %v2168
        %2245 = vmatprep.subr.bf16.mxu0 0
        %2246 = vmatpush1.bf16.msra.mxu0 %v2169
        %2247 = vmatprep.subr.bf16.mxu0 0
        %2248 = vmatpush1.bf16.msra.mxu0 %v2170
        %2249 = vmatprep.subr.bf16.mxu0 0
        %2250 = vmatpush1.bf16.msra.mxu0 %v2171
        %2251 = vmatprep.subr.bf16.mxu0 0
        %2252 = vmatpush1.bf16.msra.mxu0 %v2172
        %2253 = vmatprep.subr.bf16.mxu0 0
        %2254 = vmatpush1.bf16.msra.mxu0 %v2173
        %2255 = vmatprep.subr.bf16.mxu0 0
        %2256 = vmatpush1.bf16.msra.mxu0 0
        %2257 = vmatprep.subr.bf16.mxu0 0
        %2258 = vmatpush1.bf16.msra.mxu0 0
        %2259 = vmatprep.subr.bf16.mxu0 0
        %2260 = vmatpush1.bf16.msra.mxu0 0
        %2261 = vmatprep.subr.bf16.mxu0 0
        %2262 = vmatpush1.bf16.msra.mxu0 0
        %2263 = vmatprep.mubr.bf16.mxu0 %v2220
        %2264 = vmatmul.mubr.bf16.gmra.mrb[0].mxu0 %v2207
        %v2265 = vpop.f32.mrb[0].mxu0
        %v2266 = vadd.f32 0.0, %v2265
        %v2267 = vpop.f32.mrb[0].mxu0
        %v2268 = vpop.f32.mrb[0].mxu0
        %v2269 = vadd.f32 0.0, %v2268
        %v2270 = vpop.f32.mrb[0].mxu0
        %2271 = vmatprep.mubr.bf16.mxu0 %v2223
        %2272 = vmatmul.mubr.bf16.gmra.mrb[0].mxu0 %v2209
        %v2273 = vpop.f32.mrb[0].mxu0
        %v2274 = vadd.f32 0.0, %v2273
        %v2275 = vpop.f32.mrb[0].mxu0
        %v2276 = vpop.f32.mrb[0].mxu0
        %v2277 = vadd.f32 0.0, %v2276
        %v2278 = vpop.f32.mrb[0].mxu0
        %2279 = vmatprep.mubr.bf16.mxu0 %v2226
        %2280 = vmatmul.mubr.bf16.gmra.mrb[0].mxu0 %v2211
        %v2281 = vpop.f32.mrb[0].mxu0
        %v2282 = vadd.f32 0.0, %v2281
        %v2283 = vpop.f32.mrb[0].mxu0
        %v2284 = vpop.f32.mrb[0].mxu0
        %v2285 = vadd.f32 0.0, %v2284
        %v2286 = vpop.f32.mrb[0].mxu0
        %2287 = vmatprep.mubr.bf16.mxu0 %v2229
        %2288 = vmatmul.mubr.bf16.gmra.mrb[0].mxu0 %v2213
        %v2289 = vpop.f32.mrb[0].mxu0
        %v2290 = vadd.f32 0.0, %v2289
        %v2291 = vpop.f32.mrb[0].mxu0
        %v2292 = vpop.f32.mrb[0].mxu0
        %v2293 = vadd.f32 0.0, %v2292
        %v2294 = vpop.f32.mrb[0].mxu0
        %2295 = vdwg.mxu0
        %v2296 = vmul.f32 %v2266, 0.2
        %v2297 = vmul.f32 %v2269, 0.2
        %v2298 = vmul.f32 %v2274, 0.2
        %v2299 = vmul.f32 %v2277, 0.2
        %v2300 = vmul.f32 %v2282, 0.2
        %v2301 = vmul.f32 %v2285, 0.2
        %v2302 = vmul.f32 %v2290, 0.2
        %v2303 = vmul.f32 %v2293, 0.2
        %v2304 = vmax.f32 %v2266, %v2296
        %v2305 = vmax.f32 %v2269, %v2297
        %v2306 = vmax.f32 %v2274, %v2298
        %v2307 = vmax.f32 %v2277, %v2299
        %v2308 = vmax.f32 %v2282, %v2300
        %v2309 = vmax.f32 %v2285, %v2301
        %v2310 = vmax.f32 %v2290, %v2302
        %v2311 = vmax.f32 %v2293, %v2303
        %2320 = vrot.lane.b32.xlu0 %v2304, 1
        %v2321 = vpop.permute.xlu0 %2320
        %2322 = vrot.lane.b32.xlu0 %v2305, 1
        %v2323 = vpop.permute.xlu0 %2322
        %2324 = vrot.lane.b32.xlu0 %v2306, 1
        %v2325 = vpop.permute.xlu0 %2324
        %2326 = vrot.lane.b32.xlu0 %v2307, 1
        %v2327 = vpop.permute.xlu0 %2326
        %2328 = vrot.lane.b32.xlu0 %v2308, 1
        %v2329 = vpop.permute.xlu0 %2328
        %2330 = vrot.lane.b32.xlu0 %v2309, 1
        %v2331 = vpop.permute.xlu0 %2330
        %2332 = vrot.lane.b32.xlu0 %v2310, 1
        %v2333 = vpop.permute.xlu0 %2332
        %2334 = vrot.lane.b32.xlu0 %v2311, 1
        %v2335 = vpop.permute.xlu0 %2334
        %v2344 = vsel %vm344, 0.0, %v2321
        %v2345 = vsel %vm344, 0.0, %v2323
        %v2346 = vsel %vm344, 0.0, %v2325
        %v2347 = vsel %vm344, 0.0, %v2327
        %v2348 = vsel %vm344, 0.0, %v2329
        %v2349 = vsel %vm344, 0.0, %v2331
        %v2350 = vsel %vm344, 0.0, %v2333
        %v2351 = vsel %vm344, 0.0, %v2335
        %2352 = vrot.lane.b32.xlu0 %v2304, 127
        %v2353 = vpop.permute.xlu0 %2352
        %2354 = vrot.lane.b32.xlu0 %v2305, 127
        %v2355 = vpop.permute.xlu0 %2354
        %2356 = vrot.lane.b32.xlu0 %v2306, 127
        %v2357 = vpop.permute.xlu0 %2356
        %2358 = vrot.lane.b32.xlu0 %v2307, 127
        %v2359 = vpop.permute.xlu0 %2358
        %2360 = vrot.lane.b32.xlu0 %v2308, 127
        %v2361 = vpop.permute.xlu0 %2360
        %2362 = vrot.lane.b32.xlu0 %v2309, 127
        %v2363 = vpop.permute.xlu0 %2362
        %2364 = vrot.lane.b32.xlu0 %v2310, 127
        %v2365 = vpop.permute.xlu0 %2364
        %2366 = vrot.lane.b32.xlu0 %v2311, 127
        %v2367 = vpop.permute.xlu0 %2366
        %v2376 = vsel %vm377, %v2353, 0.0
        %v2377 = vsel %vm377, %v2355, 0.0
        %v2378 = vsel %vm377, %v2357, 0.0
        %v2379 = vsel %vm377, %v2359, 0.0
        %v2380 = vsel %vm377, %v2361, 0.0
        %v2381 = vsel %vm377, %v2363, 0.0
        %v2382 = vsel %vm377, %v2365, 0.0
        %v2383 = vsel %vm377, %v2367, 0.0
        %v2384 = vpack.c.bf16 %v2345, %v2344
        %v2385 = vpack.c.bf16 %v2347, %v2346
        %v2386 = vpack.c.bf16 %v2349, %v2348
        %v2387 = vpack.c.bf16 %v2351, %v2350
        %v2388 = vpack.c.bf16 %v2305, %v2304
        %v2389 = vpack.c.bf16 %v2307, %v2306
        %v2390 = vpack.c.bf16 %v2309, %v2308
        %v2391 = vpack.c.bf16 %v2311, %v2310
        %v2392 = vpack.c.bf16 %v2377, %v2376
        %v2393 = vpack.c.bf16 %v2379, %v2378
        %v2394 = vpack.c.bf16 %v2381, %v2380
        %v2395 = vpack.c.bf16 %v2383, %v2382
        %s2396 = scalar_lea.vmem %s2, 576
        %v2397 = vld [vmem:[%s2396] sm:$0xff]
        %v2398 = vld [vmem:[%s2396 + $0x8] sm:$0xff]
        %v2399 = vld [vmem:[%s2396 + $0x10] sm:$0xff]
        %v2400 = vld [vmem:[%s2396 + $0x18] sm:$0xff]
        %v2401 = vld [vmem:[%s2396 + $0x20] sm:$0xff]
        %v2402 = vld [vmem:[%s2396 + $0x28] sm:$0xff]
        %v2403 = vld [vmem:[%s2396 + $0x30] sm:$0xff]
        %v2404 = vld [vmem:[%s2396 + $0x38] sm:$0xff]
        %v2413 = vunpack.c.l.b16 %v2397
        %v2414 = vunpack.c.h.b16 %v2397
        %v2415 = vunpack.c.l.b16 %v2398
        %v2416 = vunpack.c.h.b16 %v2398
        %v2417 = vunpack.c.l.b16 %v2399
        %v2418 = vunpack.c.h.b16 %v2399
        %v2419 = vunpack.c.l.b16 %v2400
        %v2420 = vunpack.c.h.b16 %v2400
        %v2421 = vunpack.c.l.b16 %v2401
        %v2422 = vunpack.c.h.b16 %v2401
        %v2423 = vunpack.c.l.b16 %v2402
        %v2424 = vunpack.c.h.b16 %v2402
        %v2425 = vunpack.c.l.b16 %v2403
        %v2426 = vunpack.c.h.b16 %v2403
        %v2427 = vunpack.c.l.b16 %v2404
        %v2428 = vunpack.c.h.b16 %v2404
        %v2429 = vpack.c.b16 %v2415, %v2413
        %v2430 = vpack.c.b16 %v2416, %v2414
        %v2431 = vpack.c.b16 %v2419, %v2417
        %v2432 = vpack.c.b16 %v2420, %v2418
        %v2433 = vpack.c.b16 %v2423, %v2421
        %v2434 = vpack.c.b16 %v2424, %v2422
        %v2435 = vpack.c.b16 %v2427, %v2425
        %v2436 = vpack.c.b16 %v2428, %v2426
        %v2442 = vsel %vm442, %v2430, 0
        %v2445 = vsel %vm442, %v2432, 0
        %v2448 = vsel %vm442, %v2434, 0
        %v2451 = vsel %vm442, %v2436, 0
        %2453 = vmatprep.subr.bf16.mxu0 0
        %2454 = vmatpush1.bf16.msra.mxu0 %v2384
        %2455 = vmatprep.subr.bf16.mxu0 0
        %2456 = vmatpush1.bf16.msra.mxu0 %v2385
        %2457 = vmatprep.subr.bf16.mxu0 0
        %2458 = vmatpush1.bf16.msra.mxu0 %v2386
        %2459 = vmatprep.subr.bf16.mxu0 0
        %2460 = vmatpush1.bf16.msra.mxu0 %v2387
        %2461 = vmatprep.subr.bf16.mxu0 0
        %2462 = vmatpush1.bf16.msra.mxu0 %v2388
        %2463 = vmatprep.subr.bf16.mxu0 0
        %2464 = vmatpush1.bf16.msra.mxu0 %v2389
        %2465 = vmatprep.subr.bf16.mxu0 0
        %2466 = vmatpush1.bf16.msra.mxu0 %v2390
        %2467 = vmatprep.subr.bf16.mxu0 0
        %2468 = vmatpush1.bf16.msra.mxu0 %v2391
        %2469 = vmatprep.subr.bf16.mxu0 0
        %2470 = vmatpush1.bf16.msra.mxu0 %v2392
        %2471 = vmatprep.subr.bf16.mxu0 0
        %2472 = vmatpush1.bf16.msra.mxu0 %v2393
        %2473 = vmatprep.subr.bf16.mxu0 0
        %2474 = vmatpush1.bf16.msra.mxu0 %v2394
        %2475 = vmatprep.subr.bf16.mxu0 0
        %2476 = vmatpush1.bf16.msra.mxu0 %v2395
        %2477 = vmatprep.subr.bf16.mxu0 0
        %2478 = vmatpush1.bf16.msra.mxu0 0
        %2479 = vmatprep.subr.bf16.mxu0 0
        %2480 = vmatpush1.bf16.msra.mxu0 0
        %2481 = vmatprep.subr.bf16.mxu0 0
        %2482 = vmatpush1.bf16.msra.mxu0 0
        %2483 = vmatprep.subr.bf16.mxu0 0
        %2484 = vmatpush1.bf16.msra.mxu0 0
        %2485 = vmatprep.mubr.bf16.mxu0 %v2442
        %2486 = vmatmul.mubr.bf16.gmra.mrb[0].mxu0 %v2429
        %v2487 = vpop.f32.mrb[0].mxu0
        %v2488 = vadd.f32 0.0, %v2487
        %v2489 = vpop.f32.mrb[0].mxu0
        %v2490 = vpop.f32.mrb[0].mxu0
        %v2491 = vadd.f32 0.0, %v2490
        %v2492 = vpop.f32.mrb[0].mxu0
        %2493 = vmatprep.mubr.bf16.mxu0 %v2445
        %2494 = vmatmul.mubr.bf16.gmra.mrb[0].mxu0 %v2431
        %v2495 = vpop.f32.mrb[0].mxu0
        %v2496 = vadd.f32 0.0, %v2495
        %v2497 = vpop.f32.mrb[0].mxu0
        %v2498 = vpop.f32.mrb[0].mxu0
        %v2499 = vadd.f32 0.0, %v2498
        %v2500 = vpop.f32.mrb[0].mxu0
        %2501 = vmatprep.mubr.bf16.mxu0 %v2448
        %2502 = vmatmul.mubr.bf16.gmra.mrb[0].mxu0 %v2433
        %v2503 = vpop.f32.mrb[0].mxu0
        %v2504 = vadd.f32 0.0, %v2503
        %v2505 = vpop.f32.mrb[0].mxu0
        %v2506 = vpop.f32.mrb[0].mxu0
        %v2507 = vadd.f32 0.0, %v2506
        %v2508 = vpop.f32.mrb[0].mxu0
        %2509 = vmatprep.mubr.bf16.mxu0 %v2451
        %2510 = vmatmul.mubr.bf16.gmra.mrb[0].mxu0 %v2435
        %v2511 = vpop.f32.mrb[0].mxu0
        %v2512 = vadd.f32 0.0, %v2511
        %v2513 = vpop.f32.mrb[0].mxu0
        %v2514 = vpop.f32.mrb[0].mxu0
        %v2515 = vadd.f32 0.0, %v2514
        %v2516 = vpop.f32.mrb[0].mxu0
        %2517 = vdwg.mxu0
        %v2518 = vmul.f32 %v2488, 0.2
        %v2519 = vmul.f32 %v2491, 0.2
        %v2520 = vmul.f32 %v2496, 0.2
        %v2521 = vmul.f32 %v2499, 0.2
        %v2522 = vmul.f32 %v2504, 0.2
        %v2523 = vmul.f32 %v2507, 0.2
        %v2524 = vmul.f32 %v2512, 0.2
        %v2525 = vmul.f32 %v2515, 0.2
        %v2526 = vmax.f32 %v2488, %v2518
        %v2527 = vmax.f32 %v2491, %v2519
        %v2528 = vmax.f32 %v2496, %v2520
        %v2529 = vmax.f32 %v2499, %v2521
        %v2530 = vmax.f32 %v2504, %v2522
        %v2531 = vmax.f32 %v2507, %v2523
        %v2532 = vmax.f32 %v2512, %v2524
        %v2533 = vmax.f32 %v2515, %v2525
        %2542 = vrot.lane.b32.xlu0 %v2526, 1
        %v2543 = vpop.permute.xlu0 %2542
        %2544 = vrot.lane.b32.xlu0 %v2527, 1
        %v2545 = vpop.permute.xlu0 %2544
        %2546 = vrot.lane.b32.xlu0 %v2528, 1
        %v2547 = vpop.permute.xlu0 %2546
        %2548 = vrot.lane.b32.xlu0 %v2529, 1
        %v2549 = vpop.permute.xlu0 %2548
        %2550 = vrot.lane.b32.xlu0 %v2530, 1
        %v2551 = vpop.permute.xlu0 %2550
        %2552 = vrot.lane.b32.xlu0 %v2531, 1
        %v2553 = vpop.permute.xlu0 %2552
        %2554 = vrot.lane.b32.xlu0 %v2532, 1
        %v2555 = vpop.permute.xlu0 %2554
        %2556 = vrot.lane.b32.xlu0 %v2533, 1
        %v2557 = vpop.permute.xlu0 %2556
        %v2566 = vsel %vm344, 0.0, %v2543
        %v2567 = vsel %vm344, 0.0, %v2545
        %v2568 = vsel %vm344, 0.0, %v2547
        %v2569 = vsel %vm344, 0.0, %v2549
        %v2570 = vsel %vm344, 0.0, %v2551
        %v2571 = vsel %vm344, 0.0, %v2553
        %v2572 = vsel %vm344, 0.0, %v2555
        %v2573 = vsel %vm344, 0.0, %v2557
        %2574 = vrot.lane.b32.xlu0 %v2526, 127
        %v2575 = vpop.permute.xlu0 %2574
        %2576 = vrot.lane.b32.xlu0 %v2527, 127
        %v2577 = vpop.permute.xlu0 %2576
        %2578 = vrot.lane.b32.xlu0 %v2528, 127
        %v2579 = vpop.permute.xlu0 %2578
        %2580 = vrot.lane.b32.xlu0 %v2529, 127
        %v2581 = vpop.permute.xlu0 %2580
        %2582 = vrot.lane.b32.xlu0 %v2530, 127
        %v2583 = vpop.permute.xlu0 %2582
        %2584 = vrot.lane.b32.xlu0 %v2531, 127
        %v2585 = vpop.permute.xlu0 %2584
        %2586 = vrot.lane.b32.xlu0 %v2532, 127
        %v2587 = vpop.permute.xlu0 %2586
        %2588 = vrot.lane.b32.xlu0 %v2533, 127
        %v2589 = vpop.permute.xlu0 %2588
        %v2598 = vsel %vm377, %v2575, 0.0
        %v2599 = vsel %vm377, %v2577, 0.0
        %v2600 = vsel %vm377, %v2579, 0.0
        %v2601 = vsel %vm377, %v2581, 0.0
        %v2602 = vsel %vm377, %v2583, 0.0
        %v2603 = vsel %vm377, %v2585, 0.0
        %v2604 = vsel %vm377, %v2587, 0.0
        %v2605 = vsel %vm377, %v2589, 0.0
        %v2606 = vpack.c.bf16 %v2567, %v2566
        %v2607 = vpack.c.bf16 %v2569, %v2568
        %v2608 = vpack.c.bf16 %v2571, %v2570
        %v2609 = vpack.c.bf16 %v2573, %v2572
        %v2610 = vpack.c.bf16 %v2527, %v2526
        %v2611 = vpack.c.bf16 %v2529, %v2528
        %v2612 = vpack.c.bf16 %v2531, %v2530
        %v2613 = vpack.c.bf16 %v2533, %v2532
        %v2614 = vpack.c.bf16 %v2599, %v2598
        %v2615 = vpack.c.bf16 %v2601, %v2600
        %v2616 = vpack.c.bf16 %v2603, %v2602
        %v2617 = vpack.c.bf16 %v2605, %v2604
        %v2618 = vld [vmem:[%s3] sm:$0xff]
        %v2619 = vld [vmem:[%s3 + $0x8] sm:$0xff]
        %v2620 = vld [vmem:[%s3 + $0x10] sm:$0xff]
        %v2621 = vld [vmem:[%s3 + $0x18] sm:$0xff]
        %v2622 = vld [vmem:[%s3 + $0x20] sm:$0xff]
        %v2623 = vld [vmem:[%s3 + $0x28] sm:$0xff]
        %v2624 = vld [vmem:[%s3 + $0x30] sm:$0xff]
        %v2625 = vld [vmem:[%s3 + $0x38] sm:$0xff]
        %v2626 = vld [vmem:[%s3 + $0x40] sm:$0xff]
        %v2627 = vld [vmem:[%s3 + $0x48] sm:$0xff]
        %v2628 = vld [vmem:[%s3 + $0x50] sm:$0xff]
        %v2629 = vld [vmem:[%s3 + $0x58] sm:$0xff]
        %v2630 = vld [vmem:[%s3 + $0x60] sm:$0xff]
        %v2631 = vld [vmem:[%s3 + $0x68] sm:$0xff]
        %v2632 = vld [vmem:[%s3 + $0x70] sm:$0xff]
        %v2633 = vld [vmem:[%s3 + $0x78] sm:$0xff]
        %v2650 = vunpack.c.l.b16 %v2618
        %v2651 = vunpack.c.h.b16 %v2618
        %v2652 = vunpack.c.l.b16 %v2619
        %v2653 = vunpack.c.h.b16 %v2619
        %v2654 = vunpack.c.l.b16 %v2620
        %v2655 = vunpack.c.h.b16 %v2620
        %v2656 = vunpack.c.l.b16 %v2621
        %v2657 = vunpack.c.h.b16 %v2621
        %v2658 = vunpack.c.l.b16 %v2622
        %v2659 = vunpack.c.h.b16 %v2622
        %v2660 = vunpack.c.l.b16 %v2623
        %v2661 = vunpack.c.h.b16 %v2623
        %v2662 = vunpack.c.l.b16 %v2624
        %v2663 = vunpack.c.h.b16 %v2624
        %v2664 = vunpack.c.l.b16 %v2625
        %v2665 = vunpack.c.h.b16 %v2625
        %v2666 = vunpack.c.l.b16 %v2626
        %v2667 = vunpack.c.h.b16 %v2626
        %v2668 = vunpack.c.l.b16 %v2627
        %v2669 = vunpack.c.h.b16 %v2627
        %v2670 = vunpack.c.l.b16 %v2628
        %v2671 = vunpack.c.h.b16 %v2628
        %v2672 = vunpack.c.l.b16 %v2629
        %v2673 = vunpack.c.h.b16 %v2629
        %v2674 = vunpack.c.l.b16 %v2630
        %v2675 = vunpack.c.h.b16 %v2630
        %v2676 = vunpack.c.l.b16 %v2631
        %v2677 = vunpack.c.h.b16 %v2631
        %v2678 = vunpack.c.l.b16 %v2632
        %v2679 = vunpack.c.h.b16 %v2632
        %v2680 = vunpack.c.l.b16 %v2633
        %v2681 = vunpack.c.h.b16 %v2633
        %v2682 = vpack.c.b16 %v2652, %v2650
        %v2683 = vpack.c.b16 %v2653, %v2651
        %v2684 = vpack.c.b16 %v2656, %v2654
        %v2685 = vpack.c.b16 %v2657, %v2655
        %v2686 = vpack.c.b16 %v2660, %v2658
        %v2687 = vpack.c.b16 %v2661, %v2659
        %v2688 = vpack.c.b16 %v2664, %v2662
        %v2689 = vpack.c.b16 %v2665, %v2663
        %v2690 = vpack.c.b16 %v2668, %v2666
        %v2691 = vpack.c.b16 %v2669, %v2667
        %v2692 = vpack.c.b16 %v2672, %v2670
        %v2693 = vpack.c.b16 %v2673, %v2671
        %v2694 = vpack.c.b16 %v2676, %v2674
        %v2695 = vpack.c.b16 %v2677, %v2675
        %v2696 = vpack.c.b16 %v2680, %v2678
        %v2697 = vpack.c.b16 %v2681, %v2679
        %v2707 = vsel %vm442, %v2683, 0
        %v2710 = vsel %vm442, %v2685, 0
        %v2713 = vsel %vm442, %v2687, 0
        %v2716 = vsel %vm442, %v2689, 0
        %v2719 = vsel %vm442, %v2691, 0
        %v2722 = vsel %vm442, %v2693, 0
        %v2725 = vsel %vm442, %v2695, 0
        %v2728 = vsel %vm442, %v2697, 0
        %2730 = vmatprep.subr.bf16.mxu0 0
        %2731 = vmatpush1.bf16.msra.mxu0 %v2606
        %2732 = vmatprep.subr.bf16.mxu0 0
        %2733 = vmatpush1.bf16.msra.mxu0 %v2607
        %2734 = vmatprep.subr.bf16.mxu0 0
        %2735 = vmatpush1.bf16.msra.mxu0 %v2608
        %2736 = vmatprep.subr.bf16.mxu0 0
        %2737 = vmatpush1.bf16.msra.mxu0 %v2609
        %2738 = vmatprep.subr.bf16.mxu0 0
        %2739 = vmatpush1.bf16.msra.mxu0 %v2610
        %2740 = vmatprep.subr.bf16.mxu0 0
        %2741 = vmatpush1.bf16.msra.mxu0 %v2611
        %2742 = vmatprep.subr.bf16.mxu0 0
        %2743 = vmatpush1.bf16.msra.mxu0 %v2612
        %2744 = vmatprep.subr.bf16.mxu0 0
        %2745 = vmatpush1.bf16.msra.mxu0 %v2613
        %2746 = vmatprep.subr.bf16.mxu0 0
        %2747 = vmatpush1.bf16.msra.mxu0 %v2614
        %2748 = vmatprep.subr.bf16.mxu0 0
        %2749 = vmatpush1.bf16.msra.mxu0 %v2615
        %2750 = vmatprep.subr.bf16.mxu0 0
        %2751 = vmatpush1.bf16.msra.mxu0 %v2616
        %2752 = vmatprep.subr.bf16.mxu0 0
        %2753 = vmatpush1.bf16.msra.mxu0 %v2617
        %2754 = vmatprep.subr.bf16.mxu0 0
        %2755 = vmatpush1.bf16.msra.mxu0 0
        %2756 = vmatprep.subr.bf16.mxu0 0
        %2757 = vmatpush1.bf16.msra.mxu0 0
        %2758 = vmatprep.subr.bf16.mxu0 0
        %2759 = vmatpush1.bf16.msra.mxu0 0
        %2760 = vmatprep.subr.bf16.mxu0 0
        %2761 = vmatpush1.bf16.msra.mxu0 0
        %2762 = vmatprep.mubr.bf16.mxu0 %v2707
        %2763 = vmatmul.mubr.bf16.gmra.mrb[0].mxu0 %v2682
        %v2764 = vpop.f32.mrb[0].mxu0
        %v2765 = vadd.f32 0.0, %v2764
        %v2766 = vpop.f32.mrb[0].mxu0
        %v2767 = vpop.f32.mrb[0].mxu0
        %v2768 = vadd.f32 0.0, %v2767
        %v2769 = vpop.f32.mrb[0].mxu0
        %2770 = vmatprep.mubr.bf16.mxu0 %v2710
        %2771 = vmatmul.mubr.bf16.gmra.mrb[0].mxu0 %v2684
        %v2772 = vpop.f32.mrb[0].mxu0
        %v2773 = vadd.f32 0.0, %v2772
        %v2774 = vpop.f32.mrb[0].mxu0
        %v2775 = vpop.f32.mrb[0].mxu0
        %v2776 = vadd.f32 0.0, %v2775
        %v2777 = vpop.f32.mrb[0].mxu0
        %2778 = vmatprep.mubr.bf16.mxu0 %v2713
        %2779 = vmatmul.mubr.bf16.gmra.mrb[0].mxu0 %v2686
        %v2780 = vpop.f32.mrb[0].mxu0
        %v2781 = vadd.f32 0.0, %v2780
        %v2782 = vpop.f32.mrb[0].mxu0
        %v2783 = vpop.f32.mrb[0].mxu0
        %v2784 = vadd.f32 0.0, %v2783
        %v2785 = vpop.f32.mrb[0].mxu0
        %2786 = vmatprep.mubr.bf16.mxu0 %v2716
        %2787 = vmatmul.mubr.bf16.gmra.mrb[0].mxu0 %v2688
        %v2788 = vpop.f32.mrb[0].mxu0
        %v2789 = vadd.f32 0.0, %v2788
        %v2790 = vpop.f32.mrb[0].mxu0
        %v2791 = vpop.f32.mrb[0].mxu0
        %v2792 = vadd.f32 0.0, %v2791
        %v2793 = vpop.f32.mrb[0].mxu0
        %2794 = vmatprep.mubr.bf16.mxu0 %v2719
        %2795 = vmatmul.mubr.bf16.gmra.mrb[0].mxu0 %v2690
        %v2796 = vpop.f32.mrb[0].mxu0
        %v2797 = vadd.f32 0.0, %v2796
        %v2798 = vpop.f32.mrb[0].mxu0
        %v2799 = vpop.f32.mrb[0].mxu0
        %v2800 = vadd.f32 0.0, %v2799
        %v2801 = vpop.f32.mrb[0].mxu0
        %2802 = vmatprep.mubr.bf16.mxu0 %v2722
        %2803 = vmatmul.mubr.bf16.gmra.mrb[0].mxu0 %v2692
        %v2804 = vpop.f32.mrb[0].mxu0
        %v2805 = vadd.f32 0.0, %v2804
        %v2806 = vpop.f32.mrb[0].mxu0
        %v2807 = vpop.f32.mrb[0].mxu0
        %v2808 = vadd.f32 0.0, %v2807
        %v2809 = vpop.f32.mrb[0].mxu0
        %2810 = vmatprep.mubr.bf16.mxu0 %v2725
        %2811 = vmatmul.mubr.bf16.gmra.mrb[0].mxu0 %v2694
        %v2812 = vpop.f32.mrb[0].mxu0
        %v2813 = vadd.f32 0.0, %v2812
        %v2814 = vpop.f32.mrb[0].mxu0
        %v2815 = vpop.f32.mrb[0].mxu0
        %v2816 = vadd.f32 0.0, %v2815
        %v2817 = vpop.f32.mrb[0].mxu0
        %2818 = vmatprep.mubr.bf16.mxu0 %v2728
        %2819 = vmatmul.mubr.bf16.gmra.mrb[0].mxu0 %v2696
        %v2820 = vpop.f32.mrb[0].mxu0
        %v2821 = vadd.f32 0.0, %v2820
        %v2822 = vpop.f32.mrb[0].mxu0
        %v2823 = vpop.f32.mrb[0].mxu0
        %v2824 = vadd.f32 0.0, %v2823
        %v2825 = vpop.f32.mrb[0].mxu0
        %2826 = vdwg.mxu0
        %v2827 = vmul.f32 %v2765, 0.2
        %v2828 = vmul.f32 %v2768, 0.2
        %v2829 = vmul.f32 %v2773, 0.2
        %v2830 = vmul.f32 %v2776, 0.2
        %v2831 = vmul.f32 %v2781, 0.2
        %v2832 = vmul.f32 %v2784, 0.2
        %v2833 = vmul.f32 %v2789, 0.2
        %v2834 = vmul.f32 %v2792, 0.2
        %v2835 = vmul.f32 %v2797, 0.2
        %v2836 = vmul.f32 %v2800, 0.2
        %v2837 = vmul.f32 %v2805, 0.2
        %v2838 = vmul.f32 %v2808, 0.2
        %v2839 = vmul.f32 %v2813, 0.2
        %v2840 = vmul.f32 %v2816, 0.2
        %v2841 = vmul.f32 %v2821, 0.2
        %v2842 = vmul.f32 %v2824, 0.2
        %v2843 = vmax.f32 %v2765, %v2827
        %v2844 = vmax.f32 %v2768, %v2828
        %v2845 = vmax.f32 %v2773, %v2829
        %v2846 = vmax.f32 %v2776, %v2830
        %v2847 = vmax.f32 %v2781, %v2831
        %v2848 = vmax.f32 %v2784, %v2832
        %v2849 = vmax.f32 %v2789, %v2833
        %v2850 = vmax.f32 %v2792, %v2834
        %v2851 = vmax.f32 %v2797, %v2835
        %v2852 = vmax.f32 %v2800, %v2836
        %v2853 = vmax.f32 %v2805, %v2837
        %v2854 = vmax.f32 %v2808, %v2838
        %v2855 = vmax.f32 %v2813, %v2839
        %v2856 = vmax.f32 %v2816, %v2840
        %v2857 = vmax.f32 %v2821, %v2841
        %v2858 = vmax.f32 %v2824, %v2842
        %vm2859 = vcmask 261120
        %2860 = vst.msk [vmem:[%s283] sm:$0xff] %vm2859, %v2843
        %2861 = vst.msk [vmem:[%s283 + $0x8] sm:$0xff] %vm2859, %v2844
        %2862 = vst.msk [vmem:[%s283 + $0x10] sm:$0xff] %vm2859, %v2845
        %2863 = vst.msk [vmem:[%s283 + $0x18] sm:$0xff] %vm2859, %v2846
        %2864 = vst.msk [vmem:[%s283 + $0x20] sm:$0xff] %vm2859, %v2847
        %2865 = vst.msk [vmem:[%s283 + $0x28] sm:$0xff] %vm2859, %v2848
        %2866 = vst.msk [vmem:[%s283 + $0x30] sm:$0xff] %vm2859, %v2849
        %2867 = vst.msk [vmem:[%s283 + $0x38] sm:$0xff] %vm2859, %v2850
        %2868 = vst.msk [vmem:[%s283 + $0x40] sm:$0xff] %vm2859, %v2851
        %2869 = vst.msk [vmem:[%s283 + $0x48] sm:$0xff] %vm2859, %v2852
        %2870 = vst.msk [vmem:[%s283 + $0x50] sm:$0xff] %vm2859, %v2853
        %2871 = vst.msk [vmem:[%s283 + $0x58] sm:$0xff] %vm2859, %v2854
        %2872 = vst.msk [vmem:[%s283 + $0x60] sm:$0xff] %vm2859, %v2855
        %2873 = vst.msk [vmem:[%s283 + $0x68] sm:$0xff] %vm2859, %v2856
        %2874 = vst.msk [vmem:[%s283 + $0x70] sm:$0xff] %vm2859, %v2857
        %2875 = vst.msk [vmem:[%s283 + $0x78] sm:$0xff] %vm2859, %v2858
        %v2876 = vld [vmem:[%s4] sm:$0xff]
        %2885 = vrot.lane.b32.xlu0 %v2851, 1
        %v2886 = vpop.permute.xlu0 %2885
        %2887 = vrot.lane.b32.xlu0 %v2852, 1
        %v2888 = vpop.permute.xlu0 %2887
        %2889 = vrot.lane.b32.xlu0 %v2853, 1
        %v2890 = vpop.permute.xlu0 %2889
        %2891 = vrot.lane.b32.xlu0 %v2854, 1
        %v2892 = vpop.permute.xlu0 %2891
        %2893 = vrot.lane.b32.xlu0 %v2855, 1
        %v2894 = vpop.permute.xlu0 %2893
        %2895 = vrot.lane.b32.xlu0 %v2856, 1
        %v2896 = vpop.permute.xlu0 %2895
        %2897 = vrot.lane.b32.xlu0 %v2857, 1
        %v2898 = vpop.permute.xlu0 %2897
        %2899 = vrot.lane.b32.xlu0 %v2858, 1
        %v2900 = vpop.permute.xlu0 %2899
        %v2909 = vsel %vm344, 0.0, %v2886
        %v2910 = vsel %vm344, 0.0, %v2888
        %v2911 = vsel %vm344, 0.0, %v2890
        %v2912 = vsel %vm344, 0.0, %v2892
        %v2913 = vsel %vm344, 0.0, %v2894
        %v2914 = vsel %vm344, 0.0, %v2896
        %v2915 = vsel %vm344, 0.0, %v2898
        %v2916 = vsel %vm344, 0.0, %v2900
        %v2917 = vpack.c.bf16 %v2910, %v2909
        %v2918 = vpack.c.bf16 %v2912, %v2911
        %v2919 = vpack.c.bf16 %v2914, %v2913
        %v2920 = vpack.c.bf16 %v2916, %v2915
        %v2921 = vpack.c.bf16 %v2844, %v2843
        %v2922 = vpack.c.bf16 %v2846, %v2845
        %v2923 = vpack.c.bf16 %v2848, %v2847
        %v2924 = vpack.c.bf16 %v2850, %v2849
        %v2925 = vpack.c.bf16 %v2852, %v2851
        %v2926 = vpack.c.bf16 %v2854, %v2853
        %v2927 = vpack.c.bf16 %v2856, %v2855
        %v2928 = vpack.c.bf16 %v2858, %v2857
        %v2930 = vunpack.c.l.b16 %v2876
        %v2931 = vunpack.c.h.b16 %v2876
        %v2932 = vpack.c.b16 %v2930, %v2930
        %v2933 = vpack.c.b16 %v2931, %v2931
        %v2936 = vsel %vm442, %v2933, 0
        %2938 = vmatprep.subr.bf16.mxu0 0
        %2939 = vmatpush1.bf16.msra.mxu0 %v2917
        %2940 = vmatprep.subr.bf16.mxu0 0
        %2941 = vmatpush1.bf16.msra.mxu0 %v2918
        %2942 = vmatprep.subr.bf16.mxu0 0
        %2943 = vmatpush1.bf16.msra.mxu0 %v2919
        %2944 = vmatprep.subr.bf16.mxu0 0
        %2945 = vmatpush1.bf16.msra.mxu0 %v2920
        %2946 = vmatprep.subr.bf16.mxu0 0
        %2947 = vmatpush1.bf16.msra.mxu0 %v2921
        %2948 = vmatprep.subr.bf16.mxu0 0
        %2949 = vmatpush1.bf16.msra.mxu0 %v2922
        %2950 = vmatprep.subr.bf16.mxu0 0
        %2951 = vmatpush1.bf16.msra.mxu0 %v2923
        %2952 = vmatprep.subr.bf16.mxu0 0
        %2953 = vmatpush1.bf16.msra.mxu0 %v2924
        %2954 = vmatprep.subr.bf16.mxu0 0
        %2955 = vmatpush1.bf16.msra.mxu0 %v2925
        %2956 = vmatprep.subr.bf16.mxu0 0
        %2957 = vmatpush1.bf16.msra.mxu0 %v2926
        %2958 = vmatprep.subr.bf16.mxu0 0
        %2959 = vmatpush1.bf16.msra.mxu0 %v2927
        %2960 = vmatprep.subr.bf16.mxu0 0
        %2961 = vmatpush1.bf16.msra.mxu0 %v2928
        %2962 = vmatprep.subr.bf16.mxu0 0
        %2963 = vmatpush1.bf16.msra.mxu0 0
        %2964 = vmatprep.subr.bf16.mxu0 0
        %2965 = vmatpush1.bf16.msra.mxu0 0
        %2966 = vmatprep.subr.bf16.mxu0 0
        %2967 = vmatpush1.bf16.msra.mxu0 0
        %2968 = vmatprep.subr.bf16.mxu0 0
        %2969 = vmatpush1.bf16.msra.mxu0 0
        %2970 = vmatprep.mubr.bf16.mxu0 %v2936
        %2971 = vmatmul.mubr.bf16.gmra.mrb[0].mxu0 %v2932
        %v2972 = vpop.f32.mrb[0].mxu0
        %v2973 = vadd.f32 0.0, %v2972
        %v2974 = vpop.f32.mrb[0].mxu0
        %v2975 = vpop.f32.mrb[0].mxu0
        %v2976 = vpop.f32.mrb[0].mxu0
        %2977 = vdwg.mxu0
        %2986 = vrot.lane.b32.xlu0 %v2843, 127
        %v2987 = vpop.permute.xlu0 %2986
        %2988 = vrot.lane.b32.xlu0 %v2844, 127
        %v2989 = vpop.permute.xlu0 %2988
        %2990 = vrot.lane.b32.xlu0 %v2845, 127
        %v2991 = vpop.permute.xlu0 %2990
        %2992 = vrot.lane.b32.xlu0 %v2846, 127
        %v2993 = vpop.permute.xlu0 %2992
        %2994 = vrot.lane.b32.xlu0 %v2847, 127
        %v2995 = vpop.permute.xlu0 %2994
        %2996 = vrot.lane.b32.xlu0 %v2848, 127
        %v2997 = vpop.permute.xlu0 %2996
        %2998 = vrot.lane.b32.xlu0 %v2849, 127
        %v2999 = vpop.permute.xlu0 %2998
        %3000 = vrot.lane.b32.xlu0 %v2850, 127
        %v3001 = vpop.permute.xlu0 %3000
        %v3010 = vsel %vm377, %v2987, 0.0
        %v3011 = vsel %vm377, %v2989, 0.0
        %v3012 = vsel %vm377, %v2991, 0.0
        %v3013 = vsel %vm377, %v2993, 0.0
        %v3014 = vsel %vm377, %v2995, 0.0
        %v3015 = vsel %vm377, %v2997, 0.0
        %v3016 = vsel %vm377, %v2999, 0.0
        %v3017 = vsel %vm377, %v3001, 0.0
        %v3018 = vpack.c.bf16 %v3011, %v3010
        %v3019 = vpack.c.bf16 %v3013, %v3012
        %v3020 = vpack.c.bf16 %v3015, %v3014
        %v3021 = vpack.c.bf16 %v3017, %v3016
        %3022 = vmatprep.subr.bf16.mxu0 0
        %3023 = vmatpush1.bf16.msra.mxu0 %v2921
        %3024 = vmatprep.subr.bf16.mxu0 0
        %3025 = vmatpush1.bf16.msra.mxu0 %v2922
        %3026 = vmatprep.subr.bf16.mxu0 0
        %3027 = vmatpush1.bf16.msra.mxu0 %v2923
        %3028 = vmatprep.subr.bf16.mxu0 0
        %3029 = vmatpush1.bf16.msra.mxu0 %v2924
        %3030 = vmatprep.subr.bf16.mxu0 0
        %3031 = vmatpush1.bf16.msra.mxu0 %v2925
        %3032 = vmatprep.subr.bf16.mxu0 0
        %3033 = vmatpush1.bf16.msra.mxu0 %v2926
        %3034 = vmatprep.subr.bf16.mxu0 0
        %3035 = vmatpush1.bf16.msra.mxu0 %v2927
        %3036 = vmatprep.subr.bf16.mxu0 0
        %3037 = vmatpush1.bf16.msra.mxu0 %v2928
        %3038 = vmatprep.subr.bf16.mxu0 0
        %3039 = vmatpush1.bf16.msra.mxu0 %v3018
        %3040 = vmatprep.subr.bf16.mxu0 0
        %3041 = vmatpush1.bf16.msra.mxu0 %v3019
        %3042 = vmatprep.subr.bf16.mxu0 0
        %3043 = vmatpush1.bf16.msra.mxu0 %v3020
        %3044 = vmatprep.subr.bf16.mxu0 0
        %3045 = vmatpush1.bf16.msra.mxu0 %v3021
        %3046 = vmatprep.subr.bf16.mxu0 0
        %3047 = vmatpush1.bf16.msra.mxu0 0
        %3048 = vmatprep.subr.bf16.mxu0 0
        %3049 = vmatpush1.bf16.msra.mxu0 0
        %3050 = vmatprep.subr.bf16.mxu0 0
        %3051 = vmatpush1.bf16.msra.mxu0 0
        %3052 = vmatprep.subr.bf16.mxu0 0
        %3053 = vmatpush1.bf16.msra.mxu0 0
        %3054 = vmatprep.mubr.bf16.mxu0 %v2936
        %3055 = vmatmul.mubr.bf16.gmra.mrb[0].mxu0 %v2932
        %v3056 = vpop.f32.mrb[0].mxu0
        %v3057 = vadd.f32 0.0, %v3056
        %v3058 = vpop.f32.mrb[0].mxu0
        %v3059 = vpop.f32.mrb[0].mxu0
        %v3060 = vpop.f32.mrb[0].mxu0
        %3061 = vdwg.mxu0
        %v3062 = vld [vmem:[%s5] sm:$0x1]
        %3064 = vset.pattern.permute.xlu0 1
        %3065 = vperm.xlu0 %3064, %v3062
        %v3066 = vpop.permute.xlu0 %3065
        %v3068 = vlaneseq
        %v3069 = vshrl.u32 %v3068, 7
        %v3070 = vsub.s32 0, %v3069
        %v3071 = vrot.slane %v3066, %v3070
        %v3072 = vmul.f32 %v3071, %v303
        %v3074 = vlaneseq
        %v3075 = vshrl.u32 %v3074, 7
        %v3076 = vsub.s32 0, %v3075
        %v3077 = vrot.slane %v303, %v3076
        %3078 = vrot.lane.b32.xlu0 %v3077, 1
        %v3079 = vpop.permute.xlu0 %3078
        %v3081 = vsel %vm344, 0.0, %v3079
        %3082 = vset.pattern.permute.xlu0 3
        %3083 = vperm.xlu0 %3082, %v3062
        %v3084 = vpop.permute.xlu0 %3083
        %v3086 = vlaneseq
        %v3087 = vshrl.u32 %v3086, 7
        %v3088 = vsub.s32 0, %v3087
        %v3089 = vrot.slane %v3084, %v3088
        %v3090 = vmul.f32 %v3089, %v3081
        %v3091 = vadd.f32 %v3072, %v3090
        %3092 = vrot.lane.b32.xlu0 %v3077, 127
        %v3093 = vpop.permute.xlu0 %3092
        %v3095 = vsel %vm377, %v3093, 0.0
        %3096 = vset.pattern.permute.xlu0 0
        %3097 = vperm.xlu0 %3096, %v3062
        %v3098 = vpop.permute.xlu0 %3097
        %v3100 = vlaneseq
        %v3101 = vshrl.u32 %v3100, 7
        %v3102 = vsub.s32 0, %v3101
        %v3103 = vrot.slane %v3098, %v3102
        %v3104 = vmul.f32 %v3103, %v3095
        %3105 = vset.pattern.permute.xlu0 2
        %3106 = vperm.xlu0 %3105, %v3062
        %v3107 = vpop.permute.xlu0 %3106
        %v3109 = vlaneseq
        %v3110 = vshrl.u32 %v3109, 7
        %v3111 = vsub.s32 0, %v3110
        %v3112 = vrot.slane %v3107, %v3111
        %v3113 = vmul.f32 %v3112, %v303
        %v3114 = vadd.f32 %v3104, %v3113
        %v3115 = vadd.f32 %v3091, %v2973
        %vm3116 = vcmask 253952
        %3117 = vst.msk [vmem:[%s301] sm:$0x1] %vm3116, %v3115
        %v3118 = vadd.f32 %v3114, %v3057
        %3119 = vst.msk [vmem:[%s301 + $0x1] sm:$0x1] %vm3116, %v3118
        %s3120 = sand.u32 %s166, 1
        %s3121 = scalar_lea.sflag [#allocation3], %s3120
        %s3122 = sand.u32 %s166, 1
        %s3123 = smul.addr %s3122, 128
        %s3124 = scalar_lea.vmem [#allocation2], %s3123
        %p3125 = scmp.lt.s32.totalorder %s22, 1
        %s3126 = scalar_select %p3125, %s22, 1
        %s3127 = smul.addr %s3126, 2
        %s3128 = scalar_lea.vmem %s7, %s3127
        // Predicated region
        $region45: #{lapsrn_forward_pallas.3} parent=43 // pred_check
          %p3129 = pneg %p176
        $region46: #{lapsrn_forward_pallas.3} parent=43 // pred_check_branch
          %3131 = sbr.rel (%p3129) target = $region48
        $region47: #{lapsrn_forward_pallas.3} parent=43 // pred_region
          %s3133 = ssub.s32 2048, 2048
          %3134 = vsyncadd %s3121, %s3133
          %s3135 = smul.addr %s22, 16
          %s3136 = smul.addr %s3135, 128
          %s3137 = scalar_lea.hbm %s6, %s3136
          %s3138 = sshll.u32 %s3124, 4
          %s3139 = int_to_ptr.vmem [resolvable:$true] %s3138
          %3144 = dma.vmem_to_hbm [thread:$0]  %s3139, 2048, %s3137, %s3121, 128, 128, 8
        $region48: #{lapsrn_forward_pallas.3} parent=43 // pred_fallthru
          _
        // Predicated region
        $region49: #{lapsrn_forward_pallas.3} parent=43 // pred_check
          %p3145 = pneg %p202
        $region50: #{lapsrn_forward_pallas.3} parent=43 // pred_check_branch
          %3147 = sbr.rel (%p3145) target = $region52
        $region51: #{lapsrn_forward_pallas.3} parent=43 // pred_region
          _
        $region52: #{lapsrn_forward_pallas.3} parent=43 // pred_fallthru
          _
      $region44: #{lapsrn_forward_pallas.3} parent=5 // pred_fallthru
        _
      %p3148 = scmp.le.s32.totalorder 2, %s17
      // Predicated region
      $region53: #{lapsrn_forward_pallas.3} parent=5 // pred_check
        %p3149 = pneg %p3148
      $region54: #{lapsrn_forward_pallas.3} parent=5 // pred_check_branch
        %3151 = sbr.rel (%p3149) target = $region56
      $region55: #{lapsrn_forward_pallas.3} parent=5 // pred_region
        %s3152 = ssub.s32 %s17, 2
        // Predicated region
        $region57: #{lapsrn_forward_pallas.3} parent=55 // pred_check
          %p3153 = pneg %p182
        $region58: #{lapsrn_forward_pallas.3} parent=55 // pred_check_branch
          %3155 = sbr.rel (%p3153) target = $region60
        $region59: #{lapsrn_forward_pallas.3} parent=55 // pred_region
          %s3156 = sand.u32 %s167, 1
          %s3157 = scalar_lea.sflag [#allocation3], %s3156
          %s3158 = sand.u32 %s167, 1
          %s3159 = smul.addr %s3158, 128
          %s3160 = scalar_lea.vmem [#allocation2], %s3159
          %3161 = dma.done %s3157, 2048
        $region60: #{lapsrn_forward_pallas.3} parent=55 // pred_fallthru
          _
        // Predicated region
        $region61: #{lapsrn_forward_pallas.3} parent=55 // pred_check
          %p3162 = pneg %p208
        $region62: #{lapsrn_forward_pallas.3} parent=55 // pred_check_branch
          %3164 = sbr.rel (%p3162) target = $region64
        $region63: #{lapsrn_forward_pallas.3} parent=55 // pred_region
          %p3165 = scmp.lt.s32.totalorder %s23, 1
          %s3166 = scalar_select %p3165, %s23, 1
          %s3167 = smul.addr %s3166, 2
          %s3168 = scalar_lea.vmem %s7, %s3167
        $region64: #{lapsrn_forward_pallas.3} parent=55 // pred_fallthru
          _
      $region56: #{lapsrn_forward_pallas.3} parent=5 // pred_fallthru
        _
    $region6: #{lapsrn_forward_pallas.3} parent=1 // loop_footer
      %s21 = sadd.s32 1, %s17
    $region7: #{lapsrn_forward_pallas.3} parent=1 // loop_footer_branch
      %16 = sbr.rel target = $region3
    $region8: #{lapsrn_forward_pallas.3} parent=1 // loop_exit
      _
    %3169 = vsyncpa [#allocation3], 1
    %s3170 = scalar_lea.sflag [#allocation3], 1
    %3171 = vsyncpa %s3170, 1

// kernel: lapsrn_forward_pallas.2
$region0: #{lapsrn_forward_pallas.2}
  #allocation0 [shape = 'u32[]', space=smem, size = 0x4, offset = 0x4, fixed_abs, tag = 'smem constant byte address 0x4 - core index']
  #allocation1 [shape = 'u32[144,128]{1,0:T(1,128)}', space=vmem, size = 0x12000, scoped, tag = 'internal scratch']
  %s0 = inlined_call_operand.vmem [shape: f32[2,1,16], index: 0, kind: input, shape index: {}]
  %s1 = inlined_call_operand.vmem [shape: f32[64,3], index: 1, kind: input, shape index: {}]
  %s2 = inlined_call_operand.vmem [shape: bf16[10,64,192], index: 2, kind: input, shape index: {}]
  %s3 = inlined_call_operand.vmem [shape: bf16[128,192], index: 3, kind: input, shape index: {}]
  %s4 = inlined_call_operand.vmem [shape: bf16[8,192], index: 4, kind: input, shape index: {}]
  %s5 = inlined_call_operand.vmem [shape: f32[1,4], index: 5, kind: input, shape index: {}]
  %s6 = inlined_call_operand.vmem [shape: f32[2,128,16], index: 6, kind: output, shape index: {0}]
  %s7 = inlined_call_operand.vmem [shape: f32[2,2,16], index: 7, kind: output, shape index: {1}]
  %8 = xla_tuple %s6, %s7
  %s9 = sld [smem:[#allocation0]]
  $region65: #{lapsrn_forward_pallas.2} parent=0
    _
  %s11 = ssub.s32 1, %s9
  %s12 = scalar_select 0, %s11, %s9
  loop: start=0, step=1, limit=4
  $region2: #{lapsrn_forward_pallas.2} parent=0 // loop_pre_header
    _
  $region3: #{lapsrn_forward_pallas.2} parent=0 // loop_header
    %s14 = sphi 0, %s18
    %p15 = scmp.ge.s32.totalorder %s14, 4
    %s24 = sphi 0, %s26
    %s27 = sphi 0, %s24
    %s28 = sphi 0, %s27
    %s44 = sphi 0, %s28
    %s48 = sphi 0, %s48
    %s50 = sphi 0, %s48
    %s51 = sphi 0, %s50
    %s65 = sphi 0, %s51
    %s69 = sphi 0, %s69
    %s71 = sphi 0, %s69
    %s72 = sphi 0, %s71
    %s86 = sphi 0, %s72
    %s90 = sphi 0, %s90
    %s92 = sphi 0, %s90
    %s93 = sphi 0, %s92
    %s107 = sphi 0, %s93
    %s111 = sphi 0, %s111
    %s113 = sphi 0, %s111
    %s114 = sphi 0, %s113
    %s128 = sphi 0, %s114
    %s132 = sphi 0, %s132
    %s134 = sphi 0, %s132
    %s135 = sphi 0, %s134
    %s149 = sphi 0, %s135
    %s155 = sphi 0, %s157
    %s158 = sphi 0, %s155
    %s159 = sphi 0, %s158
    %s175 = sphi 0, %s159
    %s181 = sphi 0, %s183
    %s184 = sphi 0, %s181
    %s185 = sphi 0, %s184
    %s201 = sphi 0, %s185
  $region4: #{lapsrn_forward_pallas.2} parent=0 // loop_header_branch
    %17 = sbr.rel (%p15) target = $region8
  $region5: #{lapsrn_forward_pallas.2} parent=0 // loop_body
    %s19 = ssub.s32 %s14, 1
    %s20 = ssub.s32 %s14, 2
    %s21 = sadd.s32 %s14, 1
    %s22 = ssub.s32 %s14, %s21
    %p23 = scmp.eq.s32.totalorder %s22, 0
    %s25 = sadd.s32 %s24, 1
    %s26 = scalar_select %p23, %s24, %s25
    %p29 = pneg %p23
    %p30 = scmp.eq.s32.totalorder %s14, 1
    %p31 = por %p29, %p30
    %p32 = scmp.ne.s32.totalorder %s24, %s27
    %p33 = scmp.eq.s32.totalorder %s14, 0
    %p34 = por %p32, %p33
    %p35 = scmp.ne.s32.totalorder %s24, %s27
    %p36 = scmp.eq.s32.totalorder %s19, 1
    %p37 = por %p35, %p36
    %p38 = scmp.ne.s32.totalorder %s27, %s28
    %p39 = scmp.eq.s32.totalorder %s19, 0
    %p40 = por %p38, %p39
    %p41 = scmp.ne.s32.totalorder %s27, %s28
    %p42 = scmp.eq.s32.totalorder %s20, 1
    %p43 = por %p41, %p42
    %p45 = scmp.ne.s32.totalorder %s28, %s44
    %p46 = scmp.eq.s32.totalorder %s20, 0
    %p47 = por %p45, %p46
    %s49 = sadd.s32 %s48, 1
    %p52 = scmp.eq.s32.totalorder %s14, 1
    %p53 = scmp.ne.s32.totalorder %s48, %s50
    %p54 = scmp.eq.s32.totalorder %s14, 0
    %p55 = por %p53, %p54
    %p56 = scmp.ne.s32.totalorder %s48, %s50
    %p57 = scmp.eq.s32.totalorder %s19, 1
    %p58 = por %p56, %p57
    %p59 = scmp.ne.s32.totalorder %s50, %s51
    %p60 = scmp.eq.s32.totalorder %s19, 0
    %p61 = por %p59, %p60
    %p62 = scmp.ne.s32.totalorder %s50, %s51
    %p63 = scmp.eq.s32.totalorder %s20, 1
    %p64 = por %p62, %p63
    %p66 = scmp.ne.s32.totalorder %s51, %s65
    %p67 = scmp.eq.s32.totalorder %s20, 0
    %p68 = por %p66, %p67
    %s70 = sadd.s32 %s69, 1
    %p73 = scmp.eq.s32.totalorder %s14, 1
    %p74 = scmp.ne.s32.totalorder %s69, %s71
    %p75 = scmp.eq.s32.totalorder %s14, 0
    %p76 = por %p74, %p75
    %p77 = scmp.ne.s32.totalorder %s69, %s71
    %p78 = scmp.eq.s32.totalorder %s19, 1
    %p79 = por %p77, %p78
    %p80 = scmp.ne.s32.totalorder %s71, %s72
    %p81 = scmp.eq.s32.totalorder %s19, 0
    %p82 = por %p80, %p81
    %p83 = scmp.ne.s32.totalorder %s71, %s72
    %p84 = scmp.eq.s32.totalorder %s20, 1
    %p85 = por %p83, %p84
    %p87 = scmp.ne.s32.totalorder %s72, %s86
    %p88 = scmp.eq.s32.totalorder %s20, 0
    %p89 = por %p87, %p88
    %s91 = sadd.s32 %s90, 1
    %p94 = scmp.eq.s32.totalorder %s14, 1
    %p95 = scmp.ne.s32.totalorder %s90, %s92
    %p96 = scmp.eq.s32.totalorder %s14, 0
    %p97 = por %p95, %p96
    %p98 = scmp.ne.s32.totalorder %s90, %s92
    %p99 = scmp.eq.s32.totalorder %s19, 1
    %p100 = por %p98, %p99
    %p101 = scmp.ne.s32.totalorder %s92, %s93
    %p102 = scmp.eq.s32.totalorder %s19, 0
    %p103 = por %p101, %p102
    %p104 = scmp.ne.s32.totalorder %s92, %s93
    %p105 = scmp.eq.s32.totalorder %s20, 1
    %p106 = por %p104, %p105
    %p108 = scmp.ne.s32.totalorder %s93, %s107
    %p109 = scmp.eq.s32.totalorder %s20, 0
    %p110 = por %p108, %p109
    %s112 = sadd.s32 %s111, 1
    %p115 = scmp.eq.s32.totalorder %s14, 1
    %p116 = scmp.ne.s32.totalorder %s111, %s113
    %p117 = scmp.eq.s32.totalorder %s14, 0
    %p118 = por %p116, %p117
    %p119 = scmp.ne.s32.totalorder %s111, %s113
    %p120 = scmp.eq.s32.totalorder %s19, 1
    %p121 = por %p119, %p120
    %p122 = scmp.ne.s32.totalorder %s113, %s114
    %p123 = scmp.eq.s32.totalorder %s19, 0
    %p124 = por %p122, %p123
    %p125 = scmp.ne.s32.totalorder %s113, %s114
    %p126 = scmp.eq.s32.totalorder %s20, 1
    %p127 = por %p125, %p126
    %p129 = scmp.ne.s32.totalorder %s114, %s128
    %p130 = scmp.eq.s32.totalorder %s20, 0
    %p131 = por %p129, %p130
    %s133 = sadd.s32 %s132, 1
    %p136 = scmp.eq.s32.totalorder %s14, 1
    %p137 = scmp.ne.s32.totalorder %s132, %s134
    %p138 = scmp.eq.s32.totalorder %s14, 0
    %p139 = por %p137, %p138
    %p140 = scmp.ne.s32.totalorder %s132, %s134
    %p141 = scmp.eq.s32.totalorder %s19, 1
    %p142 = por %p140, %p141
    %p143 = scmp.ne.s32.totalorder %s134, %s135
    %p144 = scmp.eq.s32.totalorder %s19, 0
    %p145 = por %p143, %p144
    %p146 = scmp.ne.s32.totalorder %s134, %s135
    %p147 = scmp.eq.s32.totalorder %s20, 1
    %p148 = por %p146, %p147
    %p150 = scmp.ne.s32.totalorder %s135, %s149
    %p151 = scmp.eq.s32.totalorder %s20, 0
    %p152 = por %p150, %p151
    %s153 = ssub.s32 %s14, %s21
    %p154 = scmp.eq.s32.totalorder %s153, 0
    %s156 = sadd.s32 %s155, 1
    %s157 = scalar_select %p154, %s155, %s156
    %p160 = pneg %p154
    %p161 = scmp.eq.s32.totalorder %s14, 1
    %p162 = por %p160, %p161
    %p163 = scmp.ne.s32.totalorder %s155, %s158
    %p164 = scmp.eq.s32.totalorder %s14, 0
    %p165 = por %p163, %p164
    %p166 = scmp.ne.s32.totalorder %s155, %s158
    %p167 = scmp.eq.s32.totalorder %s19, 1
    %p168 = por %p166, %p167
    %p169 = scmp.ne.s32.totalorder %s158, %s159
    %p170 = scmp.eq.s32.totalorder %s19, 0
    %p171 = por %p169, %p170
    %p172 = scmp.ne.s32.totalorder %s158, %s159
    %p173 = scmp.eq.s32.totalorder %s20, 1
    %p174 = por %p172, %p173
    %p176 = scmp.ne.s32.totalorder %s159, %s175
    %p177 = scmp.eq.s32.totalorder %s20, 0
    %p178 = por %p176, %p177
    %s179 = ssub.s32 %s14, %s21
    %p180 = scmp.eq.s32.totalorder %s179, 0
    %s182 = sadd.s32 %s181, 1
    %s183 = scalar_select %p180, %s181, %s182
    %p186 = pneg %p180
    %p187 = scmp.eq.s32.totalorder %s14, 1
    %p188 = por %p186, %p187
    %p189 = scmp.ne.s32.totalorder %s181, %s184
    %p190 = scmp.eq.s32.totalorder %s14, 0
    %p191 = por %p189, %p190
    %p192 = scmp.ne.s32.totalorder %s181, %s184
    %p193 = scmp.eq.s32.totalorder %s19, 1
    %p194 = por %p192, %p193
    %p195 = scmp.ne.s32.totalorder %s184, %s185
    %p196 = scmp.eq.s32.totalorder %s19, 0
    %p197 = por %p195, %p196
    %p198 = scmp.ne.s32.totalorder %s184, %s185
    %p199 = scmp.eq.s32.totalorder %s20, 1
    %p200 = por %p198, %p199
    %p202 = scmp.ne.s32.totalorder %s185, %s201
    %p203 = scmp.eq.s32.totalorder %s20, 0
    %p204 = por %p202, %p203
    %p205 = scmp.le.s32.totalorder 1, %s14
    %p206 = scmp.lt.s32.totalorder %s14, 3
    %p207 = pnand %p205, %p206
    %p208 = pneg %p207
    // Predicated region
    $region9: #{lapsrn_forward_pallas.2} parent=5 // pred_check
      _
    $region10: #{lapsrn_forward_pallas.2} parent=5 // pred_check_branch
      %210 = sbr.rel (%p207) target = $region12
    $region11: #{lapsrn_forward_pallas.2} parent=5 // pred_region
      %s211 = ssub.s32 %s14, 1
      // Predicated region
      $region13: #{lapsrn_forward_pallas.2} parent=11 // pred_check
        %p212 = pneg %p61
      $region14: #{lapsrn_forward_pallas.2} parent=11 // pred_check_branch
        %214 = sbr.rel (%p212) target = $region16
      $region15: #{lapsrn_forward_pallas.2} parent=11 // pred_region
        _
      $region16: #{lapsrn_forward_pallas.2} parent=11 // pred_fallthru
        _
      // Predicated region
      $region17: #{lapsrn_forward_pallas.2} parent=11 // pred_check
        %p215 = pneg %p82
      $region18: #{lapsrn_forward_pallas.2} parent=11 // pred_check_branch
        %217 = sbr.rel (%p215) target = $region20
      $region19: #{lapsrn_forward_pallas.2} parent=11 // pred_region
        _
      $region20: #{lapsrn_forward_pallas.2} parent=11 // pred_fallthru
        _
      // Predicated region
      $region21: #{lapsrn_forward_pallas.2} parent=11 // pred_check
        %p218 = pneg %p103
      $region22: #{lapsrn_forward_pallas.2} parent=11 // pred_check_branch
        %220 = sbr.rel (%p218) target = $region24
      $region23: #{lapsrn_forward_pallas.2} parent=11 // pred_region
        _
      $region24: #{lapsrn_forward_pallas.2} parent=11 // pred_fallthru
        _
      // Predicated region
      $region25: #{lapsrn_forward_pallas.2} parent=11 // pred_check
        %p221 = pneg %p124
      $region26: #{lapsrn_forward_pallas.2} parent=11 // pred_check_branch
        %223 = sbr.rel (%p221) target = $region28
      $region27: #{lapsrn_forward_pallas.2} parent=11 // pred_region
        _
      $region28: #{lapsrn_forward_pallas.2} parent=11 // pred_fallthru
        _
      // Predicated region
      $region29: #{lapsrn_forward_pallas.2} parent=11 // pred_check
        %p224 = pneg %p145
      $region30: #{lapsrn_forward_pallas.2} parent=11 // pred_check_branch
        %226 = sbr.rel (%p224) target = $region32
      $region31: #{lapsrn_forward_pallas.2} parent=11 // pred_region
        _
      $region32: #{lapsrn_forward_pallas.2} parent=11 // pred_fallthru
        _
    $region12: #{lapsrn_forward_pallas.2} parent=5 // pred_fallthru
      _
    %p227 = scmp.lt.s32.totalorder %s14, 2
    // Predicated region
    $region33: #{lapsrn_forward_pallas.2} parent=5 // pred_check
      %p228 = pneg %p227
    $region34: #{lapsrn_forward_pallas.2} parent=5 // pred_check_branch
      %230 = sbr.rel (%p228) target = $region36
    $region35: #{lapsrn_forward_pallas.2} parent=5 // pred_region
      // Predicated region
      $region37: #{lapsrn_forward_pallas.2} parent=35 // pred_check
        %p231 = pneg %p34
      $region38: #{lapsrn_forward_pallas.2} parent=35 // pred_check_branch
        %233 = sbr.rel (%p231) target = $region40
      $region39: #{lapsrn_forward_pallas.2} parent=35 // pred_region
        %p234 = scmp.lt.s32.totalorder %s14, 1
        %s235 = scalar_select %p234, %s14, 1
        %s236 = scalar_lea.vmem %s0, %s235
      $region40: #{lapsrn_forward_pallas.2} parent=35 // pred_fallthru
        _
    $region36: #{lapsrn_forward_pallas.2} parent=5 // pred_fallthru
      _
    %p237 = scmp.le.s32.totalorder 1, %s14
    %p238 = scmp.lt.s32.totalorder %s14, 3
    %p239 = pnand %p237, %p238
    %p240 = pneg %p239
    // Predicated region
    $region41: #{lapsrn_forward_pallas.2} parent=5 // pred_check
      _
    $region42: #{lapsrn_forward_pallas.2} parent=5 // pred_check_branch
      %242 = sbr.rel (%p239) target = $region44
    $region43: #{lapsrn_forward_pallas.2} parent=5 // pred_region
      %s243 = ssub.s32 %s14, 1
      %p244 = scmp.lt.s32.totalorder %s19, 1
      %s245 = scalar_select %p244, %s19, 1
      %s246 = scalar_lea.vmem %s0, %s245
      %p247 = pneg %p40
      %p248 = pneg %p37
      %p249 = pneg %p61
      %p250 = pneg %p58
      %p251 = pneg %p82
      %p252 = pneg %p79
      %p253 = pneg %p103
      %p254 = pneg %p100
      %p255 = pneg %p124
      %p256 = pneg %p121
      %p257 = pneg %p145
      %p258 = pneg %p142
      %p259 = pneg %p171
      %p260 = pneg %p168
      %p261 = scmp.lt.s32.totalorder %s19, 1
      %s262 = scalar_select %p261, %s19, 1
      %s263 = smul.addr %s262, 16
      %s264 = smul.addr %s263, 8
      %s265 = scalar_lea.vmem %s6, %s264
      %p266 = pneg %p197
      %p267 = pneg %p194
      %p268 = scmp.lt.s32.totalorder %s19, 1
      %s269 = scalar_select %p268, %s19, 1
      %s270 = smul.addr %s269, 2
      %s271 = scalar_lea.vmem %s7, %s270
      %p272 = scmp.lt.s32.totalorder %s19, 1
      %s273 = scalar_select %p272, %s19, 1
      %s274 = scalar_lea.vmem %s0, %s273
      %p275 = scmp.lt.s32.totalorder %s19, 1
      %s276 = scalar_select %p275, %s19, 1
      %s277 = smul.addr %s276, 16
      %s278 = smul.addr %s277, 8
      %s279 = scalar_lea.vmem %s6, %s278
      %p280 = scmp.lt.s32.totalorder %s19, 1
      %s281 = scalar_select %p280, %s19, 1
      %s282 = smul.addr %s281, 2
      %s283 = scalar_lea.vmem %s7, %s282
      %v285 = vld [vmem:[%s274] sm:$0x1]
      %v286 = vld [vmem:[%s1] sm:$0xff]
      %v287 = vld [vmem:[%s1 + $0x8] sm:$0xff]
      %v288 = vld [vmem:[%s1 + $0x10] sm:$0xff]
      %v289 = vld [vmem:[%s1 + $0x18] sm:$0xff]
      %v290 = vld [vmem:[%s1 + $0x20] sm:$0xff]
      %v291 = vld [vmem:[%s1 + $0x28] sm:$0xff]
      %v292 = vld [vmem:[%s1 + $0x30] sm:$0xff]
      %v293 = vld [vmem:[%s1 + $0x38] sm:$0xff]
      %v295 = vlaneseq
      %v296 = vshrl.u32 %v295, 7
      %v297 = vsub.s32 0, %v296
      %v298 = vrot.slane %v285, %v297
      %299 = vrot.lane.b32.xlu0 %v298, 1
      %v300 = vpop.permute.xlu0 %299
      %vm302 = vcmask 7168
      %v303 = vsel %vm302, 0.0, %v300
      %305 = vset.pattern.permute.xlu0 0
      %306 = vperm.xlu0 %305, %v286
      %v307 = vpop.permute.xlu0 %306
      %310 = vset.pattern.permute.xlu0 0
      %311 = vperm.xlu0 %310, %v287
      %v312 = vpop.permute.xlu0 %311
      %315 = vset.pattern.permute.xlu0 0
      %316 = vperm.xlu0 %315, %v288
      %v317 = vpop.permute.xlu0 %316
      %320 = vset.pattern.permute.xlu0 0
      %321 = vperm.xlu0 %320, %v289
      %v322 = vpop.permute.xlu0 %321
      %325 = vset.pattern.permute.xlu0 0
      %326 = vperm.xlu0 %325, %v290
      %v327 = vpop.permute.xlu0 %326
      %330 = vset.pattern.permute.xlu0 0
      %331 = vperm.xlu0 %330, %v291
      %v332 = vpop.permute.xlu0 %331
      %335 = vset.pattern.permute.xlu0 0
      %336 = vperm.xlu0 %335, %v292
      %v337 = vpop.permute.xlu0 %336
      %340 = vset.pattern.permute.xlu0 0
      %341 = vperm.xlu0 %340, %v293
      %v342 = vpop.permute.xlu0 %341
      %v344 = vlaneseq
      %v345 = vshrl.u32 %v344, 7
      %v346 = vsub.s32 0, %v345
      %v347 = vrot.slane %v303, %v346
      %v348 = vmul.f32 %v307, %v347
      %v349 = vmul.f32 %v312, %v347
      %v350 = vmul.f32 %v317, %v347
      %v351 = vmul.f32 %v322, %v347
      %v352 = vmul.f32 %v327, %v347
      %v353 = vmul.f32 %v332, %v347
      %v354 = vmul.f32 %v337, %v347
      %v355 = vmul.f32 %v342, %v347
      %356 = vset.pattern.permute.xlu0 1
      %357 = vperm.xlu0 %356, %v286
      %v358 = vpop.permute.xlu0 %357
      %360 = vset.pattern.permute.xlu0 1
      %361 = vperm.xlu0 %360, %v287
      %v362 = vpop.permute.xlu0 %361
      %364 = vset.pattern.permute.xlu0 1
      %365 = vperm.xlu0 %364, %v288
      %v366 = vpop.permute.xlu0 %365
      %368 = vset.pattern.permute.xlu0 1
      %369 = vperm.xlu0 %368, %v289
      %v370 = vpop.permute.xlu0 %369
      %372 = vset.pattern.permute.xlu0 1
      %373 = vperm.xlu0 %372, %v290
      %v374 = vpop.permute.xlu0 %373
      %376 = vset.pattern.permute.xlu0 1
      %377 = vperm.xlu0 %376, %v291
      %v378 = vpop.permute.xlu0 %377
      %380 = vset.pattern.permute.xlu0 1
      %381 = vperm.xlu0 %380, %v292
      %v382 = vpop.permute.xlu0 %381
      %384 = vset.pattern.permute.xlu0 1
      %385 = vperm.xlu0 %384, %v293
      %v386 = vpop.permute.xlu0 %385
      %v389 = vmul.f32 %v358, %v298
      %v390 = vmul.f32 %v362, %v298
      %v391 = vmul.f32 %v366, %v298
      %v392 = vmul.f32 %v370, %v298
      %v393 = vmul.f32 %v374, %v298
      %v394 = vmul.f32 %v378, %v298
      %v395 = vmul.f32 %v382, %v298
      %v396 = vmul.f32 %v386, %v298
      %v397 = vadd.f32 %v348, %v389
      %v398 = vadd.f32 %v349, %v390
      %v399 = vadd.f32 %v350, %v391
      %v400 = vadd.f32 %v351, %v392
      %v401 = vadd.f32 %v352, %v393
      %v402 = vadd.f32 %v353, %v394
      %v403 = vadd.f32 %v354, %v395
      %v404 = vadd.f32 %v355, %v396
      %405 = vrot.lane.b32.xlu0 %v298, 127
      %v406 = vpop.permute.xlu0 %405
      %vm408 = vcmask 121856
      %v409 = vsel %vm408, %v406, 0.0
      %410 = vset.pattern.permute.xlu0 2
      %411 = vperm.xlu0 %410, %v286
      %v412 = vpop.permute.xlu0 %411
      %414 = vset.pattern.permute.xlu0 2
      %415 = vperm.xlu0 %414, %v287
      %v416 = vpop.permute.xlu0 %415
      %418 = vset.pattern.permute.xlu0 2
      %419 = vperm.xlu0 %418, %v288
      %v420 = vpop.permute.xlu0 %419
      %422 = vset.pattern.permute.xlu0 2
      %423 = vperm.xlu0 %422, %v289
      %v424 = vpop.permute.xlu0 %423
      %426 = vset.pattern.permute.xlu0 2
      %427 = vperm.xlu0 %426, %v290
      %v428 = vpop.permute.xlu0 %427
      %430 = vset.pattern.permute.xlu0 2
      %431 = vperm.xlu0 %430, %v291
      %v432 = vpop.permute.xlu0 %431
      %434 = vset.pattern.permute.xlu0 2
      %435 = vperm.xlu0 %434, %v292
      %v436 = vpop.permute.xlu0 %435
      %438 = vset.pattern.permute.xlu0 2
      %439 = vperm.xlu0 %438, %v293
      %v440 = vpop.permute.xlu0 %439
      %v442 = vlaneseq
      %v443 = vshrl.u32 %v442, 7
      %v444 = vsub.s32 0, %v443
      %v445 = vrot.slane %v409, %v444
      %v446 = vmul.f32 %v412, %v445
      %v447 = vmul.f32 %v416, %v445
      %v448 = vmul.f32 %v420, %v445
      %v449 = vmul.f32 %v424, %v445
      %v450 = vmul.f32 %v428, %v445
      %v451 = vmul.f32 %v432, %v445
      %v452 = vmul.f32 %v436, %v445
      %v453 = vmul.f32 %v440, %v445
      %v454 = vadd.f32 %v397, %v446
      %v455 = vadd.f32 %v398, %v447
      %v456 = vadd.f32 %v399, %v448
      %v457 = vadd.f32 %v400, %v449
      %v458 = vadd.f32 %v401, %v450
      %v459 = vadd.f32 %v402, %v451
      %v460 = vadd.f32 %v403, %v452
      %v461 = vadd.f32 %v404, %v453
      %v462 = vmul.f32 %v454, 0.2
      %v463 = vmul.f32 %v455, 0.2
      %v464 = vmul.f32 %v456, 0.2
      %v465 = vmul.f32 %v457, 0.2
      %v466 = vmul.f32 %v458, 0.2
      %v467 = vmul.f32 %v459, 0.2
      %v468 = vmul.f32 %v460, 0.2
      %v469 = vmul.f32 %v461, 0.2
      %v470 = vmax.f32 %v454, %v462
      %v471 = vmax.f32 %v455, %v463
      %v472 = vmax.f32 %v456, %v464
      %v473 = vmax.f32 %v457, %v465
      %v474 = vmax.f32 %v458, %v466
      %v475 = vmax.f32 %v459, %v467
      %v476 = vmax.f32 %v460, %v468
      %v477 = vmax.f32 %v461, %v469
      %486 = vrot.lane.b32.xlu0 %v470, 1
      %v487 = vpop.permute.xlu0 %486
      %488 = vrot.lane.b32.xlu0 %v471, 1
      %v489 = vpop.permute.xlu0 %488
      %490 = vrot.lane.b32.xlu0 %v472, 1
      %v491 = vpop.permute.xlu0 %490
      %492 = vrot.lane.b32.xlu0 %v473, 1
      %v493 = vpop.permute.xlu0 %492
      %494 = vrot.lane.b32.xlu0 %v474, 1
      %v495 = vpop.permute.xlu0 %494
      %496 = vrot.lane.b32.xlu0 %v475, 1
      %v497 = vpop.permute.xlu0 %496
      %498 = vrot.lane.b32.xlu0 %v476, 1
      %v499 = vpop.permute.xlu0 %498
      %500 = vrot.lane.b32.xlu0 %v477, 1
      %v501 = vpop.permute.xlu0 %500
      %v510 = vsel %vm302, 0.0, %v487
      %v511 = vsel %vm302, 0.0, %v489
      %v512 = vsel %vm302, 0.0, %v491
      %v513 = vsel %vm302, 0.0, %v493
      %v514 = vsel %vm302, 0.0, %v495
      %v515 = vsel %vm302, 0.0, %v497
      %v516 = vsel %vm302, 0.0, %v499
      %v517 = vsel %vm302, 0.0, %v501
      %518 = vrot.lane.b32.xlu0 %v470, 127
      %v519 = vpop.permute.xlu0 %518
      %520 = vrot.lane.b32.xlu0 %v471, 127
      %v521 = vpop.permute.xlu0 %520
      %522 = vrot.lane.b32.xlu0 %v472, 127
      %v523 = vpop.permute.xlu0 %522
      %524 = vrot.lane.b32.xlu0 %v473, 127
      %v525 = vpop.permute.xlu0 %524
      %526 = vrot.lane.b32.xlu0 %v474, 127
      %v527 = vpop.permute.xlu0 %526
      %528 = vrot.lane.b32.xlu0 %v475, 127
      %v529 = vpop.permute.xlu0 %528
      %530 = vrot.lane.b32.xlu0 %v476, 127
      %v531 = vpop.permute.xlu0 %530
      %532 = vrot.lane.b32.xlu0 %v477, 127
      %v533 = vpop.permute.xlu0 %532
      %v542 = vsel %vm408, %v519, 0.0
      %v543 = vsel %vm408, %v521, 0.0
      %v544 = vsel %vm408, %v523, 0.0
      %v545 = vsel %vm408, %v525, 0.0
      %v546 = vsel %vm408, %v527, 0.0
      %v547 = vsel %vm408, %v529, 0.0
      %v548 = vsel %vm408, %v531, 0.0
      %v549 = vsel %vm408, %v533, 0.0
      %v550 = vpack.c.bf16 %v511, %v510
      %v551 = vpack.c.bf16 %v513, %v512
      %v552 = vpack.c.bf16 %v515, %v514
      %v553 = vpack.c.bf16 %v517, %v516
      %v554 = vpack.c.bf16 %v471, %v470
      %v555 = vpack.c.bf16 %v473, %v472
      %v556 = vpack.c.bf16 %v475, %v474
      %v557 = vpack.c.bf16 %v477, %v476
      %v558 = vpack.c.bf16 %v543, %v542
      %v559 = vpack.c.bf16 %v545, %v544
      %v560 = vpack.c.bf16 %v547, %v546
      %v561 = vpack.c.bf16 %v549, %v548
      %v562 = vld [vmem:[%s2] sm:$0xff]
      %v563 = vld [vmem:[%s2 + $0x8] sm:$0xff]
      %v564 = vld [vmem:[%s2 + $0x10] sm:$0xff]
      %v565 = vld [vmem:[%s2 + $0x18] sm:$0xff]
      %v566 = vld [vmem:[%s2 + $0x20] sm:$0xff]
      %v567 = vld [vmem:[%s2 + $0x28] sm:$0xff]
      %v568 = vld [vmem:[%s2 + $0x30] sm:$0xff]
      %v569 = vld [vmem:[%s2 + $0x38] sm:$0xff]
      %v578 = vunpack.c.l.b16 %v562
      %v579 = vunpack.c.h.b16 %v562
      %v580 = vunpack.c.l.b16 %v563
      %v581 = vunpack.c.h.b16 %v563
      %v582 = vunpack.c.l.b16 %v564
      %v583 = vunpack.c.h.b16 %v564
      %v584 = vunpack.c.l.b16 %v565
      %v585 = vunpack.c.h.b16 %v565
      %v586 = vunpack.c.l.b16 %v566
      %v587 = vunpack.c.h.b16 %v566
      %v588 = vunpack.c.l.b16 %v567
      %v589 = vunpack.c.h.b16 %v567
      %v590 = vunpack.c.l.b16 %v568
      %v591 = vunpack.c.h.b16 %v568
      %v592 = vunpack.c.l.b16 %v569
      %v593 = vunpack.c.h.b16 %v569
      %v594 = vpack.c.b16 %v580, %v578
      %v595 = vpack.c.b16 %v581, %v579
      %v596 = vpack.c.b16 %v584, %v582
      %v597 = vpack.c.b16 %v585, %v583
      %v598 = vpack.c.b16 %v588, %v586
      %v599 = vpack.c.b16 %v589, %v587
      %v600 = vpack.c.b16 %v592, %v590
      %v601 = vpack.c.b16 %v593, %v591
      %vm606 = vcmask 523264
      %v608 = vsel %vm606, %v595, 0
      %v611 = vsel %vm606, %v597, 0
      %v614 = vsel %vm606, %v599, 0
      %v617 = vsel %vm606, %v601, 0
      %619 = vmatprep.subr.bf16.mxu0 0
      %620 = vmatpush1.bf16.msra.mxu0 %v550
      %621 = vmatprep.subr.bf16.mxu0 0
      %622 = vmatpush1.bf16.msra.mxu0 %v551
      %623 = vmatprep.subr.bf16.mxu0 0
      %624 = vmatpush1.bf16.msra.mxu0 %v552
      %625 = vmatprep.subr.bf16.mxu0 0
      %626 = vmatpush1.bf16.msra.mxu0 %v553
      %627 = vmatprep.subr.bf16.mxu0 0
      %628 = vmatpush1.bf16.msra.mxu0 %v554
      %629 = vmatprep.subr.bf16.mxu0 0
      %630 = vmatpush1.bf16.msra.mxu0 %v555
      %631 = vmatprep.subr.bf16.mxu0 0
      %632 = vmatpush1.bf16.msra.mxu0 %v556
      %633 = vmatprep.subr.bf16.mxu0 0
      %634 = vmatpush1.bf16.msra.mxu0 %v557
      %635 = vmatprep.subr.bf16.mxu0 0
      %636 = vmatpush1.bf16.msra.mxu0 %v558
      %637 = vmatprep.subr.bf16.mxu0 0
      %638 = vmatpush1.bf16.msra.mxu0 %v559
      %639 = vmatprep.subr.bf16.mxu0 0
      %640 = vmatpush1.bf16.msra.mxu0 %v560
      %641 = vmatprep.subr.bf16.mxu0 0
      %642 = vmatpush1.bf16.msra.mxu0 %v561
      %643 = vmatprep.subr.bf16.mxu0 0
      %644 = vmatpush1.bf16.msra.mxu0 0
      %645 = vmatprep.subr.bf16.mxu0 0
      %646 = vmatpush1.bf16.msra.mxu0 0
      %647 = vmatprep.subr.bf16.mxu0 0
      %648 = vmatpush1.bf16.msra.mxu0 0
      %649 = vmatprep.subr.bf16.mxu0 0
      %650 = vmatpush1.bf16.msra.mxu0 0
      %651 = vmatprep.mubr.bf16.mxu0 %v608
      %652 = vmatmul.mubr.bf16.gmra.mrb[0].mxu0 %v594
      %v653 = vpop.f32.mrb[0].mxu0
      %v654 = vadd.f32 0.0, %v653
      %v655 = vpop.f32.mrb[0].mxu0
      %v656 = vpop.f32.mrb[0].mxu0
      %v657 = vadd.f32 0.0, %v656
      %v658 = vpop.f32.mrb[0].mxu0
      %659 = vmatprep.mubr.bf16.mxu0 %v611
      %660 = vmatmul.mubr.bf16.gmra.mrb[0].mxu0 %v596
      %v661 = vpop.f32.mrb[0].mxu0
      %v662 = vadd.f32 0.0, %v661
      %v663 = vpop.f32.mrb[0].mxu0
      %v664 = vpop.f32.mrb[0].mxu0
      %v665 = vadd.f32 0.0, %v664
      %v666 = vpop.f32.mrb[0].mxu0
      %667 = vmatprep.mubr.bf16.mxu0 %v614
      %668 = vmatmul.mubr.bf16.gmra.mrb[0].mxu0 %v598
      %v669 = vpop.f32.mrb[0].mxu0
      %v670 = vadd.f32 0.0, %v669
      %v671 = vpop.f32.mrb[0].mxu0
      %v672 = vpop.f32.mrb[0].mxu0
      %v673 = vadd.f32 0.0, %v672
      %v674 = vpop.f32.mrb[0].mxu0
      %675 = vmatprep.mubr.bf16.mxu0 %v617
      %676 = vmatmul.mubr.bf16.gmra.mrb[0].mxu0 %v600
      %v677 = vpop.f32.mrb[0].mxu0
      %v678 = vadd.f32 0.0, %v677
      %v679 = vpop.f32.mrb[0].mxu0
      %v680 = vpop.f32.mrb[0].mxu0
      %v681 = vadd.f32 0.0, %v680
      %v682 = vpop.f32.mrb[0].mxu0
      %683 = vdwg.mxu0
      %v684 = vmul.f32 %v654, 0.2
      %v685 = vmul.f32 %v657, 0.2
      %v686 = vmul.f32 %v662, 0.2
      %v687 = vmul.f32 %v665, 0.2
      %v688 = vmul.f32 %v670, 0.2
      %v689 = vmul.f32 %v673, 0.2
      %v690 = vmul.f32 %v678, 0.2
      %v691 = vmul.f32 %v681, 0.2
      %v692 = vmax.f32 %v654, %v684
      %v693 = vmax.f32 %v657, %v685
      %v694 = vmax.f32 %v662, %v686
      %v695 = vmax.f32 %v665, %v687
      %v696 = vmax.f32 %v670, %v688
      %v697 = vmax.f32 %v673, %v689
      %v698 = vmax.f32 %v678, %v690
      %v699 = vmax.f32 %v681, %v691
      %708 = vrot.lane.b32.xlu0 %v692, 1
      %v709 = vpop.permute.xlu0 %708
      %710 = vrot.lane.b32.xlu0 %v693, 1
      %v711 = vpop.permute.xlu0 %710
      %712 = vrot.lane.b32.xlu0 %v694, 1
      %v713 = vpop.permute.xlu0 %712
      %714 = vrot.lane.b32.xlu0 %v695, 1
      %v715 = vpop.permute.xlu0 %714
      %716 = vrot.lane.b32.xlu0 %v696, 1
      %v717 = vpop.permute.xlu0 %716
      %718 = vrot.lane.b32.xlu0 %v697, 1
      %v719 = vpop.permute.xlu0 %718
      %720 = vrot.lane.b32.xlu0 %v698, 1
      %v721 = vpop.permute.xlu0 %720
      %722 = vrot.lane.b32.xlu0 %v699, 1
      %v723 = vpop.permute.xlu0 %722
      %v732 = vsel %vm302, 0.0, %v709
      %v733 = vsel %vm302, 0.0, %v711
      %v734 = vsel %vm302, 0.0, %v713
      %v735 = vsel %vm302, 0.0, %v715
      %v736 = vsel %vm302, 0.0, %v717
      %v737 = vsel %vm302, 0.0, %v719
      %v738 = vsel %vm302, 0.0, %v721
      %v739 = vsel %vm302, 0.0, %v723
      %740 = vrot.lane.b32.xlu0 %v692, 127
      %v741 = vpop.permute.xlu0 %740
      %742 = vrot.lane.b32.xlu0 %v693, 127
      %v743 = vpop.permute.xlu0 %742
      %744 = vrot.lane.b32.xlu0 %v694, 127
      %v745 = vpop.permute.xlu0 %744
      %746 = vrot.lane.b32.xlu0 %v695, 127
      %v747 = vpop.permute.xlu0 %746
      %748 = vrot.lane.b32.xlu0 %v696, 127
      %v749 = vpop.permute.xlu0 %748
      %750 = vrot.lane.b32.xlu0 %v697, 127
      %v751 = vpop.permute.xlu0 %750
      %752 = vrot.lane.b32.xlu0 %v698, 127
      %v753 = vpop.permute.xlu0 %752
      %754 = vrot.lane.b32.xlu0 %v699, 127
      %v755 = vpop.permute.xlu0 %754
      %v764 = vsel %vm408, %v741, 0.0
      %v765 = vsel %vm408, %v743, 0.0
      %v766 = vsel %vm408, %v745, 0.0
      %v767 = vsel %vm408, %v747, 0.0
      %v768 = vsel %vm408, %v749, 0.0
      %v769 = vsel %vm408, %v751, 0.0
      %v770 = vsel %vm408, %v753, 0.0
      %v771 = vsel %vm408, %v755, 0.0
      %v772 = vpack.c.bf16 %v733, %v732
      %v773 = vpack.c.bf16 %v735, %v734
      %v774 = vpack.c.bf16 %v737, %v736
      %v775 = vpack.c.bf16 %v739, %v738
      %v776 = vpack.c.bf16 %v693, %v692
      %v777 = vpack.c.bf16 %v695, %v694
      %v778 = vpack.c.bf16 %v697, %v696
      %v779 = vpack.c.bf16 %v699, %v698
      %v780 = vpack.c.bf16 %v765, %v764
      %v781 = vpack.c.bf16 %v767, %v766
      %v782 = vpack.c.bf16 %v769, %v768
      %v783 = vpack.c.bf16 %v771, %v770
      %s784 = scalar_lea.vmem %s2, 64
      %v785 = vld [vmem:[%s784] sm:$0xff]
      %v786 = vld [vmem:[%s784 + $0x8] sm:$0xff]
      %v787 = vld [vmem:[%s784 + $0x10] sm:$0xff]
      %v788 = vld [vmem:[%s784 + $0x18] sm:$0xff]
      %v789 = vld [vmem:[%s784 + $0x20] sm:$0xff]
      %v790 = vld [vmem:[%s784 + $0x28] sm:$0xff]
      %v791 = vld [vmem:[%s784 + $0x30] sm:$0xff]
      %v792 = vld [vmem:[%s784 + $0x38] sm:$0xff]
      %v801 = vunpack.c.l.b16 %v785
      %v802 = vunpack.c.h.b16 %v785
      %v803 = vunpack.c.l.b16 %v786
      %v804 = vunpack.c.h.b16 %v786
      %v805 = vunpack.c.l.b16 %v787
      %v806 = vunpack.c.h.b16 %v787
      %v807 = vunpack.c.l.b16 %v788
      %v808 = vunpack.c.h.b16 %v788
      %v809 = vunpack.c.l.b16 %v789
      %v810 = vunpack.c.h.b16 %v789
      %v811 = vunpack.c.l.b16 %v790
      %v812 = vunpack.c.h.b16 %v790
      %v813 = vunpack.c.l.b16 %v791
      %v814 = vunpack.c.h.b16 %v791
      %v815 = vunpack.c.l.b16 %v792
      %v816 = vunpack.c.h.b16 %v792
      %v817 = vpack.c.b16 %v803, %v801
      %v818 = vpack.c.b16 %v804, %v802
      %v819 = vpack.c.b16 %v807, %v805
      %v820 = vpack.c.b16 %v808, %v806
      %v821 = vpack.c.b16 %v811, %v809
      %v822 = vpack.c.b16 %v812, %v810
      %v823 = vpack.c.b16 %v815, %v813
      %v824 = vpack.c.b16 %v816, %v814
      %v830 = vsel %vm606, %v818, 0
      %v833 = vsel %vm606, %v820, 0
      %v836 = vsel %vm606, %v822, 0
      %v839 = vsel %vm606, %v824, 0
      %841 = vmatprep.subr.bf16.mxu0 0
      %842 = vmatpush1.bf16.msra.mxu0 %v772
      %843 = vmatprep.subr.bf16.mxu0 0
      %844 = vmatpush1.bf16.msra.mxu0 %v773
      %845 = vmatprep.subr.bf16.mxu0 0
      %846 = vmatpush1.bf16.msra.mxu0 %v774
      %847 = vmatprep.subr.bf16.mxu0 0
      %848 = vmatpush1.bf16.msra.mxu0 %v775
      %849 = vmatprep.subr.bf16.mxu0 0
      %850 = vmatpush1.bf16.msra.mxu0 %v776
      %851 = vmatprep.subr.bf16.mxu0 0
      %852 = vmatpush1.bf16.msra.mxu0 %v777
      %853 = vmatprep.subr.bf16.mxu0 0
      %854 = vmatpush1.bf16.msra.mxu0 %v778
      %855 = vmatprep.subr.bf16.mxu0 0
      %856 = vmatpush1.bf16.msra.mxu0 %v779
      %857 = vmatprep.subr.bf16.mxu0 0
      %858 = vmatpush1.bf16.msra.mxu0 %v780
      %859 = vmatprep.subr.bf16.mxu0 0
      %860 = vmatpush1.bf16.msra.mxu0 %v781
      %861 = vmatprep.subr.bf16.mxu0 0
      %862 = vmatpush1.bf16.msra.mxu0 %v782
      %863 = vmatprep.subr.bf16.mxu0 0
      %864 = vmatpush1.bf16.msra.mxu0 %v783
      %865 = vmatprep.subr.bf16.mxu0 0
      %866 = vmatpush1.bf16.msra.mxu0 0
      %867 = vmatprep.subr.bf16.mxu0 0
      %868 = vmatpush1.bf16.msra.mxu0 0
      %869 = vmatprep.subr.bf16.mxu0 0
      %870 = vmatpush1.bf16.msra.mxu0 0
      %871 = vmatprep.subr.bf16.mxu0 0
      %872 = vmatpush1.bf16.msra.mxu0 0
      %873 = vmatprep.mubr.bf16.mxu0 %v830
      %874 = vmatmul.mubr.bf16.gmra.mrb[0].mxu0 %v817
      %v875 = vpop.f32.mrb[0].mxu0
      %v876 = vadd.f32 0.0, %v875
      %v877 = vpop.f32.mrb[0].mxu0
      %v878 = vpop.f32.mrb[0].mxu0
      %v879 = vadd.f32 0.0, %v878
      %v880 = vpop.f32.mrb[0].mxu0
      %881 = vmatprep.mubr.bf16.mxu0 %v833
      %882 = vmatmul.mubr.bf16.gmra.mrb[0].mxu0 %v819
      %v883 = vpop.f32.mrb[0].mxu0
      %v884 = vadd.f32 0.0, %v883
      %v885 = vpop.f32.mrb[0].mxu0
      %v886 = vpop.f32.mrb[0].mxu0
      %v887 = vadd.f32 0.0, %v886
      %v888 = vpop.f32.mrb[0].mxu0
      %889 = vmatprep.mubr.bf16.mxu0 %v836
      %890 = vmatmul.mubr.bf16.gmra.mrb[0].mxu0 %v821
      %v891 = vpop.f32.mrb[0].mxu0
      %v892 = vadd.f32 0.0, %v891
      %v893 = vpop.f32.mrb[0].mxu0
      %v894 = vpop.f32.mrb[0].mxu0
      %v895 = vadd.f32 0.0, %v894
      %v896 = vpop.f32.mrb[0].mxu0
      %897 = vmatprep.mubr.bf16.mxu0 %v839
      %898 = vmatmul.mubr.bf16.gmra.mrb[0].mxu0 %v823
      %v899 = vpop.f32.mrb[0].mxu0
      %v900 = vadd.f32 0.0, %v899
      %v901 = vpop.f32.mrb[0].mxu0
      %v902 = vpop.f32.mrb[0].mxu0
      %v903 = vadd.f32 0.0, %v902
      %v904 = vpop.f32.mrb[0].mxu0
      %905 = vdwg.mxu0
      %v906 = vmul.f32 %v876, 0.2
      %v907 = vmul.f32 %v879, 0.2
      %v908 = vmul.f32 %v884, 0.2
      %v909 = vmul.f32 %v887, 0.2
      %v910 = vmul.f32 %v892, 0.2
      %v911 = vmul.f32 %v895, 0.2
      %v912 = vmul.f32 %v900, 0.2
      %v913 = vmul.f32 %v903, 0.2
      %v914 = vmax.f32 %v876, %v906
      %v915 = vmax.f32 %v879, %v907
      %v916 = vmax.f32 %v884, %v908
      %v917 = vmax.f32 %v887, %v909
      %v918 = vmax.f32 %v892, %v910
      %v919 = vmax.f32 %v895, %v911
      %v920 = vmax.f32 %v900, %v912
      %v921 = vmax.f32 %v903, %v913
      %930 = vrot.lane.b32.xlu0 %v914, 1
      %v931 = vpop.permute.xlu0 %930
      %932 = vrot.lane.b32.xlu0 %v915, 1
      %v933 = vpop.permute.xlu0 %932
      %934 = vrot.lane.b32.xlu0 %v916, 1
      %v935 = vpop.permute.xlu0 %934
      %936 = vrot.lane.b32.xlu0 %v917, 1
      %v937 = vpop.permute.xlu0 %936
      %938 = vrot.lane.b32.xlu0 %v918, 1
      %v939 = vpop.permute.xlu0 %938
      %940 = vrot.lane.b32.xlu0 %v919, 1
      %v941 = vpop.permute.xlu0 %940
      %942 = vrot.lane.b32.xlu0 %v920, 1
      %v943 = vpop.permute.xlu0 %942
      %944 = vrot.lane.b32.xlu0 %v921, 1
      %v945 = vpop.permute.xlu0 %944
      %v954 = vsel %vm302, 0.0, %v931
      %v955 = vsel %vm302, 0.0, %v933
      %v956 = vsel %vm302, 0.0, %v935
      %v957 = vsel %vm302, 0.0, %v937
      %v958 = vsel %vm302, 0.0, %v939
      %v959 = vsel %vm302, 0.0, %v941
      %v960 = vsel %vm302, 0.0, %v943
      %v961 = vsel %vm302, 0.0, %v945
      %962 = vrot.lane.b32.xlu0 %v914, 127
      %v963 = vpop.permute.xlu0 %962
      %964 = vrot.lane.b32.xlu0 %v915, 127
      %v965 = vpop.permute.xlu0 %964
      %966 = vrot.lane.b32.xlu0 %v916, 127
      %v967 = vpop.permute.xlu0 %966
      %968 = vrot.lane.b32.xlu0 %v917, 127
      %v969 = vpop.permute.xlu0 %968
      %970 = vrot.lane.b32.xlu0 %v918, 127
      %v971 = vpop.permute.xlu0 %970
      %972 = vrot.lane.b32.xlu0 %v919, 127
      %v973 = vpop.permute.xlu0 %972
      %974 = vrot.lane.b32.xlu0 %v920, 127
      %v975 = vpop.permute.xlu0 %974
      %976 = vrot.lane.b32.xlu0 %v921, 127
      %v977 = vpop.permute.xlu0 %976
      %v986 = vsel %vm408, %v963, 0.0
      %v987 = vsel %vm408, %v965, 0.0
      %v988 = vsel %vm408, %v967, 0.0
      %v989 = vsel %vm408, %v969, 0.0
      %v990 = vsel %vm408, %v971, 0.0
      %v991 = vsel %vm408, %v973, 0.0
      %v992 = vsel %vm408, %v975, 0.0
      %v993 = vsel %vm408, %v977, 0.0
      %v994 = vpack.c.bf16 %v955, %v954
      %v995 = vpack.c.bf16 %v957, %v956
      %v996 = vpack.c.bf16 %v959, %v958
      %v997 = vpack.c.bf16 %v961, %v960
      %v998 = vpack.c.bf16 %v915, %v914
      %v999 = vpack.c.bf16 %v917, %v916
      %v1000 = vpack.c.bf16 %v919, %v918
      %v1001 = vpack.c.bf16 %v921, %v920
      %v1002 = vpack.c.bf16 %v987, %v986
      %v1003 = vpack.c.bf16 %v989, %v988
      %v1004 = vpack.c.bf16 %v991, %v990
      %v1005 = vpack.c.bf16 %v993, %v992
      %s1006 = scalar_lea.vmem %s2, 128
      %v1007 = vld [vmem:[%s1006] sm:$0xff]
      %v1008 = vld [vmem:[%s1006 + $0x8] sm:$0xff]
      %v1009 = vld [vmem:[%s1006 + $0x10] sm:$0xff]
      %v1010 = vld [vmem:[%s1006 + $0x18] sm:$0xff]
      %v1011 = vld [vmem:[%s1006 + $0x20] sm:$0xff]
      %v1012 = vld [vmem:[%s1006 + $0x28] sm:$0xff]
      %v1013 = vld [vmem:[%s1006 + $0x30] sm:$0xff]
      %v1014 = vld [vmem:[%s1006 + $0x38] sm:$0xff]
      %v1023 = vunpack.c.l.b16 %v1007
      %v1024 = vunpack.c.h.b16 %v1007
      %v1025 = vunpack.c.l.b16 %v1008
      %v1026 = vunpack.c.h.b16 %v1008
      %v1027 = vunpack.c.l.b16 %v1009
      %v1028 = vunpack.c.h.b16 %v1009
      %v1029 = vunpack.c.l.b16 %v1010
      %v1030 = vunpack.c.h.b16 %v1010
      %v1031 = vunpack.c.l.b16 %v1011
      %v1032 = vunpack.c.h.b16 %v1011
      %v1033 = vunpack.c.l.b16 %v1012
      %v1034 = vunpack.c.h.b16 %v1012
      %v1035 = vunpack.c.l.b16 %v1013
      %v1036 = vunpack.c.h.b16 %v1013
      %v1037 = vunpack.c.l.b16 %v1014
      %v1038 = vunpack.c.h.b16 %v1014
      %v1039 = vpack.c.b16 %v1025, %v1023
      %v1040 = vpack.c.b16 %v1026, %v1024
      %v1041 = vpack.c.b16 %v1029, %v1027
      %v1042 = vpack.c.b16 %v1030, %v1028
      %v1043 = vpack.c.b16 %v1033, %v1031
      %v1044 = vpack.c.b16 %v1034, %v1032
      %v1045 = vpack.c.b16 %v1037, %v1035
      %v1046 = vpack.c.b16 %v1038, %v1036
      %v1052 = vsel %vm606, %v1040, 0
      %v1055 = vsel %vm606, %v1042, 0
      %v1058 = vsel %vm606, %v1044, 0
      %v1061 = vsel %vm606, %v1046, 0
      %1063 = vmatprep.subr.bf16.mxu0 0
      %1064 = vmatpush1.bf16.msra.mxu0 %v994
      %1065 = vmatprep.subr.bf16.mxu0 0
      %1066 = vmatpush1.bf16.msra.mxu0 %v995
      %1067 = vmatprep.subr.bf16.mxu0 0
      %1068 = vmatpush1.bf16.msra.mxu0 %v996
      %1069 = vmatprep.subr.bf16.mxu0 0
      %1070 = vmatpush1.bf16.msra.mxu0 %v997
      %1071 = vmatprep.subr.bf16.mxu0 0
      %1072 = vmatpush1.bf16.msra.mxu0 %v998
      %1073 = vmatprep.subr.bf16.mxu0 0
      %1074 = vmatpush1.bf16.msra.mxu0 %v999
      %1075 = vmatprep.subr.bf16.mxu0 0
      %1076 = vmatpush1.bf16.msra.mxu0 %v1000
      %1077 = vmatprep.subr.bf16.mxu0 0
      %1078 = vmatpush1.bf16.msra.mxu0 %v1001
      %1079 = vmatprep.subr.bf16.mxu0 0
      %1080 = vmatpush1.bf16.msra.mxu0 %v1002
      %1081 = vmatprep.subr.bf16.mxu0 0
      %1082 = vmatpush1.bf16.msra.mxu0 %v1003
      %1083 = vmatprep.subr.bf16.mxu0 0
      %1084 = vmatpush1.bf16.msra.mxu0 %v1004
      %1085 = vmatprep.subr.bf16.mxu0 0
      %1086 = vmatpush1.bf16.msra.mxu0 %v1005
      %1087 = vmatprep.subr.bf16.mxu0 0
      %1088 = vmatpush1.bf16.msra.mxu0 0
      %1089 = vmatprep.subr.bf16.mxu0 0
      %1090 = vmatpush1.bf16.msra.mxu0 0
      %1091 = vmatprep.subr.bf16.mxu0 0
      %1092 = vmatpush1.bf16.msra.mxu0 0
      %1093 = vmatprep.subr.bf16.mxu0 0
      %1094 = vmatpush1.bf16.msra.mxu0 0
      %1095 = vmatprep.mubr.bf16.mxu0 %v1052
      %1096 = vmatmul.mubr.bf16.gmra.mrb[0].mxu0 %v1039
      %v1097 = vpop.f32.mrb[0].mxu0
      %v1098 = vadd.f32 0.0, %v1097
      %v1099 = vpop.f32.mrb[0].mxu0
      %v1100 = vpop.f32.mrb[0].mxu0
      %v1101 = vadd.f32 0.0, %v1100
      %v1102 = vpop.f32.mrb[0].mxu0
      %1103 = vmatprep.mubr.bf16.mxu0 %v1055
      %1104 = vmatmul.mubr.bf16.gmra.mrb[0].mxu0 %v1041
      %v1105 = vpop.f32.mrb[0].mxu0
      %v1106 = vadd.f32 0.0, %v1105
      %v1107 = vpop.f32.mrb[0].mxu0
      %v1108 = vpop.f32.mrb[0].mxu0
      %v1109 = vadd.f32 0.0, %v1108
      %v1110 = vpop.f32.mrb[0].mxu0
      %1111 = vmatprep.mubr.bf16.mxu0 %v1058
      %1112 = vmatmul.mubr.bf16.gmra.mrb[0].mxu0 %v1043
      %v1113 = vpop.f32.mrb[0].mxu0
      %v1114 = vadd.f32 0.0, %v1113
      %v1115 = vpop.f32.mrb[0].mxu0
      %v1116 = vpop.f32.mrb[0].mxu0
      %v1117 = vadd.f32 0.0, %v1116
      %v1118 = vpop.f32.mrb[0].mxu0
      %1119 = vmatprep.mubr.bf16.mxu0 %v1061
      %1120 = vmatmul.mubr.bf16.gmra.mrb[0].mxu0 %v1045
      %v1121 = vpop.f32.mrb[0].mxu0
      %v1122 = vadd.f32 0.0, %v1121
      %v1123 = vpop.f32.mrb[0].mxu0
      %v1124 = vpop.f32.mrb[0].mxu0
      %v1125 = vadd.f32 0.0, %v1124
      %v1126 = vpop.f32.mrb[0].mxu0
      %1127 = vdwg.mxu0
      %v1128 = vmul.f32 %v1098, 0.2
      %v1129 = vmul.f32 %v1101, 0.2
      %v1130 = vmul.f32 %v1106, 0.2
      %v1131 = vmul.f32 %v1109, 0.2
      %v1132 = vmul.f32 %v1114, 0.2
      %v1133 = vmul.f32 %v1117, 0.2
      %v1134 = vmul.f32 %v1122, 0.2
      %v1135 = vmul.f32 %v1125, 0.2
      %v1136 = vmax.f32 %v1098, %v1128
      %v1137 = vmax.f32 %v1101, %v1129
      %v1138 = vmax.f32 %v1106, %v1130
      %v1139 = vmax.f32 %v1109, %v1131
      %v1140 = vmax.f32 %v1114, %v1132
      %v1141 = vmax.f32 %v1117, %v1133
      %v1142 = vmax.f32 %v1122, %v1134
      %v1143 = vmax.f32 %v1125, %v1135
      %1152 = vrot.lane.b32.xlu0 %v1136, 1
      %v1153 = vpop.permute.xlu0 %1152
      %1154 = vrot.lane.b32.xlu0 %v1137, 1
      %v1155 = vpop.permute.xlu0 %1154
      %1156 = vrot.lane.b32.xlu0 %v1138, 1
      %v1157 = vpop.permute.xlu0 %1156
      %1158 = vrot.lane.b32.xlu0 %v1139, 1
      %v1159 = vpop.permute.xlu0 %1158
      %1160 = vrot.lane.b32.xlu0 %v1140, 1
      %v1161 = vpop.permute.xlu0 %1160
      %1162 = vrot.lane.b32.xlu0 %v1141, 1
      %v1163 = vpop.permute.xlu0 %1162
      %1164 = vrot.lane.b32.xlu0 %v1142, 1
      %v1165 = vpop.permute.xlu0 %1164
      %1166 = vrot.lane.b32.xlu0 %v1143, 1
      %v1167 = vpop.permute.xlu0 %1166
      %v1176 = vsel %vm302, 0.0, %v1153
      %v1177 = vsel %vm302, 0.0, %v1155
      %v1178 = vsel %vm302, 0.0, %v1157
      %v1179 = vsel %vm302, 0.0, %v1159
      %v1180 = vsel %vm302, 0.0, %v1161
      %v1181 = vsel %vm302, 0.0, %v1163
      %v1182 = vsel %vm302, 0.0, %v1165
      %v1183 = vsel %vm302, 0.0, %v1167
      %1184 = vrot.lane.b32.xlu0 %v1136, 127
      %v1185 = vpop.permute.xlu0 %1184
      %1186 = vrot.lane.b32.xlu0 %v1137, 127
      %v1187 = vpop.permute.xlu0 %1186
      %1188 = vrot.lane.b32.xlu0 %v1138, 127
      %v1189 = vpop.permute.xlu0 %1188
      %1190 = vrot.lane.b32.xlu0 %v1139, 127
      %v1191 = vpop.permute.xlu0 %1190
      %1192 = vrot.lane.b32.xlu0 %v1140, 127
      %v1193 = vpop.permute.xlu0 %1192
      %1194 = vrot.lane.b32.xlu0 %v1141, 127
      %v1195 = vpop.permute.xlu0 %1194
      %1196 = vrot.lane.b32.xlu0 %v1142, 127
      %v1197 = vpop.permute.xlu0 %1196
      %1198 = vrot.lane.b32.xlu0 %v1143, 127
      %v1199 = vpop.permute.xlu0 %1198
      %v1208 = vsel %vm408, %v1185, 0.0
      %v1209 = vsel %vm408, %v1187, 0.0
      %v1210 = vsel %vm408, %v1189, 0.0
      %v1211 = vsel %vm408, %v1191, 0.0
      %v1212 = vsel %vm408, %v1193, 0.0
      %v1213 = vsel %vm408, %v1195, 0.0
      %v1214 = vsel %vm408, %v1197, 0.0
      %v1215 = vsel %vm408, %v1199, 0.0
      %v1216 = vpack.c.bf16 %v1177, %v1176
      %v1217 = vpack.c.bf16 %v1179, %v1178
      %v1218 = vpack.c.bf16 %v1181, %v1180
      %v1219 = vpack.c.bf16 %v1183, %v1182
      %v1220 = vpack.c.bf16 %v1137, %v1136
      %v1221 = vpack.c.bf16 %v1139, %v1138
      %v1222 = vpack.c.bf16 %v1141, %v1140
      %v1223 = vpack.c.bf16 %v1143, %v1142
      %v1224 = vpack.c.bf16 %v1209, %v1208
      %v1225 = vpack.c.bf16 %v1211, %v1210
      %v1226 = vpack.c.bf16 %v1213, %v1212
      %v1227 = vpack.c.bf16 %v1215, %v1214
      %s1228 = scalar_lea.vmem %s2, 192
      %v1229 = vld [vmem:[%s1228] sm:$0xff]
      %v1230 = vld [vmem:[%s1228 + $0x8] sm:$0xff]
      %v1231 = vld [vmem:[%s1228 + $0x10] sm:$0xff]
      %v1232 = vld [vmem:[%s1228 + $0x18] sm:$0xff]
      %v1233 = vld [vmem:[%s1228 + $0x20] sm:$0xff]
      %v1234 = vld [vmem:[%s1228 + $0x28] sm:$0xff]
      %v1235 = vld [vmem:[%s1228 + $0x30] sm:$0xff]
      %v1236 = vld [vmem:[%s1228 + $0x38] sm:$0xff]
      %v1245 = vunpack.c.l.b16 %v1229
      %v1246 = vunpack.c.h.b16 %v1229
      %v1247 = vunpack.c.l.b16 %v1230
      %v1248 = vunpack.c.h.b16 %v1230
      %v1249 = vunpack.c.l.b16 %v1231
      %v1250 = vunpack.c.h.b16 %v1231
      %v1251 = vunpack.c.l.b16 %v1232
      %v1252 = vunpack.c.h.b16 %v1232
      %v1253 = vunpack.c.l.b16 %v1233
      %v1254 = vunpack.c.h.b16 %v1233
      %v1255 = vunpack.c.l.b16 %v1234
      %v1256 = vunpack.c.h.b16 %v1234
      %v1257 = vunpack.c.l.b16 %v1235
      %v1258 = vunpack.c.h.b16 %v1235
      %v1259 = vunpack.c.l.b16 %v1236
      %v1260 = vunpack.c.h.b16 %v1236
      %v1261 = vpack.c.b16 %v1247, %v1245
      %v1262 = vpack.c.b16 %v1248, %v1246
      %v1263 = vpack.c.b16 %v1251, %v1249
      %v1264 = vpack.c.b16 %v1252, %v1250
      %v1265 = vpack.c.b16 %v1255, %v1253
      %v1266 = vpack.c.b16 %v1256, %v1254
      %v1267 = vpack.c.b16 %v1259, %v1257
      %v1268 = vpack.c.b16 %v1260, %v1258
      %v1274 = vsel %vm606, %v1262, 0
      %v1277 = vsel %vm606, %v1264, 0
      %v1280 = vsel %vm606, %v1266, 0
      %v1283 = vsel %vm606, %v1268, 0
      %1285 = vmatprep.subr.bf16.mxu0 0
      %1286 = vmatpush1.bf16.msra.mxu0 %v1216
      %1287 = vmatprep.subr.bf16.mxu0 0
      %1288 = vmatpush1.bf16.msra.mxu0 %v1217
      %1289 = vmatprep.subr.bf16.mxu0 0
      %1290 = vmatpush1.bf16.msra.mxu0 %v1218
      %1291 = vmatprep.subr.bf16.mxu0 0
      %1292 = vmatpush1.bf16.msra.mxu0 %v1219
      %1293 = vmatprep.subr.bf16.mxu0 0
      %1294 = vmatpush1.bf16.msra.mxu0 %v1220
      %1295 = vmatprep.subr.bf16.mxu0 0
      %1296 = vmatpush1.bf16.msra.mxu0 %v1221
      %1297 = vmatprep.subr.bf16.mxu0 0
      %1298 = vmatpush1.bf16.msra.mxu0 %v1222
      %1299 = vmatprep.subr.bf16.mxu0 0
      %1300 = vmatpush1.bf16.msra.mxu0 %v1223
      %1301 = vmatprep.subr.bf16.mxu0 0
      %1302 = vmatpush1.bf16.msra.mxu0 %v1224
      %1303 = vmatprep.subr.bf16.mxu0 0
      %1304 = vmatpush1.bf16.msra.mxu0 %v1225
      %1305 = vmatprep.subr.bf16.mxu0 0
      %1306 = vmatpush1.bf16.msra.mxu0 %v1226
      %1307 = vmatprep.subr.bf16.mxu0 0
      %1308 = vmatpush1.bf16.msra.mxu0 %v1227
      %1309 = vmatprep.subr.bf16.mxu0 0
      %1310 = vmatpush1.bf16.msra.mxu0 0
      %1311 = vmatprep.subr.bf16.mxu0 0
      %1312 = vmatpush1.bf16.msra.mxu0 0
      %1313 = vmatprep.subr.bf16.mxu0 0
      %1314 = vmatpush1.bf16.msra.mxu0 0
      %1315 = vmatprep.subr.bf16.mxu0 0
      %1316 = vmatpush1.bf16.msra.mxu0 0
      %1317 = vmatprep.mubr.bf16.mxu0 %v1274
      %1318 = vmatmul.mubr.bf16.gmra.mrb[0].mxu0 %v1261
      %v1319 = vpop.f32.mrb[0].mxu0
      %v1320 = vadd.f32 0.0, %v1319
      %v1321 = vpop.f32.mrb[0].mxu0
      %v1322 = vpop.f32.mrb[0].mxu0
      %v1323 = vadd.f32 0.0, %v1322
      %v1324 = vpop.f32.mrb[0].mxu0
      %1325 = vmatprep.mubr.bf16.mxu0 %v1277
      %1326 = vmatmul.mubr.bf16.gmra.mrb[0].mxu0 %v1263
      %v1327 = vpop.f32.mrb[0].mxu0
      %v1328 = vadd.f32 0.0, %v1327
      %v1329 = vpop.f32.mrb[0].mxu0
      %v1330 = vpop.f32.mrb[0].mxu0
      %v1331 = vadd.f32 0.0, %v1330
      %v1332 = vpop.f32.mrb[0].mxu0
      %1333 = vmatprep.mubr.bf16.mxu0 %v1280
      %1334 = vmatmul.mubr.bf16.gmra.mrb[0].mxu0 %v1265
      %v1335 = vpop.f32.mrb[0].mxu0
      %v1336 = vadd.f32 0.0, %v1335
      %v1337 = vpop.f32.mrb[0].mxu0
      %v1338 = vpop.f32.mrb[0].mxu0
      %v1339 = vadd.f32 0.0, %v1338
      %v1340 = vpop.f32.mrb[0].mxu0
      %1341 = vmatprep.mubr.bf16.mxu0 %v1283
      %1342 = vmatmul.mubr.bf16.gmra.mrb[0].mxu0 %v1267
      %v1343 = vpop.f32.mrb[0].mxu0
      %v1344 = vadd.f32 0.0, %v1343
      %v1345 = vpop.f32.mrb[0].mxu0
      %v1346 = vpop.f32.mrb[0].mxu0
      %v1347 = vadd.f32 0.0, %v1346
      %v1348 = vpop.f32.mrb[0].mxu0
      %1349 = vdwg.mxu0
      %v1350 = vmul.f32 %v1320, 0.2
      %v1351 = vmul.f32 %v1323, 0.2
      %v1352 = vmul.f32 %v1328, 0.2
      %v1353 = vmul.f32 %v1331, 0.2
      %v1354 = vmul.f32 %v1336, 0.2
      %v1355 = vmul.f32 %v1339, 0.2
      %v1356 = vmul.f32 %v1344, 0.2
      %v1357 = vmul.f32 %v1347, 0.2
      %v1358 = vmax.f32 %v1320, %v1350
      %v1359 = vmax.f32 %v1323, %v1351
      %v1360 = vmax.f32 %v1328, %v1352
      %v1361 = vmax.f32 %v1331, %v1353
      %v1362 = vmax.f32 %v1336, %v1354
      %v1363 = vmax.f32 %v1339, %v1355
      %v1364 = vmax.f32 %v1344, %v1356
      %v1365 = vmax.f32 %v1347, %v1357
      %1374 = vrot.lane.b32.xlu0 %v1358, 1
      %v1375 = vpop.permute.xlu0 %1374
      %1376 = vrot.lane.b32.xlu0 %v1359, 1
      %v1377 = vpop.permute.xlu0 %1376
      %1378 = vrot.lane.b32.xlu0 %v1360, 1
      %v1379 = vpop.permute.xlu0 %1378
      %1380 = vrot.lane.b32.xlu0 %v1361, 1
      %v1381 = vpop.permute.xlu0 %1380
      %1382 = vrot.lane.b32.xlu0 %v1362, 1
      %v1383 = vpop.permute.xlu0 %1382
      %1384 = vrot.lane.b32.xlu0 %v1363, 1
      %v1385 = vpop.permute.xlu0 %1384
      %1386 = vrot.lane.b32.xlu0 %v1364, 1
      %v1387 = vpop.permute.xlu0 %1386
      %1388 = vrot.lane.b32.xlu0 %v1365, 1
      %v1389 = vpop.permute.xlu0 %1388
      %v1398 = vsel %vm302, 0.0, %v1375
      %v1399 = vsel %vm302, 0.0, %v1377
      %v1400 = vsel %vm302, 0.0, %v1379
      %v1401 = vsel %vm302, 0.0, %v1381
      %v1402 = vsel %vm302, 0.0, %v1383
      %v1403 = vsel %vm302, 0.0, %v1385
      %v1404 = vsel %vm302, 0.0, %v1387
      %v1405 = vsel %vm302, 0.0, %v1389
      %1406 = vrot.lane.b32.xlu0 %v1358, 127
      %v1407 = vpop.permute.xlu0 %1406
      %1408 = vrot.lane.b32.xlu0 %v1359, 127
      %v1409 = vpop.permute.xlu0 %1408
      %1410 = vrot.lane.b32.xlu0 %v1360, 127
      %v1411 = vpop.permute.xlu0 %1410
      %1412 = vrot.lane.b32.xlu0 %v1361, 127
      %v1413 = vpop.permute.xlu0 %1412
      %1414 = vrot.lane.b32.xlu0 %v1362, 127
      %v1415 = vpop.permute.xlu0 %1414
      %1416 = vrot.lane.b32.xlu0 %v1363, 127
      %v1417 = vpop.permute.xlu0 %1416
      %1418 = vrot.lane.b32.xlu0 %v1364, 127
      %v1419 = vpop.permute.xlu0 %1418
      %1420 = vrot.lane.b32.xlu0 %v1365, 127
      %v1421 = vpop.permute.xlu0 %1420
      %v1430 = vsel %vm408, %v1407, 0.0
      %v1431 = vsel %vm408, %v1409, 0.0
      %v1432 = vsel %vm408, %v1411, 0.0
      %v1433 = vsel %vm408, %v1413, 0.0
      %v1434 = vsel %vm408, %v1415, 0.0
      %v1435 = vsel %vm408, %v1417, 0.0
      %v1436 = vsel %vm408, %v1419, 0.0
      %v1437 = vsel %vm408, %v1421, 0.0
      %v1438 = vpack.c.bf16 %v1399, %v1398
      %v1439 = vpack.c.bf16 %v1401, %v1400
      %v1440 = vpack.c.bf16 %v1403, %v1402
      %v1441 = vpack.c.bf16 %v1405, %v1404
      %v1442 = vpack.c.bf16 %v1359, %v1358
      %v1443 = vpack.c.bf16 %v1361, %v1360
      %v1444 = vpack.c.bf16 %v1363, %v1362
      %v1445 = vpack.c.bf16 %v1365, %v1364
      %v1446 = vpack.c.bf16 %v1431, %v1430
      %v1447 = vpack.c.bf16 %v1433, %v1432
      %v1448 = vpack.c.bf16 %v1435, %v1434
      %v1449 = vpack.c.bf16 %v1437, %v1436
      %s1450 = scalar_lea.vmem %s2, 256
      %v1451 = vld [vmem:[%s1450] sm:$0xff]
      %v1452 = vld [vmem:[%s1450 + $0x8] sm:$0xff]
      %v1453 = vld [vmem:[%s1450 + $0x10] sm:$0xff]
      %v1454 = vld [vmem:[%s1450 + $0x18] sm:$0xff]
      %v1455 = vld [vmem:[%s1450 + $0x20] sm:$0xff]
      %v1456 = vld [vmem:[%s1450 + $0x28] sm:$0xff]
      %v1457 = vld [vmem:[%s1450 + $0x30] sm:$0xff]
      %v1458 = vld [vmem:[%s1450 + $0x38] sm:$0xff]
      %v1467 = vunpack.c.l.b16 %v1451
      %v1468 = vunpack.c.h.b16 %v1451
      %v1469 = vunpack.c.l.b16 %v1452
      %v1470 = vunpack.c.h.b16 %v1452
      %v1471 = vunpack.c.l.b16 %v1453
      %v1472 = vunpack.c.h.b16 %v1453
      %v1473 = vunpack.c.l.b16 %v1454
      %v1474 = vunpack.c.h.b16 %v1454
      %v1475 = vunpack.c.l.b16 %v1455
      %v1476 = vunpack.c.h.b16 %v1455
      %v1477 = vunpack.c.l.b16 %v1456
      %v1478 = vunpack.c.h.b16 %v1456
      %v1479 = vunpack.c.l.b16 %v1457
      %v1480 = vunpack.c.h.b16 %v1457
      %v1481 = vunpack.c.l.b16 %v1458
      %v1482 = vunpack.c.h.b16 %v1458
      %v1483 = vpack.c.b16 %v1469, %v1467
      %v1484 = vpack.c.b16 %v1470, %v1468
      %v1485 = vpack.c.b16 %v1473, %v1471
      %v1486 = vpack.c.b16 %v1474, %v1472
      %v1487 = vpack.c.b16 %v1477, %v1475
      %v1488 = vpack.c.b16 %v1478, %v1476
      %v1489 = vpack.c.b16 %v1481, %v1479
      %v1490 = vpack.c.b16 %v1482, %v1480
      %v1496 = vsel %vm606, %v1484, 0
      %v1499 = vsel %vm606, %v1486, 0
      %v1502 = vsel %vm606, %v1488, 0
      %v1505 = vsel %vm606, %v1490, 0
      %1507 = vmatprep.subr.bf16.mxu0 0
      %1508 = vmatpush1.bf16.msra.mxu0 %v1438
      %1509 = vmatprep.subr.bf16.mxu0 0
      %1510 = vmatpush1.bf16.msra.mxu0 %v1439
      %1511 = vmatprep.subr.bf16.mxu0 0
      %1512 = vmatpush1.bf16.msra.mxu0 %v1440
      %1513 = vmatprep.subr.bf16.mxu0 0
      %1514 = vmatpush1.bf16.msra.mxu0 %v1441
      %1515 = vmatprep.subr.bf16.mxu0 0
      %1516 = vmatpush1.bf16.msra.mxu0 %v1442
      %1517 = vmatprep.subr.bf16.mxu0 0
      %1518 = vmatpush1.bf16.msra.mxu0 %v1443
      %1519 = vmatprep.subr.bf16.mxu0 0
      %1520 = vmatpush1.bf16.msra.mxu0 %v1444
      %1521 = vmatprep.subr.bf16.mxu0 0
      %1522 = vmatpush1.bf16.msra.mxu0 %v1445
      %1523 = vmatprep.subr.bf16.mxu0 0
      %1524 = vmatpush1.bf16.msra.mxu0 %v1446
      %1525 = vmatprep.subr.bf16.mxu0 0
      %1526 = vmatpush1.bf16.msra.mxu0 %v1447
      %1527 = vmatprep.subr.bf16.mxu0 0
      %1528 = vmatpush1.bf16.msra.mxu0 %v1448
      %1529 = vmatprep.subr.bf16.mxu0 0
      %1530 = vmatpush1.bf16.msra.mxu0 %v1449
      %1531 = vmatprep.subr.bf16.mxu0 0
      %1532 = vmatpush1.bf16.msra.mxu0 0
      %1533 = vmatprep.subr.bf16.mxu0 0
      %1534 = vmatpush1.bf16.msra.mxu0 0
      %1535 = vmatprep.subr.bf16.mxu0 0
      %1536 = vmatpush1.bf16.msra.mxu0 0
      %1537 = vmatprep.subr.bf16.mxu0 0
      %1538 = vmatpush1.bf16.msra.mxu0 0
      %1539 = vmatprep.mubr.bf16.mxu0 %v1496
      %1540 = vmatmul.mubr.bf16.gmra.mrb[0].mxu0 %v1483
      %v1541 = vpop.f32.mrb[0].mxu0
      %v1542 = vadd.f32 0.0, %v1541
      %v1543 = vpop.f32.mrb[0].mxu0
      %v1544 = vpop.f32.mrb[0].mxu0
      %v1545 = vadd.f32 0.0, %v1544
      %v1546 = vpop.f32.mrb[0].mxu0
      %1547 = vmatprep.mubr.bf16.mxu0 %v1499
      %1548 = vmatmul.mubr.bf16.gmra.mrb[0].mxu0 %v1485
      %v1549 = vpop.f32.mrb[0].mxu0
      %v1550 = vadd.f32 0.0, %v1549
      %v1551 = vpop.f32.mrb[0].mxu0
      %v1552 = vpop.f32.mrb[0].mxu0
      %v1553 = vadd.f32 0.0, %v1552
      %v1554 = vpop.f32.mrb[0].mxu0
      %1555 = vmatprep.mubr.bf16.mxu0 %v1502
      %1556 = vmatmul.mubr.bf16.gmra.mrb[0].mxu0 %v1487
      %v1557 = vpop.f32.mrb[0].mxu0
      %v1558 = vadd.f32 0.0, %v1557
      %v1559 = vpop.f32.mrb[0].mxu0
      %v1560 = vpop.f32.mrb[0].mxu0
      %v1561 = vadd.f32 0.0, %v1560
      %v1562 = vpop.f32.mrb[0].mxu0
      %1563 = vmatprep.mubr.bf16.mxu0 %v1505
      %1564 = vmatmul.mubr.bf16.gmra.mrb[0].mxu0 %v1489
      %v1565 = vpop.f32.mrb[0].mxu0
      %v1566 = vadd.f32 0.0, %v1565
      %v1567 = vpop.f32.mrb[0].mxu0
      %v1568 = vpop.f32.mrb[0].mxu0
      %v1569 = vadd.f32 0.0, %v1568
      %v1570 = vpop.f32.mrb[0].mxu0
      %1571 = vdwg.mxu0
      %v1572 = vmul.f32 %v1542, 0.2
      %v1573 = vmul.f32 %v1545, 0.2
      %v1574 = vmul.f32 %v1550, 0.2
      %v1575 = vmul.f32 %v1553, 0.2
      %v1576 = vmul.f32 %v1558, 0.2
      %v1577 = vmul.f32 %v1561, 0.2
      %v1578 = vmul.f32 %v1566, 0.2
      %v1579 = vmul.f32 %v1569, 0.2
      %v1580 = vmax.f32 %v1542, %v1572
      %v1581 = vmax.f32 %v1545, %v1573
      %v1582 = vmax.f32 %v1550, %v1574
      %v1583 = vmax.f32 %v1553, %v1575
      %v1584 = vmax.f32 %v1558, %v1576
      %v1585 = vmax.f32 %v1561, %v1577
      %v1586 = vmax.f32 %v1566, %v1578
      %v1587 = vmax.f32 %v1569, %v1579
      %1596 = vrot.lane.b32.xlu0 %v1580, 1
      %v1597 = vpop.permute.xlu0 %1596
      %1598 = vrot.lane.b32.xlu0 %v1581, 1
      %v1599 = vpop.permute.xlu0 %1598
      %1600 = vrot.lane.b32.xlu0 %v1582, 1
      %v1601 = vpop.permute.xlu0 %1600
      %1602 = vrot.lane.b32.xlu0 %v1583, 1
      %v1603 = vpop.permute.xlu0 %1602
      %1604 = vrot.lane.b32.xlu0 %v1584, 1
      %v1605 = vpop.permute.xlu0 %1604
      %1606 = vrot.lane.b32.xlu0 %v1585, 1
      %v1607 = vpop.permute.xlu0 %1606
      %1608 = vrot.lane.b32.xlu0 %v1586, 1
      %v1609 = vpop.permute.xlu0 %1608
      %1610 = vrot.lane.b32.xlu0 %v1587, 1
      %v1611 = vpop.permute.xlu0 %1610
      %v1620 = vsel %vm302, 0.0, %v1597
      %v1621 = vsel %vm302, 0.0, %v1599
      %v1622 = vsel %vm302, 0.0, %v1601
      %v1623 = vsel %vm302, 0.0, %v1603
      %v1624 = vsel %vm302, 0.0, %v1605
      %v1625 = vsel %vm302, 0.0, %v1607
      %v1626 = vsel %vm302, 0.0, %v1609
      %v1627 = vsel %vm302, 0.0, %v1611
      %1628 = vrot.lane.b32.xlu0 %v1580, 127
      %v1629 = vpop.permute.xlu0 %1628
      %1630 = vrot.lane.b32.xlu0 %v1581, 127
      %v1631 = vpop.permute.xlu0 %1630
      %1632 = vrot.lane.b32.xlu0 %v1582, 127
      %v1633 = vpop.permute.xlu0 %1632
      %1634 = vrot.lane.b32.xlu0 %v1583, 127
      %v1635 = vpop.permute.xlu0 %1634
      %1636 = vrot.lane.b32.xlu0 %v1584, 127
      %v1637 = vpop.permute.xlu0 %1636
      %1638 = vrot.lane.b32.xlu0 %v1585, 127
      %v1639 = vpop.permute.xlu0 %1638
      %1640 = vrot.lane.b32.xlu0 %v1586, 127
      %v1641 = vpop.permute.xlu0 %1640
      %1642 = vrot.lane.b32.xlu0 %v1587, 127
      %v1643 = vpop.permute.xlu0 %1642
      %v1652 = vsel %vm408, %v1629, 0.0
      %v1653 = vsel %vm408, %v1631, 0.0
      %v1654 = vsel %vm408, %v1633, 0.0
      %v1655 = vsel %vm408, %v1635, 0.0
      %v1656 = vsel %vm408, %v1637, 0.0
      %v1657 = vsel %vm408, %v1639, 0.0
      %v1658 = vsel %vm408, %v1641, 0.0
      %v1659 = vsel %vm408, %v1643, 0.0
      %v1660 = vpack.c.bf16 %v1621, %v1620
      %v1661 = vpack.c.bf16 %v1623, %v1622
      %v1662 = vpack.c.bf16 %v1625, %v1624
      %v1663 = vpack.c.bf16 %v1627, %v1626
      %v1664 = vpack.c.bf16 %v1581, %v1580
      %v1665 = vpack.c.bf16 %v1583, %v1582
      %v1666 = vpack.c.bf16 %v1585, %v1584
      %v1667 = vpack.c.bf16 %v1587, %v1586
      %v1668 = vpack.c.bf16 %v1653, %v1652
      %v1669 = vpack.c.bf16 %v1655, %v1654
      %v1670 = vpack.c.bf16 %v1657, %v1656
      %v1671 = vpack.c.bf16 %v1659, %v1658
      %s1672 = scalar_lea.vmem %s2, 320
      %v1673 = vld [vmem:[%s1672] sm:$0xff]
      %v1674 = vld [vmem:[%s1672 + $0x8] sm:$0xff]
      %v1675 = vld [vmem:[%s1672 + $0x10] sm:$0xff]
      %v1676 = vld [vmem:[%s1672 + $0x18] sm:$0xff]
      %v1677 = vld [vmem:[%s1672 + $0x20] sm:$0xff]
      %v1678 = vld [vmem:[%s1672 + $0x28] sm:$0xff]
      %v1679 = vld [vmem:[%s1672 + $0x30] sm:$0xff]
      %v1680 = vld [vmem:[%s1672 + $0x38] sm:$0xff]
      %v1689 = vunpack.c.l.b16 %v1673
      %v1690 = vunpack.c.h.b16 %v1673
      %v1691 = vunpack.c.l.b16 %v1674
      %v1692 = vunpack.c.h.b16 %v1674
      %v1693 = vunpack.c.l.b16 %v1675
      %v1694 = vunpack.c.h.b16 %v1675
      %v1695 = vunpack.c.l.b16 %v1676
      %v1696 = vunpack.c.h.b16 %v1676
      %v1697 = vunpack.c.l.b16 %v1677
      %v1698 = vunpack.c.h.b16 %v1677
      %v1699 = vunpack.c.l.b16 %v1678
      %v1700 = vunpack.c.h.b16 %v1678
      %v1701 = vunpack.c.l.b16 %v1679
      %v1702 = vunpack.c.h.b16 %v1679
      %v1703 = vunpack.c.l.b16 %v1680
      %v1704 = vunpack.c.h.b16 %v1680
      %v1705 = vpack.c.b16 %v1691, %v1689
      %v1706 = vpack.c.b16 %v1692, %v1690
      %v1707 = vpack.c.b16 %v1695, %v1693
      %v1708 = vpack.c.b16 %v1696, %v1694
      %v1709 = vpack.c.b16 %v1699, %v1697
      %v1710 = vpack.c.b16 %v1700, %v1698
      %v1711 = vpack.c.b16 %v1703, %v1701
      %v1712 = vpack.c.b16 %v1704, %v1702
      %v1718 = vsel %vm606, %v1706, 0
      %v1721 = vsel %vm606, %v1708, 0
      %v1724 = vsel %vm606, %v1710, 0
      %v1727 = vsel %vm606, %v1712, 0
      %1729 = vmatprep.subr.bf16.mxu0 0
      %1730 = vmatpush1.bf16.msra.mxu0 %v1660
      %1731 = vmatprep.subr.bf16.mxu0 0
      %1732 = vmatpush1.bf16.msra.mxu0 %v1661
      %1733 = vmatprep.subr.bf16.mxu0 0
      %1734 = vmatpush1.bf16.msra.mxu0 %v1662
      %1735 = vmatprep.subr.bf16.mxu0 0
      %1736 = vmatpush1.bf16.msra.mxu0 %v1663
      %1737 = vmatprep.subr.bf16.mxu0 0
      %1738 = vmatpush1.bf16.msra.mxu0 %v1664
      %1739 = vmatprep.subr.bf16.mxu0 0
      %1740 = vmatpush1.bf16.msra.mxu0 %v1665
      %1741 = vmatprep.subr.bf16.mxu0 0
      %1742 = vmatpush1.bf16.msra.mxu0 %v1666
      %1743 = vmatprep.subr.bf16.mxu0 0
      %1744 = vmatpush1.bf16.msra.mxu0 %v1667
      %1745 = vmatprep.subr.bf16.mxu0 0
      %1746 = vmatpush1.bf16.msra.mxu0 %v1668
      %1747 = vmatprep.subr.bf16.mxu0 0
      %1748 = vmatpush1.bf16.msra.mxu0 %v1669
      %1749 = vmatprep.subr.bf16.mxu0 0
      %1750 = vmatpush1.bf16.msra.mxu0 %v1670
      %1751 = vmatprep.subr.bf16.mxu0 0
      %1752 = vmatpush1.bf16.msra.mxu0 %v1671
      %1753 = vmatprep.subr.bf16.mxu0 0
      %1754 = vmatpush1.bf16.msra.mxu0 0
      %1755 = vmatprep.subr.bf16.mxu0 0
      %1756 = vmatpush1.bf16.msra.mxu0 0
      %1757 = vmatprep.subr.bf16.mxu0 0
      %1758 = vmatpush1.bf16.msra.mxu0 0
      %1759 = vmatprep.subr.bf16.mxu0 0
      %1760 = vmatpush1.bf16.msra.mxu0 0
      %1761 = vmatprep.mubr.bf16.mxu0 %v1718
      %1762 = vmatmul.mubr.bf16.gmra.mrb[0].mxu0 %v1705
      %v1763 = vpop.f32.mrb[0].mxu0
      %v1764 = vadd.f32 0.0, %v1763
      %v1765 = vpop.f32.mrb[0].mxu0
      %v1766 = vpop.f32.mrb[0].mxu0
      %v1767 = vadd.f32 0.0, %v1766
      %v1768 = vpop.f32.mrb[0].mxu0
      %1769 = vmatprep.mubr.bf16.mxu0 %v1721
      %1770 = vmatmul.mubr.bf16.gmra.mrb[0].mxu0 %v1707
      %v1771 = vpop.f32.mrb[0].mxu0
      %v1772 = vadd.f32 0.0, %v1771
      %v1773 = vpop.f32.mrb[0].mxu0
      %v1774 = vpop.f32.mrb[0].mxu0
      %v1775 = vadd.f32 0.0, %v1774
      %v1776 = vpop.f32.mrb[0].mxu0
      %1777 = vmatprep.mubr.bf16.mxu0 %v1724
      %1778 = vmatmul.mubr.bf16.gmra.mrb[0].mxu0 %v1709
      %v1779 = vpop.f32.mrb[0].mxu0
      %v1780 = vadd.f32 0.0, %v1779
      %v1781 = vpop.f32.mrb[0].mxu0
      %v1782 = vpop.f32.mrb[0].mxu0
      %v1783 = vadd.f32 0.0, %v1782
      %v1784 = vpop.f32.mrb[0].mxu0
      %1785 = vmatprep.mubr.bf16.mxu0 %v1727
      %1786 = vmatmul.mubr.bf16.gmra.mrb[0].mxu0 %v1711
      %v1787 = vpop.f32.mrb[0].mxu0
      %v1788 = vadd.f32 0.0, %v1787
      %v1789 = vpop.f32.mrb[0].mxu0
      %v1790 = vpop.f32.mrb[0].mxu0
      %v1791 = vadd.f32 0.0, %v1790
      %v1792 = vpop.f32.mrb[0].mxu0
      %1793 = vdwg.mxu0
      %v1794 = vmul.f32 %v1764, 0.2
      %v1795 = vmul.f32 %v1767, 0.2
      %v1796 = vmul.f32 %v1772, 0.2
      %v1797 = vmul.f32 %v1775, 0.2
      %v1798 = vmul.f32 %v1780, 0.2
      %v1799 = vmul.f32 %v1783, 0.2
      %v1800 = vmul.f32 %v1788, 0.2
      %v1801 = vmul.f32 %v1791, 0.2
      %v1802 = vmax.f32 %v1764, %v1794
      %v1803 = vmax.f32 %v1767, %v1795
      %v1804 = vmax.f32 %v1772, %v1796
      %v1805 = vmax.f32 %v1775, %v1797
      %v1806 = vmax.f32 %v1780, %v1798
      %v1807 = vmax.f32 %v1783, %v1799
      %v1808 = vmax.f32 %v1788, %v1800
      %v1809 = vmax.f32 %v1791, %v1801
      %1818 = vrot.lane.b32.xlu0 %v1802, 1
      %v1819 = vpop.permute.xlu0 %1818
      %1820 = vrot.lane.b32.xlu0 %v1803, 1
      %v1821 = vpop.permute.xlu0 %1820
      %1822 = vrot.lane.b32.xlu0 %v1804, 1
      %v1823 = vpop.permute.xlu0 %1822
      %1824 = vrot.lane.b32.xlu0 %v1805, 1
      %v1825 = vpop.permute.xlu0 %1824
      %1826 = vrot.lane.b32.xlu0 %v1806, 1
      %v1827 = vpop.permute.xlu0 %1826
      %1828 = vrot.lane.b32.xlu0 %v1807, 1
      %v1829 = vpop.permute.xlu0 %1828
      %1830 = vrot.lane.b32.xlu0 %v1808, 1
      %v1831 = vpop.permute.xlu0 %1830
      %1832 = vrot.lane.b32.xlu0 %v1809, 1
      %v1833 = vpop.permute.xlu0 %1832
      %v1842 = vsel %vm302, 0.0, %v1819
      %v1843 = vsel %vm302, 0.0, %v1821
      %v1844 = vsel %vm302, 0.0, %v1823
      %v1845 = vsel %vm302, 0.0, %v1825
      %v1846 = vsel %vm302, 0.0, %v1827
      %v1847 = vsel %vm302, 0.0, %v1829
      %v1848 = vsel %vm302, 0.0, %v1831
      %v1849 = vsel %vm302, 0.0, %v1833
      %1850 = vrot.lane.b32.xlu0 %v1802, 127
      %v1851 = vpop.permute.xlu0 %1850
      %1852 = vrot.lane.b32.xlu0 %v1803, 127
      %v1853 = vpop.permute.xlu0 %1852
      %1854 = vrot.lane.b32.xlu0 %v1804, 127
      %v1855 = vpop.permute.xlu0 %1854
      %1856 = vrot.lane.b32.xlu0 %v1805, 127
      %v1857 = vpop.permute.xlu0 %1856
      %1858 = vrot.lane.b32.xlu0 %v1806, 127
      %v1859 = vpop.permute.xlu0 %1858
      %1860 = vrot.lane.b32.xlu0 %v1807, 127
      %v1861 = vpop.permute.xlu0 %1860
      %1862 = vrot.lane.b32.xlu0 %v1808, 127
      %v1863 = vpop.permute.xlu0 %1862
      %1864 = vrot.lane.b32.xlu0 %v1809, 127
      %v1865 = vpop.permute.xlu0 %1864
      %v1874 = vsel %vm408, %v1851, 0.0
      %v1875 = vsel %vm408, %v1853, 0.0
      %v1876 = vsel %vm408, %v1855, 0.0
      %v1877 = vsel %vm408, %v1857, 0.0
      %v1878 = vsel %vm408, %v1859, 0.0
      %v1879 = vsel %vm408, %v1861, 0.0
      %v1880 = vsel %vm408, %v1863, 0.0
      %v1881 = vsel %vm408, %v1865, 0.0
      %v1882 = vpack.c.bf16 %v1843, %v1842
      %v1883 = vpack.c.bf16 %v1845, %v1844
      %v1884 = vpack.c.bf16 %v1847, %v1846
      %v1885 = vpack.c.bf16 %v1849, %v1848
      %v1886 = vpack.c.bf16 %v1803, %v1802
      %v1887 = vpack.c.bf16 %v1805, %v1804
      %v1888 = vpack.c.bf16 %v1807, %v1806
      %v1889 = vpack.c.bf16 %v1809, %v1808
      %v1890 = vpack.c.bf16 %v1875, %v1874
      %v1891 = vpack.c.bf16 %v1877, %v1876
      %v1892 = vpack.c.bf16 %v1879, %v1878
      %v1893 = vpack.c.bf16 %v1881, %v1880
      %s1894 = scalar_lea.vmem %s2, 384
      %v1895 = vld [vmem:[%s1894] sm:$0xff]
      %v1896 = vld [vmem:[%s1894 + $0x8] sm:$0xff]
      %v1897 = vld [vmem:[%s1894 + $0x10] sm:$0xff]
      %v1898 = vld [vmem:[%s1894 + $0x18] sm:$0xff]
      %v1899 = vld [vmem:[%s1894 + $0x20] sm:$0xff]
      %v1900 = vld [vmem:[%s1894 + $0x28] sm:$0xff]
      %v1901 = vld [vmem:[%s1894 + $0x30] sm:$0xff]
      %v1902 = vld [vmem:[%s1894 + $0x38] sm:$0xff]
      %v1911 = vunpack.c.l.b16 %v1895
      %v1912 = vunpack.c.h.b16 %v1895
      %v1913 = vunpack.c.l.b16 %v1896
      %v1914 = vunpack.c.h.b16 %v1896
      %v1915 = vunpack.c.l.b16 %v1897
      %v1916 = vunpack.c.h.b16 %v1897
      %v1917 = vunpack.c.l.b16 %v1898
      %v1918 = vunpack.c.h.b16 %v1898
      %v1919 = vunpack.c.l.b16 %v1899
      %v1920 = vunpack.c.h.b16 %v1899
      %v1921 = vunpack.c.l.b16 %v1900
      %v1922 = vunpack.c.h.b16 %v1900
      %v1923 = vunpack.c.l.b16 %v1901
      %v1924 = vunpack.c.h.b16 %v1901
      %v1925 = vunpack.c.l.b16 %v1902
      %v1926 = vunpack.c.h.b16 %v1902
      %v1927 = vpack.c.b16 %v1913, %v1911
      %v1928 = vpack.c.b16 %v1914, %v1912
      %v1929 = vpack.c.b16 %v1917, %v1915
      %v1930 = vpack.c.b16 %v1918, %v1916
      %v1931 = vpack.c.b16 %v1921, %v1919
      %v1932 = vpack.c.b16 %v1922, %v1920
      %v1933 = vpack.c.b16 %v1925, %v1923
      %v1934 = vpack.c.b16 %v1926, %v1924
      %v1940 = vsel %vm606, %v1928, 0
      %v1943 = vsel %vm606, %v1930, 0
      %v1946 = vsel %vm606, %v1932, 0
      %v1949 = vsel %vm606, %v1934, 0
      %1951 = vmatprep.subr.bf16.mxu0 0
      %1952 = vmatpush1.bf16.msra.mxu0 %v1882
      %1953 = vmatprep.subr.bf16.mxu0 0
      %1954 = vmatpush1.bf16.msra.mxu0 %v1883
      %1955 = vmatprep.subr.bf16.mxu0 0
      %1956 = vmatpush1.bf16.msra.mxu0 %v1884
      %1957 = vmatprep.subr.bf16.mxu0 0
      %1958 = vmatpush1.bf16.msra.mxu0 %v1885
      %1959 = vmatprep.subr.bf16.mxu0 0
      %1960 = vmatpush1.bf16.msra.mxu0 %v1886
      %1961 = vmatprep.subr.bf16.mxu0 0
      %1962 = vmatpush1.bf16.msra.mxu0 %v1887
      %1963 = vmatprep.subr.bf16.mxu0 0
      %1964 = vmatpush1.bf16.msra.mxu0 %v1888
      %1965 = vmatprep.subr.bf16.mxu0 0
      %1966 = vmatpush1.bf16.msra.mxu0 %v1889
      %1967 = vmatprep.subr.bf16.mxu0 0
      %1968 = vmatpush1.bf16.msra.mxu0 %v1890
      %1969 = vmatprep.subr.bf16.mxu0 0
      %1970 = vmatpush1.bf16.msra.mxu0 %v1891
      %1971 = vmatprep.subr.bf16.mxu0 0
      %1972 = vmatpush1.bf16.msra.mxu0 %v1892
      %1973 = vmatprep.subr.bf16.mxu0 0
      %1974 = vmatpush1.bf16.msra.mxu0 %v1893
      %1975 = vmatprep.subr.bf16.mxu0 0
      %1976 = vmatpush1.bf16.msra.mxu0 0
      %1977 = vmatprep.subr.bf16.mxu0 0
      %1978 = vmatpush1.bf16.msra.mxu0 0
      %1979 = vmatprep.subr.bf16.mxu0 0
      %1980 = vmatpush1.bf16.msra.mxu0 0
      %1981 = vmatprep.subr.bf16.mxu0 0
      %1982 = vmatpush1.bf16.msra.mxu0 0
      %1983 = vmatprep.mubr.bf16.mxu0 %v1940
      %1984 = vmatmul.mubr.bf16.gmra.mrb[0].mxu0 %v1927
      %v1985 = vpop.f32.mrb[0].mxu0
      %v1986 = vadd.f32 0.0, %v1985
      %v1987 = vpop.f32.mrb[0].mxu0
      %v1988 = vpop.f32.mrb[0].mxu0
      %v1989 = vadd.f32 0.0, %v1988
      %v1990 = vpop.f32.mrb[0].mxu0
      %1991 = vmatprep.mubr.bf16.mxu0 %v1943
      %1992 = vmatmul.mubr.bf16.gmra.mrb[0].mxu0 %v1929
      %v1993 = vpop.f32.mrb[0].mxu0
      %v1994 = vadd.f32 0.0, %v1993
      %v1995 = vpop.f32.mrb[0].mxu0
      %v1996 = vpop.f32.mrb[0].mxu0
      %v1997 = vadd.f32 0.0, %v1996
      %v1998 = vpop.f32.mrb[0].mxu0
      %1999 = vmatprep.mubr.bf16.mxu0 %v1946
      %2000 = vmatmul.mubr.bf16.gmra.mrb[0].mxu0 %v1931
      %v2001 = vpop.f32.mrb[0].mxu0
      %v2002 = vadd.f32 0.0, %v2001
      %v2003 = vpop.f32.mrb[0].mxu0
      %v2004 = vpop.f32.mrb[0].mxu0
      %v2005 = vadd.f32 0.0, %v2004
      %v2006 = vpop.f32.mrb[0].mxu0
      %2007 = vmatprep.mubr.bf16.mxu0 %v1949
      %2008 = vmatmul.mubr.bf16.gmra.mrb[0].mxu0 %v1933
      %v2009 = vpop.f32.mrb[0].mxu0
      %v2010 = vadd.f32 0.0, %v2009
      %v2011 = vpop.f32.mrb[0].mxu0
      %v2012 = vpop.f32.mrb[0].mxu0
      %v2013 = vadd.f32 0.0, %v2012
      %v2014 = vpop.f32.mrb[0].mxu0
      %2015 = vdwg.mxu0
      %v2016 = vmul.f32 %v1986, 0.2
      %v2017 = vmul.f32 %v1989, 0.2
      %v2018 = vmul.f32 %v1994, 0.2
      %v2019 = vmul.f32 %v1997, 0.2
      %v2020 = vmul.f32 %v2002, 0.2
      %v2021 = vmul.f32 %v2005, 0.2
      %v2022 = vmul.f32 %v2010, 0.2
      %v2023 = vmul.f32 %v2013, 0.2
      %v2024 = vmax.f32 %v1986, %v2016
      %v2025 = vmax.f32 %v1989, %v2017
      %v2026 = vmax.f32 %v1994, %v2018
      %v2027 = vmax.f32 %v1997, %v2019
      %v2028 = vmax.f32 %v2002, %v2020
      %v2029 = vmax.f32 %v2005, %v2021
      %v2030 = vmax.f32 %v2010, %v2022
      %v2031 = vmax.f32 %v2013, %v2023
      %2040 = vrot.lane.b32.xlu0 %v2024, 1
      %v2041 = vpop.permute.xlu0 %2040
      %2042 = vrot.lane.b32.xlu0 %v2025, 1
      %v2043 = vpop.permute.xlu0 %2042
      %2044 = vrot.lane.b32.xlu0 %v2026, 1
      %v2045 = vpop.permute.xlu0 %2044
      %2046 = vrot.lane.b32.xlu0 %v2027, 1
      %v2047 = vpop.permute.xlu0 %2046
      %2048 = vrot.lane.b32.xlu0 %v2028, 1
      %v2049 = vpop.permute.xlu0 %2048
      %2050 = vrot.lane.b32.xlu0 %v2029, 1
      %v2051 = vpop.permute.xlu0 %2050
      %2052 = vrot.lane.b32.xlu0 %v2030, 1
      %v2053 = vpop.permute.xlu0 %2052
      %2054 = vrot.lane.b32.xlu0 %v2031, 1
      %v2055 = vpop.permute.xlu0 %2054
      %v2064 = vsel %vm302, 0.0, %v2041
      %v2065 = vsel %vm302, 0.0, %v2043
      %v2066 = vsel %vm302, 0.0, %v2045
      %v2067 = vsel %vm302, 0.0, %v2047
      %v2068 = vsel %vm302, 0.0, %v2049
      %v2069 = vsel %vm302, 0.0, %v2051
      %v2070 = vsel %vm302, 0.0, %v2053
      %v2071 = vsel %vm302, 0.0, %v2055
      %2072 = vrot.lane.b32.xlu0 %v2024, 127
      %v2073 = vpop.permute.xlu0 %2072
      %2074 = vrot.lane.b32.xlu0 %v2025, 127
      %v2075 = vpop.permute.xlu0 %2074
      %2076 = vrot.lane.b32.xlu0 %v2026, 127
      %v2077 = vpop.permute.xlu0 %2076
      %2078 = vrot.lane.b32.xlu0 %v2027, 127
      %v2079 = vpop.permute.xlu0 %2078
      %2080 = vrot.lane.b32.xlu0 %v2028, 127
      %v2081 = vpop.permute.xlu0 %2080
      %2082 = vrot.lane.b32.xlu0 %v2029, 127
      %v2083 = vpop.permute.xlu0 %2082
      %2084 = vrot.lane.b32.xlu0 %v2030, 127
      %v2085 = vpop.permute.xlu0 %2084
      %2086 = vrot.lane.b32.xlu0 %v2031, 127
      %v2087 = vpop.permute.xlu0 %2086
      %v2096 = vsel %vm408, %v2073, 0.0
      %v2097 = vsel %vm408, %v2075, 0.0
      %v2098 = vsel %vm408, %v2077, 0.0
      %v2099 = vsel %vm408, %v2079, 0.0
      %v2100 = vsel %vm408, %v2081, 0.0
      %v2101 = vsel %vm408, %v2083, 0.0
      %v2102 = vsel %vm408, %v2085, 0.0
      %v2103 = vsel %vm408, %v2087, 0.0
      %v2104 = vpack.c.bf16 %v2065, %v2064
      %v2105 = vpack.c.bf16 %v2067, %v2066
      %v2106 = vpack.c.bf16 %v2069, %v2068
      %v2107 = vpack.c.bf16 %v2071, %v2070
      %v2108 = vpack.c.bf16 %v2025, %v2024
      %v2109 = vpack.c.bf16 %v2027, %v2026
      %v2110 = vpack.c.bf16 %v2029, %v2028
      %v2111 = vpack.c.bf16 %v2031, %v2030
      %v2112 = vpack.c.bf16 %v2097, %v2096
      %v2113 = vpack.c.bf16 %v2099, %v2098
      %v2114 = vpack.c.bf16 %v2101, %v2100
      %v2115 = vpack.c.bf16 %v2103, %v2102
      %s2116 = scalar_lea.vmem %s2, 448
      %v2117 = vld [vmem:[%s2116] sm:$0xff]
      %v2118 = vld [vmem:[%s2116 + $0x8] sm:$0xff]
      %v2119 = vld [vmem:[%s2116 + $0x10] sm:$0xff]
      %v2120 = vld [vmem:[%s2116 + $0x18] sm:$0xff]
      %v2121 = vld [vmem:[%s2116 + $0x20] sm:$0xff]
      %v2122 = vld [vmem:[%s2116 + $0x28] sm:$0xff]
      %v2123 = vld [vmem:[%s2116 + $0x30] sm:$0xff]
      %v2124 = vld [vmem:[%s2116 + $0x38] sm:$0xff]
      %v2133 = vunpack.c.l.b16 %v2117
      %v2134 = vunpack.c.h.b16 %v2117
      %v2135 = vunpack.c.l.b16 %v2118
      %v2136 = vunpack.c.h.b16 %v2118
      %v2137 = vunpack.c.l.b16 %v2119
      %v2138 = vunpack.c.h.b16 %v2119
      %v2139 = vunpack.c.l.b16 %v2120
      %v2140 = vunpack.c.h.b16 %v2120
      %v2141 = vunpack.c.l.b16 %v2121
      %v2142 = vunpack.c.h.b16 %v2121
      %v2143 = vunpack.c.l.b16 %v2122
      %v2144 = vunpack.c.h.b16 %v2122
      %v2145 = vunpack.c.l.b16 %v2123
      %v2146 = vunpack.c.h.b16 %v2123
      %v2147 = vunpack.c.l.b16 %v2124
      %v2148 = vunpack.c.h.b16 %v2124
      %v2149 = vpack.c.b16 %v2135, %v2133
      %v2150 = vpack.c.b16 %v2136, %v2134
      %v2151 = vpack.c.b16 %v2139, %v2137
      %v2152 = vpack.c.b16 %v2140, %v2138
      %v2153 = vpack.c.b16 %v2143, %v2141
      %v2154 = vpack.c.b16 %v2144, %v2142
      %v2155 = vpack.c.b16 %v2147, %v2145
      %v2156 = vpack.c.b16 %v2148, %v2146
      %v2162 = vsel %vm606, %v2150, 0
      %v2165 = vsel %vm606, %v2152, 0
      %v2168 = vsel %vm606, %v2154, 0
      %v2171 = vsel %vm606, %v2156, 0
      %2173 = vmatprep.subr.bf16.mxu0 0
      %2174 = vmatpush1.bf16.msra.mxu0 %v2104
      %2175 = vmatprep.subr.bf16.mxu0 0
      %2176 = vmatpush1.bf16.msra.mxu0 %v2105
      %2177 = vmatprep.subr.bf16.mxu0 0
      %2178 = vmatpush1.bf16.msra.mxu0 %v2106
      %2179 = vmatprep.subr.bf16.mxu0 0
      %2180 = vmatpush1.bf16.msra.mxu0 %v2107
      %2181 = vmatprep.subr.bf16.mxu0 0
      %2182 = vmatpush1.bf16.msra.mxu0 %v2108
      %2183 = vmatprep.subr.bf16.mxu0 0
      %2184 = vmatpush1.bf16.msra.mxu0 %v2109
      %2185 = vmatprep.subr.bf16.mxu0 0
      %2186 = vmatpush1.bf16.msra.mxu0 %v2110
      %2187 = vmatprep.subr.bf16.mxu0 0
      %2188 = vmatpush1.bf16.msra.mxu0 %v2111
      %2189 = vmatprep.subr.bf16.mxu0 0
      %2190 = vmatpush1.bf16.msra.mxu0 %v2112
      %2191 = vmatprep.subr.bf16.mxu0 0
      %2192 = vmatpush1.bf16.msra.mxu0 %v2113
      %2193 = vmatprep.subr.bf16.mxu0 0
      %2194 = vmatpush1.bf16.msra.mxu0 %v2114
      %2195 = vmatprep.subr.bf16.mxu0 0
      %2196 = vmatpush1.bf16.msra.mxu0 %v2115
      %2197 = vmatprep.subr.bf16.mxu0 0
      %2198 = vmatpush1.bf16.msra.mxu0 0
      %2199 = vmatprep.subr.bf16.mxu0 0
      %2200 = vmatpush1.bf16.msra.mxu0 0
      %2201 = vmatprep.subr.bf16.mxu0 0
      %2202 = vmatpush1.bf16.msra.mxu0 0
      %2203 = vmatprep.subr.bf16.mxu0 0
      %2204 = vmatpush1.bf16.msra.mxu0 0
      %2205 = vmatprep.mubr.bf16.mxu0 %v2162
      %2206 = vmatmul.mubr.bf16.gmra.mrb[0].mxu0 %v2149
      %v2207 = vpop.f32.mrb[0].mxu0
      %v2208 = vadd.f32 0.0, %v2207
      %v2209 = vpop.f32.mrb[0].mxu0
      %v2210 = vpop.f32.mrb[0].mxu0
      %v2211 = vadd.f32 0.0, %v2210
      %v2212 = vpop.f32.mrb[0].mxu0
      %2213 = vmatprep.mubr.bf16.mxu0 %v2165
      %2214 = vmatmul.mubr.bf16.gmra.mrb[0].mxu0 %v2151
      %v2215 = vpop.f32.mrb[0].mxu0
      %v2216 = vadd.f32 0.0, %v2215
      %v2217 = vpop.f32.mrb[0].mxu0
      %v2218 = vpop.f32.mrb[0].mxu0
      %v2219 = vadd.f32 0.0, %v2218
      %v2220 = vpop.f32.mrb[0].mxu0
      %2221 = vmatprep.mubr.bf16.mxu0 %v2168
      %2222 = vmatmul.mubr.bf16.gmra.mrb[0].mxu0 %v2153
      %v2223 = vpop.f32.mrb[0].mxu0
      %v2224 = vadd.f32 0.0, %v2223
      %v2225 = vpop.f32.mrb[0].mxu0
      %v2226 = vpop.f32.mrb[0].mxu0
      %v2227 = vadd.f32 0.0, %v2226
      %v2228 = vpop.f32.mrb[0].mxu0
      %2229 = vmatprep.mubr.bf16.mxu0 %v2171
      %2230 = vmatmul.mubr.bf16.gmra.mrb[0].mxu0 %v2155
      %v2231 = vpop.f32.mrb[0].mxu0
      %v2232 = vadd.f32 0.0, %v2231
      %v2233 = vpop.f32.mrb[0].mxu0
      %v2234 = vpop.f32.mrb[0].mxu0
      %v2235 = vadd.f32 0.0, %v2234
      %v2236 = vpop.f32.mrb[0].mxu0
      %2237 = vdwg.mxu0
      %v2238 = vmul.f32 %v2208, 0.2
      %v2239 = vmul.f32 %v2211, 0.2
      %v2240 = vmul.f32 %v2216, 0.2
      %v2241 = vmul.f32 %v2219, 0.2
      %v2242 = vmul.f32 %v2224, 0.2
      %v2243 = vmul.f32 %v2227, 0.2
      %v2244 = vmul.f32 %v2232, 0.2
      %v2245 = vmul.f32 %v2235, 0.2
      %v2246 = vmax.f32 %v2208, %v2238
      %v2247 = vmax.f32 %v2211, %v2239
      %v2248 = vmax.f32 %v2216, %v2240
      %v2249 = vmax.f32 %v2219, %v2241
      %v2250 = vmax.f32 %v2224, %v2242
      %v2251 = vmax.f32 %v2227, %v2243
      %v2252 = vmax.f32 %v2232, %v2244
      %v2253 = vmax.f32 %v2235, %v2245
      %2262 = vrot.lane.b32.xlu0 %v2246, 1
      %v2263 = vpop.permute.xlu0 %2262
      %2264 = vrot.lane.b32.xlu0 %v2247, 1
      %v2265 = vpop.permute.xlu0 %2264
      %2266 = vrot.lane.b32.xlu0 %v2248, 1
      %v2267 = vpop.permute.xlu0 %2266
      %2268 = vrot.lane.b32.xlu0 %v2249, 1
      %v2269 = vpop.permute.xlu0 %2268
      %2270 = vrot.lane.b32.xlu0 %v2250, 1
      %v2271 = vpop.permute.xlu0 %2270
      %2272 = vrot.lane.b32.xlu0 %v2251, 1
      %v2273 = vpop.permute.xlu0 %2272
      %2274 = vrot.lane.b32.xlu0 %v2252, 1
      %v2275 = vpop.permute.xlu0 %2274
      %2276 = vrot.lane.b32.xlu0 %v2253, 1
      %v2277 = vpop.permute.xlu0 %2276
      %v2286 = vsel %vm302, 0.0, %v2263
      %v2287 = vsel %vm302, 0.0, %v2265
      %v2288 = vsel %vm302, 0.0, %v2267
      %v2289 = vsel %vm302, 0.0, %v2269
      %v2290 = vsel %vm302, 0.0, %v2271
      %v2291 = vsel %vm302, 0.0, %v2273
      %v2292 = vsel %vm302, 0.0, %v2275
      %v2293 = vsel %vm302, 0.0, %v2277
      %2294 = vrot.lane.b32.xlu0 %v2246, 127
      %v2295 = vpop.permute.xlu0 %2294
      %2296 = vrot.lane.b32.xlu0 %v2247, 127
      %v2297 = vpop.permute.xlu0 %2296
      %2298 = vrot.lane.b32.xlu0 %v2248, 127
      %v2299 = vpop.permute.xlu0 %2298
      %2300 = vrot.lane.b32.xlu0 %v2249, 127
      %v2301 = vpop.permute.xlu0 %2300
      %2302 = vrot.lane.b32.xlu0 %v2250, 127
      %v2303 = vpop.permute.xlu0 %2302
      %2304 = vrot.lane.b32.xlu0 %v2251, 127
      %v2305 = vpop.permute.xlu0 %2304
      %2306 = vrot.lane.b32.xlu0 %v2252, 127
      %v2307 = vpop.permute.xlu0 %2306
      %2308 = vrot.lane.b32.xlu0 %v2253, 127
      %v2309 = vpop.permute.xlu0 %2308
      %v2318 = vsel %vm408, %v2295, 0.0
      %v2319 = vsel %vm408, %v2297, 0.0
      %v2320 = vsel %vm408, %v2299, 0.0
      %v2321 = vsel %vm408, %v2301, 0.0
      %v2322 = vsel %vm408, %v2303, 0.0
      %v2323 = vsel %vm408, %v2305, 0.0
      %v2324 = vsel %vm408, %v2307, 0.0
      %v2325 = vsel %vm408, %v2309, 0.0
      %v2326 = vpack.c.bf16 %v2287, %v2286
      %v2327 = vpack.c.bf16 %v2289, %v2288
      %v2328 = vpack.c.bf16 %v2291, %v2290
      %v2329 = vpack.c.bf16 %v2293, %v2292
      %v2330 = vpack.c.bf16 %v2247, %v2246
      %v2331 = vpack.c.bf16 %v2249, %v2248
      %v2332 = vpack.c.bf16 %v2251, %v2250
      %v2333 = vpack.c.bf16 %v2253, %v2252
      %v2334 = vpack.c.bf16 %v2319, %v2318
      %v2335 = vpack.c.bf16 %v2321, %v2320
      %v2336 = vpack.c.bf16 %v2323, %v2322
      %v2337 = vpack.c.bf16 %v2325, %v2324
      %s2338 = scalar_lea.vmem %s2, 512
      %v2339 = vld [vmem:[%s2338] sm:$0xff]
      %v2340 = vld [vmem:[%s2338 + $0x8] sm:$0xff]
      %v2341 = vld [vmem:[%s2338 + $0x10] sm:$0xff]
      %v2342 = vld [vmem:[%s2338 + $0x18] sm:$0xff]
      %v2343 = vld [vmem:[%s2338 + $0x20] sm:$0xff]
      %v2344 = vld [vmem:[%s2338 + $0x28] sm:$0xff]
      %v2345 = vld [vmem:[%s2338 + $0x30] sm:$0xff]
      %v2346 = vld [vmem:[%s2338 + $0x38] sm:$0xff]
      %v2355 = vunpack.c.l.b16 %v2339
      %v2356 = vunpack.c.h.b16 %v2339
      %v2357 = vunpack.c.l.b16 %v2340
      %v2358 = vunpack.c.h.b16 %v2340
      %v2359 = vunpack.c.l.b16 %v2341
      %v2360 = vunpack.c.h.b16 %v2341
      %v2361 = vunpack.c.l.b16 %v2342
      %v2362 = vunpack.c.h.b16 %v2342
      %v2363 = vunpack.c.l.b16 %v2343
      %v2364 = vunpack.c.h.b16 %v2343
      %v2365 = vunpack.c.l.b16 %v2344
      %v2366 = vunpack.c.h.b16 %v2344
      %v2367 = vunpack.c.l.b16 %v2345
      %v2368 = vunpack.c.h.b16 %v2345
      %v2369 = vunpack.c.l.b16 %v2346
      %v2370 = vunpack.c.h.b16 %v2346
      %v2371 = vpack.c.b16 %v2357, %v2355
      %v2372 = vpack.c.b16 %v2358, %v2356
      %v2373 = vpack.c.b16 %v2361, %v2359
      %v2374 = vpack.c.b16 %v2362, %v2360
      %v2375 = vpack.c.b16 %v2365, %v2363
      %v2376 = vpack.c.b16 %v2366, %v2364
      %v2377 = vpack.c.b16 %v2369, %v2367
      %v2378 = vpack.c.b16 %v2370, %v2368
      %v2384 = vsel %vm606, %v2372, 0
      %v2387 = vsel %vm606, %v2374, 0
      %v2390 = vsel %vm606, %v2376, 0
      %v2393 = vsel %vm606, %v2378, 0
      %2395 = vmatprep.subr.bf16.mxu0 0
      %2396 = vmatpush1.bf16.msra.mxu0 %v2326
      %2397 = vmatprep.subr.bf16.mxu0 0
      %2398 = vmatpush1.bf16.msra.mxu0 %v2327
      %2399 = vmatprep.subr.bf16.mxu0 0
      %2400 = vmatpush1.bf16.msra.mxu0 %v2328
      %2401 = vmatprep.subr.bf16.mxu0 0
      %2402 = vmatpush1.bf16.msra.mxu0 %v2329
      %2403 = vmatprep.subr.bf16.mxu0 0
      %2404 = vmatpush1.bf16.msra.mxu0 %v2330
      %2405 = vmatprep.subr.bf16.mxu0 0
      %2406 = vmatpush1.bf16.msra.mxu0 %v2331
      %2407 = vmatprep.subr.bf16.mxu0 0
      %2408 = vmatpush1.bf16.msra.mxu0 %v2332
      %2409 = vmatprep.subr.bf16.mxu0 0
      %2410 = vmatpush1.bf16.msra.mxu0 %v2333
      %2411 = vmatprep.subr.bf16.mxu0 0
      %2412 = vmatpush1.bf16.msra.mxu0 %v2334
      %2413 = vmatprep.subr.bf16.mxu0 0
      %2414 = vmatpush1.bf16.msra.mxu0 %v2335
      %2415 = vmatprep.subr.bf16.mxu0 0
      %2416 = vmatpush1.bf16.msra.mxu0 %v2336
      %2417 = vmatprep.subr.bf16.mxu0 0
      %2418 = vmatpush1.bf16.msra.mxu0 %v2337
      %2419 = vmatprep.subr.bf16.mxu0 0
      %2420 = vmatpush1.bf16.msra.mxu0 0
      %2421 = vmatprep.subr.bf16.mxu0 0
      %2422 = vmatpush1.bf16.msra.mxu0 0
      %2423 = vmatprep.subr.bf16.mxu0 0
      %2424 = vmatpush1.bf16.msra.mxu0 0
      %2425 = vmatprep.subr.bf16.mxu0 0
      %2426 = vmatpush1.bf16.msra.mxu0 0
      %2427 = vmatprep.mubr.bf16.mxu0 %v2384
      %2428 = vmatmul.mubr.bf16.gmra.mrb[0].mxu0 %v2371
      %v2429 = vpop.f32.mrb[0].mxu0
      %v2430 = vadd.f32 0.0, %v2429
      %v2431 = vpop.f32.mrb[0].mxu0
      %v2432 = vpop.f32.mrb[0].mxu0
      %v2433 = vadd.f32 0.0, %v2432
      %v2434 = vpop.f32.mrb[0].mxu0
      %2435 = vmatprep.mubr.bf16.mxu0 %v2387
      %2436 = vmatmul.mubr.bf16.gmra.mrb[0].mxu0 %v2373
      %v2437 = vpop.f32.mrb[0].mxu0
      %v2438 = vadd.f32 0.0, %v2437
      %v2439 = vpop.f32.mrb[0].mxu0
      %v2440 = vpop.f32.mrb[0].mxu0
      %v2441 = vadd.f32 0.0, %v2440
      %v2442 = vpop.f32.mrb[0].mxu0
      %2443 = vmatprep.mubr.bf16.mxu0 %v2390
      %2444 = vmatmul.mubr.bf16.gmra.mrb[0].mxu0 %v2375
      %v2445 = vpop.f32.mrb[0].mxu0
      %v2446 = vadd.f32 0.0, %v2445
      %v2447 = vpop.f32.mrb[0].mxu0
      %v2448 = vpop.f32.mrb[0].mxu0
      %v2449 = vadd.f32 0.0, %v2448
      %v2450 = vpop.f32.mrb[0].mxu0
      %2451 = vmatprep.mubr.bf16.mxu0 %v2393
      %2452 = vmatmul.mubr.bf16.gmra.mrb[0].mxu0 %v2377
      %v2453 = vpop.f32.mrb[0].mxu0
      %v2454 = vadd.f32 0.0, %v2453
      %v2455 = vpop.f32.mrb[0].mxu0
      %v2456 = vpop.f32.mrb[0].mxu0
      %v2457 = vadd.f32 0.0, %v2456
      %v2458 = vpop.f32.mrb[0].mxu0
      %2459 = vdwg.mxu0
      %v2460 = vmul.f32 %v2430, 0.2
      %v2461 = vmul.f32 %v2433, 0.2
      %v2462 = vmul.f32 %v2438, 0.2
      %v2463 = vmul.f32 %v2441, 0.2
      %v2464 = vmul.f32 %v2446, 0.2
      %v2465 = vmul.f32 %v2449, 0.2
      %v2466 = vmul.f32 %v2454, 0.2
      %v2467 = vmul.f32 %v2457, 0.2
      %v2468 = vmax.f32 %v2430, %v2460
      %v2469 = vmax.f32 %v2433, %v2461
      %v2470 = vmax.f32 %v2438, %v2462
      %v2471 = vmax.f32 %v2441, %v2463
      %v2472 = vmax.f32 %v2446, %v2464
      %v2473 = vmax.f32 %v2449, %v2465
      %v2474 = vmax.f32 %v2454, %v2466
      %v2475 = vmax.f32 %v2457, %v2467
      %2484 = vrot.lane.b32.xlu0 %v2468, 1
      %v2485 = vpop.permute.xlu0 %2484
      %2486 = vrot.lane.b32.xlu0 %v2469, 1
      %v2487 = vpop.permute.xlu0 %2486
      %2488 = vrot.lane.b32.xlu0 %v2470, 1
      %v2489 = vpop.permute.xlu0 %2488
      %2490 = vrot.lane.b32.xlu0 %v2471, 1
      %v2491 = vpop.permute.xlu0 %2490
      %2492 = vrot.lane.b32.xlu0 %v2472, 1
      %v2493 = vpop.permute.xlu0 %2492
      %2494 = vrot.lane.b32.xlu0 %v2473, 1
      %v2495 = vpop.permute.xlu0 %2494
      %2496 = vrot.lane.b32.xlu0 %v2474, 1
      %v2497 = vpop.permute.xlu0 %2496
      %2498 = vrot.lane.b32.xlu0 %v2475, 1
      %v2499 = vpop.permute.xlu0 %2498
      %v2508 = vsel %vm302, 0.0, %v2485
      %v2509 = vsel %vm302, 0.0, %v2487
      %v2510 = vsel %vm302, 0.0, %v2489
      %v2511 = vsel %vm302, 0.0, %v2491
      %v2512 = vsel %vm302, 0.0, %v2493
      %v2513 = vsel %vm302, 0.0, %v2495
      %v2514 = vsel %vm302, 0.0, %v2497
      %v2515 = vsel %vm302, 0.0, %v2499
      %2516 = vrot.lane.b32.xlu0 %v2468, 127
      %v2517 = vpop.permute.xlu0 %2516
      %2518 = vrot.lane.b32.xlu0 %v2469, 127
      %v2519 = vpop.permute.xlu0 %2518
      %2520 = vrot.lane.b32.xlu0 %v2470, 127
      %v2521 = vpop.permute.xlu0 %2520
      %2522 = vrot.lane.b32.xlu0 %v2471, 127
      %v2523 = vpop.permute.xlu0 %2522
      %2524 = vrot.lane.b32.xlu0 %v2472, 127
      %v2525 = vpop.permute.xlu0 %2524
      %2526 = vrot.lane.b32.xlu0 %v2473, 127
      %v2527 = vpop.permute.xlu0 %2526
      %2528 = vrot.lane.b32.xlu0 %v2474, 127
      %v2529 = vpop.permute.xlu0 %2528
      %2530 = vrot.lane.b32.xlu0 %v2475, 127
      %v2531 = vpop.permute.xlu0 %2530
      %v2540 = vsel %vm408, %v2517, 0.0
      %v2541 = vsel %vm408, %v2519, 0.0
      %v2542 = vsel %vm408, %v2521, 0.0
      %v2543 = vsel %vm408, %v2523, 0.0
      %v2544 = vsel %vm408, %v2525, 0.0
      %v2545 = vsel %vm408, %v2527, 0.0
      %v2546 = vsel %vm408, %v2529, 0.0
      %v2547 = vsel %vm408, %v2531, 0.0
      %v2548 = vpack.c.bf16 %v2509, %v2508
      %v2549 = vpack.c.bf16 %v2511, %v2510
      %v2550 = vpack.c.bf16 %v2513, %v2512
      %v2551 = vpack.c.bf16 %v2515, %v2514
      %v2552 = vpack.c.bf16 %v2469, %v2468
      %v2553 = vpack.c.bf16 %v2471, %v2470
      %v2554 = vpack.c.bf16 %v2473, %v2472
      %v2555 = vpack.c.bf16 %v2475, %v2474
      %v2556 = vpack.c.bf16 %v2541, %v2540
      %v2557 = vpack.c.bf16 %v2543, %v2542
      %v2558 = vpack.c.bf16 %v2545, %v2544
      %v2559 = vpack.c.bf16 %v2547, %v2546
      %s2560 = scalar_lea.vmem %s2, 576
      %v2561 = vld [vmem:[%s2560] sm:$0xff]
      %v2562 = vld [vmem:[%s2560 + $0x8] sm:$0xff]
      %v2563 = vld [vmem:[%s2560 + $0x10] sm:$0xff]
      %v2564 = vld [vmem:[%s2560 + $0x18] sm:$0xff]
      %v2565 = vld [vmem:[%s2560 + $0x20] sm:$0xff]
      %v2566 = vld [vmem:[%s2560 + $0x28] sm:$0xff]
      %v2567 = vld [vmem:[%s2560 + $0x30] sm:$0xff]
      %v2568 = vld [vmem:[%s2560 + $0x38] sm:$0xff]
      %v2577 = vunpack.c.l.b16 %v2561
      %v2578 = vunpack.c.h.b16 %v2561
      %v2579 = vunpack.c.l.b16 %v2562
      %v2580 = vunpack.c.h.b16 %v2562
      %v2581 = vunpack.c.l.b16 %v2563
      %v2582 = vunpack.c.h.b16 %v2563
      %v2583 = vunpack.c.l.b16 %v2564
      %v2584 = vunpack.c.h.b16 %v2564
      %v2585 = vunpack.c.l.b16 %v2565
      %v2586 = vunpack.c.h.b16 %v2565
      %v2587 = vunpack.c.l.b16 %v2566
      %v2588 = vunpack.c.h.b16 %v2566
      %v2589 = vunpack.c.l.b16 %v2567
      %v2590 = vunpack.c.h.b16 %v2567
      %v2591 = vunpack.c.l.b16 %v2568
      %v2592 = vunpack.c.h.b16 %v2568
      %v2593 = vpack.c.b16 %v2579, %v2577
      %v2594 = vpack.c.b16 %v2580, %v2578
      %v2595 = vpack.c.b16 %v2583, %v2581
      %v2596 = vpack.c.b16 %v2584, %v2582
      %v2597 = vpack.c.b16 %v2587, %v2585
      %v2598 = vpack.c.b16 %v2588, %v2586
      %v2599 = vpack.c.b16 %v2591, %v2589
      %v2600 = vpack.c.b16 %v2592, %v2590
      %v2606 = vsel %vm606, %v2594, 0
      %v2609 = vsel %vm606, %v2596, 0
      %v2612 = vsel %vm606, %v2598, 0
      %v2615 = vsel %vm606, %v2600, 0
      %2617 = vmatprep.subr.bf16.mxu0 0
      %2618 = vmatpush1.bf16.msra.mxu0 %v2548
      %2619 = vmatprep.subr.bf16.mxu0 0
      %2620 = vmatpush1.bf16.msra.mxu0 %v2549
      %2621 = vmatprep.subr.bf16.mxu0 0
      %2622 = vmatpush1.bf16.msra.mxu0 %v2550
      %2623 = vmatprep.subr.bf16.mxu0 0
      %2624 = vmatpush1.bf16.msra.mxu0 %v2551
      %2625 = vmatprep.subr.bf16.mxu0 0
      %2626 = vmatpush1.bf16.msra.mxu0 %v2552
      %2627 = vmatprep.subr.bf16.mxu0 0
      %2628 = vmatpush1.bf16.msra.mxu0 %v2553
      %2629 = vmatprep.subr.bf16.mxu0 0
      %2630 = vmatpush1.bf16.msra.mxu0 %v2554
      %2631 = vmatprep.subr.bf16.mxu0 0
      %2632 = vmatpush1.bf16.msra.mxu0 %v2555
      %2633 = vmatprep.subr.bf16.mxu0 0
      %2634 = vmatpush1.bf16.msra.mxu0 %v2556
      %2635 = vmatprep.subr.bf16.mxu0 0
      %2636 = vmatpush1.bf16.msra.mxu0 %v2557
      %2637 = vmatprep.subr.bf16.mxu0 0
      %2638 = vmatpush1.bf16.msra.mxu0 %v2558
      %2639 = vmatprep.subr.bf16.mxu0 0
      %2640 = vmatpush1.bf16.msra.mxu0 %v2559
      %2641 = vmatprep.subr.bf16.mxu0 0
      %2642 = vmatpush1.bf16.msra.mxu0 0
      %2643 = vmatprep.subr.bf16.mxu0 0
      %2644 = vmatpush1.bf16.msra.mxu0 0
      %2645 = vmatprep.subr.bf16.mxu0 0
      %2646 = vmatpush1.bf16.msra.mxu0 0
      %2647 = vmatprep.subr.bf16.mxu0 0
      %2648 = vmatpush1.bf16.msra.mxu0 0
      %2649 = vmatprep.mubr.bf16.mxu0 %v2606
      %2650 = vmatmul.mubr.bf16.gmra.mrb[0].mxu0 %v2593
      %v2651 = vpop.f32.mrb[0].mxu0
      %v2652 = vadd.f32 0.0, %v2651
      %v2653 = vpop.f32.mrb[0].mxu0
      %v2654 = vpop.f32.mrb[0].mxu0
      %v2655 = vadd.f32 0.0, %v2654
      %v2656 = vpop.f32.mrb[0].mxu0
      %2657 = vmatprep.mubr.bf16.mxu0 %v2609
      %2658 = vmatmul.mubr.bf16.gmra.mrb[0].mxu0 %v2595
      %v2659 = vpop.f32.mrb[0].mxu0
      %v2660 = vadd.f32 0.0, %v2659
      %v2661 = vpop.f32.mrb[0].mxu0
      %v2662 = vpop.f32.mrb[0].mxu0
      %v2663 = vadd.f32 0.0, %v2662
      %v2664 = vpop.f32.mrb[0].mxu0
      %2665 = vmatprep.mubr.bf16.mxu0 %v2612
      %2666 = vmatmul.mubr.bf16.gmra.mrb[0].mxu0 %v2597
      %v2667 = vpop.f32.mrb[0].mxu0
      %v2668 = vadd.f32 0.0, %v2667
      %v2669 = vpop.f32.mrb[0].mxu0
      %v2670 = vpop.f32.mrb[0].mxu0
      %v2671 = vadd.f32 0.0, %v2670
      %v2672 = vpop.f32.mrb[0].mxu0
      %2673 = vmatprep.mubr.bf16.mxu0 %v2615
      %2674 = vmatmul.mubr.bf16.gmra.mrb[0].mxu0 %v2599
      %v2675 = vpop.f32.mrb[0].mxu0
      %v2676 = vadd.f32 0.0, %v2675
      %v2677 = vpop.f32.mrb[0].mxu0
      %v2678 = vpop.f32.mrb[0].mxu0
      %v2679 = vadd.f32 0.0, %v2678
      %v2680 = vpop.f32.mrb[0].mxu0
      %2681 = vdwg.mxu0
      %v2682 = vmul.f32 %v2652, 0.2
      %v2683 = vmul.f32 %v2655, 0.2
      %v2684 = vmul.f32 %v2660, 0.2
      %v2685 = vmul.f32 %v2663, 0.2
      %v2686 = vmul.f32 %v2668, 0.2
      %v2687 = vmul.f32 %v2671, 0.2
      %v2688 = vmul.f32 %v2676, 0.2
      %v2689 = vmul.f32 %v2679, 0.2
      %v2690 = vmax.f32 %v2652, %v2682
      %v2691 = vmax.f32 %v2655, %v2683
      %v2692 = vmax.f32 %v2660, %v2684
      %v2693 = vmax.f32 %v2663, %v2685
      %v2694 = vmax.f32 %v2668, %v2686
      %v2695 = vmax.f32 %v2671, %v2687
      %v2696 = vmax.f32 %v2676, %v2688
      %v2697 = vmax.f32 %v2679, %v2689
      %2706 = vrot.lane.b32.xlu0 %v2690, 1
      %v2707 = vpop.permute.xlu0 %2706
      %2708 = vrot.lane.b32.xlu0 %v2691, 1
      %v2709 = vpop.permute.xlu0 %2708
      %2710 = vrot.lane.b32.xlu0 %v2692, 1
      %v2711 = vpop.permute.xlu0 %2710
      %2712 = vrot.lane.b32.xlu0 %v2693, 1
      %v2713 = vpop.permute.xlu0 %2712
      %2714 = vrot.lane.b32.xlu0 %v2694, 1
      %v2715 = vpop.permute.xlu0 %2714
      %2716 = vrot.lane.b32.xlu0 %v2695, 1
      %v2717 = vpop.permute.xlu0 %2716
      %2718 = vrot.lane.b32.xlu0 %v2696, 1
      %v2719 = vpop.permute.xlu0 %2718
      %2720 = vrot.lane.b32.xlu0 %v2697, 1
      %v2721 = vpop.permute.xlu0 %2720
      %v2730 = vsel %vm302, 0.0, %v2707
      %v2731 = vsel %vm302, 0.0, %v2709
      %v2732 = vsel %vm302, 0.0, %v2711
      %v2733 = vsel %vm302, 0.0, %v2713
      %v2734 = vsel %vm302, 0.0, %v2715
      %v2735 = vsel %vm302, 0.0, %v2717
      %v2736 = vsel %vm302, 0.0, %v2719
      %v2737 = vsel %vm302, 0.0, %v2721
      %2738 = vrot.lane.b32.xlu0 %v2690, 127
      %v2739 = vpop.permute.xlu0 %2738
      %2740 = vrot.lane.b32.xlu0 %v2691, 127
      %v2741 = vpop.permute.xlu0 %2740
      %2742 = vrot.lane.b32.xlu0 %v2692, 127
      %v2743 = vpop.permute.xlu0 %2742
      %2744 = vrot.lane.b32.xlu0 %v2693, 127
      %v2745 = vpop.permute.xlu0 %2744
      %2746 = vrot.lane.b32.xlu0 %v2694, 127
      %v2747 = vpop.permute.xlu0 %2746
      %2748 = vrot.lane.b32.xlu0 %v2695, 127
      %v2749 = vpop.permute.xlu0 %2748
      %2750 = vrot.lane.b32.xlu0 %v2696, 127
      %v2751 = vpop.permute.xlu0 %2750
      %2752 = vrot.lane.b32.xlu0 %v2697, 127
      %v2753 = vpop.permute.xlu0 %2752
      %v2762 = vsel %vm408, %v2739, 0.0
      %v2763 = vsel %vm408, %v2741, 0.0
      %v2764 = vsel %vm408, %v2743, 0.0
      %v2765 = vsel %vm408, %v2745, 0.0
      %v2766 = vsel %vm408, %v2747, 0.0
      %v2767 = vsel %vm408, %v2749, 0.0
      %v2768 = vsel %vm408, %v2751, 0.0
      %v2769 = vsel %vm408, %v2753, 0.0
      %v2770 = vpack.c.bf16 %v2731, %v2730
      %v2771 = vpack.c.bf16 %v2733, %v2732
      %v2772 = vpack.c.bf16 %v2735, %v2734
      %v2773 = vpack.c.bf16 %v2737, %v2736
      %v2774 = vpack.c.bf16 %v2691, %v2690
      %v2775 = vpack.c.bf16 %v2693, %v2692
      %v2776 = vpack.c.bf16 %v2695, %v2694
      %v2777 = vpack.c.bf16 %v2697, %v2696
      %v2778 = vpack.c.bf16 %v2763, %v2762
      %v2779 = vpack.c.bf16 %v2765, %v2764
      %v2780 = vpack.c.bf16 %v2767, %v2766
      %v2781 = vpack.c.bf16 %v2769, %v2768
      %v2782 = vld [vmem:[%s3] sm:$0xff]
      %v2783 = vld [vmem:[%s3 + $0x8] sm:$0xff]
      %v2784 = vld [vmem:[%s3 + $0x10] sm:$0xff]
      %v2785 = vld [vmem:[%s3 + $0x18] sm:$0xff]
      %v2786 = vld [vmem:[%s3 + $0x20] sm:$0xff]
      %v2787 = vld [vmem:[%s3 + $0x28] sm:$0xff]
      %v2788 = vld [vmem:[%s3 + $0x30] sm:$0xff]
      %v2789 = vld [vmem:[%s3 + $0x38] sm:$0xff]
      %v2790 = vld [vmem:[%s3 + $0x40] sm:$0xff]
      %v2791 = vld [vmem:[%s3 + $0x48] sm:$0xff]
      %v2792 = vld [vmem:[%s3 + $0x50] sm:$0xff]
      %v2793 = vld [vmem:[%s3 + $0x58] sm:$0xff]
      %v2794 = vld [vmem:[%s3 + $0x60] sm:$0xff]
      %v2795 = vld [vmem:[%s3 + $0x68] sm:$0xff]
      %v2796 = vld [vmem:[%s3 + $0x70] sm:$0xff]
      %v2797 = vld [vmem:[%s3 + $0x78] sm:$0xff]
      %v2814 = vunpack.c.l.b16 %v2782
      %v2815 = vunpack.c.h.b16 %v2782
      %v2816 = vunpack.c.l.b16 %v2783
      %v2817 = vunpack.c.h.b16 %v2783
      %v2818 = vunpack.c.l.b16 %v2784
      %v2819 = vunpack.c.h.b16 %v2784
      %v2820 = vunpack.c.l.b16 %v2785
      %v2821 = vunpack.c.h.b16 %v2785
      %v2822 = vunpack.c.l.b16 %v2786
      %v2823 = vunpack.c.h.b16 %v2786
      %v2824 = vunpack.c.l.b16 %v2787
      %v2825 = vunpack.c.h.b16 %v2787
      %v2826 = vunpack.c.l.b16 %v2788
      %v2827 = vunpack.c.h.b16 %v2788
      %v2828 = vunpack.c.l.b16 %v2789
      %v2829 = vunpack.c.h.b16 %v2789
      %v2830 = vunpack.c.l.b16 %v2790
      %v2831 = vunpack.c.h.b16 %v2790
      %v2832 = vunpack.c.l.b16 %v2791
      %v2833 = vunpack.c.h.b16 %v2791
      %v2834 = vunpack.c.l.b16 %v2792
      %v2835 = vunpack.c.h.b16 %v2792
      %v2836 = vunpack.c.l.b16 %v2793
      %v2837 = vunpack.c.h.b16 %v2793
      %v2838 = vunpack.c.l.b16 %v2794
      %v2839 = vunpack.c.h.b16 %v2794
      %v2840 = vunpack.c.l.b16 %v2795
      %v2841 = vunpack.c.h.b16 %v2795
      %v2842 = vunpack.c.l.b16 %v2796
      %v2843 = vunpack.c.h.b16 %v2796
      %v2844 = vunpack.c.l.b16 %v2797
      %v2845 = vunpack.c.h.b16 %v2797
      %v2846 = vpack.c.b16 %v2816, %v2814
      %v2847 = vpack.c.b16 %v2817, %v2815
      %v2848 = vpack.c.b16 %v2820, %v2818
      %v2849 = vpack.c.b16 %v2821, %v2819
      %v2850 = vpack.c.b16 %v2824, %v2822
      %v2851 = vpack.c.b16 %v2825, %v2823
      %v2852 = vpack.c.b16 %v2828, %v2826
      %v2853 = vpack.c.b16 %v2829, %v2827
      %v2854 = vpack.c.b16 %v2832, %v2830
      %v2855 = vpack.c.b16 %v2833, %v2831
      %v2856 = vpack.c.b16 %v2836, %v2834
      %v2857 = vpack.c.b16 %v2837, %v2835
      %v2858 = vpack.c.b16 %v2840, %v2838
      %v2859 = vpack.c.b16 %v2841, %v2839
      %v2860 = vpack.c.b16 %v2844, %v2842
      %v2861 = vpack.c.b16 %v2845, %v2843
      %v2871 = vsel %vm606, %v2847, 0
      %v2874 = vsel %vm606, %v2849, 0
      %v2877 = vsel %vm606, %v2851, 0
      %v2880 = vsel %vm606, %v2853, 0
      %v2883 = vsel %vm606, %v2855, 0
      %v2886 = vsel %vm606, %v2857, 0
      %v2889 = vsel %vm606, %v2859, 0
      %v2892 = vsel %vm606, %v2861, 0
      %2894 = vmatprep.subr.bf16.mxu0 0
      %2895 = vmatpush1.bf16.msra.mxu0 %v2770
      %2896 = vmatprep.subr.bf16.mxu0 0
      %2897 = vmatpush1.bf16.msra.mxu0 %v2771
      %2898 = vmatprep.subr.bf16.mxu0 0
      %2899 = vmatpush1.bf16.msra.mxu0 %v2772
      %2900 = vmatprep.subr.bf16.mxu0 0
      %2901 = vmatpush1.bf16.msra.mxu0 %v2773
      %2902 = vmatprep.subr.bf16.mxu0 0
      %2903 = vmatpush1.bf16.msra.mxu0 %v2774
      %2904 = vmatprep.subr.bf16.mxu0 0
      %2905 = vmatpush1.bf16.msra.mxu0 %v2775
      %2906 = vmatprep.subr.bf16.mxu0 0
      %2907 = vmatpush1.bf16.msra.mxu0 %v2776
      %2908 = vmatprep.subr.bf16.mxu0 0
      %2909 = vmatpush1.bf16.msra.mxu0 %v2777
      %2910 = vmatprep.subr.bf16.mxu0 0
      %2911 = vmatpush1.bf16.msra.mxu0 %v2778
      %2912 = vmatprep.subr.bf16.mxu0 0
      %2913 = vmatpush1.bf16.msra.mxu0 %v2779
      %2914 = vmatprep.subr.bf16.mxu0 0
      %2915 = vmatpush1.bf16.msra.mxu0 %v2780
      %2916 = vmatprep.subr.bf16.mxu0 0
      %2917 = vmatpush1.bf16.msra.mxu0 %v2781
      %2918 = vmatprep.subr.bf16.mxu0 0
      %2919 = vmatpush1.bf16.msra.mxu0 0
      %2920 = vmatprep.subr.bf16.mxu0 0
      %2921 = vmatpush1.bf16.msra.mxu0 0
      %2922 = vmatprep.subr.bf16.mxu0 0
      %2923 = vmatpush1.bf16.msra.mxu0 0
      %2924 = vmatprep.subr.bf16.mxu0 0
      %2925 = vmatpush1.bf16.msra.mxu0 0
      %2926 = vmatprep.mubr.bf16.mxu0 %v2871
      %2927 = vmatmul.mubr.bf16.gmra.mrb[0].mxu0 %v2846
      %v2928 = vpop.f32.mrb[0].mxu0
      %v2929 = vadd.f32 0.0, %v2928
      %v2930 = vpop.f32.mrb[0].mxu0
      %v2931 = vpop.f32.mrb[0].mxu0
      %v2932 = vadd.f32 0.0, %v2931
      %v2933 = vpop.f32.mrb[0].mxu0
      %2934 = vmatprep.mubr.bf16.mxu0 %v2874
      %2935 = vmatmul.mubr.bf16.gmra.mrb[0].mxu0 %v2848
      %v2936 = vpop.f32.mrb[0].mxu0
      %v2937 = vadd.f32 0.0, %v2936
      %v2938 = vpop.f32.mrb[0].mxu0
      %v2939 = vpop.f32.mrb[0].mxu0
      %v2940 = vadd.f32 0.0, %v2939
      %v2941 = vpop.f32.mrb[0].mxu0
      %2942 = vmatprep.mubr.bf16.mxu0 %v2877
      %2943 = vmatmul.mubr.bf16.gmra.mrb[0].mxu0 %v2850
      %v2944 = vpop.f32.mrb[0].mxu0
      %v2945 = vadd.f32 0.0, %v2944
      %v2946 = vpop.f32.mrb[0].mxu0
      %v2947 = vpop.f32.mrb[0].mxu0
      %v2948 = vadd.f32 0.0, %v2947
      %v2949 = vpop.f32.mrb[0].mxu0
      %2950 = vmatprep.mubr.bf16.mxu0 %v2880
      %2951 = vmatmul.mubr.bf16.gmra.mrb[0].mxu0 %v2852
      %v2952 = vpop.f32.mrb[0].mxu0
      %v2953 = vadd.f32 0.0, %v2952
      %v2954 = vpop.f32.mrb[0].mxu0
      %v2955 = vpop.f32.mrb[0].mxu0
      %v2956 = vadd.f32 0.0, %v2955
      %v2957 = vpop.f32.mrb[0].mxu0
      %2958 = vmatprep.mubr.bf16.mxu0 %v2883
      %2959 = vmatmul.mubr.bf16.gmra.mrb[0].mxu0 %v2854
      %v2960 = vpop.f32.mrb[0].mxu0
      %v2961 = vadd.f32 0.0, %v2960
      %v2962 = vpop.f32.mrb[0].mxu0
      %v2963 = vpop.f32.mrb[0].mxu0
      %v2964 = vadd.f32 0.0, %v2963
      %v2965 = vpop.f32.mrb[0].mxu0
      %2966 = vmatprep.mubr.bf16.mxu0 %v2886
      %2967 = vmatmul.mubr.bf16.gmra.mrb[0].mxu0 %v2856
      %v2968 = vpop.f32.mrb[0].mxu0
      %v2969 = vadd.f32 0.0, %v2968
      %v2970 = vpop.f32.mrb[0].mxu0
      %v2971 = vpop.f32.mrb[0].mxu0
      %v2972 = vadd.f32 0.0, %v2971
      %v2973 = vpop.f32.mrb[0].mxu0
      %2974 = vmatprep.mubr.bf16.mxu0 %v2889
      %2975 = vmatmul.mubr.bf16.gmra.mrb[0].mxu0 %v2858
      %v2976 = vpop.f32.mrb[0].mxu0
      %v2977 = vadd.f32 0.0, %v2976
      %v2978 = vpop.f32.mrb[0].mxu0
      %v2979 = vpop.f32.mrb[0].mxu0
      %v2980 = vadd.f32 0.0, %v2979
      %v2981 = vpop.f32.mrb[0].mxu0
      %2982 = vmatprep.mubr.bf16.mxu0 %v2892
      %2983 = vmatmul.mubr.bf16.gmra.mrb[0].mxu0 %v2860
      %v2984 = vpop.f32.mrb[0].mxu0
      %v2985 = vadd.f32 0.0, %v2984
      %v2986 = vpop.f32.mrb[0].mxu0
      %v2987 = vpop.f32.mrb[0].mxu0
      %v2988 = vadd.f32 0.0, %v2987
      %v2989 = vpop.f32.mrb[0].mxu0
      %2990 = vdwg.mxu0
      %v2991 = vmul.f32 %v2929, 0.2
      %v2992 = vmul.f32 %v2932, 0.2
      %v2993 = vmul.f32 %v2937, 0.2
      %v2994 = vmul.f32 %v2940, 0.2
      %v2995 = vmul.f32 %v2945, 0.2
      %v2996 = vmul.f32 %v2948, 0.2
      %v2997 = vmul.f32 %v2953, 0.2
      %v2998 = vmul.f32 %v2956, 0.2
      %v2999 = vmul.f32 %v2961, 0.2
      %v3000 = vmul.f32 %v2964, 0.2
      %v3001 = vmul.f32 %v2969, 0.2
      %v3002 = vmul.f32 %v2972, 0.2
      %v3003 = vmul.f32 %v2977, 0.2
      %v3004 = vmul.f32 %v2980, 0.2
      %v3005 = vmul.f32 %v2985, 0.2
      %v3006 = vmul.f32 %v2988, 0.2
      %v3007 = vmax.f32 %v2929, %v2991
      %v3008 = vmax.f32 %v2932, %v2992
      %v3009 = vmax.f32 %v2937, %v2993
      %v3010 = vmax.f32 %v2940, %v2994
      %v3011 = vmax.f32 %v2945, %v2995
      %v3012 = vmax.f32 %v2948, %v2996
      %v3013 = vmax.f32 %v2953, %v2997
      %v3014 = vmax.f32 %v2956, %v2998
      %v3015 = vmax.f32 %v2961, %v2999
      %v3016 = vmax.f32 %v2964, %v3000
      %v3017 = vmax.f32 %v2969, %v3001
      %v3018 = vmax.f32 %v2972, %v3002
      %v3019 = vmax.f32 %v2977, %v3003
      %v3020 = vmax.f32 %v2980, %v3004
      %v3021 = vmax.f32 %v2985, %v3005
      %v3022 = vmax.f32 %v2988, %v3006
      %vm3023 = vcmask 130048
      %3024 = vst.msk [vmem:[%s279] sm:$0xff] %vm3023, %v3007
      %3025 = vst.msk [vmem:[%s279 + $0x8] sm:$0xff] %vm3023, %v3008
      %3026 = vst.msk [vmem:[%s279 + $0x10] sm:$0xff] %vm3023, %v3009
      %3027 = vst.msk [vmem:[%s279 + $0x18] sm:$0xff] %vm3023, %v3010
      %3028 = vst.msk [vmem:[%s279 + $0x20] sm:$0xff] %vm3023, %v3011
      %3029 = vst.msk [vmem:[%s279 + $0x28] sm:$0xff] %vm3023, %v3012
      %3030 = vst.msk [vmem:[%s279 + $0x30] sm:$0xff] %vm3023, %v3013
      %3031 = vst.msk [vmem:[%s279 + $0x38] sm:$0xff] %vm3023, %v3014
      %3032 = vst.msk [vmem:[%s279 + $0x40] sm:$0xff] %vm3023, %v3015
      %3033 = vst.msk [vmem:[%s279 + $0x48] sm:$0xff] %vm3023, %v3016
      %3034 = vst.msk [vmem:[%s279 + $0x50] sm:$0xff] %vm3023, %v3017
      %3035 = vst.msk [vmem:[%s279 + $0x58] sm:$0xff] %vm3023, %v3018
      %3036 = vst.msk [vmem:[%s279 + $0x60] sm:$0xff] %vm3023, %v3019
      %3037 = vst.msk [vmem:[%s279 + $0x68] sm:$0xff] %vm3023, %v3020
      %3038 = vst.msk [vmem:[%s279 + $0x70] sm:$0xff] %vm3023, %v3021
      %3039 = vst.msk [vmem:[%s279 + $0x78] sm:$0xff] %vm3023, %v3022
      %v3040 = vld [vmem:[%s4] sm:$0xff]
      %3049 = vrot.lane.b32.xlu0 %v3015, 1
      %v3050 = vpop.permute.xlu0 %3049
      %3051 = vrot.lane.b32.xlu0 %v3016, 1
      %v3052 = vpop.permute.xlu0 %3051
      %3053 = vrot.lane.b32.xlu0 %v3017, 1
      %v3054 = vpop.permute.xlu0 %3053
      %3055 = vrot.lane.b32.xlu0 %v3018, 1
      %v3056 = vpop.permute.xlu0 %3055
      %3057 = vrot.lane.b32.xlu0 %v3019, 1
      %v3058 = vpop.permute.xlu0 %3057
      %3059 = vrot.lane.b32.xlu0 %v3020, 1
      %v3060 = vpop.permute.xlu0 %3059
      %3061 = vrot.lane.b32.xlu0 %v3021, 1
      %v3062 = vpop.permute.xlu0 %3061
      %3063 = vrot.lane.b32.xlu0 %v3022, 1
      %v3064 = vpop.permute.xlu0 %3063
      %v3073 = vsel %vm302, 0.0, %v3050
      %v3074 = vsel %vm302, 0.0, %v3052
      %v3075 = vsel %vm302, 0.0, %v3054
      %v3076 = vsel %vm302, 0.0, %v3056
      %v3077 = vsel %vm302, 0.0, %v3058
      %v3078 = vsel %vm302, 0.0, %v3060
      %v3079 = vsel %vm302, 0.0, %v3062
      %v3080 = vsel %vm302, 0.0, %v3064
      %v3081 = vpack.c.bf16 %v3074, %v3073
      %v3082 = vpack.c.bf16 %v3076, %v3075
      %v3083 = vpack.c.bf16 %v3078, %v3077
      %v3084 = vpack.c.bf16 %v3080, %v3079
      %v3085 = vpack.c.bf16 %v3008, %v3007
      %v3086 = vpack.c.bf16 %v3010, %v3009
      %v3087 = vpack.c.bf16 %v3012, %v3011
      %v3088 = vpack.c.bf16 %v3014, %v3013
      %v3089 = vpack.c.bf16 %v3016, %v3015
      %v3090 = vpack.c.bf16 %v3018, %v3017
      %v3091 = vpack.c.bf16 %v3020, %v3019
      %v3092 = vpack.c.bf16 %v3022, %v3021
      %v3094 = vunpack.c.l.b16 %v3040
      %v3095 = vunpack.c.h.b16 %v3040
      %v3096 = vpack.c.b16 %v3094, %v3094
      %v3097 = vpack.c.b16 %v3095, %v3095
      %v3100 = vsel %vm606, %v3097, 0
      %3102 = vmatprep.subr.bf16.mxu0 0
      %3103 = vmatpush1.bf16.msra.mxu0 %v3081
      %3104 = vmatprep.subr.bf16.mxu0 0
      %3105 = vmatpush1.bf16.msra.mxu0 %v3082
      %3106 = vmatprep.subr.bf16.mxu0 0
      %3107 = vmatpush1.bf16.msra.mxu0 %v3083
      %3108 = vmatprep.subr.bf16.mxu0 0
      %3109 = vmatpush1.bf16.msra.mxu0 %v3084
      %3110 = vmatprep.subr.bf16.mxu0 0
      %3111 = vmatpush1.bf16.msra.mxu0 %v3085
      %3112 = vmatprep.subr.bf16.mxu0 0
      %3113 = vmatpush1.bf16.msra.mxu0 %v3086
      %3114 = vmatprep.subr.bf16.mxu0 0
      %3115 = vmatpush1.bf16.msra.mxu0 %v3087
      %3116 = vmatprep.subr.bf16.mxu0 0
      %3117 = vmatpush1.bf16.msra.mxu0 %v3088
      %3118 = vmatprep.subr.bf16.mxu0 0
      %3119 = vmatpush1.bf16.msra.mxu0 %v3089
      %3120 = vmatprep.subr.bf16.mxu0 0
      %3121 = vmatpush1.bf16.msra.mxu0 %v3090
      %3122 = vmatprep.subr.bf16.mxu0 0
      %3123 = vmatpush1.bf16.msra.mxu0 %v3091
      %3124 = vmatprep.subr.bf16.mxu0 0
      %3125 = vmatpush1.bf16.msra.mxu0 %v3092
      %3126 = vmatprep.subr.bf16.mxu0 0
      %3127 = vmatpush1.bf16.msra.mxu0 0
      %3128 = vmatprep.subr.bf16.mxu0 0
      %3129 = vmatpush1.bf16.msra.mxu0 0
      %3130 = vmatprep.subr.bf16.mxu0 0
      %3131 = vmatpush1.bf16.msra.mxu0 0
      %3132 = vmatprep.subr.bf16.mxu0 0
      %3133 = vmatpush1.bf16.msra.mxu0 0
      %3134 = vmatprep.mubr.bf16.mxu0 %v3100
      %3135 = vmatmul.mubr.bf16.gmra.mrb[0].mxu0 %v3096
      %v3136 = vpop.f32.mrb[0].mxu0
      %v3137 = vadd.f32 0.0, %v3136
      %v3138 = vpop.f32.mrb[0].mxu0
      %v3139 = vpop.f32.mrb[0].mxu0
      %v3140 = vpop.f32.mrb[0].mxu0
      %3141 = vdwg.mxu0
      %3150 = vrot.lane.b32.xlu0 %v3007, 127
      %v3151 = vpop.permute.xlu0 %3150
      %3152 = vrot.lane.b32.xlu0 %v3008, 127
      %v3153 = vpop.permute.xlu0 %3152
      %3154 = vrot.lane.b32.xlu0 %v3009, 127
      %v3155 = vpop.permute.xlu0 %3154
      %3156 = vrot.lane.b32.xlu0 %v3010, 127
      %v3157 = vpop.permute.xlu0 %3156
      %3158 = vrot.lane.b32.xlu0 %v3011, 127
      %v3159 = vpop.permute.xlu0 %3158
      %3160 = vrot.lane.b32.xlu0 %v3012, 127
      %v3161 = vpop.permute.xlu0 %3160
      %3162 = vrot.lane.b32.xlu0 %v3013, 127
      %v3163 = vpop.permute.xlu0 %3162
      %3164 = vrot.lane.b32.xlu0 %v3014, 127
      %v3165 = vpop.permute.xlu0 %3164
      %v3174 = vsel %vm408, %v3151, 0.0
      %v3175 = vsel %vm408, %v3153, 0.0
      %v3176 = vsel %vm408, %v3155, 0.0
      %v3177 = vsel %vm408, %v3157, 0.0
      %v3178 = vsel %vm408, %v3159, 0.0
      %v3179 = vsel %vm408, %v3161, 0.0
      %v3180 = vsel %vm408, %v3163, 0.0
      %v3181 = vsel %vm408, %v3165, 0.0
      %v3182 = vpack.c.bf16 %v3175, %v3174
      %v3183 = vpack.c.bf16 %v3177, %v3176
      %v3184 = vpack.c.bf16 %v3179, %v3178
      %v3185 = vpack.c.bf16 %v3181, %v3180
      %3186 = vmatprep.subr.bf16.mxu0 0
      %3187 = vmatpush1.bf16.msra.mxu0 %v3085
      %3188 = vmatprep.subr.bf16.mxu0 0
      %3189 = vmatpush1.bf16.msra.mxu0 %v3086
      %3190 = vmatprep.subr.bf16.mxu0 0
      %3191 = vmatpush1.bf16.msra.mxu0 %v3087
      %3192 = vmatprep.subr.bf16.mxu0 0
      %3193 = vmatpush1.bf16.msra.mxu0 %v3088
      %3194 = vmatprep.subr.bf16.mxu0 0
      %3195 = vmatpush1.bf16.msra.mxu0 %v3089
      %3196 = vmatprep.subr.bf16.mxu0 0
      %3197 = vmatpush1.bf16.msra.mxu0 %v3090
      %3198 = vmatprep.subr.bf16.mxu0 0
      %3199 = vmatpush1.bf16.msra.mxu0 %v3091
      %3200 = vmatprep.subr.bf16.mxu0 0
      %3201 = vmatpush1.bf16.msra.mxu0 %v3092
      %3202 = vmatprep.subr.bf16.mxu0 0
      %3203 = vmatpush1.bf16.msra.mxu0 %v3182
      %3204 = vmatprep.subr.bf16.mxu0 0
      %3205 = vmatpush1.bf16.msra.mxu0 %v3183
      %3206 = vmatprep.subr.bf16.mxu0 0
      %3207 = vmatpush1.bf16.msra.mxu0 %v3184
      %3208 = vmatprep.subr.bf16.mxu0 0
      %3209 = vmatpush1.bf16.msra.mxu0 %v3185
      %3210 = vmatprep.subr.bf16.mxu0 0
      %3211 = vmatpush1.bf16.msra.mxu0 0
      %3212 = vmatprep.subr.bf16.mxu0 0
      %3213 = vmatpush1.bf16.msra.mxu0 0
      %3214 = vmatprep.subr.bf16.mxu0 0
      %3215 = vmatpush1.bf16.msra.mxu0 0
      %3216 = vmatprep.subr.bf16.mxu0 0
      %3217 = vmatpush1.bf16.msra.mxu0 0
      %3218 = vmatprep.mubr.bf16.mxu0 %v3100
      %3219 = vmatmul.mubr.bf16.gmra.mrb[0].mxu0 %v3096
      %v3220 = vpop.f32.mrb[0].mxu0
      %v3221 = vadd.f32 0.0, %v3220
      %v3222 = vpop.f32.mrb[0].mxu0
      %v3223 = vpop.f32.mrb[0].mxu0
      %v3224 = vpop.f32.mrb[0].mxu0
      %3225 = vdwg.mxu0
      %v3226 = vld [vmem:[%s5] sm:$0x1]
      %3228 = vset.pattern.permute.xlu0 1
      %3229 = vperm.xlu0 %3228, %v3226
      %v3230 = vpop.permute.xlu0 %3229
      %v3232 = vlaneseq
      %v3233 = vshrl.u32 %v3232, 7
      %v3234 = vsub.s32 0, %v3233
      %v3235 = vrot.slane %v3230, %v3234
      %v3236 = vmul.f32 %v3235, %v285
      %3237 = vset.pattern.permute.xlu0 3
      %3238 = vperm.xlu0 %3237, %v3226
      %v3239 = vpop.permute.xlu0 %3238
      %v3241 = vlaneseq
      %v3242 = vshrl.u32 %v3241, 7
      %v3243 = vsub.s32 0, %v3242
      %v3244 = vrot.slane %v3239, %v3243
      %v3245 = vmul.f32 %v3244, %v303
      %v3246 = vadd.f32 %v3236, %v3245
      %3247 = vset.pattern.permute.xlu0 0
      %3248 = vperm.xlu0 %3247, %v3226
      %v3249 = vpop.permute.xlu0 %3248
      %v3251 = vlaneseq
      %v3252 = vshrl.u32 %v3251, 7
      %v3253 = vsub.s32 0, %v3252
      %v3254 = vrot.slane %v3249, %v3253
      %v3255 = vmul.f32 %v3254, %v409
      %3256 = vset.pattern.permute.xlu0 2
      %3257 = vperm.xlu0 %3256, %v3226
      %v3258 = vpop.permute.xlu0 %3257
      %v3260 = vlaneseq
      %v3261 = vshrl.u32 %v3260, 7
      %v3262 = vsub.s32 0, %v3261
      %v3263 = vrot.slane %v3258, %v3262
      %v3264 = vmul.f32 %v3263, %v285
      %v3265 = vadd.f32 %v3255, %v3264
      %v3266 = vadd.f32 %v3246, %v3137
      %vm3267 = vcmask 122880
      %3268 = vst.msk [vmem:[%s283] sm:$0x1] %vm3267, %v3266
      %v3269 = vadd.f32 %v3265, %v3221
      %3270 = vst.msk [vmem:[%s283 + $0x1] sm:$0x1] %vm3267, %v3269
      %p3271 = scmp.lt.s32.totalorder %s19, 1
      %s3272 = scalar_select %p3271, %s19, 1
      %s3273 = smul.addr %s3272, 16
      %s3274 = smul.addr %s3273, 8
      %s3275 = scalar_lea.vmem %s6, %s3274
      %p3276 = scmp.lt.s32.totalorder %s19, 1
      %s3277 = scalar_select %p3276, %s19, 1
      %s3278 = smul.addr %s3277, 2
      %s3279 = scalar_lea.vmem %s7, %s3278
      // Predicated region
      $region45: #{lapsrn_forward_pallas.2} parent=43 // pred_check
        %p3280 = pneg %p168
      $region46: #{lapsrn_forward_pallas.2} parent=43 // pred_check_branch
        %3282 = sbr.rel (%p3280) target = $region48
      $region47: #{lapsrn_forward_pallas.2} parent=43 // pred_region
        _
      $region48: #{lapsrn_forward_pallas.2} parent=43 // pred_fallthru
        _
      // Predicated region
      $region49: #{lapsrn_forward_pallas.2} parent=43 // pred_check
        %p3283 = pneg %p194
      $region50: #{lapsrn_forward_pallas.2} parent=43 // pred_check_branch
        %3285 = sbr.rel (%p3283) target = $region52
      $region51: #{lapsrn_forward_pallas.2} parent=43 // pred_region
        _
      $region52: #{lapsrn_forward_pallas.2} parent=43 // pred_fallthru
        _
    $region44: #{lapsrn_forward_pallas.2} parent=5 // pred_fallthru
      _
    %p3286 = scmp.le.s32.totalorder 2, %s14
    // Predicated region
    $region53: #{lapsrn_forward_pallas.2} parent=5 // pred_check
      %p3287 = pneg %p3286
    $region54: #{lapsrn_forward_pallas.2} parent=5 // pred_check_branch
      %3289 = sbr.rel (%p3287) target = $region56
    $region55: #{lapsrn_forward_pallas.2} parent=5 // pred_region
      %s3290 = ssub.s32 %s14, 2
      // Predicated region
      $region57: #{lapsrn_forward_pallas.2} parent=55 // pred_check
        %p3291 = pneg %p174
      $region58: #{lapsrn_forward_pallas.2} parent=55 // pred_check_branch
        %3293 = sbr.rel (%p3291) target = $region60
      $region59: #{lapsrn_forward_pallas.2} parent=55 // pred_region
        %p3294 = scmp.lt.s32.totalorder %s20, 1
        %s3295 = scalar_select %p3294, %s20, 1
        %s3296 = smul.addr %s3295, 16
        %s3297 = smul.addr %s3296, 8
        %s3298 = scalar_lea.vmem %s6, %s3297
      $region60: #{lapsrn_forward_pallas.2} parent=55 // pred_fallthru
        _
      // Predicated region
      $region61: #{lapsrn_forward_pallas.2} parent=55 // pred_check
        %p3299 = pneg %p200
      $region62: #{lapsrn_forward_pallas.2} parent=55 // pred_check_branch
        %3301 = sbr.rel (%p3299) target = $region64
      $region63: #{lapsrn_forward_pallas.2} parent=55 // pred_region
        %p3302 = scmp.lt.s32.totalorder %s20, 1
        %s3303 = scalar_select %p3302, %s20, 1
        %s3304 = smul.addr %s3303, 2
        %s3305 = scalar_lea.vmem %s7, %s3304
      $region64: #{lapsrn_forward_pallas.2} parent=55 // pred_fallthru
        _
    $region56: #{lapsrn_forward_pallas.2} parent=5 // pred_fallthru
      _
  $region6: #{lapsrn_forward_pallas.2} parent=0 // loop_footer
    %s18 = sadd.s32 1, %s14
  $region7: #{lapsrn_forward_pallas.2} parent=0 // loop_footer_branch
    %13 = sbr.rel target = $region3
  $region8: #{lapsrn_forward_pallas.2} parent=0 // loop_exit
    _

</llo_original>
